<compile_context>
chip_gen: v7x
topology: tpu7x:2x2x1
jax: 0.10.0
libtpu: 0.0.40
codegen_flags: <defaults>
</compile_context>

<pallas_src>
import functools

import jax
import jax.numpy as jnp
from jax.experimental import pallas as pl
from jax.experimental.pallas import tpu as pltpu


def _decoder_layer_kernel(x_ref,
                          g1_ref, be1_ref,
                          wqkv_ref, bqkv_ref,
                          wo_ref, bo_ref,
                          g2_ref, be2_ref,
                          w1_ref, b1_ref,
                          w2_ref, b2_ref,
                          out_ref,
                          *, nhead, eps):
    f32 = jnp.float32
    bf16 = jnp.bfloat16

    x = x_ref[...].astype(f32)                     # (Bt, S, D) batch-major block
    Bt, S, D = x.shape
    N = Bt * S
    hd = D // nhead
    scale = 1.0 / float(hd) ** 0.5

    # Hoist all small parameter reads / casts (read once per grid step).
    g1 = g1_ref[...].astype(f32)
    be1 = be1_ref[...].astype(f32)
    g2 = g2_ref[...].astype(f32)
    be2 = be2_ref[...].astype(f32)
    bqkv = bqkv_ref[...].astype(f32)
    bo = bo_ref[...].astype(f32)
    b1 = b1_ref[...].astype(f32)
    b2 = b2_ref[...].astype(f32)

    def layer_norm(v, g, b):                       # f32 statistics (matches PyTorch)
        m = jnp.mean(v, axis=-1, keepdims=True)
        c = v - m
        var = jnp.mean(c * c, axis=-1, keepdims=True)
        return c * jax.lax.rsqrt(var + eps) * g + b

    # ---------------- self-attention branch (pre-norm) ----------------
    xf = x.reshape(N, D)                           # token-flat (batch-major rows)
    xn = layer_norm(xf, g1, be1)

    # Fused QKV projection: one wide MXU matmul with M = Bt*S rows.
    qkv = jnp.dot(xn.astype(bf16), wqkv_ref[...],
                  preferred_element_type=f32) + bqkv            # (N, 3D) f32
    qkv16 = qkv.astype(bf16)                                    # single hoisted cast

    # Attention is inherently per-sequence; with batch-major rows each sequence
    # is a contiguous static row-slice of the flat qkv (no relayout gathers).
    attn_heads = []
    for b in range(Bt):
        qkv_b = qkv16[b * S:(b + 1) * S]                        # (S, 3D) bf16

        # TODO(synk): a single lane-splitting reshape + transpose would pack
        # heads with fewer copies (review item 6), but Mosaic reshape support
        # for lane-dim splits is shaky; keep the proven slice+stack pattern.
        def head_stack(col0):
            return jnp.stack(
                [qkv_b[:, col0 + h * hd: col0 + (h + 1) * hd]
                 for h in range(nhead)], axis=0)                # (H, S, hd) bf16

        q = head_stack(0)
        k = head_stack(D)
        v = head_stack(2 * D)

        s = jnp.einsum("hqd,hkd->hqk", q, k,
                       preferred_element_type=f32) * scale      # (H, S, S) f32
        s = s - jnp.max(s, axis=-1, keepdims=True)
        p = jnp.exp(s)
        denom = jnp.sum(p, axis=-1, keepdims=True)
        p = p * pl.reciprocal(denom, approx=True)               # EUP, not VPU divide

        attn = jnp.einsum("hqk,hkd->hqd", p.astype(bf16), v,
                          preferred_element_type=f32)           # (H, S, hd) f32

        # Lane-concatenate heads (same order as PyTorch) -> (S, D) bf16 slab.
        attn_heads.append(jnp.concatenate(
            [attn[h].astype(bf16) for h in range(nhead)], axis=-1))

    # One fused output projection for ALL Bt*S tokens: single big MXU matmul,
    # no per-head skinny matmuls and no (H, S, D) f32 temporary.
    attn_all = jnp.concatenate(attn_heads, axis=0)              # (N, D) bf16
    o = jnp.dot(attn_all, wo_ref[...], preferred_element_type=f32) + bo

    t = xf + o                                   # residual (dropout == identity)

    # ---------------- feedforward branch (pre-norm) ----------------
    tn = layer_norm(t, g2, be2)
    h1 = jnp.dot(tn.astype(bf16), w1_ref[...], preferred_element_type=f32) + b1
    h1 = jnp.maximum(h1, 0.0)
    ff = jnp.dot(h1.astype(bf16), w2_ref[...], preferred_element_type=f32) + b2

    out_ref[...] = (t + ff).reshape(Bt, S, D).astype(out_ref.dtype)


def _pick_block_batch(batch, seq, min_rows=256):
    """Smallest batch-tile whose token count fills the MXU (>= min_rows rows),
    while keeping >= 2 grid steps when possible (v7x has 2 TensorCores)."""
    divisors = [d for d in range(1, batch + 1) if batch % d == 0]
    cands = [d for d in divisors if batch // d >= 2] or divisors
    for d in cands:
        if d * seq >= min_rows:
            return d
    return cands[-1]


@functools.partial(jax.jit, static_argnames=("nhead", "block_batch"))
def decoder_layer(tgt, params, *, nhead, block_batch=None):
    """tgt: (B, S, D) float32, batch-major (= PyTorch (S,B,D) tgt.transpose(0,1)).

    Batch-major input lets the kernel stream (Bt, S, D) tiles straight from HBM
    with zero wrapper transposes (perf-review item 1).
    """
    B, S, D = tgt.shape
    dff = params["w1"].shape[1]
    bt = block_batch if block_batch is not None else _pick_block_batch(B, S)
    assert B % bt == 0, "block_batch must divide batch"

    def full(shape):
        # Grid-invariant parameter: whole array every step.
        # TODO(synk): pipeline_mode=pl.Buffered(1) here at production sizes.
        return pl.BlockSpec(shape, lambda *_: (0,) * len(shape))

    in_specs = [
        pl.BlockSpec((bt, S, D), lambda i: (i, 0, 0)),  # Bt sequences per grid step
        full((1, D)), full((1, D)),                     # norm1 gamma / beta
        full((D, 3 * D)), full((1, 3 * D)),             # fused Wqkv^T (bf16), bqkv
        full((D, D)), full((1, D)),                     # Wo^T (bf16), bo
        full((1, D)), full((1, D)),                     # norm2 gamma / beta
        full((D, dff)), full((1, dff)),                 # W1^T (bf16), b1
        full((dff, D)), full((1, D)),                   # W2^T (bf16), b2
    ]

    # Size the VMEM request from actual buffer math (review item 5), with 2x
    # headroom, floor 8 MiB, cap 56 MiB (v7x has 64 MiB per TensorCore).
    n = bt * S
    weight_bytes = 2 * (D * 3 * D + D * D + D * dff + dff * D) * 2   # bf16, dbl-buffered
    io_bytes = 2 * 2 * bt * S * D * 4                                # in+out blocks, dbl-buffered
    act_bytes = (n * 3 * D + 5 * n * D + n * dff + 3 * nhead * S * S) * 4
    vmem_limit = int(min(max(2 * (weight_bytes + io_bytes + act_bytes),
                             8 * 1024 * 1024), 56 * 1024 * 1024))

    return pl.pallas_call(
        functools.partial(_decoder_layer_kernel, nhead=nhead, eps=1e-5),
        out_shape=jax.ShapeDtypeStruct((B, S, D), tgt.dtype),
        grid=(B // bt,),
        in_specs=in_specs,
        out_specs=pl.BlockSpec((bt, S, D), lambda i: (i, 0, 0)),
        compiler_params=pltpu.CompilerParams(
            dimension_semantics=("parallel",),
            vmem_limit_bytes=vmem_limit),
    )(tgt,
      params["g1"], params["be1"],
      params["wqkv"], params["bqkv"],
      params["wo"], params["bo"],
      params["g2"], params["be2"],
      params["w1"], params["b1"],
      params["w2"], params["b2"])


def init_params(key, d_model, nhead, dim_feedforward):
    ks = jax.random.split(key, 8)
    sc = 0.05
    f32, bf16 = jnp.float32, jnp.bfloat16
    # nn.MultiheadAttention: in_proj_weight (3D, D), out_proj.weight (D, D)
    in_proj_w = sc * jax.random.normal(ks[0], (3 * d_model, d_model), f32)
    in_proj_b = sc * jax.random.normal(ks[1], (3 * d_model,), f32)
    out_w = sc * jax.random.normal(ks[2], (d_model, d_model), f32)
    out_b = sc * jax.random.normal(ks[3], (d_model,), f32)
    # feedforward: Linear(d_model, dff) then Linear(dff, d_model)
    w1 = sc * jax.random.normal(ks[4], (dim_feedforward, d_model), f32)
    b1 = sc * jax.random.normal(ks[5], (dim_feedforward,), f32)
    w2 = sc * jax.random.normal(ks[6], (d_model, dim_feedforward), f32)
    b2 = sc * jax.random.normal(ks[7], (d_model,), f32)
    return {
        "g1": jnp.ones((1, d_model), f32),
        "be1": jnp.zeros((1, d_model), f32),
        # fused QKV, pre-transposed for x @ W^T; bf16 MXU operands (half the DMA)
        "wqkv": in_proj_w.T.astype(bf16),          # (D, 3D)
        "bqkv": in_proj_b[None, :],                # (1, 3D) f32
        "wo": out_w.T.astype(bf16),                # (D, D)
        "bo": out_b[None, :],
        "g2": jnp.ones((1, d_model), f32),
        "be2": jnp.zeros((1, d_model), f32),
        "w1": w1.T.astype(bf16), "b1": b1[None, :],
        "w2": w2.T.astype(bf16), "b2": b2[None, :],
    }


def reference(tgt, p, nhead, eps=1e-5):
    """Pure-JAX f32 mirror of the PyTorch forward (eval mode), batch-major
    (B, S, D), using the same (bf16-rounded) weight values as the kernel."""
    f32 = jnp.float32

    def ln(x, g, b):
        m = x.mean(-1, keepdims=True)
        v = ((x - m) ** 2).mean(-1, keepdims=True)
        return (x - m) / jnp.sqrt(v + eps) * g + b

    B, S, D = tgt.shape
    hd = D // nhead
    wqkv = p["wqkv"].astype(f32)
    wq, wk, wv = wqkv[:, :D], wqkv[:, D:2 * D], wqkv[:, 2 * D:]
    bq, bk, bv = p["bqkv"][0, :D], p["bqkv"][0, D:2 * D], p["bqkv"][0, 2 * D:]
    wo = p["wo"].astype(f32)

    x = tgt
    xn = ln(x, p["g1"][0], p["be1"][0])
    q = xn @ wq + bq
    k = xn @ wk + bk
    v = xn @ wv + bv
    q = q.reshape(B, S, nhead, hd).transpose(0, 2, 1, 3)
    k = k.reshape(B, S, nhead, hd).transpose(0, 2, 1, 3)
    v = v.reshape(B, S, nhead, hd).transpose(0, 2, 1, 3)
    s = jnp.einsum("bhqd,bhkd->bhqk", q, k) / jnp.sqrt(hd)
    pm = jax.nn.softmax(s, axis=-1)
    o = jnp.einsum("bhqk,bhkd->bhqd", pm, v)
    o = o.transpose(0, 2, 1, 3).reshape(B, S, D)
    o = o @ wo + p["bo"][0]
    x = x + o
    xn = ln(x, p["g2"][0], p["be2"][0])
    h = jnp.maximum(xn @ p["w1"].astype(f32) + p["b1"][0], 0.0)
    return x + h @ p["w2"].astype(f32) + p["b2"][0]


if __name__ == "__main__":
    # Lane-dense small config.  Bt = 2 sequences per grid step -> M = 256 token
    # rows per MXU matmul, grid = (2,) so both v7x TensorCores stay busy.
    B, S, D, NHEAD, DFF = 4, 128, 128, 4, 256
    key = jax.random.PRNGKey(0)
    kx, kp = jax.random.split(key)
    tgt = jax.random.normal(kx, (B, S, D), jnp.float32)      # batch-major
    params = init_params(kp, D, NHEAD, DFF)

    out = decoder_layer(tgt, params, nhead=NHEAD)
    out = jax.block_until_ready(out)

    ref = reference(tgt, params, NHEAD)
    assert out.shape == (B, S, D)
    # Tolerance covers bf16 MXU operands + approx reciprocal vs. the f32 reference.
    err = float(jnp.max(jnp.abs(out - ref)))
    assert jnp.allclose(out, ref, atol=2e-2, rtol=2e-2), f"mismatch vs reference: {err}"
    print("KERNEL_OK")
</pallas_src>

<mosaic_0001>
module attributes {stable_mosaic.version = 11 : i64} {
  func.func @_decoder_layer_kernel(%arg0: i32, %arg1: memref<2x128x128xf32, #tpu.memory_space<vmem>>, %arg2: memref<1x128xf32, #tpu.memory_space<vmem>>, %arg3: memref<1x128xf32, #tpu.memory_space<vmem>>, %arg4: memref<128x384xbf16, #tpu.memory_space<vmem>>, %arg5: memref<1x384xf32, #tpu.memory_space<vmem>>, %arg6: memref<128x128xbf16, #tpu.memory_space<vmem>>, %arg7: memref<1x128xf32, #tpu.memory_space<vmem>>, %arg8: memref<1x128xf32, #tpu.memory_space<vmem>>, %arg9: memref<1x128xf32, #tpu.memory_space<vmem>>, %arg10: memref<128x256xbf16, #tpu.memory_space<vmem>>, %arg11: memref<1x256xf32, #tpu.memory_space<vmem>>, %arg12: memref<256x128xbf16, #tpu.memory_space<vmem>>, %arg13: memref<1x128xf32, #tpu.memory_space<vmem>>, %arg14: memref<2x128x128xf32, #tpu.memory_space<vmem>>) attributes {dimension_semantics = [#tpu.dimension_semantics<parallel>], iteration_bounds = array<i64: 2>, scalar_prefetch = 0 : i64, scratch_operands = 0 : i64, tpu.core_type = #tpu.core_type<tc>, window_params = [{transform_indices = @transform_0, window_bounds = array<i64: 2, 128, 128>}, {pipeline_mode = #tpu.pipeline_mode<synchronous>, transform_indices = @transform_1, window_bounds = array<i64: 1, 128>}, {pipeline_mode = #tpu.pipeline_mode<synchronous>, transform_indices = @transform_2, window_bounds = array<i64: 1, 128>}, {pipeline_mode = #tpu.pipeline_mode<synchronous>, transform_indices = @transform_3, window_bounds = array<i64: 128, 384>}, {pipeline_mode = #tpu.pipeline_mode<synchronous>, transform_indices = @transform_4, window_bounds = array<i64: 1, 384>}, {pipeline_mode = #tpu.pipeline_mode<synchronous>, transform_indices = @transform_5, window_bounds = array<i64: 128, 128>}, {pipeline_mode = #tpu.pipeline_mode<synchronous>, transform_indices = @transform_6, window_bounds = array<i64: 1, 128>}, {pipeline_mode = #tpu.pipeline_mode<synchronous>, transform_indices = @transform_7, window_bounds = array<i64: 1, 128>}, {pipeline_mode = #tpu.pipeline_mode<synchronous>, transform_indices = @transform_8, window_bounds = array<i64: 1, 128>}, {pipeline_mode = #tpu.pipeline_mode<synchronous>, transform_indices = @transform_9, window_bounds = array<i64: 128, 256>}, {pipeline_mode = #tpu.pipeline_mode<synchronous>, transform_indices = @transform_10, window_bounds = array<i64: 1, 256>}, {pipeline_mode = #tpu.pipeline_mode<synchronous>, transform_indices = @transform_11, window_bounds = array<i64: 256, 128>}, {pipeline_mode = #tpu.pipeline_mode<synchronous>, transform_indices = @transform_12, window_bounds = array<i64: 1, 128>}, {transform_indices = @transform_13, window_bounds = array<i64: 2, 128, 128>}]} {
    %c0 = arith.constant 0 : index
    %c0_0 = arith.constant 0 : index
    %c0_1 = arith.constant 0 : index
    %0 = vector.load %arg1[%c0, %c0_0, %c0_1] : memref<2x128x128xf32, #tpu.memory_space<vmem>>, vector<2x128x128xf32>
    %c0_2 = arith.constant 0 : index
    %c0_3 = arith.constant 0 : index
    %1 = vector.load %arg2[%c0_2, %c0_3] : memref<1x128xf32, #tpu.memory_space<vmem>>, vector<1x128xf32>
    %c0_4 = arith.constant 0 : index
    %c0_5 = arith.constant 0 : index
    %2 = vector.load %arg3[%c0_4, %c0_5] : memref<1x128xf32, #tpu.memory_space<vmem>>, vector<1x128xf32>
    %c0_6 = arith.constant 0 : index
    %c0_7 = arith.constant 0 : index
    %3 = vector.load %arg8[%c0_6, %c0_7] : memref<1x128xf32, #tpu.memory_space<vmem>>, vector<1x128xf32>
    %c0_8 = arith.constant 0 : index
    %c0_9 = arith.constant 0 : index
    %4 = vector.load %arg9[%c0_8, %c0_9] : memref<1x128xf32, #tpu.memory_space<vmem>>, vector<1x128xf32>
    %c0_10 = arith.constant 0 : index
    %c0_11 = arith.constant 0 : index
    %5 = vector.load %arg5[%c0_10, %c0_11] : memref<1x384xf32, #tpu.memory_space<vmem>>, vector<1x384xf32>
    %c0_12 = arith.constant 0 : index
    %c0_13 = arith.constant 0 : index
    %6 = vector.load %arg7[%c0_12, %c0_13] : memref<1x128xf32, #tpu.memory_space<vmem>>, vector<1x128xf32>
    %c0_14 = arith.constant 0 : index
    %c0_15 = arith.constant 0 : index
    %7 = vector.load %arg11[%c0_14, %c0_15] : memref<1x256xf32, #tpu.memory_space<vmem>>, vector<1x256xf32>
    %c0_16 = arith.constant 0 : index
    %c0_17 = arith.constant 0 : index
    %8 = vector.load %arg13[%c0_16, %c0_17] : memref<1x128xf32, #tpu.memory_space<vmem>>, vector<1x128xf32>
    %9 = vector.shape_cast %0 : vector<2x128x128xf32> to vector<256x128xf32>
    %cst = arith.constant dense<0.000000e+00> : vector<256xf32>
    %10 = vector.multi_reduction <add>, %9, %cst [1] : vector<256x128xf32> to vector<256xf32>
    %11 = vector.shape_cast %10 : vector<256xf32> to vector<256x1xf32>
    %cst_18 = arith.constant 1.280000e+02 : f32
    %12 = vector.broadcast %cst_18 : f32 to vector<256x1xf32>
    %13 = arith.divf %11, %12 : vector<256x1xf32>
    %14 = vector.broadcast %13 : vector<256x1xf32> to vector<256x128xf32>
    %15 = arith.subf %9, %14 : vector<256x128xf32>
    %16 = arith.mulf %15, %15 : vector<256x128xf32>
    %cst_19 = arith.constant dense<0.000000e+00> : vector<256xf32>
    %17 = vector.multi_reduction <add>, %16, %cst_19 [1] : vector<256x128xf32> to vector<256xf32>
    %18 = vector.shape_cast %17 : vector<256xf32> to vector<256x1xf32>
    %cst_20 = arith.constant 1.280000e+02 : f32
    %19 = vector.broadcast %cst_20 : f32 to vector<256x1xf32>
    %20 = arith.divf %18, %19 : vector<256x1xf32>
    %cst_21 = arith.constant 9.99999974E-6 : f32
    %21 = vector.broadcast %cst_21 : f32 to vector<256x1xf32>
    %22 = arith.addf %20, %21 : vector<256x1xf32>
    %23 = math.rsqrt %22 : vector<256x1xf32>
    %24 = vector.broadcast %23 : vector<256x1xf32> to vector<256x128xf32>
    %25 = arith.mulf %15, %24 : vector<256x128xf32>
    %26 = vector.broadcast %1 : vector<1x128xf32> to vector<256x128xf32>
    %27 = arith.mulf %25, %26 : vector<256x128xf32>
    %28 = vector.broadcast %2 : vector<1x128xf32> to vector<256x128xf32>
    %29 = arith.addf %27, %28 : vector<256x128xf32>
    %30 = arith.truncf %29 : vector<256x128xf32> to vector<256x128xbf16>
    %c0_22 = arith.constant 0 : index
    %c0_23 = arith.constant 0 : index
    %31 = vector.load %arg4[%c0_22, %c0_23] : memref<128x384xbf16, #tpu.memory_space<vmem>>, vector<128x384xbf16>
    %cst_24 = arith.constant dense<0.000000e+00> : vector<256x384xf32>
    %32 = tpu.matmul %30, %31, %cst_24 {dimension_numbers = #tpu.dot_dimension_numbers<[1], [0], [0], [1], [0, 0, 1, 1], [], []>} : vector<256x128xbf16>, vector<128x384xbf16>, vector<256x384xf32> -> vector<256x384xf32>
    %33 = vector.broadcast %5 : vector<1x384xf32> to vector<256x384xf32>
    %34 = arith.addf %32, %33 : vector<256x384xf32>
    %35 = arith.truncf %34 : vector<256x384xf32> to vector<256x384xbf16>
    %36 = vector.extract_strided_slice %35 {offsets = [0, 0], sizes = [128, 384], strides = [1, 1]} : vector<256x384xbf16> to vector<128x384xbf16>
    %37 = vector.extract_strided_slice %36 {offsets = [0, 0], sizes = [128, 32], strides = [1, 1]} : vector<128x384xbf16> to vector<128x32xbf16>
    %38 = vector.extract_strided_slice %36 {offsets = [0, 32], sizes = [128, 32], strides = [1, 1]} : vector<128x384xbf16> to vector<128x32xbf16>
    %39 = vector.extract_strided_slice %36 {offsets = [0, 64], sizes = [128, 32], strides = [1, 1]} : vector<128x384xbf16> to vector<128x32xbf16>
    %40 = vector.extract_strided_slice %36 {offsets = [0, 96], sizes = [128, 32], strides = [1, 1]} : vector<128x384xbf16> to vector<128x32xbf16>
    %41 = vector.shape_cast %37 : vector<128x32xbf16> to vector<1x128x32xbf16>
    %42 = vector.shape_cast %38 : vector<128x32xbf16> to vector<1x128x32xbf16>
    %43 = vector.shape_cast %39 : vector<128x32xbf16> to vector<1x128x32xbf16>
    %44 = vector.shape_cast %40 : vector<128x32xbf16> to vector<1x128x32xbf16>
    %45 = tpu.concatenate %41, %42, %43, %44 in 0 : vector<1x128x32xbf16>, vector<1x128x32xbf16>, vector<1x128x32xbf16>, vector<1x128x32xbf16> -> vector<4x128x32xbf16>
    %46 = vector.extract_strided_slice %36 {offsets = [0, 128], sizes = [128, 32], strides = [1, 1]} : vector<128x384xbf16> to vector<128x32xbf16>
    %47 = vector.extract_strided_slice %36 {offsets = [0, 160], sizes = [128, 32], strides = [1, 1]} : vector<128x384xbf16> to vector<128x32xbf16>
    %48 = vector.extract_strided_slice %36 {offsets = [0, 192], sizes = [128, 32], strides = [1, 1]} : vector<128x384xbf16> to vector<128x32xbf16>
    %49 = vector.extract_strided_slice %36 {offsets = [0, 224], sizes = [128, 32], strides = [1, 1]} : vector<128x384xbf16> to vector<128x32xbf16>
    %50 = vector.shape_cast %46 : vector<128x32xbf16> to vector<1x128x32xbf16>
    %51 = vector.shape_cast %47 : vector<128x32xbf16> to vector<1x128x32xbf16>
    %52 = vector.shape_cast %48 : vector<128x32xbf16> to vector<1x128x32xbf16>
    %53 = vector.shape_cast %49 : vector<128x32xbf16> to vector<1x128x32xbf16>
    %54 = tpu.concatenate %50, %51, %52, %53 in 0 : vector<1x128x32xbf16>, vector<1x128x32xbf16>, vector<1x128x32xbf16>, vector<1x128x32xbf16> -> vector<4x128x32xbf16>
    %55 = vector.extract_strided_slice %36 {offsets = [0, 256], sizes = [128, 32], strides = [1, 1]} : vector<128x384xbf16> to vector<128x32xbf16>
    %56 = vector.extract_strided_slice %36 {offsets = [0, 288], sizes = [128, 32], strides = [1, 1]} : vector<128x384xbf16> to vector<128x32xbf16>
    %57 = vector.extract_strided_slice %36 {offsets = [0, 320], sizes = [128, 32], strides = [1, 1]} : vector<128x384xbf16> to vector<128x32xbf16>
    %58 = vector.extract_strided_slice %36 {offsets = [0, 352], sizes = [128, 32], strides = [1, 1]} : vector<128x384xbf16> to vector<128x32xbf16>
    %59 = vector.shape_cast %55 : vector<128x32xbf16> to vector<1x128x32xbf16>
    %60 = vector.shape_cast %56 : vector<128x32xbf16> to vector<1x128x32xbf16>
    %61 = vector.shape_cast %57 : vector<128x32xbf16> to vector<1x128x32xbf16>
    %62 = vector.shape_cast %58 : vector<128x32xbf16> to vector<1x128x32xbf16>
    %63 = tpu.concatenate %59, %60, %61, %62 in 0 : vector<1x128x32xbf16>, vector<1x128x32xbf16>, vector<1x128x32xbf16>, vector<1x128x32xbf16> -> vector<4x128x32xbf16>
    "tpu.trace_start"() <{level = 10 : i32, message = "hqd,hkd->hqk"}> : () -> ()
    %cst_25 = arith.constant dense<0.000000e+00> : vector<4x128x128xf32>
    %64 = tpu.matmul %45, %54, %cst_25 {dimension_numbers = #tpu.dot_dimension_numbers<[2], [2], [1], [1], [0, 0, 0, 1, 1, 1], [0], [0]>} : vector<4x128x32xbf16>, vector<4x128x32xbf16>, vector<4x128x128xf32> -> vector<4x128x128xf32>
    "tpu.trace_stop"() : () -> ()
    %cst_26 = arith.constant 0.176776692 : f32
    %65 = vector.broadcast %cst_26 : f32 to vector<4x128x128xf32>
    %66 = arith.mulf %64, %65 : vector<4x128x128xf32>
    %cst_27 = arith.constant dense<0xFF800000> : vector<4x128xf32>
    %67 = vector.multi_reduction <maximumf>, %66, %cst_27 [2] : vector<4x128x128xf32> to vector<4x128xf32>
    %68 = vector.shape_cast %67 : vector<4x128xf32> to vector<4x128x1xf32>
    %69 = vector.broadcast %68 : vector<4x128x1xf32> to vector<4x128x128xf32>
    %70 = arith.subf %66, %69 : vector<4x128x128xf32>
    %71 = math.exp %70 : vector<4x128x128xf32>
    %cst_28 = arith.constant dense<0.000000e+00> : vector<4x128xf32>
    %72 = vector.multi_reduction <add>, %71, %cst_28 [2] : vector<4x128x128xf32> to vector<4x128xf32>
    %73 = vector.shape_cast %72 : vector<4x128xf32> to vector<4x128x1xf32>
    %74 = tpu.reciprocal %73 {approx = true} : vector<4x128x1xf32> -> vector<4x128x1xf32>
    %75 = vector.broadcast %74 : vector<4x128x1xf32> to vector<4x128x128xf32>
    %76 = arith.mulf %71, %75 : vector<4x128x128xf32>
    %77 = arith.truncf %76 : vector<4x128x128xf32> to vector<4x128x128xbf16>
    "tpu.trace_start"() <{level = 10 : i32, message = "hqk,hkd->hqd"}> : () -> ()
    %cst_29 = arith.constant dense<0.000000e+00> : vector<4x128x32xf32>
    %78 = tpu.matmul %77, %63, %cst_29 {dimension_numbers = #tpu.dot_dimension_numbers<[2], [1], [1], [2], [0, 0, 0, 1, 1, 2], [0], [0]>} : vector<4x128x128xbf16>, vector<4x128x32xbf16>, vector<4x128x32xf32> -> vector<4x128x32xf32>
    "tpu.trace_stop"() : () -> ()
    %79 = vector.extract_strided_slice %78 {offsets = [0, 0, 0], sizes = [1, 128, 32], strides = [1, 1, 1]} : vector<4x128x32xf32> to vector<1x128x32xf32>
    %80 = vector.shape_cast %79 : vector<1x128x32xf32> to vector<128x32xf32>
    %81 = arith.truncf %80 : vector<128x32xf32> to vector<128x32xbf16>
    %82 = vector.extract_strided_slice %78 {offsets = [1, 0, 0], sizes = [1, 128, 32], strides = [1, 1, 1]} : vector<4x128x32xf32> to vector<1x128x32xf32>
    %83 = vector.shape_cast %82 : vector<1x128x32xf32> to vector<128x32xf32>
    %84 = arith.truncf %83 : vector<128x32xf32> to vector<128x32xbf16>
    %85 = vector.extract_strided_slice %78 {offsets = [2, 0, 0], sizes = [1, 128, 32], strides = [1, 1, 1]} : vector<4x128x32xf32> to vector<1x128x32xf32>
    %86 = vector.shape_cast %85 : vector<1x128x32xf32> to vector<128x32xf32>
    %87 = arith.truncf %86 : vector<128x32xf32> to vector<128x32xbf16>
    %88 = vector.extract_strided_slice %78 {offsets = [3, 0, 0], sizes = [1, 128, 32], strides = [1, 1, 1]} : vector<4x128x32xf32> to vector<1x128x32xf32>
    %89 = vector.shape_cast %88 : vector<1x128x32xf32> to vector<128x32xf32>
    %90 = arith.truncf %89 : vector<128x32xf32> to vector<128x32xbf16>
    %91 = tpu.concatenate %81, %84, %87, %90 in 1 : vector<128x32xbf16>, vector<128x32xbf16>, vector<128x32xbf16>, vector<128x32xbf16> -> vector<128x128xbf16>
    %92 = vector.extract_strided_slice %35 {offsets = [128, 0], sizes = [128, 384], strides = [1, 1]} : vector<256x384xbf16> to vector<128x384xbf16>
    %93 = vector.extract_strided_slice %92 {offsets = [0, 0], sizes = [128, 32], strides = [1, 1]} : vector<128x384xbf16> to vector<128x32xbf16>
    %94 = vector.extract_strided_slice %92 {offsets = [0, 32], sizes = [128, 32], strides = [1, 1]} : vector<128x384xbf16> to vector<128x32xbf16>
    %95 = vector.extract_strided_slice %92 {offsets = [0, 64], sizes = [128, 32], strides = [1, 1]} : vector<128x384xbf16> to vector<128x32xbf16>
    %96 = vector.extract_strided_slice %92 {offsets = [0, 96], sizes = [128, 32], strides = [1, 1]} : vector<128x384xbf16> to vector<128x32xbf16>
    %97 = vector.shape_cast %93 : vector<128x32xbf16> to vector<1x128x32xbf16>
    %98 = vector.shape_cast %94 : vector<128x32xbf16> to vector<1x128x32xbf16>
    %99 = vector.shape_cast %95 : vector<128x32xbf16> to vector<1x128x32xbf16>
    %100 = vector.shape_cast %96 : vector<128x32xbf16> to vector<1x128x32xbf16>
    %101 = tpu.concatenate %97, %98, %99, %100 in 0 : vector<1x128x32xbf16>, vector<1x128x32xbf16>, vector<1x128x32xbf16>, vector<1x128x32xbf16> -> vector<4x128x32xbf16>
    %102 = vector.extract_strided_slice %92 {offsets = [0, 128], sizes = [128, 32], strides = [1, 1]} : vector<128x384xbf16> to vector<128x32xbf16>
    %103 = vector.extract_strided_slice %92 {offsets = [0, 160], sizes = [128, 32], strides = [1, 1]} : vector<128x384xbf16> to vector<128x32xbf16>
    %104 = vector.extract_strided_slice %92 {offsets = [0, 192], sizes = [128, 32], strides = [1, 1]} : vector<128x384xbf16> to vector<128x32xbf16>
    %105 = vector.extract_strided_slice %92 {offsets = [0, 224], sizes = [128, 32], strides = [1, 1]} : vector<128x384xbf16> to vector<128x32xbf16>
    %106 = vector.shape_cast %102 : vector<128x32xbf16> to vector<1x128x32xbf16>
    %107 = vector.shape_cast %103 : vector<128x32xbf16> to vector<1x128x32xbf16>
    %108 = vector.shape_cast %104 : vector<128x32xbf16> to vector<1x128x32xbf16>
    %109 = vector.shape_cast %105 : vector<128x32xbf16> to vector<1x128x32xbf16>
    %110 = tpu.concatenate %106, %107, %108, %109 in 0 : vector<1x128x32xbf16>, vector<1x128x32xbf16>, vector<1x128x32xbf16>, vector<1x128x32xbf16> -> vector<4x128x32xbf16>
    %111 = vector.extract_strided_slice %92 {offsets = [0, 256], sizes = [128, 32], strides = [1, 1]} : vector<128x384xbf16> to vector<128x32xbf16>
    %112 = vector.extract_strided_slice %92 {offsets = [0, 288], sizes = [128, 32], strides = [1, 1]} : vector<128x384xbf16> to vector<128x32xbf16>
    %113 = vector.extract_strided_slice %92 {offsets = [0, 320], sizes = [128, 32], strides = [1, 1]} : vector<128x384xbf16> to vector<128x32xbf16>
    %114 = vector.extract_strided_slice %92 {offsets = [0, 352], sizes = [128, 32], strides = [1, 1]} : vector<128x384xbf16> to vector<128x32xbf16>
    %115 = vector.shape_cast %111 : vector<128x32xbf16> to vector<1x128x32xbf16>
    %116 = vector.shape_cast %112 : vector<128x32xbf16> to vector<1x128x32xbf16>
    %117 = vector.shape_cast %113 : vector<128x32xbf16> to vector<1x128x32xbf16>
    %118 = vector.shape_cast %114 : vector<128x32xbf16> to vector<1x128x32xbf16>
    %119 = tpu.concatenate %115, %116, %117, %118 in 0 : vector<1x128x32xbf16>, vector<1x128x32xbf16>, vector<1x128x32xbf16>, vector<1x128x32xbf16> -> vector<4x128x32xbf16>
    "tpu.trace_start"() <{level = 10 : i32, message = "hqd,hkd->hqk"}> : () -> ()
    %cst_30 = arith.constant dense<0.000000e+00> : vector<4x128x128xf32>
    %120 = tpu.matmul %101, %110, %cst_30 {dimension_numbers = #tpu.dot_dimension_numbers<[2], [2], [1], [1], [0, 0, 0, 1, 1, 1], [0], [0]>} : vector<4x128x32xbf16>, vector<4x128x32xbf16>, vector<4x128x128xf32> -> vector<4x128x128xf32>
    "tpu.trace_stop"() : () -> ()
    %cst_31 = arith.constant 0.176776692 : f32
    %121 = vector.broadcast %cst_31 : f32 to vector<4x128x128xf32>
    %122 = arith.mulf %120, %121 : vector<4x128x128xf32>
    %cst_32 = arith.constant dense<0xFF800000> : vector<4x128xf32>
    %123 = vector.multi_reduction <maximumf>, %122, %cst_32 [2] : vector<4x128x128xf32> to vector<4x128xf32>
    %124 = vector.shape_cast %123 : vector<4x128xf32> to vector<4x128x1xf32>
    %125 = vector.broadcast %124 : vector<4x128x1xf32> to vector<4x128x128xf32>
    %126 = arith.subf %122, %125 : vector<4x128x128xf32>
    %127 = math.exp %126 : vector<4x128x128xf32>
    %cst_33 = arith.constant dense<0.000000e+00> : vector<4x128xf32>
    %128 = vector.multi_reduction <add>, %127, %cst_33 [2] : vector<4x128x128xf32> to vector<4x128xf32>
    %129 = vector.shape_cast %128 : vector<4x128xf32> to vector<4x128x1xf32>
    %130 = tpu.reciprocal %129 {approx = true} : vector<4x128x1xf32> -> vector<4x128x1xf32>
    %131 = vector.broadcast %130 : vector<4x128x1xf32> to vector<4x128x128xf32>
    %132 = arith.mulf %127, %131 : vector<4x128x128xf32>
    %133 = arith.truncf %132 : vector<4x128x128xf32> to vector<4x128x128xbf16>
    "tpu.trace_start"() <{level = 10 : i32, message = "hqk,hkd->hqd"}> : () -> ()
    %cst_34 = arith.constant dense<0.000000e+00> : vector<4x128x32xf32>
    %134 = tpu.matmul %133, %119, %cst_34 {dimension_numbers = #tpu.dot_dimension_numbers<[2], [1], [1], [2], [0, 0, 0, 1, 1, 2], [0], [0]>} : vector<4x128x128xbf16>, vector<4x128x32xbf16>, vector<4x128x32xf32> -> vector<4x128x32xf32>
    "tpu.trace_stop"() : () -> ()
    %135 = vector.extract_strided_slice %134 {offsets = [0, 0, 0], sizes = [1, 128, 32], strides = [1, 1, 1]} : vector<4x128x32xf32> to vector<1x128x32xf32>
    %136 = vector.shape_cast %135 : vector<1x128x32xf32> to vector<128x32xf32>
    %137 = arith.truncf %136 : vector<128x32xf32> to vector<128x32xbf16>
    %138 = vector.extract_strided_slice %134 {offsets = [1, 0, 0], sizes = [1, 128, 32], strides = [1, 1, 1]} : vector<4x128x32xf32> to vector<1x128x32xf32>
    %139 = vector.shape_cast %138 : vector<1x128x32xf32> to vector<128x32xf32>
    %140 = arith.truncf %139 : vector<128x32xf32> to vector<128x32xbf16>
    %141 = vector.extract_strided_slice %134 {offsets = [2, 0, 0], sizes = [1, 128, 32], strides = [1, 1, 1]} : vector<4x128x32xf32> to vector<1x128x32xf32>
    %142 = vector.shape_cast %141 : vector<1x128x32xf32> to vector<128x32xf32>
    %143 = arith.truncf %142 : vector<128x32xf32> to vector<128x32xbf16>
    %144 = vector.extract_strided_slice %134 {offsets = [3, 0, 0], sizes = [1, 128, 32], strides = [1, 1, 1]} : vector<4x128x32xf32> to vector<1x128x32xf32>
    %145 = vector.shape_cast %144 : vector<1x128x32xf32> to vector<128x32xf32>
    %146 = arith.truncf %145 : vector<128x32xf32> to vector<128x32xbf16>
    %147 = tpu.concatenate %137, %140, %143, %146 in 1 : vector<128x32xbf16>, vector<128x32xbf16>, vector<128x32xbf16>, vector<128x32xbf16> -> vector<128x128xbf16>
    %148 = tpu.concatenate %91, %147 in 0 : vector<128x128xbf16>, vector<128x128xbf16> -> vector<256x128xbf16>
    %c0_35 = arith.constant 0 : index
    %c0_36 = arith.constant 0 : index
    %149 = vector.load %arg6[%c0_35, %c0_36] : memref<128x128xbf16, #tpu.memory_space<vmem>>, vector<128x128xbf16>
    %cst_37 = arith.constant dense<0.000000e+00> : vector<256x128xf32>
    %150 = tpu.matmul %148, %149, %cst_37 {dimension_numbers = #tpu.dot_dimension_numbers<[1], [0], [0], [1], [0, 0, 1, 1], [], []>} : vector<256x128xbf16>, vector<128x128xbf16>, vector<256x128xf32> -> vector<256x128xf32>
    %151 = vector.broadcast %6 : vector<1x128xf32> to vector<256x128xf32>
    %152 = arith.addf %150, %151 : vector<256x128xf32>
    %153 = arith.addf %9, %152 : vector<256x128xf32>
    %cst_38 = arith.constant dense<0.000000e+00> : vector<256xf32>
    %154 = vector.multi_reduction <add>, %153, %cst_38 [1] : vector<256x128xf32> to vector<256xf32>
    %155 = vector.shape_cast %154 : vector<256xf32> to vector<256x1xf32>
    %cst_39 = arith.constant 1.280000e+02 : f32
    %156 = vector.broadcast %cst_39 : f32 to vector<256x1xf32>
    %157 = arith.divf %155, %156 : vector<256x1xf32>
    %158 = vector.broadcast %157 : vector<256x1xf32> to vector<256x128xf32>
    %159 = arith.subf %153, %158 : vector<256x128xf32>
    %160 = arith.mulf %159, %159 : vector<256x128xf32>
    %cst_40 = arith.constant dense<0.000000e+00> : vector<256xf32>
    %161 = vector.multi_reduction <add>, %160, %cst_40 [1] : vector<256x128xf32> to vector<256xf32>
    %162 = vector.shape_cast %161 : vector<256xf32> to vector<256x1xf32>
    %cst_41 = arith.constant 1.280000e+02 : f32
    %163 = vector.broadcast %cst_41 : f32 to vector<256x1xf32>
    %164 = arith.divf %162, %163 : vector<256x1xf32>
    %cst_42 = arith.constant 9.99999974E-6 : f32
    %165 = vector.broadcast %cst_42 : f32 to vector<256x1xf32>
    %166 = arith.addf %164, %165 : vector<256x1xf32>
    %167 = math.rsqrt %166 : vector<256x1xf32>
    %168 = vector.broadcast %167 : vector<256x1xf32> to vector<256x128xf32>
    %169 = arith.mulf %159, %168 : vector<256x128xf32>
    %170 = vector.broadcast %3 : vector<1x128xf32> to vector<256x128xf32>
    %171 = arith.mulf %169, %170 : vector<256x128xf32>
    %172 = vector.broadcast %4 : vector<1x128xf32> to vector<256x128xf32>
    %173 = arith.addf %171, %172 : vector<256x128xf32>
    %174 = arith.truncf %173 : vector<256x128xf32> to vector<256x128xbf16>
    %c0_43 = arith.constant 0 : index
    %c0_44 = arith.constant 0 : index
    %175 = vector.load %arg10[%c0_43, %c0_44] : memref<128x256xbf16, #tpu.memory_space<vmem>>, vector<128x256xbf16>
    %cst_45 = arith.constant dense<0.000000e+00> : vector<256x256xf32>
    %176 = tpu.matmul %174, %175, %cst_45 {dimension_numbers = #tpu.dot_dimension_numbers<[1], [0], [0], [1], [0, 0, 1, 1], [], []>} : vector<256x128xbf16>, vector<128x256xbf16>, vector<256x256xf32> -> vector<256x256xf32>
    %177 = vector.broadcast %7 : vector<1x256xf32> to vector<256x256xf32>
    %178 = arith.addf %176, %177 : vector<256x256xf32>
    %cst_46 = arith.constant 0.000000e+00 : f32
    %179 = vector.broadcast %cst_46 : f32 to vector<256x256xf32>
    %180 = arith.maximumf %178, %179 : vector<256x256xf32>
    %181 = arith.truncf %180 : vector<256x256xf32> to vector<256x256xbf16>
    %c0_47 = arith.constant 0 : index
    %c0_48 = arith.constant 0 : index
    %182 = vector.load %arg12[%c0_47, %c0_48] : memref<256x128xbf16, #tpu.memory_space<vmem>>, vector<256x128xbf16>
    %cst_49 = arith.constant dense<0.000000e+00> : vector<256x128xf32>
    %183 = tpu.matmul %181, %182, %cst_49 {dimension_numbers = #tpu.dot_dimension_numbers<[1], [0], [0], [1], [0, 0, 1, 1], [], []>} : vector<256x256xbf16>, vector<256x128xbf16>, vector<256x128xf32> -> vector<256x128xf32>
    %184 = vector.broadcast %8 : vector<1x128xf32> to vector<256x128xf32>
    %185 = arith.addf %183, %184 : vector<256x128xf32>
    %186 = arith.addf %153, %185 : vector<256x128xf32>
    %187 = vector.shape_cast %186 : vector<256x128xf32> to vector<2x128x128xf32>
    %c0_50 = arith.constant 0 : index
    %c0_51 = arith.constant 0 : index
    %c0_52 = arith.constant 0 : index
    %188 = vector.load %arg14[%c0_50, %c0_51, %c0_52] : memref<2x128x128xf32, #tpu.memory_space<vmem>>, vector<2x128x128xf32>
    tpu.vector_store %arg14[%c0_50, %c0_51, %c0_52], %187 {strides = array<i32>} : memref<2x128x128xf32, #tpu.memory_space<vmem>>, vector<2x128x128xf32>,
    return
  }
  func.func @transform_0(%arg0: i32) -> (i32, i32, i32) {
    %c0_i32 = arith.constant 0 : i32
    %c0_i32_0 = arith.constant 0 : i32
    %c0_i32_1 = arith.constant 0 : i32
    return %arg0, %c0_i32, %c0_i32_0 : i32, i32, i32
  }
  func.func @transform_1(%arg0: i32) -> (i32, i32) {
    %c0_i32 = arith.constant 0 : i32
    %c0_i32_0 = arith.constant 0 : i32
    %c0_i32_1 = arith.constant 0 : i32
    return %c0_i32, %c0_i32_0 : i32, i32
  }
  func.func @transform_2(%arg0: i32) -> (i32, i32) {
    %c0_i32 = arith.constant 0 : i32
    %c0_i32_0 = arith.constant 0 : i32
    %c0_i32_1 = arith.constant 0 : i32
    return %c0_i32, %c0_i32_0 : i32, i32
  }
  func.func @transform_3(%arg0: i32) -> (i32, i32) {
    %c0_i32 = arith.constant 0 : i32
    %c0_i32_0 = arith.constant 0 : i32
    %c0_i32_1 = arith.constant 0 : i32
    return %c0_i32, %c0_i32_0 : i32, i32
  }
  func.func @transform_4(%arg0: i32) -> (i32, i32) {
    %c0_i32 = arith.constant 0 : i32
    %c0_i32_0 = arith.constant 0 : i32
    %c0_i32_1 = arith.constant 0 : i32
    return %c0_i32, %c0_i32_0 : i32, i32
  }
  func.func @transform_5(%arg0: i32) -> (i32, i32) {
    %c0_i32 = arith.constant 0 : i32
    %c0_i32_0 = arith.constant 0 : i32
    %c0_i32_1 = arith.constant 0 : i32
    return %c0_i32, %c0_i32_0 : i32, i32
  }
  func.func @transform_6(%arg0: i32) -> (i32, i32) {
    %c0_i32 = arith.constant 0 : i32
    %c0_i32_0 = arith.constant 0 : i32
    %c0_i32_1 = arith.constant 0 : i32
    return %c0_i32, %c0_i32_0 : i32, i32
  }
  func.func @transform_7(%arg0: i32) -> (i32, i32) {
    %c0_i32 = arith.constant 0 : i32
    %c0_i32_0 = arith.constant 0 : i32
    %c0_i32_1 = arith.constant 0 : i32
    return %c0_i32, %c0_i32_0 : i32, i32
  }
  func.func @transform_8(%arg0: i32) -> (i32, i32) {
    %c0_i32 = arith.constant 0 : i32
    %c0_i32_0 = arith.constant 0 : i32
    %c0_i32_1 = arith.constant 0 : i32
    return %c0_i32, %c0_i32_0 : i32, i32
  }
  func.func @transform_9(%arg0: i32) -> (i32, i32) {
    %c0_i32 = arith.constant 0 : i32
    %c0_i32_0 = arith.constant 0 : i32
    %c0_i32_1 = arith.constant 0 : i32
    return %c0_i32, %c0_i32_0 : i32, i32
  }
  func.func @transform_10(%arg0: i32) -> (i32, i32) {
    %c0_i32 = arith.constant 0 : i32
    %c0_i32_0 = arith.constant 0 : i32
    %c0_i32_1 = arith.constant 0 : i32
    return %c0_i32, %c0_i32_0 : i32, i32
  }
  func.func @transform_11(%arg0: i32) -> (i32, i32) {
    %c0_i32 = arith.constant 0 : i32
    %c0_i32_0 = arith.constant 0 : i32
    %c0_i32_1 = arith.constant 0 : i32
    return %c0_i32, %c0_i32_0 : i32, i32
  }
  func.func @transform_12(%arg0: i32) -> (i32, i32) {
    %c0_i32 = arith.constant 0 : i32
    %c0_i32_0 = arith.constant 0 : i32
    %c0_i32_1 = arith.constant 0 : i32
    return %c0_i32, %c0_i32_0 : i32, i32
  }
  func.func @transform_13(%arg0: i32) -> (i32, i32, i32) {
    %c0_i32 = arith.constant 0 : i32
    %c0_i32_0 = arith.constant 0 : i32
    %c0_i32_1 = arith.constant 0 : i32
    return %arg0, %c0_i32, %c0_i32_0 : i32, i32, i32
  }
}

</mosaic_0001>

<llo_original>
// kernel: decoder_layer.1
$region0: #{decoder_layer.1}
  #allocation0 [shape = 'u32[]', space=smem, size = 0x4, offset = 0x4, fixed_abs, tag = 'smem constant byte address 0x4 - core index']
  #allocation1 [shape = 'u32[144,128]{1,0:T(1,128)}', space=vmem, size = 0x12000, scoped, tag = 'internal scratch']
  %s0 = inlined_call_operand.hbm [shape: f32[4,128,128], index: 0, kind: input, shape index: {}]
  %s1 = inlined_call_operand.vmem [shape: f32[1,128], index: 1, kind: input, shape index: {}]
  %s2 = inlined_call_operand.vmem [shape: f32[1,128], index: 2, kind: input, shape index: {}]
  %s3 = inlined_call_operand.hbm [shape: bf16[128,384], index: 3, kind: input, shape index: {}]
  %s4 = inlined_call_operand.vmem [shape: f32[1,384], index: 4, kind: input, shape index: {}]
  %s5 = inlined_call_operand.hbm [shape: bf16[128,128], index: 5, kind: input, shape index: {}]
  %s6 = inlined_call_operand.vmem [shape: f32[1,128], index: 6, kind: input, shape index: {}]
  %s7 = inlined_call_operand.vmem [shape: f32[1,128], index: 7, kind: input, shape index: {}]
  %s8 = inlined_call_operand.vmem [shape: f32[1,128], index: 8, kind: input, shape index: {}]
  %s9 = inlined_call_operand.hbm [shape: bf16[128,256], index: 9, kind: input, shape index: {}]
  %s10 = inlined_call_operand.vmem [shape: f32[1,256], index: 10, kind: input, shape index: {}]
  %s11 = inlined_call_operand.hbm [shape: bf16[256,128], index: 11, kind: input, shape index: {}]
  %s12 = inlined_call_operand.hbm [shape: f32[1,128], index: 12, kind: input, shape index: {}]
  %s13 = inlined_call_operand.hbm [shape: f32[4,128,128], index: 13, kind: output, shape index: {}]
  %s14 = sld [smem:[#allocation0]]
  $region109: #{decoder_layer.1} parent=0
    _
  %s16 = ssub.s32 1, %s14
  %s17 = scalar_select 0, %s16, %s14
  $region1: #{decoder_layer.1} parent=0
    #allocation2 [shape = 'u8[262144]{0}', space=vmem, size = 0x40000, scoped, tag = 'input window, operand 0']
    #allocation3 [shape = 's32[2]{0}', space=sflag, size = 0x8, scoped, tag = 'scoped memory for decoder_layer.1']
    #allocation4 [shape = 's32[2]{0}', space=sflag, size = 0x8, scoped, tag = 'scoped memory for decoder_layer.1']
    #allocation5 [shape = 'u8[98304]{0}', space=vmem, size = 0x18000, scoped, tag = 'input window, operand 3, single buffered']
    #allocation6 [shape = 's32[1]{0}', space=sflag, size = 0x4, scoped, tag = 'scoped memory for decoder_layer.1']
    #allocation7 [shape = 'u8[32768]{0}', space=vmem, size = 0x8000, scoped, tag = 'input window, operand 5, single buffered']
    #allocation8 [shape = 'u8[65536]{0}', space=vmem, size = 0x10000, scoped, tag = 'input window, operand 9, single buffered']
    #allocation9 [shape = 's32[1]{0}', space=sflag, size = 0x4, scoped, tag = 'scoped memory for decoder_layer.1']
    #allocation10 [shape = 'u8[65536]{0}', space=vmem, size = 0x10000, scoped, tag = 'input window, operand 11, single buffered']
    #allocation11 [shape = 'u8[512]{0}', space=vmem, size = 0x400, scoped, tag = 'input window, operand 12, single buffered']
    #allocation12 [shape = 's32[1]{0}', space=sflag, size = 0x4, scoped, tag = 'scoped memory for decoder_layer.1']
    #allocation13 [shape = 'u8[262144]{0}', space=vmem, size = 0x40000, scoped, tag = 'output window, operand 0']
    %18 = vsyncpa [#allocation3], 0
    %s19 = scalar_lea.sflag [#allocation3], 1
    %20 = vsyncpa %s19, 0
    %21 = vsyncpa [#allocation6], 0
    %22 = vsyncpa [#allocation9], 0
    %23 = vsyncpa [#allocation12], 0
    %24 = vsyncpa [#allocation4], 0
    %s25 = scalar_lea.sflag [#allocation4], 1
    %26 = vsyncpa %s25, 0
    loop: start=0, step=1, limit=4
    $region2: #{decoder_layer.1} parent=1 // loop_pre_header
      _
    $region3: #{decoder_layer.1} parent=1 // loop_header
      %s28 = sphi 0, %s32
      %p29 = scmp.ge.s32.totalorder %s28, 4
      %s38 = sphi 0, %s40
      %s41 = sphi 0, %s38
      %s42 = sphi 0, %s41
      %s58 = sphi 0, %s42
      %s62 = sphi 0, %s62
      %s64 = sphi 0, %s62
      %s65 = sphi 0, %s64
      %s79 = sphi 0, %s65
      %s83 = sphi 0, %s83
      %s85 = sphi 0, %s83
      %s86 = sphi 0, %s85
      %s100 = sphi 0, %s86
      %s104 = sphi 0, %s104
      %s106 = sphi 0, %s104
      %s107 = sphi 0, %s106
      %s121 = sphi 0, %s107
      %s125 = sphi 0, %s125
      %s127 = sphi 0, %s125
      %s128 = sphi 0, %s127
      %s142 = sphi 0, %s128
      %s146 = sphi 0, %s146
      %s148 = sphi 0, %s146
      %s149 = sphi 0, %s148
      %s163 = sphi 0, %s149
      %s167 = sphi 0, %s167
      %s169 = sphi 0, %s167
      %s170 = sphi 0, %s169
      %s184 = sphi 0, %s170
      %s188 = sphi 0, %s188
      %s190 = sphi 0, %s188
      %s191 = sphi 0, %s190
      %s205 = sphi 0, %s191
      %s209 = sphi 0, %s209
      %s211 = sphi 0, %s209
      %s212 = sphi 0, %s211
      %s226 = sphi 0, %s212
      %s230 = sphi 0, %s230
      %s232 = sphi 0, %s230
      %s233 = sphi 0, %s232
      %s247 = sphi 0, %s233
      %s251 = sphi 0, %s251
      %s253 = sphi 0, %s251
      %s254 = sphi 0, %s253
      %s268 = sphi 0, %s254
      %s272 = sphi 0, %s272
      %s274 = sphi 0, %s272
      %s275 = sphi 0, %s274
      %s289 = sphi 0, %s275
      %s293 = sphi 0, %s293
      %s295 = sphi 0, %s293
      %s296 = sphi 0, %s295
      %s310 = sphi 0, %s296
      %s316 = sphi 0, %s318
      %s319 = sphi 0, %s316
      %s320 = sphi 0, %s319
      %s336 = sphi 0, %s320
    $region4: #{decoder_layer.1} parent=1 // loop_header_branch
      %31 = sbr.rel (%p29) target = $region8
    $region5: #{decoder_layer.1} parent=1 // loop_body
      %s33 = ssub.s32 %s28, 1
      %s34 = ssub.s32 %s28, 2
      %s35 = sadd.s32 %s28, 1
      %s36 = ssub.s32 %s28, %s35
      %p37 = scmp.eq.s32.totalorder %s36, 0
      %s39 = sadd.s32 %s38, 1
      %s40 = scalar_select %p37, %s38, %s39
      %p43 = pneg %p37
      %p44 = scmp.eq.s32.totalorder %s28, 1
      %p45 = por %p43, %p44
      %p46 = scmp.ne.s32.totalorder %s38, %s41
      %p47 = scmp.eq.s32.totalorder %s28, 0
      %p48 = por %p46, %p47
      %p49 = scmp.ne.s32.totalorder %s38, %s41
      %p50 = scmp.eq.s32.totalorder %s33, 1
      %p51 = por %p49, %p50
      %p52 = scmp.ne.s32.totalorder %s41, %s42
      %p53 = scmp.eq.s32.totalorder %s33, 0
      %p54 = por %p52, %p53
      %p55 = scmp.ne.s32.totalorder %s41, %s42
      %p56 = scmp.eq.s32.totalorder %s34, 1
      %p57 = por %p55, %p56
      %p59 = scmp.ne.s32.totalorder %s42, %s58
      %p60 = scmp.eq.s32.totalorder %s34, 0
      %p61 = por %p59, %p60
      %s63 = sadd.s32 %s62, 1
      %p66 = scmp.eq.s32.totalorder %s28, 1
      %p67 = scmp.ne.s32.totalorder %s62, %s64
      %p68 = scmp.eq.s32.totalorder %s28, 0
      %p69 = por %p67, %p68
      %p70 = scmp.ne.s32.totalorder %s62, %s64
      %p71 = scmp.eq.s32.totalorder %s33, 1
      %p72 = por %p70, %p71
      %p73 = scmp.ne.s32.totalorder %s64, %s65
      %p74 = scmp.eq.s32.totalorder %s33, 0
      %p75 = por %p73, %p74
      %p76 = scmp.ne.s32.totalorder %s64, %s65
      %p77 = scmp.eq.s32.totalorder %s34, 1
      %p78 = por %p76, %p77
      %p80 = scmp.ne.s32.totalorder %s65, %s79
      %p81 = scmp.eq.s32.totalorder %s34, 0
      %p82 = por %p80, %p81
      %s84 = sadd.s32 %s83, 1
      %p87 = scmp.eq.s32.totalorder %s28, 1
      %p88 = scmp.ne.s32.totalorder %s83, %s85
      %p89 = scmp.eq.s32.totalorder %s28, 0
      %p90 = por %p88, %p89
      %p91 = scmp.ne.s32.totalorder %s83, %s85
      %p92 = scmp.eq.s32.totalorder %s33, 1
      %p93 = por %p91, %p92
      %p94 = scmp.ne.s32.totalorder %s85, %s86
      %p95 = scmp.eq.s32.totalorder %s33, 0
      %p96 = por %p94, %p95
      %p97 = scmp.ne.s32.totalorder %s85, %s86
      %p98 = scmp.eq.s32.totalorder %s34, 1
      %p99 = por %p97, %p98
      %p101 = scmp.ne.s32.totalorder %s86, %s100
      %p102 = scmp.eq.s32.totalorder %s34, 0
      %p103 = por %p101, %p102
      %s105 = sadd.s32 %s104, 1
      %p108 = scmp.eq.s32.totalorder %s28, 1
      %p109 = scmp.ne.s32.totalorder %s104, %s106
      %p110 = scmp.eq.s32.totalorder %s28, 0
      %p111 = por %p109, %p110
      %p112 = scmp.ne.s32.totalorder %s104, %s106
      %p113 = scmp.eq.s32.totalorder %s33, 1
      %p114 = por %p112, %p113
      %p115 = scmp.ne.s32.totalorder %s106, %s107
      %p116 = scmp.eq.s32.totalorder %s33, 0
      %p117 = por %p115, %p116
      %p118 = scmp.ne.s32.totalorder %s106, %s107
      %p119 = scmp.eq.s32.totalorder %s34, 1
      %p120 = por %p118, %p119
      %p122 = scmp.ne.s32.totalorder %s107, %s121
      %p123 = scmp.eq.s32.totalorder %s34, 0
      %p124 = por %p122, %p123
      %s126 = sadd.s32 %s125, 1
      %p129 = scmp.eq.s32.totalorder %s28, 1
      %p130 = scmp.ne.s32.totalorder %s125, %s127
      %p131 = scmp.eq.s32.totalorder %s28, 0
      %p132 = por %p130, %p131
      %p133 = scmp.ne.s32.totalorder %s125, %s127
      %p134 = scmp.eq.s32.totalorder %s33, 1
      %p135 = por %p133, %p134
      %p136 = scmp.ne.s32.totalorder %s127, %s128
      %p137 = scmp.eq.s32.totalorder %s33, 0
      %p138 = por %p136, %p137
      %p139 = scmp.ne.s32.totalorder %s127, %s128
      %p140 = scmp.eq.s32.totalorder %s34, 1
      %p141 = por %p139, %p140
      %p143 = scmp.ne.s32.totalorder %s128, %s142
      %p144 = scmp.eq.s32.totalorder %s34, 0
      %p145 = por %p143, %p144
      %s147 = sadd.s32 %s146, 1
      %p150 = scmp.eq.s32.totalorder %s28, 1
      %p151 = scmp.ne.s32.totalorder %s146, %s148
      %p152 = scmp.eq.s32.totalorder %s28, 0
      %p153 = por %p151, %p152
      %p154 = scmp.ne.s32.totalorder %s146, %s148
      %p155 = scmp.eq.s32.totalorder %s33, 1
      %p156 = por %p154, %p155
      %p157 = scmp.ne.s32.totalorder %s148, %s149
      %p158 = scmp.eq.s32.totalorder %s33, 0
      %p159 = por %p157, %p158
      %p160 = scmp.ne.s32.totalorder %s148, %s149
      %p161 = scmp.eq.s32.totalorder %s34, 1
      %p162 = por %p160, %p161
      %p164 = scmp.ne.s32.totalorder %s149, %s163
      %p165 = scmp.eq.s32.totalorder %s34, 0
      %p166 = por %p164, %p165
      %s168 = sadd.s32 %s167, 1
      %p171 = scmp.eq.s32.totalorder %s28, 1
      %p172 = scmp.ne.s32.totalorder %s167, %s169
      %p173 = scmp.eq.s32.totalorder %s28, 0
      %p174 = por %p172, %p173
      %p175 = scmp.ne.s32.totalorder %s167, %s169
      %p176 = scmp.eq.s32.totalorder %s33, 1
      %p177 = por %p175, %p176
      %p178 = scmp.ne.s32.totalorder %s169, %s170
      %p179 = scmp.eq.s32.totalorder %s33, 0
      %p180 = por %p178, %p179
      %p181 = scmp.ne.s32.totalorder %s169, %s170
      %p182 = scmp.eq.s32.totalorder %s34, 1
      %p183 = por %p181, %p182
      %p185 = scmp.ne.s32.totalorder %s170, %s184
      %p186 = scmp.eq.s32.totalorder %s34, 0
      %p187 = por %p185, %p186
      %s189 = sadd.s32 %s188, 1
      %p192 = scmp.eq.s32.totalorder %s28, 1
      %p193 = scmp.ne.s32.totalorder %s188, %s190
      %p194 = scmp.eq.s32.totalorder %s28, 0
      %p195 = por %p193, %p194
      %p196 = scmp.ne.s32.totalorder %s188, %s190
      %p197 = scmp.eq.s32.totalorder %s33, 1
      %p198 = por %p196, %p197
      %p199 = scmp.ne.s32.totalorder %s190, %s191
      %p200 = scmp.eq.s32.totalorder %s33, 0
      %p201 = por %p199, %p200
      %p202 = scmp.ne.s32.totalorder %s190, %s191
      %p203 = scmp.eq.s32.totalorder %s34, 1
      %p204 = por %p202, %p203
      %p206 = scmp.ne.s32.totalorder %s191, %s205
      %p207 = scmp.eq.s32.totalorder %s34, 0
      %p208 = por %p206, %p207
      %s210 = sadd.s32 %s209, 1
      %p213 = scmp.eq.s32.totalorder %s28, 1
      %p214 = scmp.ne.s32.totalorder %s209, %s211
      %p215 = scmp.eq.s32.totalorder %s28, 0
      %p216 = por %p214, %p215
      %p217 = scmp.ne.s32.totalorder %s209, %s211
      %p218 = scmp.eq.s32.totalorder %s33, 1
      %p219 = por %p217, %p218
      %p220 = scmp.ne.s32.totalorder %s211, %s212
      %p221 = scmp.eq.s32.totalorder %s33, 0
      %p222 = por %p220, %p221
      %p223 = scmp.ne.s32.totalorder %s211, %s212
      %p224 = scmp.eq.s32.totalorder %s34, 1
      %p225 = por %p223, %p224
      %p227 = scmp.ne.s32.totalorder %s212, %s226
      %p228 = scmp.eq.s32.totalorder %s34, 0
      %p229 = por %p227, %p228
      %s231 = sadd.s32 %s230, 1
      %p234 = scmp.eq.s32.totalorder %s28, 1
      %p235 = scmp.ne.s32.totalorder %s230, %s232
      %p236 = scmp.eq.s32.totalorder %s28, 0
      %p237 = por %p235, %p236
      %p238 = scmp.ne.s32.totalorder %s230, %s232
      %p239 = scmp.eq.s32.totalorder %s33, 1
      %p240 = por %p238, %p239
      %p241 = scmp.ne.s32.totalorder %s232, %s233
      %p242 = scmp.eq.s32.totalorder %s33, 0
      %p243 = por %p241, %p242
      %p244 = scmp.ne.s32.totalorder %s232, %s233
      %p245 = scmp.eq.s32.totalorder %s34, 1
      %p246 = por %p244, %p245
      %p248 = scmp.ne.s32.totalorder %s233, %s247
      %p249 = scmp.eq.s32.totalorder %s34, 0
      %p250 = por %p248, %p249
      %s252 = sadd.s32 %s251, 1
      %p255 = scmp.eq.s32.totalorder %s28, 1
      %p256 = scmp.ne.s32.totalorder %s251, %s253
      %p257 = scmp.eq.s32.totalorder %s28, 0
      %p258 = por %p256, %p257
      %p259 = scmp.ne.s32.totalorder %s251, %s253
      %p260 = scmp.eq.s32.totalorder %s33, 1
      %p261 = por %p259, %p260
      %p262 = scmp.ne.s32.totalorder %s253, %s254
      %p263 = scmp.eq.s32.totalorder %s33, 0
      %p264 = por %p262, %p263
      %p265 = scmp.ne.s32.totalorder %s253, %s254
      %p266 = scmp.eq.s32.totalorder %s34, 1
      %p267 = por %p265, %p266
      %p269 = scmp.ne.s32.totalorder %s254, %s268
      %p270 = scmp.eq.s32.totalorder %s34, 0
      %p271 = por %p269, %p270
      %s273 = sadd.s32 %s272, 1
      %p276 = scmp.eq.s32.totalorder %s28, 1
      %p277 = scmp.ne.s32.totalorder %s272, %s274
      %p278 = scmp.eq.s32.totalorder %s28, 0
      %p279 = por %p277, %p278
      %p280 = scmp.ne.s32.totalorder %s272, %s274
      %p281 = scmp.eq.s32.totalorder %s33, 1
      %p282 = por %p280, %p281
      %p283 = scmp.ne.s32.totalorder %s274, %s275
      %p284 = scmp.eq.s32.totalorder %s33, 0
      %p285 = por %p283, %p284
      %p286 = scmp.ne.s32.totalorder %s274, %s275
      %p287 = scmp.eq.s32.totalorder %s34, 1
      %p288 = por %p286, %p287
      %p290 = scmp.ne.s32.totalorder %s275, %s289
      %p291 = scmp.eq.s32.totalorder %s34, 0
      %p292 = por %p290, %p291
      %s294 = sadd.s32 %s293, 1
      %p297 = scmp.eq.s32.totalorder %s28, 1
      %p298 = scmp.ne.s32.totalorder %s293, %s295
      %p299 = scmp.eq.s32.totalorder %s28, 0
      %p300 = por %p298, %p299
      %p301 = scmp.ne.s32.totalorder %s293, %s295
      %p302 = scmp.eq.s32.totalorder %s33, 1
      %p303 = por %p301, %p302
      %p304 = scmp.ne.s32.totalorder %s295, %s296
      %p305 = scmp.eq.s32.totalorder %s33, 0
      %p306 = por %p304, %p305
      %p307 = scmp.ne.s32.totalorder %s295, %s296
      %p308 = scmp.eq.s32.totalorder %s34, 1
      %p309 = por %p307, %p308
      %p311 = scmp.ne.s32.totalorder %s296, %s310
      %p312 = scmp.eq.s32.totalorder %s34, 0
      %p313 = por %p311, %p312
      %s314 = ssub.s32 %s28, %s35
      %p315 = scmp.eq.s32.totalorder %s314, 0
      %s317 = sadd.s32 %s316, 1
      %s318 = scalar_select %p315, %s316, %s317
      %p321 = pneg %p315
      %p322 = scmp.eq.s32.totalorder %s28, 1
      %p323 = por %p321, %p322
      %p324 = scmp.ne.s32.totalorder %s316, %s319
      %p325 = scmp.eq.s32.totalorder %s28, 0
      %p326 = por %p324, %p325
      %p327 = scmp.ne.s32.totalorder %s316, %s319
      %p328 = scmp.eq.s32.totalorder %s33, 1
      %p329 = por %p327, %p328
      %p330 = scmp.ne.s32.totalorder %s319, %s320
      %p331 = scmp.eq.s32.totalorder %s33, 0
      %p332 = por %p330, %p331
      %p333 = scmp.ne.s32.totalorder %s319, %s320
      %p334 = scmp.eq.s32.totalorder %s34, 1
      %p335 = por %p333, %p334
      %p337 = scmp.ne.s32.totalorder %s320, %s336
      %p338 = scmp.eq.s32.totalorder %s34, 0
      %p339 = por %p337, %p338
      %p340 = scmp.le.s32.totalorder 1, %s28
      %p341 = scmp.lt.s32.totalorder %s28, 3
      %p342 = pnand %p340, %p341
      %p343 = pneg %p342
      // Predicated region
      $region9: #{decoder_layer.1} parent=5 // pred_check
        _
      $region10: #{decoder_layer.1} parent=5 // pred_check_branch
        %345 = sbr.rel (%p342) target = $region12
      $region11: #{decoder_layer.1} parent=5 // pred_region
        %s346 = ssub.s32 %s28, 1
        // Predicated region
        $region13: #{decoder_layer.1} parent=11 // pred_check
          %p347 = pneg %p75
        $region14: #{decoder_layer.1} parent=11 // pred_check_branch
          %349 = sbr.rel (%p347) target = $region16
        $region15: #{decoder_layer.1} parent=11 // pred_region
          _
        $region16: #{decoder_layer.1} parent=11 // pred_fallthru
          _
        // Predicated region
        $region17: #{decoder_layer.1} parent=11 // pred_check
          %p350 = pneg %p96
        $region18: #{decoder_layer.1} parent=11 // pred_check_branch
          %352 = sbr.rel (%p350) target = $region20
        $region19: #{decoder_layer.1} parent=11 // pred_region
          _
        $region20: #{decoder_layer.1} parent=11 // pred_fallthru
          _
        // Predicated region
        $region21: #{decoder_layer.1} parent=11 // pred_check
          %p353 = pneg %p117
        $region22: #{decoder_layer.1} parent=11 // pred_check_branch
          %355 = sbr.rel (%p353) target = $region24
        $region23: #{decoder_layer.1} parent=11 // pred_region
          %s357 = ssub.s32 3072, 3072
          %358 = vsyncadd [#allocation6], %s357
          %s359 = sshll.u32 [#allocation5], 4
          %s360 = int_to_ptr.vmem [resolvable:$true] %s359
          %365 = dma.hbm_to_vmem [thread:$0]  %s3, 3072, %s360, [#allocation6], 192, 192, 12
        $region24: #{decoder_layer.1} parent=11 // pred_fallthru
          _
        // Predicated region
        $region25: #{decoder_layer.1} parent=11 // pred_check
          %p366 = pneg %p138
        $region26: #{decoder_layer.1} parent=11 // pred_check_branch
          %368 = sbr.rel (%p366) target = $region28
        $region27: #{decoder_layer.1} parent=11 // pred_region
          _
        $region28: #{decoder_layer.1} parent=11 // pred_fallthru
          _
        // Predicated region
        $region29: #{decoder_layer.1} parent=11 // pred_check
          %p369 = pneg %p159
        $region30: #{decoder_layer.1} parent=11 // pred_check_branch
          %371 = sbr.rel (%p369) target = $region32
        $region31: #{decoder_layer.1} parent=11 // pred_region
          %s373 = ssub.s32 1024, 1024
          %374 = vsyncadd [#allocation6], %s373
          %s375 = sshll.u32 [#allocation7], 4
          %s376 = int_to_ptr.vmem [resolvable:$true] %s375
          %381 = dma.hbm_to_vmem [thread:$0]  %s5, 1024, %s376, [#allocation6], 64, 64, 4
        $region32: #{decoder_layer.1} parent=11 // pred_fallthru
          _
        // Predicated region
        $region33: #{decoder_layer.1} parent=11 // pred_check
          %p382 = pneg %p180
        $region34: #{decoder_layer.1} parent=11 // pred_check_branch
          %384 = sbr.rel (%p382) target = $region36
        $region35: #{decoder_layer.1} parent=11 // pred_region
          _
        $region36: #{decoder_layer.1} parent=11 // pred_fallthru
          _
        // Predicated region
        $region37: #{decoder_layer.1} parent=11 // pred_check
          %p385 = pneg %p201
        $region38: #{decoder_layer.1} parent=11 // pred_check_branch
          %387 = sbr.rel (%p385) target = $region40
        $region39: #{decoder_layer.1} parent=11 // pred_region
          _
        $region40: #{decoder_layer.1} parent=11 // pred_fallthru
          _
        // Predicated region
        $region41: #{decoder_layer.1} parent=11 // pred_check
          %p388 = pneg %p222
        $region42: #{decoder_layer.1} parent=11 // pred_check_branch
          %390 = sbr.rel (%p388) target = $region44
        $region43: #{decoder_layer.1} parent=11 // pred_region
          _
        $region44: #{decoder_layer.1} parent=11 // pred_fallthru
          _
        // Predicated region
        $region45: #{decoder_layer.1} parent=11 // pred_check
          %p391 = pneg %p243
        $region46: #{decoder_layer.1} parent=11 // pred_check_branch
          %393 = sbr.rel (%p391) target = $region48
        $region47: #{decoder_layer.1} parent=11 // pred_region
          %s395 = ssub.s32 2048, 2048
          %396 = vsyncadd [#allocation9], %s395
          %s397 = sshll.u32 [#allocation8], 4
          %s398 = int_to_ptr.vmem [resolvable:$true] %s397
          %403 = dma.hbm_to_vmem [thread:$0]  %s9, 2048, %s398, [#allocation9], 128, 128, 8
        $region48: #{decoder_layer.1} parent=11 // pred_fallthru
          _
        // Predicated region
        $region49: #{decoder_layer.1} parent=11 // pred_check
          %p404 = pneg %p264
        $region50: #{decoder_layer.1} parent=11 // pred_check_branch
          %406 = sbr.rel (%p404) target = $region52
        $region51: #{decoder_layer.1} parent=11 // pred_region
          _
        $region52: #{decoder_layer.1} parent=11 // pred_fallthru
          _
        // Predicated region
        $region53: #{decoder_layer.1} parent=11 // pred_check
          %p407 = pneg %p285
        $region54: #{decoder_layer.1} parent=11 // pred_check_branch
          %409 = sbr.rel (%p407) target = $region56
        $region55: #{decoder_layer.1} parent=11 // pred_region
          %s411 = ssub.s32 2048, 2048
          %412 = vsyncadd [#allocation9], %s411
          %s413 = sshll.u32 [#allocation10], 4
          %s414 = int_to_ptr.vmem [resolvable:$true] %s413
          %419 = dma.hbm_to_vmem [thread:$0]  %s11, 2048, %s414, [#allocation9], 64, 64, 4
        $region56: #{decoder_layer.1} parent=11 // pred_fallthru
          _
        // Predicated region
        $region57: #{decoder_layer.1} parent=11 // pred_check
          %p420 = pneg %p306
        $region58: #{decoder_layer.1} parent=11 // pred_check_branch
          %422 = sbr.rel (%p420) target = $region60
        $region59: #{decoder_layer.1} parent=11 // pred_region
          %s424 = ssub.s32 16, 16
          %425 = vsyncadd [#allocation12], %s424
          %s427 = sshll.u32 [#allocation11], 4
          %s428 = int_to_ptr.vmem [resolvable:$true] %s427
          %430 = dma.hbm_to_vmem [thread:$0]  %s12, 16, %s428, [#allocation12]
        $region60: #{decoder_layer.1} parent=11 // pred_fallthru
          _
      $region12: #{decoder_layer.1} parent=5 // pred_fallthru
        _
      %p431 = scmp.lt.s32.totalorder %s28, 2
      // Predicated region
      $region61: #{decoder_layer.1} parent=5 // pred_check
        %p432 = pneg %p431
      $region62: #{decoder_layer.1} parent=5 // pred_check_branch
        %434 = sbr.rel (%p432) target = $region64
      $region63: #{decoder_layer.1} parent=5 // pred_region
        // Predicated region
        $region65: #{decoder_layer.1} parent=63 // pred_check
          %p435 = pneg %p48
        $region66: #{decoder_layer.1} parent=63 // pred_check_branch
          %437 = sbr.rel (%p435) target = $region68
        $region67: #{decoder_layer.1} parent=63 // pred_region
          %s438 = sand.u32 %s38, 1
          %s439 = scalar_lea.sflag [#allocation3], %s438
          %s440 = sand.u32 %s38, 1
          %s441 = smul.addr %s440, 256
          %s442 = scalar_lea.vmem [#allocation2], %s441
          %s443 = smul.u32 2, %s28
          %s445 = ssub.s32 4096, 4096
          %446 = vsyncadd %s439, %s445
          %s447 = smul.addr %s443, 16
          %s448 = smul.addr %s447, 128
          %s449 = scalar_lea.hbm %s0, %s448
          %s450 = sshll.u32 %s442, 4
          %s451 = int_to_ptr.vmem [resolvable:$true] %s450
          %456 = dma.hbm_to_vmem [thread:$0]  %s449, 4096, %s451, %s439, 128, 128, 8
        $region68: #{decoder_layer.1} parent=63 // pred_fallthru
          _
      $region64: #{decoder_layer.1} parent=5 // pred_fallthru
        _
      %p457 = scmp.le.s32.totalorder 1, %s28
      %p458 = scmp.lt.s32.totalorder %s28, 3
      %p459 = pnand %p457, %p458
      %p460 = pneg %p459
      // Predicated region
      $region69: #{decoder_layer.1} parent=5 // pred_check
        _
      $region70: #{decoder_layer.1} parent=5 // pred_check_branch
        %462 = sbr.rel (%p459) target = $region72
      $region71: #{decoder_layer.1} parent=5 // pred_region
        %s463 = ssub.s32 %s28, 1
        %s464 = sand.u32 %s41, 1
        %s465 = scalar_lea.sflag [#allocation3], %s464
        %s466 = sand.u32 %s41, 1
        %s467 = smul.addr %s466, 256
        %s468 = scalar_lea.vmem [#allocation2], %s467
        // Predicated region
        $region73: #{decoder_layer.1} parent=71 // pred_check
          %p469 = pneg %p54
        $region74: #{decoder_layer.1} parent=71 // pred_check_branch
          %471 = sbr.rel (%p469) target = $region76
        $region75: #{decoder_layer.1} parent=71 // pred_region
          %472 = dma.done %s465, 4096
        $region76: #{decoder_layer.1} parent=71 // pred_fallthru
          _
        // Predicated region
        $region77: #{decoder_layer.1} parent=71 // pred_check
          %p473 = pneg %p117
        $region78: #{decoder_layer.1} parent=71 // pred_check_branch
          %475 = sbr.rel (%p473) target = $region80
        $region79: #{decoder_layer.1} parent=71 // pred_region
          %476 = dma.done [#allocation6], 3072
        $region80: #{decoder_layer.1} parent=71 // pred_fallthru
          _
        // Predicated region
        $region81: #{decoder_layer.1} parent=71 // pred_check
          %p477 = pneg %p159
        $region82: #{decoder_layer.1} parent=71 // pred_check_branch
          %479 = sbr.rel (%p477) target = $region84
        $region83: #{decoder_layer.1} parent=71 // pred_region
          %480 = dma.done [#allocation6], 1024
        $region84: #{decoder_layer.1} parent=71 // pred_fallthru
          _
        // Predicated region
        $region85: #{decoder_layer.1} parent=71 // pred_check
          %p481 = pneg %p243
        $region86: #{decoder_layer.1} parent=71 // pred_check_branch
          %483 = sbr.rel (%p481) target = $region88
        $region87: #{decoder_layer.1} parent=71 // pred_region
          %484 = dma.done [#allocation9], 2048
        $region88: #{decoder_layer.1} parent=71 // pred_fallthru
          _
        // Predicated region
        $region89: #{decoder_layer.1} parent=71 // pred_check
          %p485 = pneg %p285
        $region90: #{decoder_layer.1} parent=71 // pred_check_branch
          %487 = sbr.rel (%p485) target = $region92
        $region91: #{decoder_layer.1} parent=71 // pred_region
          %488 = dma.done [#allocation9], 2048
        $region92: #{decoder_layer.1} parent=71 // pred_fallthru
          _
        // Predicated region
        $region93: #{decoder_layer.1} parent=71 // pred_check
          %p489 = pneg %p306
        $region94: #{decoder_layer.1} parent=71 // pred_check_branch
          %491 = sbr.rel (%p489) target = $region96
        $region95: #{decoder_layer.1} parent=71 // pred_region
          %492 = dma.done [#allocation12], 16
        $region96: #{decoder_layer.1} parent=71 // pred_fallthru
          _
        %s493 = sand.u32 %s41, 1
        %s494 = scalar_lea.sflag [#allocation3], %s493
        %s495 = sand.u32 %s41, 1
        %s496 = smul.addr %s495, 256
        %s497 = scalar_lea.vmem [#allocation2], %s496
        %p498 = pneg %p54
        %p499 = pneg %p51
        %p500 = pneg %p75
        %p501 = pneg %p72
        %p502 = pneg %p96
        %p503 = pneg %p93
        %p504 = pneg %p117
        %p505 = pneg %p114
        %p506 = pneg %p138
        %p507 = pneg %p135
        %p508 = pneg %p159
        %p509 = pneg %p156
        %p510 = pneg %p180
        %p511 = pneg %p177
        %p512 = pneg %p201
        %p513 = pneg %p198
        %p514 = pneg %p222
        %p515 = pneg %p219
        %p516 = pneg %p243
        %p517 = pneg %p240
        %p518 = pneg %p264
        %p519 = pneg %p261
        %p520 = pneg %p285
        %p521 = pneg %p282
        %p522 = pneg %p306
        %p523 = pneg %p303
        %p524 = pneg %p332
        %p525 = pneg %p329
        %s526 = sand.u32 %s319, 1
        %s527 = scalar_lea.sflag [#allocation4], %s526
        %s528 = sand.u32 %s319, 1
        %s529 = smul.addr %s528, 256
        %s530 = scalar_lea.vmem [#allocation13], %s529
        %s531 = smul.u32 2, %s33
        %s532 = smul.u32 2, %s33
        %v534 = vld [vmem:[%s468] sm:$0xff]
        %v535 = vld [vmem:[%s468 + $0x8] sm:$0xff]
        %v536 = vld [vmem:[%s468 + $0x10] sm:$0xff]
        %v537 = vld [vmem:[%s468 + $0x18] sm:$0xff]
        %v538 = vld [vmem:[%s468 + $0x20] sm:$0xff]
        %v539 = vld [vmem:[%s468 + $0x28] sm:$0xff]
        %v540 = vld [vmem:[%s468 + $0x30] sm:$0xff]
        %v541 = vld [vmem:[%s468 + $0x38] sm:$0xff]
        %v542 = vld [vmem:[%s468 + $0x40] sm:$0xff]
        %v543 = vld [vmem:[%s468 + $0x48] sm:$0xff]
        %v544 = vld [vmem:[%s468 + $0x50] sm:$0xff]
        %v545 = vld [vmem:[%s468 + $0x58] sm:$0xff]
        %v546 = vld [vmem:[%s468 + $0x60] sm:$0xff]
        %v547 = vld [vmem:[%s468 + $0x68] sm:$0xff]
        %v548 = vld [vmem:[%s468 + $0x70] sm:$0xff]
        %v549 = vld [vmem:[%s468 + $0x78] sm:$0xff]
        %v550 = vld [vmem:[%s468 + $0x80] sm:$0xff]
        %v551 = vld [vmem:[%s468 + $0x88] sm:$0xff]
        %v552 = vld [vmem:[%s468 + $0x90] sm:$0xff]
        %v553 = vld [vmem:[%s468 + $0x98] sm:$0xff]
        %v554 = vld [vmem:[%s468 + $0xa0] sm:$0xff]
        %v555 = vld [vmem:[%s468 + $0xa8] sm:$0xff]
        %v556 = vld [vmem:[%s468 + $0xb0] sm:$0xff]
        %v557 = vld [vmem:[%s468 + $0xb8] sm:$0xff]
        %v558 = vld [vmem:[%s468 + $0xc0] sm:$0xff]
        %v559 = vld [vmem:[%s468 + $0xc8] sm:$0xff]
        %v560 = vld [vmem:[%s468 + $0xd0] sm:$0xff]
        %v561 = vld [vmem:[%s468 + $0xd8] sm:$0xff]
        %v562 = vld [vmem:[%s468 + $0xe0] sm:$0xff]
        %v563 = vld [vmem:[%s468 + $0xe8] sm:$0xff]
        %v564 = vld [vmem:[%s468 + $0xf0] sm:$0xff]
        %v565 = vld [vmem:[%s468 + $0xf8] sm:$0xff]
        %v566 = vld [vmem:[%s1] sm:$0x1]
        %v567 = vld [vmem:[%s2] sm:$0x1]
        %v568 = vld [vmem:[%s7] sm:$0x1]
        %v569 = vld [vmem:[%s8] sm:$0x1]
        %v570 = vld [vmem:[%s4] sm:$0x7]
        %v571 = vld [vmem:[%s6] sm:$0x1]
        %v572 = vld [vmem:[%s10] sm:$0x3]
        %v573 = vld [vmem:[#allocation11] sm:$0x1]
        %574 = vadd.xlane.f32.xlu0 %v534
        %v575 = vpop.xlane.xlu0 %574
        %576 = vadd.xlane.f32.xlu0 %v535
        %v577 = vpop.xlane.xlu0 %576
        %578 = vadd.xlane.f32.xlu0 %v536
        %v579 = vpop.xlane.xlu0 %578
        %580 = vadd.xlane.f32.xlu0 %v537
        %v581 = vpop.xlane.xlu0 %580
        %582 = vadd.xlane.f32.xlu0 %v538
        %v583 = vpop.xlane.xlu0 %582
        %584 = vadd.xlane.f32.xlu0 %v539
        %v585 = vpop.xlane.xlu0 %584
        %586 = vadd.xlane.f32.xlu0 %v540
        %v587 = vpop.xlane.xlu0 %586
        %588 = vadd.xlane.f32.xlu0 %v541
        %v589 = vpop.xlane.xlu0 %588
        %590 = vadd.xlane.f32.xlu0 %v542
        %v591 = vpop.xlane.xlu0 %590
        %592 = vadd.xlane.f32.xlu0 %v543
        %v593 = vpop.xlane.xlu0 %592
        %594 = vadd.xlane.f32.xlu0 %v544
        %v595 = vpop.xlane.xlu0 %594
        %596 = vadd.xlane.f32.xlu0 %v545
        %v597 = vpop.xlane.xlu0 %596
        %598 = vadd.xlane.f32.xlu0 %v546
        %v599 = vpop.xlane.xlu0 %598
        %600 = vadd.xlane.f32.xlu0 %v547
        %v601 = vpop.xlane.xlu0 %600
        %602 = vadd.xlane.f32.xlu0 %v548
        %v603 = vpop.xlane.xlu0 %602
        %604 = vadd.xlane.f32.xlu0 %v549
        %v605 = vpop.xlane.xlu0 %604
        %606 = vadd.xlane.f32.xlu0 %v550
        %v607 = vpop.xlane.xlu0 %606
        %608 = vadd.xlane.f32.xlu0 %v551
        %v609 = vpop.xlane.xlu0 %608
        %610 = vadd.xlane.f32.xlu0 %v552
        %v611 = vpop.xlane.xlu0 %610
        %612 = vadd.xlane.f32.xlu0 %v553
        %v613 = vpop.xlane.xlu0 %612
        %614 = vadd.xlane.f32.xlu0 %v554
        %v615 = vpop.xlane.xlu0 %614
        %616 = vadd.xlane.f32.xlu0 %v555
        %v617 = vpop.xlane.xlu0 %616
        %618 = vadd.xlane.f32.xlu0 %v556
        %v619 = vpop.xlane.xlu0 %618
        %620 = vadd.xlane.f32.xlu0 %v557
        %v621 = vpop.xlane.xlu0 %620
        %622 = vadd.xlane.f32.xlu0 %v558
        %v623 = vpop.xlane.xlu0 %622
        %624 = vadd.xlane.f32.xlu0 %v559
        %v625 = vpop.xlane.xlu0 %624
        %626 = vadd.xlane.f32.xlu0 %v560
        %v627 = vpop.xlane.xlu0 %626
        %628 = vadd.xlane.f32.xlu0 %v561
        %v629 = vpop.xlane.xlu0 %628
        %630 = vadd.xlane.f32.xlu0 %v562
        %v631 = vpop.xlane.xlu0 %630
        %632 = vadd.xlane.f32.xlu0 %v563
        %v633 = vpop.xlane.xlu0 %632
        %634 = vadd.xlane.f32.xlu0 %v564
        %v635 = vpop.xlane.xlu0 %634
        %636 = vadd.xlane.f32.xlu0 %v565
        %v637 = vpop.xlane.xlu0 %636
        %v638 = vrcp.pop 128.0
        %v639 = vmul.f32 %v575, %v638
        %v640 = vmul.f32 %v577, %v638
        %v641 = vmul.f32 %v579, %v638
        %v642 = vmul.f32 %v581, %v638
        %v643 = vmul.f32 %v583, %v638
        %v644 = vmul.f32 %v585, %v638
        %v645 = vmul.f32 %v587, %v638
        %v646 = vmul.f32 %v589, %v638
        %v647 = vmul.f32 %v591, %v638
        %v648 = vmul.f32 %v593, %v638
        %v649 = vmul.f32 %v595, %v638
        %v650 = vmul.f32 %v597, %v638
        %v651 = vmul.f32 %v599, %v638
        %v652 = vmul.f32 %v601, %v638
        %v653 = vmul.f32 %v603, %v638
        %v654 = vmul.f32 %v605, %v638
        %v655 = vmul.f32 %v607, %v638
        %v656 = vmul.f32 %v609, %v638
        %v657 = vmul.f32 %v611, %v638
        %v658 = vmul.f32 %v613, %v638
        %v659 = vmul.f32 %v615, %v638
        %v660 = vmul.f32 %v617, %v638
        %v661 = vmul.f32 %v619, %v638
        %v662 = vmul.f32 %v621, %v638
        %v663 = vmul.f32 %v623, %v638
        %v664 = vmul.f32 %v625, %v638
        %v665 = vmul.f32 %v627, %v638
        %v666 = vmul.f32 %v629, %v638
        %v667 = vmul.f32 %v631, %v638
        %v668 = vmul.f32 %v633, %v638
        %v669 = vmul.f32 %v635, %v638
        %v670 = vmul.f32 %v637, %v638
        %v671 = vsub.f32 %v534, %v639
        %v672 = vsub.f32 %v535, %v640
        %v673 = vsub.f32 %v536, %v641
        %v674 = vsub.f32 %v537, %v642
        %v675 = vsub.f32 %v538, %v643
        %v676 = vsub.f32 %v539, %v644
        %v677 = vsub.f32 %v540, %v645
        %v678 = vsub.f32 %v541, %v646
        %v679 = vsub.f32 %v542, %v647
        %v680 = vsub.f32 %v543, %v648
        %v681 = vsub.f32 %v544, %v649
        %v682 = vsub.f32 %v545, %v650
        %v683 = vsub.f32 %v546, %v651
        %v684 = vsub.f32 %v547, %v652
        %v685 = vsub.f32 %v548, %v653
        %v686 = vsub.f32 %v549, %v654
        %v687 = vsub.f32 %v550, %v655
        %v688 = vsub.f32 %v551, %v656
        %v689 = vsub.f32 %v552, %v657
        %v690 = vsub.f32 %v553, %v658
        %v691 = vsub.f32 %v554, %v659
        %v692 = vsub.f32 %v555, %v660
        %v693 = vsub.f32 %v556, %v661
        %v694 = vsub.f32 %v557, %v662
        %v695 = vsub.f32 %v558, %v663
        %v696 = vsub.f32 %v559, %v664
        %v697 = vsub.f32 %v560, %v665
        %v698 = vsub.f32 %v561, %v666
        %v699 = vsub.f32 %v562, %v667
        %v700 = vsub.f32 %v563, %v668
        %v701 = vsub.f32 %v564, %v669
        %v702 = vsub.f32 %v565, %v670
        %v703 = vmul.f32 %v671, %v671
        %v704 = vmul.f32 %v672, %v672
        %v705 = vmul.f32 %v673, %v673
        %v706 = vmul.f32 %v674, %v674
        %v707 = vmul.f32 %v675, %v675
        %v708 = vmul.f32 %v676, %v676
        %v709 = vmul.f32 %v677, %v677
        %v710 = vmul.f32 %v678, %v678
        %v711 = vmul.f32 %v679, %v679
        %v712 = vmul.f32 %v680, %v680
        %v713 = vmul.f32 %v681, %v681
        %v714 = vmul.f32 %v682, %v682
        %v715 = vmul.f32 %v683, %v683
        %v716 = vmul.f32 %v684, %v684
        %v717 = vmul.f32 %v685, %v685
        %v718 = vmul.f32 %v686, %v686
        %v719 = vmul.f32 %v687, %v687
        %v720 = vmul.f32 %v688, %v688
        %v721 = vmul.f32 %v689, %v689
        %v722 = vmul.f32 %v690, %v690
        %v723 = vmul.f32 %v691, %v691
        %v724 = vmul.f32 %v692, %v692
        %v725 = vmul.f32 %v693, %v693
        %v726 = vmul.f32 %v694, %v694
        %v727 = vmul.f32 %v695, %v695
        %v728 = vmul.f32 %v696, %v696
        %v729 = vmul.f32 %v697, %v697
        %v730 = vmul.f32 %v698, %v698
        %v731 = vmul.f32 %v699, %v699
        %v732 = vmul.f32 %v700, %v700
        %v733 = vmul.f32 %v701, %v701
        %v734 = vmul.f32 %v702, %v702
        %735 = vadd.xlane.f32.xlu0 %v703
        %v736 = vpop.xlane.xlu0 %735
        %737 = vadd.xlane.f32.xlu0 %v704
        %v738 = vpop.xlane.xlu0 %737
        %739 = vadd.xlane.f32.xlu0 %v705
        %v740 = vpop.xlane.xlu0 %739
        %741 = vadd.xlane.f32.xlu0 %v706
        %v742 = vpop.xlane.xlu0 %741
        %743 = vadd.xlane.f32.xlu0 %v707
        %v744 = vpop.xlane.xlu0 %743
        %745 = vadd.xlane.f32.xlu0 %v708
        %v746 = vpop.xlane.xlu0 %745
        %747 = vadd.xlane.f32.xlu0 %v709
        %v748 = vpop.xlane.xlu0 %747
        %749 = vadd.xlane.f32.xlu0 %v710
        %v750 = vpop.xlane.xlu0 %749
        %751 = vadd.xlane.f32.xlu0 %v711
        %v752 = vpop.xlane.xlu0 %751
        %753 = vadd.xlane.f32.xlu0 %v712
        %v754 = vpop.xlane.xlu0 %753
        %755 = vadd.xlane.f32.xlu0 %v713
        %v756 = vpop.xlane.xlu0 %755
        %757 = vadd.xlane.f32.xlu0 %v714
        %v758 = vpop.xlane.xlu0 %757
        %759 = vadd.xlane.f32.xlu0 %v715
        %v760 = vpop.xlane.xlu0 %759
        %761 = vadd.xlane.f32.xlu0 %v716
        %v762 = vpop.xlane.xlu0 %761
        %763 = vadd.xlane.f32.xlu0 %v717
        %v764 = vpop.xlane.xlu0 %763
        %765 = vadd.xlane.f32.xlu0 %v718
        %v766 = vpop.xlane.xlu0 %765
        %767 = vadd.xlane.f32.xlu0 %v719
        %v768 = vpop.xlane.xlu0 %767
        %769 = vadd.xlane.f32.xlu0 %v720
        %v770 = vpop.xlane.xlu0 %769
        %771 = vadd.xlane.f32.xlu0 %v721
        %v772 = vpop.xlane.xlu0 %771
        %773 = vadd.xlane.f32.xlu0 %v722
        %v774 = vpop.xlane.xlu0 %773
        %775 = vadd.xlane.f32.xlu0 %v723
        %v776 = vpop.xlane.xlu0 %775
        %777 = vadd.xlane.f32.xlu0 %v724
        %v778 = vpop.xlane.xlu0 %777
        %779 = vadd.xlane.f32.xlu0 %v725
        %v780 = vpop.xlane.xlu0 %779
        %781 = vadd.xlane.f32.xlu0 %v726
        %v782 = vpop.xlane.xlu0 %781
        %783 = vadd.xlane.f32.xlu0 %v727
        %v784 = vpop.xlane.xlu0 %783
        %785 = vadd.xlane.f32.xlu0 %v728
        %v786 = vpop.xlane.xlu0 %785
        %787 = vadd.xlane.f32.xlu0 %v729
        %v788 = vpop.xlane.xlu0 %787
        %789 = vadd.xlane.f32.xlu0 %v730
        %v790 = vpop.xlane.xlu0 %789
        %791 = vadd.xlane.f32.xlu0 %v731
        %v792 = vpop.xlane.xlu0 %791
        %793 = vadd.xlane.f32.xlu0 %v732
        %v794 = vpop.xlane.xlu0 %793
        %795 = vadd.xlane.f32.xlu0 %v733
        %v796 = vpop.xlane.xlu0 %795
        %797 = vadd.xlane.f32.xlu0 %v734
        %v798 = vpop.xlane.xlu0 %797
        %v799 = vmul.f32 %v736, %v638
        %v800 = vmul.f32 %v738, %v638
        %v801 = vmul.f32 %v740, %v638
        %v802 = vmul.f32 %v742, %v638
        %v803 = vmul.f32 %v744, %v638
        %v804 = vmul.f32 %v746, %v638
        %v805 = vmul.f32 %v748, %v638
        %v806 = vmul.f32 %v750, %v638
        %v807 = vmul.f32 %v752, %v638
        %v808 = vmul.f32 %v754, %v638
        %v809 = vmul.f32 %v756, %v638
        %v810 = vmul.f32 %v758, %v638
        %v811 = vmul.f32 %v760, %v638
        %v812 = vmul.f32 %v762, %v638
        %v813 = vmul.f32 %v764, %v638
        %v814 = vmul.f32 %v766, %v638
        %v815 = vmul.f32 %v768, %v638
        %v816 = vmul.f32 %v770, %v638
        %v817 = vmul.f32 %v772, %v638
        %v818 = vmul.f32 %v774, %v638
        %v819 = vmul.f32 %v776, %v638
        %v820 = vmul.f32 %v778, %v638
        %v821 = vmul.f32 %v780, %v638
        %v822 = vmul.f32 %v782, %v638
        %v823 = vmul.f32 %v784, %v638
        %v824 = vmul.f32 %v786, %v638
        %v825 = vmul.f32 %v788, %v638
        %v826 = vmul.f32 %v790, %v638
        %v827 = vmul.f32 %v792, %v638
        %v828 = vmul.f32 %v794, %v638
        %v829 = vmul.f32 %v796, %v638
        %v830 = vmul.f32 %v798, %v638
        %v831 = vadd.f32 %v799, 1e-05
        %v832 = vadd.f32 %v800, 1e-05
        %v833 = vadd.f32 %v801, 1e-05
        %v834 = vadd.f32 %v802, 1e-05
        %v835 = vadd.f32 %v803, 1e-05
        %v836 = vadd.f32 %v804, 1e-05
        %v837 = vadd.f32 %v805, 1e-05
        %v838 = vadd.f32 %v806, 1e-05
        %v839 = vadd.f32 %v807, 1e-05
        %v840 = vadd.f32 %v808, 1e-05
        %v841 = vadd.f32 %v809, 1e-05
        %v842 = vadd.f32 %v810, 1e-05
        %v843 = vadd.f32 %v811, 1e-05
        %v844 = vadd.f32 %v812, 1e-05
        %v845 = vadd.f32 %v813, 1e-05
        %v846 = vadd.f32 %v814, 1e-05
        %v847 = vadd.f32 %v815, 1e-05
        %v848 = vadd.f32 %v816, 1e-05
        %v849 = vadd.f32 %v817, 1e-05
        %v850 = vadd.f32 %v818, 1e-05
        %v851 = vadd.f32 %v819, 1e-05
        %v852 = vadd.f32 %v820, 1e-05
        %v853 = vadd.f32 %v821, 1e-05
        %v854 = vadd.f32 %v822, 1e-05
        %v855 = vadd.f32 %v823, 1e-05
        %v856 = vadd.f32 %v824, 1e-05
        %v857 = vadd.f32 %v825, 1e-05
        %v858 = vadd.f32 %v826, 1e-05
        %v859 = vadd.f32 %v827, 1e-05
        %v860 = vadd.f32 %v828, 1e-05
        %v861 = vadd.f32 %v829, 1e-05
        %v862 = vadd.f32 %v830, 1e-05
        %v863 = vrsqrt.pop %v831
        %v864 = vrsqrt.pop %v832
        %v865 = vrsqrt.pop %v833
        %v866 = vrsqrt.pop %v834
        %v867 = vrsqrt.pop %v835
        %v868 = vrsqrt.pop %v836
        %v869 = vrsqrt.pop %v837
        %v870 = vrsqrt.pop %v838
        %v871 = vrsqrt.pop %v839
        %v872 = vrsqrt.pop %v840
        %v873 = vrsqrt.pop %v841
        %v874 = vrsqrt.pop %v842
        %v875 = vrsqrt.pop %v843
        %v876 = vrsqrt.pop %v844
        %v877 = vrsqrt.pop %v845
        %v878 = vrsqrt.pop %v846
        %v879 = vrsqrt.pop %v847
        %v880 = vrsqrt.pop %v848
        %v881 = vrsqrt.pop %v849
        %v882 = vrsqrt.pop %v850
        %v883 = vrsqrt.pop %v851
        %v884 = vrsqrt.pop %v852
        %v885 = vrsqrt.pop %v853
        %v886 = vrsqrt.pop %v854
        %v887 = vrsqrt.pop %v855
        %v888 = vrsqrt.pop %v856
        %v889 = vrsqrt.pop %v857
        %v890 = vrsqrt.pop %v858
        %v891 = vrsqrt.pop %v859
        %v892 = vrsqrt.pop %v860
        %v893 = vrsqrt.pop %v861
        %v894 = vrsqrt.pop %v862
        %v895 = vmul.f32 %v671, %v863
        %v896 = vmul.f32 %v672, %v864
        %v897 = vmul.f32 %v673, %v865
        %v898 = vmul.f32 %v674, %v866
        %v899 = vmul.f32 %v675, %v867
        %v900 = vmul.f32 %v676, %v868
        %v901 = vmul.f32 %v677, %v869
        %v902 = vmul.f32 %v678, %v870
        %v903 = vmul.f32 %v679, %v871
        %v904 = vmul.f32 %v680, %v872
        %v905 = vmul.f32 %v681, %v873
        %v906 = vmul.f32 %v682, %v874
        %v907 = vmul.f32 %v683, %v875
        %v908 = vmul.f32 %v684, %v876
        %v909 = vmul.f32 %v685, %v877
        %v910 = vmul.f32 %v686, %v878
        %v911 = vmul.f32 %v687, %v879
        %v912 = vmul.f32 %v688, %v880
        %v913 = vmul.f32 %v689, %v881
        %v914 = vmul.f32 %v690, %v882
        %v915 = vmul.f32 %v691, %v883
        %v916 = vmul.f32 %v692, %v884
        %v917 = vmul.f32 %v693, %v885
        %v918 = vmul.f32 %v694, %v886
        %v919 = vmul.f32 %v695, %v887
        %v920 = vmul.f32 %v696, %v888
        %v921 = vmul.f32 %v697, %v889
        %v922 = vmul.f32 %v698, %v890
        %v923 = vmul.f32 %v699, %v891
        %v924 = vmul.f32 %v700, %v892
        %v925 = vmul.f32 %v701, %v893
        %v926 = vmul.f32 %v702, %v894
        %v928 = vlaneseq
        %v929 = vshrl.u32 %v928, 7
        %v930 = vsub.s32 0, %v929
        %v931 = vrot.slane %v566, %v930
        %v933 = vmul.f32 %v895, %v931
        %v934 = vmul.f32 %v896, %v931
        %v935 = vmul.f32 %v897, %v931
        %v936 = vmul.f32 %v898, %v931
        %v937 = vmul.f32 %v899, %v931
        %v938 = vmul.f32 %v900, %v931
        %v939 = vmul.f32 %v901, %v931
        %v940 = vmul.f32 %v902, %v931
        %v941 = vmul.f32 %v903, %v931
        %v942 = vmul.f32 %v904, %v931
        %v943 = vmul.f32 %v905, %v931
        %v944 = vmul.f32 %v906, %v931
        %v945 = vmul.f32 %v907, %v931
        %v946 = vmul.f32 %v908, %v931
        %v947 = vmul.f32 %v909, %v931
        %v948 = vmul.f32 %v910, %v931
        %v949 = vmul.f32 %v911, %v931
        %v950 = vmul.f32 %v912, %v931
        %v951 = vmul.f32 %v913, %v931
        %v952 = vmul.f32 %v914, %v931
        %v953 = vmul.f32 %v915, %v931
        %v954 = vmul.f32 %v916, %v931
        %v955 = vmul.f32 %v917, %v931
        %v956 = vmul.f32 %v918, %v931
        %v957 = vmul.f32 %v919, %v931
        %v958 = vmul.f32 %v920, %v931
        %v959 = vmul.f32 %v921, %v931
        %v960 = vmul.f32 %v922, %v931
        %v961 = vmul.f32 %v923, %v931
        %v962 = vmul.f32 %v924, %v931
        %v963 = vmul.f32 %v925, %v931
        %v964 = vmul.f32 %v926, %v931
        %v966 = vlaneseq
        %v967 = vshrl.u32 %v966, 7
        %v968 = vsub.s32 0, %v967
        %v969 = vrot.slane %v567, %v968
        %v971 = vadd.f32 %v933, %v969
        %v972 = vadd.f32 %v934, %v969
        %v973 = vadd.f32 %v935, %v969
        %v974 = vadd.f32 %v936, %v969
        %v975 = vadd.f32 %v937, %v969
        %v976 = vadd.f32 %v938, %v969
        %v977 = vadd.f32 %v939, %v969
        %v978 = vadd.f32 %v940, %v969
        %v979 = vadd.f32 %v941, %v969
        %v980 = vadd.f32 %v942, %v969
        %v981 = vadd.f32 %v943, %v969
        %v982 = vadd.f32 %v944, %v969
        %v983 = vadd.f32 %v945, %v969
        %v984 = vadd.f32 %v946, %v969
        %v985 = vadd.f32 %v947, %v969
        %v986 = vadd.f32 %v948, %v969
        %v987 = vadd.f32 %v949, %v969
        %v988 = vadd.f32 %v950, %v969
        %v989 = vadd.f32 %v951, %v969
        %v990 = vadd.f32 %v952, %v969
        %v991 = vadd.f32 %v953, %v969
        %v992 = vadd.f32 %v954, %v969
        %v993 = vadd.f32 %v955, %v969
        %v994 = vadd.f32 %v956, %v969
        %v995 = vadd.f32 %v957, %v969
        %v996 = vadd.f32 %v958, %v969
        %v997 = vadd.f32 %v959, %v969
        %v998 = vadd.f32 %v960, %v969
        %v999 = vadd.f32 %v961, %v969
        %v1000 = vadd.f32 %v962, %v969
        %v1001 = vadd.f32 %v963, %v969
        %v1002 = vadd.f32 %v964, %v969
        %v1003 = vpack.c.bf16 %v972, %v971
        %v1004 = vpack.c.bf16 %v974, %v973
        %v1005 = vpack.c.bf16 %v976, %v975
        %v1006 = vpack.c.bf16 %v978, %v977
        %v1007 = vpack.c.bf16 %v980, %v979
        %v1008 = vpack.c.bf16 %v982, %v981
        %v1009 = vpack.c.bf16 %v984, %v983
        %v1010 = vpack.c.bf16 %v986, %v985
        %v1011 = vpack.c.bf16 %v988, %v987
        %v1012 = vpack.c.bf16 %v990, %v989
        %v1013 = vpack.c.bf16 %v992, %v991
        %v1014 = vpack.c.bf16 %v994, %v993
        %v1015 = vpack.c.bf16 %v996, %v995
        %v1016 = vpack.c.bf16 %v998, %v997
        %v1017 = vpack.c.bf16 %v1000, %v999
        %v1018 = vpack.c.bf16 %v1002, %v1001
        %v1019 = vld [vmem:[#allocation5] sm:$0xff]
        %v1020 = vld [vmem:[#allocation5 + $0x8] sm:$0xf]
        %v1021 = vld [vmem:[#allocation5 + $0xc] sm:$0xff]
        %v1022 = vld [vmem:[#allocation5 + $0x14] sm:$0xf]
        %v1023 = vld [vmem:[#allocation5 + $0x18] sm:$0xff]
        %v1024 = vld [vmem:[#allocation5 + $0x20] sm:$0xf]
        %v1025 = vld [vmem:[#allocation5 + $0x24] sm:$0xff]
        %v1026 = vld [vmem:[#allocation5 + $0x2c] sm:$0xf]
        %v1027 = vld [vmem:[#allocation5 + $0x30] sm:$0xff]
        %v1028 = vld [vmem:[#allocation5 + $0x38] sm:$0xf]
        %v1029 = vld [vmem:[#allocation5 + $0x3c] sm:$0xff]
        %v1030 = vld [vmem:[#allocation5 + $0x44] sm:$0xf]
        %v1031 = vld [vmem:[#allocation5 + $0x48] sm:$0xff]
        %v1032 = vld [vmem:[#allocation5 + $0x50] sm:$0xf]
        %v1033 = vld [vmem:[#allocation5 + $0x54] sm:$0xff]
        %v1034 = vld [vmem:[#allocation5 + $0x5c] sm:$0xf]
        %v1035 = vld [vmem:[#allocation5 + $0x60] sm:$0xff]
        %v1036 = vld [vmem:[#allocation5 + $0x68] sm:$0xf]
        %v1037 = vld [vmem:[#allocation5 + $0x6c] sm:$0xff]
        %v1038 = vld [vmem:[#allocation5 + $0x74] sm:$0xf]
        %v1039 = vld [vmem:[#allocation5 + $0x78] sm:$0xff]
        %v1040 = vld [vmem:[#allocation5 + $0x80] sm:$0xf]
        %v1041 = vld [vmem:[#allocation5 + $0x84] sm:$0xff]
        %v1042 = vld [vmem:[#allocation5 + $0x8c] sm:$0xf]
        %v1043 = vld [vmem:[#allocation5 + $0x90] sm:$0xff]
        %v1044 = vld [vmem:[#allocation5 + $0x98] sm:$0xf]
        %v1045 = vld [vmem:[#allocation5 + $0x9c] sm:$0xff]
        %v1046 = vld [vmem:[#allocation5 + $0xa4] sm:$0xf]
        %v1047 = vld [vmem:[#allocation5 + $0xa8] sm:$0xff]
        %v1048 = vld [vmem:[#allocation5 + $0xb0] sm:$0xf]
        %v1049 = vld [vmem:[#allocation5 + $0xb4] sm:$0xff]
        %v1050 = vld [vmem:[#allocation5 + $0xbc] sm:$0xf]
        %v1052 = vlaneseq
        %v1053 = vshrl.u32 %v1052, 7
        %v1054 = vsub.s32 0, %v1053
        %v1055 = vrot.slane %v570, %v1054
        %v1056 = vlaneseq
        %v1057 = vshrl.u32 %v1056, 7
        %v1058 = vsub.s32 1, %v1057
        %v1059 = vrot.slane %v570, %v1058
        %v1060 = vlaneseq
        %v1061 = vshrl.u32 %v1060, 7
        %v1062 = vsub.s32 2, %v1061
        %v1063 = vrot.slane %v570, %v1062
        %v1099 = vunpack.c.l.b16 %v1019
        %v1100 = vunpack.c.h.b16 %v1019
        %v1101 = vunpack.c.l.b16 %v1020
        %v1102 = vunpack.c.l.b16 %v1021
        %v1103 = vunpack.c.h.b16 %v1021
        %v1104 = vunpack.c.l.b16 %v1022
        %v1105 = vunpack.c.l.b16 %v1023
        %v1106 = vunpack.c.h.b16 %v1023
        %v1107 = vunpack.c.l.b16 %v1024
        %v1108 = vunpack.c.l.b16 %v1025
        %v1109 = vunpack.c.h.b16 %v1025
        %v1110 = vunpack.c.l.b16 %v1026
        %v1111 = vunpack.c.l.b16 %v1027
        %v1112 = vunpack.c.h.b16 %v1027
        %v1113 = vunpack.c.l.b16 %v1028
        %v1114 = vunpack.c.l.b16 %v1029
        %v1115 = vunpack.c.h.b16 %v1029
        %v1116 = vunpack.c.l.b16 %v1030
        %v1117 = vunpack.c.l.b16 %v1031
        %v1118 = vunpack.c.h.b16 %v1031
        %v1119 = vunpack.c.l.b16 %v1032
        %v1120 = vunpack.c.l.b16 %v1033
        %v1121 = vunpack.c.h.b16 %v1033
        %v1122 = vunpack.c.l.b16 %v1034
        %v1123 = vunpack.c.l.b16 %v1035
        %v1124 = vunpack.c.h.b16 %v1035
        %v1125 = vunpack.c.l.b16 %v1036
        %v1126 = vunpack.c.l.b16 %v1037
        %v1127 = vunpack.c.h.b16 %v1037
        %v1128 = vunpack.c.l.b16 %v1038
        %v1129 = vunpack.c.l.b16 %v1039
        %v1130 = vunpack.c.h.b16 %v1039
        %v1131 = vunpack.c.l.b16 %v1040
        %v1132 = vunpack.c.l.b16 %v1041
        %v1133 = vunpack.c.h.b16 %v1041
        %v1134 = vunpack.c.l.b16 %v1042
        %v1135 = vunpack.c.l.b16 %v1043
        %v1136 = vunpack.c.h.b16 %v1043
        %v1137 = vunpack.c.l.b16 %v1044
        %v1138 = vunpack.c.l.b16 %v1045
        %v1139 = vunpack.c.h.b16 %v1045
        %v1140 = vunpack.c.l.b16 %v1046
        %v1141 = vunpack.c.l.b16 %v1047
        %v1142 = vunpack.c.h.b16 %v1047
        %v1143 = vunpack.c.l.b16 %v1048
        %v1144 = vunpack.c.l.b16 %v1049
        %v1145 = vunpack.c.h.b16 %v1049
        %v1146 = vunpack.c.l.b16 %v1050
        %v1147 = vpack.c.b16 %v1102, %v1099
        %v1148 = vpack.c.b16 %v1103, %v1100
        %v1149 = vpack.c.b16 %v1104, %v1101
        %v1150 = vpack.c.b16 %v1108, %v1105
        %v1151 = vpack.c.b16 %v1109, %v1106
        %v1152 = vpack.c.b16 %v1110, %v1107
        %v1153 = vpack.c.b16 %v1114, %v1111
        %v1154 = vpack.c.b16 %v1115, %v1112
        %v1155 = vpack.c.b16 %v1116, %v1113
        %v1156 = vpack.c.b16 %v1120, %v1117
        %v1157 = vpack.c.b16 %v1121, %v1118
        %v1158 = vpack.c.b16 %v1122, %v1119
        %v1159 = vpack.c.b16 %v1126, %v1123
        %v1160 = vpack.c.b16 %v1127, %v1124
        %v1161 = vpack.c.b16 %v1128, %v1125
        %v1162 = vpack.c.b16 %v1132, %v1129
        %v1163 = vpack.c.b16 %v1133, %v1130
        %v1164 = vpack.c.b16 %v1134, %v1131
        %v1165 = vpack.c.b16 %v1138, %v1135
        %v1166 = vpack.c.b16 %v1139, %v1136
        %v1167 = vpack.c.b16 %v1140, %v1137
        %v1168 = vpack.c.b16 %v1144, %v1141
        %v1169 = vpack.c.b16 %v1145, %v1142
        %v1170 = vpack.c.b16 %v1146, %v1143
        %1195 = vmatprep.subr.bf16.mxu0 %v1148
        %1196 = vmatpush1.bf16.msra.mxu0 %v1147
        %1197 = vmatprep.subr.bf16.mxu0 %v1151
        %1198 = vmatpush1.bf16.msra.mxu0 %v1150
        %1199 = vmatprep.subr.bf16.mxu0 %v1154
        %1200 = vmatpush1.bf16.msra.mxu0 %v1153
        %1201 = vmatprep.subr.bf16.mxu0 %v1157
        %1202 = vmatpush1.bf16.msra.mxu0 %v1156
        %1203 = vmatprep.subr.bf16.mxu0 %v1160
        %1204 = vmatpush1.bf16.msra.mxu0 %v1159
        %1205 = vmatprep.subr.bf16.mxu0 %v1163
        %1206 = vmatpush1.bf16.msra.mxu0 %v1162
        %1207 = vmatprep.subr.bf16.mxu0 %v1166
        %1208 = vmatpush1.bf16.msra.mxu0 %v1165
        %1209 = vmatprep.subr.bf16.mxu0 %v1169
        %1210 = vmatpush1.bf16.msra.mxu0 %v1168
        %1211 = vmatprep.subr.bf16.mxu0 0
        %1212 = vmatpush1.bf16.msra.mxu0 0
        %1213 = vmatprep.subr.bf16.mxu0 0
        %1214 = vmatpush1.bf16.msra.mxu0 0
        %1215 = vmatprep.subr.bf16.mxu0 0
        %1216 = vmatpush1.bf16.msra.mxu0 0
        %1217 = vmatprep.subr.bf16.mxu0 0
        %1218 = vmatpush1.bf16.msra.mxu0 0
        %1219 = vmatprep.subr.bf16.mxu0 0
        %1220 = vmatpush1.bf16.msra.mxu0 0
        %1221 = vmatprep.subr.bf16.mxu0 0
        %1222 = vmatpush1.bf16.msra.mxu0 0
        %1223 = vmatprep.subr.bf16.mxu0 0
        %1224 = vmatpush1.bf16.msra.mxu0 0
        %1225 = vmatprep.subr.bf16.mxu0 0
        %1226 = vmatpush1.bf16.msra.mxu0 0
        %1227 = vmatprep.mubr.bf16.mxu0 0
        %1228 = vmatmul.mubr.bf16.gmra.mrb[0].mxu0 %v1003
        %v1229 = vpop.f32.mrb[0].mxu0
        %v1230 = vadd.f32 %v1055, %v1229
        %v1231 = vpop.f32.mrb[0].mxu0
        %v1232 = vadd.f32 %v1059, %v1231
        %v1233 = vpop.f32.mrb[0].mxu0
        %v1234 = vadd.f32 %v1055, %v1233
        %v1235 = vpop.f32.mrb[0].mxu0
        %v1236 = vadd.f32 %v1059, %v1235
        %1237 = vmatprep.mubr.bf16.mxu0 0
        %1238 = vmatmul.mubr.bf16.gmra.mrb[0].mxu0 %v1004
        %v1239 = vpop.f32.mrb[0].mxu0
        %v1240 = vadd.f32 %v1055, %v1239
        %v1241 = vpop.f32.mrb[0].mxu0
        %v1242 = vadd.f32 %v1059, %v1241
        %v1243 = vpop.f32.mrb[0].mxu0
        %v1244 = vadd.f32 %v1055, %v1243
        %v1245 = vpop.f32.mrb[0].mxu0
        %v1246 = vadd.f32 %v1059, %v1245
        %1247 = vmatprep.mubr.bf16.mxu0 0
        %1248 = vmatmul.mubr.bf16.gmra.mrb[0].mxu0 %v1005
        %v1249 = vpop.f32.mrb[0].mxu0
        %v1250 = vadd.f32 %v1055, %v1249
        %v1251 = vpop.f32.mrb[0].mxu0
        %v1252 = vadd.f32 %v1059, %v1251
        %v1253 = vpop.f32.mrb[0].mxu0
        %v1254 = vadd.f32 %v1055, %v1253
        %v1255 = vpop.f32.mrb[0].mxu0
        %v1256 = vadd.f32 %v1059, %v1255
        %1257 = vmatprep.mubr.bf16.mxu0 0
        %1258 = vmatmul.mubr.bf16.gmra.mrb[0].mxu0 %v1006
        %v1259 = vpop.f32.mrb[0].mxu0
        %v1260 = vadd.f32 %v1055, %v1259
        %v1261 = vpop.f32.mrb[0].mxu0
        %v1262 = vadd.f32 %v1059, %v1261
        %v1263 = vpop.f32.mrb[0].mxu0
        %v1264 = vadd.f32 %v1055, %v1263
        %v1265 = vpop.f32.mrb[0].mxu0
        %v1266 = vadd.f32 %v1059, %v1265
        %1267 = vmatprep.mubr.bf16.mxu0 0
        %1268 = vmatmul.mubr.bf16.gmra.mrb[0].mxu0 %v1007
        %v1269 = vpop.f32.mrb[0].mxu0
        %v1270 = vadd.f32 %v1055, %v1269
        %v1271 = vpop.f32.mrb[0].mxu0
        %v1272 = vadd.f32 %v1059, %v1271
        %v1273 = vpop.f32.mrb[0].mxu0
        %v1274 = vadd.f32 %v1055, %v1273
        %v1275 = vpop.f32.mrb[0].mxu0
        %v1276 = vadd.f32 %v1059, %v1275
        %1277 = vmatprep.mubr.bf16.mxu0 0
        %1278 = vmatmul.mubr.bf16.gmra.mrb[0].mxu0 %v1008
        %v1279 = vpop.f32.mrb[0].mxu0
        %v1280 = vadd.f32 %v1055, %v1279
        %v1281 = vpop.f32.mrb[0].mxu0
        %v1282 = vadd.f32 %v1059, %v1281
        %v1283 = vpop.f32.mrb[0].mxu0
        %v1284 = vadd.f32 %v1055, %v1283
        %v1285 = vpop.f32.mrb[0].mxu0
        %v1286 = vadd.f32 %v1059, %v1285
        %1287 = vmatprep.mubr.bf16.mxu0 0
        %1288 = vmatmul.mubr.bf16.gmra.mrb[0].mxu0 %v1009
        %v1289 = vpop.f32.mrb[0].mxu0
        %v1290 = vadd.f32 %v1055, %v1289
        %v1291 = vpop.f32.mrb[0].mxu0
        %v1292 = vadd.f32 %v1059, %v1291
        %v1293 = vpop.f32.mrb[0].mxu0
        %v1294 = vadd.f32 %v1055, %v1293
        %v1295 = vpop.f32.mrb[0].mxu0
        %v1296 = vadd.f32 %v1059, %v1295
        %1297 = vmatprep.mubr.bf16.mxu0 0
        %1298 = vmatmul.mubr.bf16.gmra.mrb[0].mxu0 %v1010
        %v1299 = vpop.f32.mrb[0].mxu0
        %v1300 = vadd.f32 %v1055, %v1299
        %v1301 = vpop.f32.mrb[0].mxu0
        %v1302 = vadd.f32 %v1059, %v1301
        %v1303 = vpop.f32.mrb[0].mxu0
        %v1304 = vadd.f32 %v1055, %v1303
        %v1305 = vpop.f32.mrb[0].mxu0
        %v1306 = vadd.f32 %v1059, %v1305
        %1307 = vmatprep.mubr.bf16.mxu0 0
        %1308 = vmatmul.mubr.bf16.gmra.mrb[0].mxu0 %v1011
        %v1309 = vpop.f32.mrb[0].mxu0
        %v1310 = vadd.f32 %v1055, %v1309
        %v1311 = vpop.f32.mrb[0].mxu0
        %v1312 = vadd.f32 %v1059, %v1311
        %v1313 = vpop.f32.mrb[0].mxu0
        %v1314 = vadd.f32 %v1055, %v1313
        %v1315 = vpop.f32.mrb[0].mxu0
        %v1316 = vadd.f32 %v1059, %v1315
        %1317 = vmatprep.mubr.bf16.mxu0 0
        %1318 = vmatmul.mubr.bf16.gmra.mrb[0].mxu0 %v1012
        %v1319 = vpop.f32.mrb[0].mxu0
        %v1320 = vadd.f32 %v1055, %v1319
        %v1321 = vpop.f32.mrb[0].mxu0
        %v1322 = vadd.f32 %v1059, %v1321
        %v1323 = vpop.f32.mrb[0].mxu0
        %v1324 = vadd.f32 %v1055, %v1323
        %v1325 = vpop.f32.mrb[0].mxu0
        %v1326 = vadd.f32 %v1059, %v1325
        %1327 = vmatprep.mubr.bf16.mxu0 0
        %1328 = vmatmul.mubr.bf16.gmra.mrb[0].mxu0 %v1013
        %v1329 = vpop.f32.mrb[0].mxu0
        %v1330 = vadd.f32 %v1055, %v1329
        %v1331 = vpop.f32.mrb[0].mxu0
        %v1332 = vadd.f32 %v1059, %v1331
        %v1333 = vpop.f32.mrb[0].mxu0
        %v1334 = vadd.f32 %v1055, %v1333
        %v1335 = vpop.f32.mrb[0].mxu0
        %v1336 = vadd.f32 %v1059, %v1335
        %1337 = vmatprep.mubr.bf16.mxu0 0
        %1338 = vmatmul.mubr.bf16.gmra.mrb[0].mxu0 %v1014
        %v1339 = vpop.f32.mrb[0].mxu0
        %v1340 = vadd.f32 %v1055, %v1339
        %v1341 = vpop.f32.mrb[0].mxu0
        %v1342 = vadd.f32 %v1059, %v1341
        %v1343 = vpop.f32.mrb[0].mxu0
        %v1344 = vadd.f32 %v1055, %v1343
        %v1345 = vpop.f32.mrb[0].mxu0
        %v1346 = vadd.f32 %v1059, %v1345
        %1347 = vmatprep.mubr.bf16.mxu0 0
        %1348 = vmatmul.mubr.bf16.gmra.mrb[0].mxu0 %v1015
        %v1349 = vpop.f32.mrb[0].mxu0
        %v1350 = vadd.f32 %v1055, %v1349
        %v1351 = vpop.f32.mrb[0].mxu0
        %v1352 = vadd.f32 %v1059, %v1351
        %v1353 = vpop.f32.mrb[0].mxu0
        %v1354 = vadd.f32 %v1055, %v1353
        %v1355 = vpop.f32.mrb[0].mxu0
        %v1356 = vadd.f32 %v1059, %v1355
        %1357 = vmatprep.mubr.bf16.mxu0 0
        %1358 = vmatmul.mubr.bf16.gmra.mrb[0].mxu0 %v1016
        %v1359 = vpop.f32.mrb[0].mxu0
        %v1360 = vadd.f32 %v1055, %v1359
        %v1361 = vpop.f32.mrb[0].mxu0
        %v1362 = vadd.f32 %v1059, %v1361
        %v1363 = vpop.f32.mrb[0].mxu0
        %v1364 = vadd.f32 %v1055, %v1363
        %v1365 = vpop.f32.mrb[0].mxu0
        %v1366 = vadd.f32 %v1059, %v1365
        %1367 = vmatprep.mubr.bf16.mxu0 0
        %1368 = vmatmul.mubr.bf16.gmra.mrb[0].mxu0 %v1017
        %v1369 = vpop.f32.mrb[0].mxu0
        %v1370 = vadd.f32 %v1055, %v1369
        %v1371 = vpop.f32.mrb[0].mxu0
        %v1372 = vadd.f32 %v1059, %v1371
        %v1373 = vpop.f32.mrb[0].mxu0
        %v1374 = vadd.f32 %v1055, %v1373
        %v1375 = vpop.f32.mrb[0].mxu0
        %v1376 = vadd.f32 %v1059, %v1375
        %1377 = vmatprep.mubr.bf16.mxu0 0
        %1378 = vmatmul.mubr.bf16.gmra.mrb[0].mxu0 %v1018
        %v1379 = vpop.f32.mrb[0].mxu0
        %v1380 = vadd.f32 %v1055, %v1379
        %v1381 = vpop.f32.mrb[0].mxu0
        %v1382 = vadd.f32 %v1059, %v1381
        %v1383 = vpop.f32.mrb[0].mxu0
        %v1384 = vadd.f32 %v1055, %v1383
        %v1385 = vpop.f32.mrb[0].mxu0
        %v1386 = vadd.f32 %v1059, %v1385
        %1387 = vdwg.mxu0
        %1388 = vmatprep.subr.bf16.mxu0 0
        %1389 = vmatpush1.bf16.msra.mxu0 %v1149
        %1390 = vmatprep.subr.bf16.mxu0 0
        %1391 = vmatpush1.bf16.msra.mxu0 %v1152
        %1392 = vmatprep.subr.bf16.mxu0 0
        %1393 = vmatpush1.bf16.msra.mxu0 %v1155
        %1394 = vmatprep.subr.bf16.mxu0 0
        %1395 = vmatpush1.bf16.msra.mxu0 %v1158
        %1396 = vmatprep.subr.bf16.mxu0 0
        %1397 = vmatpush1.bf16.msra.mxu0 %v1161
        %1398 = vmatprep.subr.bf16.mxu0 0
        %1399 = vmatpush1.bf16.msra.mxu0 %v1164
        %1400 = vmatprep.subr.bf16.mxu0 0
        %1401 = vmatpush1.bf16.msra.mxu0 %v1167
        %1402 = vmatprep.subr.bf16.mxu0 0
        %1403 = vmatpush1.bf16.msra.mxu0 %v1170
        %1404 = vmatprep.subr.bf16.mxu0 0
        %1405 = vmatpush1.bf16.msra.mxu0 0
        %1406 = vmatprep.subr.bf16.mxu0 0
        %1407 = vmatpush1.bf16.msra.mxu0 0
        %1408 = vmatprep.subr.bf16.mxu0 0
        %1409 = vmatpush1.bf16.msra.mxu0 0
        %1410 = vmatprep.subr.bf16.mxu0 0
        %1411 = vmatpush1.bf16.msra.mxu0 0
        %1412 = vmatprep.subr.bf16.mxu0 0
        %1413 = vmatpush1.bf16.msra.mxu0 0
        %1414 = vmatprep.subr.bf16.mxu0 0
        %1415 = vmatpush1.bf16.msra.mxu0 0
        %1416 = vmatprep.subr.bf16.mxu0 0
        %1417 = vmatpush1.bf16.msra.mxu0 0
        %1418 = vmatprep.subr.bf16.mxu0 0
        %1419 = vmatpush1.bf16.msra.mxu0 0
        %1420 = vmatprep.mubr.bf16.mxu0 0
        %1421 = vmatmul.mubr.bf16.gmra.mrb[0].mxu0 %v1003
        %v1422 = vpop.f32.mrb[0].mxu0
        %v1423 = vadd.f32 %v1063, %v1422
        %v1424 = vpop.f32.mrb[0].mxu0
        %v1425 = vpop.f32.mrb[0].mxu0
        %v1426 = vadd.f32 %v1063, %v1425
        %v1427 = vpop.f32.mrb[0].mxu0
        %1428 = vmatprep.mubr.bf16.mxu0 0
        %1429 = vmatmul.mubr.bf16.gmra.mrb[0].mxu0 %v1004
        %v1430 = vpop.f32.mrb[0].mxu0
        %v1431 = vadd.f32 %v1063, %v1430
        %v1432 = vpop.f32.mrb[0].mxu0
        %v1433 = vpop.f32.mrb[0].mxu0
        %v1434 = vadd.f32 %v1063, %v1433
        %v1435 = vpop.f32.mrb[0].mxu0
        %1436 = vmatprep.mubr.bf16.mxu0 0
        %1437 = vmatmul.mubr.bf16.gmra.mrb[0].mxu0 %v1005
        %v1438 = vpop.f32.mrb[0].mxu0
        %v1439 = vadd.f32 %v1063, %v1438
        %v1440 = vpop.f32.mrb[0].mxu0
        %v1441 = vpop.f32.mrb[0].mxu0
        %v1442 = vadd.f32 %v1063, %v1441
        %v1443 = vpop.f32.mrb[0].mxu0
        %1444 = vmatprep.mubr.bf16.mxu0 0
        %1445 = vmatmul.mubr.bf16.gmra.mrb[0].mxu0 %v1006
        %v1446 = vpop.f32.mrb[0].mxu0
        %v1447 = vadd.f32 %v1063, %v1446
        %v1448 = vpop.f32.mrb[0].mxu0
        %v1449 = vpop.f32.mrb[0].mxu0
        %v1450 = vadd.f32 %v1063, %v1449
        %v1451 = vpop.f32.mrb[0].mxu0
        %1452 = vmatprep.mubr.bf16.mxu0 0
        %1453 = vmatmul.mubr.bf16.gmra.mrb[0].mxu0 %v1007
        %v1454 = vpop.f32.mrb[0].mxu0
        %v1455 = vadd.f32 %v1063, %v1454
        %v1456 = vpop.f32.mrb[0].mxu0
        %v1457 = vpop.f32.mrb[0].mxu0
        %v1458 = vadd.f32 %v1063, %v1457
        %v1459 = vpop.f32.mrb[0].mxu0
        %1460 = vmatprep.mubr.bf16.mxu0 0
        %1461 = vmatmul.mubr.bf16.gmra.mrb[0].mxu0 %v1008
        %v1462 = vpop.f32.mrb[0].mxu0
        %v1463 = vadd.f32 %v1063, %v1462
        %v1464 = vpop.f32.mrb[0].mxu0
        %v1465 = vpop.f32.mrb[0].mxu0
        %v1466 = vadd.f32 %v1063, %v1465
        %v1467 = vpop.f32.mrb[0].mxu0
        %1468 = vmatprep.mubr.bf16.mxu0 0
        %1469 = vmatmul.mubr.bf16.gmra.mrb[0].mxu0 %v1009
        %v1470 = vpop.f32.mrb[0].mxu0
        %v1471 = vadd.f32 %v1063, %v1470
        %v1472 = vpop.f32.mrb[0].mxu0
        %v1473 = vpop.f32.mrb[0].mxu0
        %v1474 = vadd.f32 %v1063, %v1473
        %v1475 = vpop.f32.mrb[0].mxu0
        %1476 = vmatprep.mubr.bf16.mxu0 0
        %1477 = vmatmul.mubr.bf16.gmra.mrb[0].mxu0 %v1010
        %v1478 = vpop.f32.mrb[0].mxu0
        %v1479 = vadd.f32 %v1063, %v1478
        %v1480 = vpop.f32.mrb[0].mxu0
        %v1481 = vpop.f32.mrb[0].mxu0
        %v1482 = vadd.f32 %v1063, %v1481
        %v1483 = vpop.f32.mrb[0].mxu0
        %1484 = vmatprep.mubr.bf16.mxu0 0
        %1485 = vmatmul.mubr.bf16.gmra.mrb[0].mxu0 %v1011
        %v1486 = vpop.f32.mrb[0].mxu0
        %v1487 = vadd.f32 %v1063, %v1486
        %v1488 = vpop.f32.mrb[0].mxu0
        %v1489 = vpop.f32.mrb[0].mxu0
        %v1490 = vadd.f32 %v1063, %v1489
        %v1491 = vpop.f32.mrb[0].mxu0
        %1492 = vmatprep.mubr.bf16.mxu0 0
        %1493 = vmatmul.mubr.bf16.gmra.mrb[0].mxu0 %v1012
        %v1494 = vpop.f32.mrb[0].mxu0
        %v1495 = vadd.f32 %v1063, %v1494
        %v1496 = vpop.f32.mrb[0].mxu0
        %v1497 = vpop.f32.mrb[0].mxu0
        %v1498 = vadd.f32 %v1063, %v1497
        %v1499 = vpop.f32.mrb[0].mxu0
        %1500 = vmatprep.mubr.bf16.mxu0 0
        %1501 = vmatmul.mubr.bf16.gmra.mrb[0].mxu0 %v1013
        %v1502 = vpop.f32.mrb[0].mxu0
        %v1503 = vadd.f32 %v1063, %v1502
        %v1504 = vpop.f32.mrb[0].mxu0
        %v1505 = vpop.f32.mrb[0].mxu0
        %v1506 = vadd.f32 %v1063, %v1505
        %v1507 = vpop.f32.mrb[0].mxu0
        %1508 = vmatprep.mubr.bf16.mxu0 0
        %1509 = vmatmul.mubr.bf16.gmra.mrb[0].mxu0 %v1014
        %v1510 = vpop.f32.mrb[0].mxu0
        %v1511 = vadd.f32 %v1063, %v1510
        %v1512 = vpop.f32.mrb[0].mxu0
        %v1513 = vpop.f32.mrb[0].mxu0
        %v1514 = vadd.f32 %v1063, %v1513
        %v1515 = vpop.f32.mrb[0].mxu0
        %1516 = vmatprep.mubr.bf16.mxu0 0
        %1517 = vmatmul.mubr.bf16.gmra.mrb[0].mxu0 %v1015
        %v1518 = vpop.f32.mrb[0].mxu0
        %v1519 = vadd.f32 %v1063, %v1518
        %v1520 = vpop.f32.mrb[0].mxu0
        %v1521 = vpop.f32.mrb[0].mxu0
        %v1522 = vadd.f32 %v1063, %v1521
        %v1523 = vpop.f32.mrb[0].mxu0
        %1524 = vmatprep.mubr.bf16.mxu0 0
        %1525 = vmatmul.mubr.bf16.gmra.mrb[0].mxu0 %v1016
        %v1526 = vpop.f32.mrb[0].mxu0
        %v1527 = vadd.f32 %v1063, %v1526
        %v1528 = vpop.f32.mrb[0].mxu0
        %v1529 = vpop.f32.mrb[0].mxu0
        %v1530 = vadd.f32 %v1063, %v1529
        %v1531 = vpop.f32.mrb[0].mxu0
        %1532 = vmatprep.mubr.bf16.mxu0 0
        %1533 = vmatmul.mubr.bf16.gmra.mrb[0].mxu0 %v1017
        %v1534 = vpop.f32.mrb[0].mxu0
        %v1535 = vadd.f32 %v1063, %v1534
        %v1536 = vpop.f32.mrb[0].mxu0
        %v1537 = vpop.f32.mrb[0].mxu0
        %v1538 = vadd.f32 %v1063, %v1537
        %v1539 = vpop.f32.mrb[0].mxu0
        %1540 = vmatprep.mubr.bf16.mxu0 0
        %1541 = vmatmul.mubr.bf16.gmra.mrb[0].mxu0 %v1018
        %v1542 = vpop.f32.mrb[0].mxu0
        %v1543 = vadd.f32 %v1063, %v1542
        %v1544 = vpop.f32.mrb[0].mxu0
        %v1545 = vpop.f32.mrb[0].mxu0
        %v1546 = vadd.f32 %v1063, %v1545
        %v1547 = vpop.f32.mrb[0].mxu0
        %1548 = vdwg.mxu0
        %v1549 = vpack.c.bf16 %v1234, %v1230
        %v1550 = vpack.c.bf16 %v1236, %v1232
        %v1551 = vpack.c.bf16 %v1426, %v1423
        %v1552 = vpack.c.bf16 %v1244, %v1240
        %v1553 = vpack.c.bf16 %v1246, %v1242
        %v1554 = vpack.c.bf16 %v1434, %v1431
        %v1555 = vpack.c.bf16 %v1254, %v1250
        %v1556 = vpack.c.bf16 %v1256, %v1252
        %v1557 = vpack.c.bf16 %v1442, %v1439
        %v1558 = vpack.c.bf16 %v1264, %v1260
        %v1559 = vpack.c.bf16 %v1266, %v1262
        %v1560 = vpack.c.bf16 %v1450, %v1447
        %v1561 = vpack.c.bf16 %v1274, %v1270
        %v1562 = vpack.c.bf16 %v1276, %v1272
        %v1563 = vpack.c.bf16 %v1458, %v1455
        %v1564 = vpack.c.bf16 %v1284, %v1280
        %v1565 = vpack.c.bf16 %v1286, %v1282
        %v1566 = vpack.c.bf16 %v1466, %v1463
        %v1567 = vpack.c.bf16 %v1294, %v1290
        %v1568 = vpack.c.bf16 %v1296, %v1292
        %v1569 = vpack.c.bf16 %v1474, %v1471
        %v1570 = vpack.c.bf16 %v1304, %v1300
        %v1571 = vpack.c.bf16 %v1306, %v1302
        %v1572 = vpack.c.bf16 %v1482, %v1479
        %v1573 = vpack.c.bf16 %v1314, %v1310
        %v1574 = vpack.c.bf16 %v1316, %v1312
        %v1575 = vpack.c.bf16 %v1490, %v1487
        %v1576 = vpack.c.bf16 %v1324, %v1320
        %v1577 = vpack.c.bf16 %v1326, %v1322
        %v1578 = vpack.c.bf16 %v1498, %v1495
        %v1579 = vpack.c.bf16 %v1334, %v1330
        %v1580 = vpack.c.bf16 %v1336, %v1332
        %v1581 = vpack.c.bf16 %v1506, %v1503
        %v1582 = vpack.c.bf16 %v1344, %v1340
        %v1583 = vpack.c.bf16 %v1346, %v1342
        %v1584 = vpack.c.bf16 %v1514, %v1511
        %v1585 = vpack.c.bf16 %v1354, %v1350
        %v1586 = vpack.c.bf16 %v1356, %v1352
        %v1587 = vpack.c.bf16 %v1522, %v1519
        %v1588 = vpack.c.bf16 %v1364, %v1360
        %v1589 = vpack.c.bf16 %v1366, %v1362
        %v1590 = vpack.c.bf16 %v1530, %v1527
        %v1591 = vpack.c.bf16 %v1374, %v1370
        %v1592 = vpack.c.bf16 %v1376, %v1372
        %v1593 = vpack.c.bf16 %v1538, %v1535
        %v1594 = vpack.c.bf16 %v1384, %v1380
        %v1595 = vpack.c.bf16 %v1386, %v1382
        %v1596 = vpack.c.bf16 %v1546, %v1543
        %1605 = vrot.lane.b32.xlu0 %v1549, 96
        %v1606 = vpop.permute.xlu0 %1605
        %1607 = vrot.lane.b32.xlu0 %v1552, 96
        %v1608 = vpop.permute.xlu0 %1607
        %1609 = vrot.lane.b32.xlu0 %v1555, 96
        %v1610 = vpop.permute.xlu0 %1609
        %1611 = vrot.lane.b32.xlu0 %v1558, 96
        %v1612 = vpop.permute.xlu0 %1611
        %1613 = vrot.lane.b32.xlu0 %v1561, 96
        %v1614 = vpop.permute.xlu0 %1613
        %1615 = vrot.lane.b32.xlu0 %v1564, 96
        %v1616 = vpop.permute.xlu0 %1615
        %1617 = vrot.lane.b32.xlu0 %v1567, 96
        %v1618 = vpop.permute.xlu0 %1617
        %1619 = vrot.lane.b32.xlu0 %v1570, 96
        %v1620 = vpop.permute.xlu0 %1619
        %1621 = vrot.lane.b32.xlu0 %v1549, 64
        %v1622 = vpop.permute.xlu0 %1621
        %1623 = vrot.lane.b32.xlu0 %v1552, 64
        %v1624 = vpop.permute.xlu0 %1623
        %1625 = vrot.lane.b32.xlu0 %v1555, 64
        %v1626 = vpop.permute.xlu0 %1625
        %1627 = vrot.lane.b32.xlu0 %v1558, 64
        %v1628 = vpop.permute.xlu0 %1627
        %1629 = vrot.lane.b32.xlu0 %v1561, 64
        %v1630 = vpop.permute.xlu0 %1629
        %1631 = vrot.lane.b32.xlu0 %v1564, 64
        %v1632 = vpop.permute.xlu0 %1631
        %1633 = vrot.lane.b32.xlu0 %v1567, 64
        %v1634 = vpop.permute.xlu0 %1633
        %1635 = vrot.lane.b32.xlu0 %v1570, 64
        %v1636 = vpop.permute.xlu0 %1635
        %1637 = vrot.lane.b32.xlu0 %v1549, 32
        %v1638 = vpop.permute.xlu0 %1637
        %1639 = vrot.lane.b32.xlu0 %v1552, 32
        %v1640 = vpop.permute.xlu0 %1639
        %1641 = vrot.lane.b32.xlu0 %v1555, 32
        %v1642 = vpop.permute.xlu0 %1641
        %1643 = vrot.lane.b32.xlu0 %v1558, 32
        %v1644 = vpop.permute.xlu0 %1643
        %1645 = vrot.lane.b32.xlu0 %v1561, 32
        %v1646 = vpop.permute.xlu0 %1645
        %1647 = vrot.lane.b32.xlu0 %v1564, 32
        %v1648 = vpop.permute.xlu0 %1647
        %1649 = vrot.lane.b32.xlu0 %v1567, 32
        %v1650 = vpop.permute.xlu0 %1649
        %1651 = vrot.lane.b32.xlu0 %v1570, 32
        %v1652 = vpop.permute.xlu0 %1651
        %1661 = vrot.lane.b32.xlu0 %v1550, 96
        %v1662 = vpop.permute.xlu0 %1661
        %1663 = vrot.lane.b32.xlu0 %v1553, 96
        %v1664 = vpop.permute.xlu0 %1663
        %1665 = vrot.lane.b32.xlu0 %v1556, 96
        %v1666 = vpop.permute.xlu0 %1665
        %1667 = vrot.lane.b32.xlu0 %v1559, 96
        %v1668 = vpop.permute.xlu0 %1667
        %1669 = vrot.lane.b32.xlu0 %v1562, 96
        %v1670 = vpop.permute.xlu0 %1669
        %1671 = vrot.lane.b32.xlu0 %v1565, 96
        %v1672 = vpop.permute.xlu0 %1671
        %1673 = vrot.lane.b32.xlu0 %v1568, 96
        %v1674 = vpop.permute.xlu0 %1673
        %1675 = vrot.lane.b32.xlu0 %v1571, 96
        %v1676 = vpop.permute.xlu0 %1675
        %1677 = vrot.lane.b32.xlu0 %v1550, 64
        %v1678 = vpop.permute.xlu0 %1677
        %1679 = vrot.lane.b32.xlu0 %v1553, 64
        %v1680 = vpop.permute.xlu0 %1679
        %1681 = vrot.lane.b32.xlu0 %v1556, 64
        %v1682 = vpop.permute.xlu0 %1681
        %1683 = vrot.lane.b32.xlu0 %v1559, 64
        %v1684 = vpop.permute.xlu0 %1683
        %1685 = vrot.lane.b32.xlu0 %v1562, 64
        %v1686 = vpop.permute.xlu0 %1685
        %1687 = vrot.lane.b32.xlu0 %v1565, 64
        %v1688 = vpop.permute.xlu0 %1687
        %1689 = vrot.lane.b32.xlu0 %v1568, 64
        %v1690 = vpop.permute.xlu0 %1689
        %1691 = vrot.lane.b32.xlu0 %v1571, 64
        %v1692 = vpop.permute.xlu0 %1691
        %1693 = vrot.lane.b32.xlu0 %v1550, 32
        %v1694 = vpop.permute.xlu0 %1693
        %1695 = vrot.lane.b32.xlu0 %v1553, 32
        %v1696 = vpop.permute.xlu0 %1695
        %1697 = vrot.lane.b32.xlu0 %v1556, 32
        %v1698 = vpop.permute.xlu0 %1697
        %1699 = vrot.lane.b32.xlu0 %v1559, 32
        %v1700 = vpop.permute.xlu0 %1699
        %1701 = vrot.lane.b32.xlu0 %v1562, 32
        %v1702 = vpop.permute.xlu0 %1701
        %1703 = vrot.lane.b32.xlu0 %v1565, 32
        %v1704 = vpop.permute.xlu0 %1703
        %1705 = vrot.lane.b32.xlu0 %v1568, 32
        %v1706 = vpop.permute.xlu0 %1705
        %1707 = vrot.lane.b32.xlu0 %v1571, 32
        %v1708 = vpop.permute.xlu0 %1707
        %1717 = vrot.lane.b32.xlu0 %v1551, 96
        %v1718 = vpop.permute.xlu0 %1717
        %1719 = vrot.lane.b32.xlu0 %v1554, 96
        %v1720 = vpop.permute.xlu0 %1719
        %1721 = vrot.lane.b32.xlu0 %v1557, 96
        %v1722 = vpop.permute.xlu0 %1721
        %1723 = vrot.lane.b32.xlu0 %v1560, 96
        %v1724 = vpop.permute.xlu0 %1723
        %1725 = vrot.lane.b32.xlu0 %v1563, 96
        %v1726 = vpop.permute.xlu0 %1725
        %1727 = vrot.lane.b32.xlu0 %v1566, 96
        %v1728 = vpop.permute.xlu0 %1727
        %1729 = vrot.lane.b32.xlu0 %v1569, 96
        %v1730 = vpop.permute.xlu0 %1729
        %1731 = vrot.lane.b32.xlu0 %v1572, 96
        %v1732 = vpop.permute.xlu0 %1731
        %1741 = vrot.lane.b32.xlu0 %v1551, 64
        %v1742 = vpop.permute.xlu0 %1741
        %1743 = vrot.lane.b32.xlu0 %v1554, 64
        %v1744 = vpop.permute.xlu0 %1743
        %1745 = vrot.lane.b32.xlu0 %v1557, 64
        %v1746 = vpop.permute.xlu0 %1745
        %1747 = vrot.lane.b32.xlu0 %v1560, 64
        %v1748 = vpop.permute.xlu0 %1747
        %1749 = vrot.lane.b32.xlu0 %v1563, 64
        %v1750 = vpop.permute.xlu0 %1749
        %1751 = vrot.lane.b32.xlu0 %v1566, 64
        %v1752 = vpop.permute.xlu0 %1751
        %1753 = vrot.lane.b32.xlu0 %v1569, 64
        %v1754 = vpop.permute.xlu0 %1753
        %1755 = vrot.lane.b32.xlu0 %v1572, 64
        %v1756 = vpop.permute.xlu0 %1755
        %1765 = vrot.lane.b32.xlu0 %v1551, 32
        %v1766 = vpop.permute.xlu0 %1765
        %1767 = vrot.lane.b32.xlu0 %v1554, 32
        %v1768 = vpop.permute.xlu0 %1767
        %1769 = vrot.lane.b32.xlu0 %v1557, 32
        %v1770 = vpop.permute.xlu0 %1769
        %1771 = vrot.lane.b32.xlu0 %v1560, 32
        %v1772 = vpop.permute.xlu0 %1771
        %1773 = vrot.lane.b32.xlu0 %v1563, 32
        %v1774 = vpop.permute.xlu0 %1773
        %1775 = vrot.lane.b32.xlu0 %v1566, 32
        %v1776 = vpop.permute.xlu0 %1775
        %1777 = vrot.lane.b32.xlu0 %v1569, 32
        %v1778 = vpop.permute.xlu0 %1777
        %1779 = vrot.lane.b32.xlu0 %v1572, 32
        %v1780 = vpop.permute.xlu0 %1779
        %vm1789 = vcmask 261120
        %v1791 = vsel %vm1789, %v1549, 0
        %v1794 = vsel %vm1789, %v1552, 0
        %v1797 = vsel %vm1789, %v1555, 0
        %v1800 = vsel %vm1789, %v1558, 0
        %v1803 = vsel %vm1789, %v1561, 0
        %v1806 = vsel %vm1789, %v1564, 0
        %v1809 = vsel %vm1789, %v1567, 0
        %v1812 = vsel %vm1789, %v1570, 0
        %v1815 = vsel %vm1789, %v1550, 0
        %v1818 = vsel %vm1789, %v1553, 0
        %v1821 = vsel %vm1789, %v1556, 0
        %v1824 = vsel %vm1789, %v1559, 0
        %v1827 = vsel %vm1789, %v1562, 0
        %v1830 = vsel %vm1789, %v1565, 0
        %v1833 = vsel %vm1789, %v1568, 0
        %v1836 = vsel %vm1789, %v1571, 0
        %1838 = vmatprep.subr.bf16.mxu0 0
        %1839 = vmatpush1.bf16.xpose.msra.mxu0 %v1815
        %1840 = vmatprep.subr.bf16.mxu0 0
        %1841 = vmatpush1.bf16.xpose.msra.mxu0 %v1818
        %1842 = vmatprep.subr.bf16.mxu0 0
        %1843 = vmatpush1.bf16.xpose.msra.mxu0 %v1821
        %1844 = vmatprep.subr.bf16.mxu0 0
        %1845 = vmatpush1.bf16.xpose.msra.mxu0 %v1824
        %1846 = vmatprep.subr.bf16.mxu0 0
        %1847 = vmatpush1.bf16.xpose.msra.mxu0 %v1827
        %1848 = vmatprep.subr.bf16.mxu0 0
        %1849 = vmatpush1.bf16.xpose.msra.mxu0 %v1830
        %1850 = vmatprep.subr.bf16.mxu0 0
        %1851 = vmatpush1.bf16.xpose.msra.mxu0 %v1833
        %1852 = vmatprep.subr.bf16.mxu0 0
        %1853 = vmatpush1.bf16.xpose.msra.mxu0 %v1836
        %1854 = vmatprep.subr.bf16.mxu0 0
        %1855 = vmatpush1.bf16.xpose.msra.mxu0 0
        %1856 = vmatprep.subr.bf16.mxu0 0
        %1857 = vmatpush1.bf16.xpose.msra.mxu0 0
        %1858 = vmatprep.subr.bf16.mxu0 0
        %1859 = vmatpush1.bf16.xpose.msra.mxu0 0
        %1860 = vmatprep.subr.bf16.mxu0 0
        %1861 = vmatpush1.bf16.xpose.msra.mxu0 0
        %1862 = vmatprep.subr.bf16.mxu0 0
        %1863 = vmatpush1.bf16.xpose.msra.mxu0 0
        %1864 = vmatprep.subr.bf16.mxu0 0
        %1865 = vmatpush1.bf16.xpose.msra.mxu0 0
        %1866 = vmatprep.subr.bf16.mxu0 0
        %1867 = vmatpush1.bf16.xpose.msra.mxu0 0
        %1868 = vmatprep.subr.bf16.mxu0 0
        %1869 = vmatpush1.bf16.xpose.msra.mxu0 0
        %1870 = vmatprep.mubr.bf16.mxu0 0
        %1871 = vmatmul.mubr.bf16.gmra.mrb[0].mxu0 %v1791
        %v1872 = vpop.f32.mrb[0].mxu0
        %v1873 = vadd.f32 0.0, %v1872
        %v1874 = vpop.f32.mrb[0].mxu0
        %v1875 = vpop.f32.mrb[0].mxu0
        %v1876 = vadd.f32 0.0, %v1875
        %v1877 = vpop.f32.mrb[0].mxu0
        %1878 = vmatprep.mubr.bf16.mxu0 0
        %1879 = vmatmul.mubr.bf16.gmra.mrb[0].mxu0 %v1794
        %v1880 = vpop.f32.mrb[0].mxu0
        %v1881 = vadd.f32 0.0, %v1880
        %v1882 = vpop.f32.mrb[0].mxu0
        %v1883 = vpop.f32.mrb[0].mxu0
        %v1884 = vadd.f32 0.0, %v1883
        %v1885 = vpop.f32.mrb[0].mxu0
        %1886 = vmatprep.mubr.bf16.mxu0 0
        %1887 = vmatmul.mubr.bf16.gmra.mrb[0].mxu0 %v1797
        %v1888 = vpop.f32.mrb[0].mxu0
        %v1889 = vadd.f32 0.0, %v1888
        %v1890 = vpop.f32.mrb[0].mxu0
        %v1891 = vpop.f32.mrb[0].mxu0
        %v1892 = vadd.f32 0.0, %v1891
        %v1893 = vpop.f32.mrb[0].mxu0
        %1894 = vmatprep.mubr.bf16.mxu0 0
        %1895 = vmatmul.mubr.bf16.gmra.mrb[0].mxu0 %v1800
        %v1896 = vpop.f32.mrb[0].mxu0
        %v1897 = vadd.f32 0.0, %v1896
        %v1898 = vpop.f32.mrb[0].mxu0
        %v1899 = vpop.f32.mrb[0].mxu0
        %v1900 = vadd.f32 0.0, %v1899
        %v1901 = vpop.f32.mrb[0].mxu0
        %1902 = vmatprep.mubr.bf16.mxu0 0
        %1903 = vmatmul.mubr.bf16.gmra.mrb[0].mxu0 %v1803
        %v1904 = vpop.f32.mrb[0].mxu0
        %v1905 = vadd.f32 0.0, %v1904
        %v1906 = vpop.f32.mrb[0].mxu0
        %v1907 = vpop.f32.mrb[0].mxu0
        %v1908 = vadd.f32 0.0, %v1907
        %v1909 = vpop.f32.mrb[0].mxu0
        %1910 = vmatprep.mubr.bf16.mxu0 0
        %1911 = vmatmul.mubr.bf16.gmra.mrb[0].mxu0 %v1806
        %v1912 = vpop.f32.mrb[0].mxu0
        %v1913 = vadd.f32 0.0, %v1912
        %v1914 = vpop.f32.mrb[0].mxu0
        %v1915 = vpop.f32.mrb[0].mxu0
        %v1916 = vadd.f32 0.0, %v1915
        %v1917 = vpop.f32.mrb[0].mxu0
        %1918 = vmatprep.mubr.bf16.mxu0 0
        %1919 = vmatmul.mubr.bf16.gmra.mrb[0].mxu0 %v1809
        %v1920 = vpop.f32.mrb[0].mxu0
        %v1921 = vadd.f32 0.0, %v1920
        %v1922 = vpop.f32.mrb[0].mxu0
        %v1923 = vpop.f32.mrb[0].mxu0
        %v1924 = vadd.f32 0.0, %v1923
        %v1925 = vpop.f32.mrb[0].mxu0
        %1926 = vmatprep.mubr.bf16.mxu0 0
        %1927 = vmatmul.mubr.bf16.gmra.mrb[0].mxu0 %v1812
        %v1928 = vpop.f32.mrb[0].mxu0
        %v1929 = vadd.f32 0.0, %v1928
        %v1930 = vpop.f32.mrb[0].mxu0
        %v1931 = vpop.f32.mrb[0].mxu0
        %v1932 = vadd.f32 0.0, %v1931
        %v1933 = vpop.f32.mrb[0].mxu0
        %1934 = vdwg.mxu0
        %v1936 = vsel %vm1789, %v1606, 0
        %v1939 = vsel %vm1789, %v1608, 0
        %v1942 = vsel %vm1789, %v1610, 0
        %v1945 = vsel %vm1789, %v1612, 0
        %v1948 = vsel %vm1789, %v1614, 0
        %v1951 = vsel %vm1789, %v1616, 0
        %v1954 = vsel %vm1789, %v1618, 0
        %v1957 = vsel %vm1789, %v1620, 0
        %v1960 = vsel %vm1789, %v1662, 0
        %v1963 = vsel %vm1789, %v1664, 0
        %v1966 = vsel %vm1789, %v1666, 0
        %v1969 = vsel %vm1789, %v1668, 0
        %v1972 = vsel %vm1789, %v1670, 0
        %v1975 = vsel %vm1789, %v1672, 0
        %v1978 = vsel %vm1789, %v1674, 0
        %v1981 = vsel %vm1789, %v1676, 0
        %1983 = vmatprep.subr.bf16.mxu0 0
        %1984 = vmatpush1.bf16.xpose.msra.mxu0 %v1960
        %1985 = vmatprep.subr.bf16.mxu0 0
        %1986 = vmatpush1.bf16.xpose.msra.mxu0 %v1963
        %1987 = vmatprep.subr.bf16.mxu0 0
        %1988 = vmatpush1.bf16.xpose.msra.mxu0 %v1966
        %1989 = vmatprep.subr.bf16.mxu0 0
        %1990 = vmatpush1.bf16.xpose.msra.mxu0 %v1969
        %1991 = vmatprep.subr.bf16.mxu0 0
        %1992 = vmatpush1.bf16.xpose.msra.mxu0 %v1972
        %1993 = vmatprep.subr.bf16.mxu0 0
        %1994 = vmatpush1.bf16.xpose.msra.mxu0 %v1975
        %1995 = vmatprep.subr.bf16.mxu0 0
        %1996 = vmatpush1.bf16.xpose.msra.mxu0 %v1978
        %1997 = vmatprep.subr.bf16.mxu0 0
        %1998 = vmatpush1.bf16.xpose.msra.mxu0 %v1981
        %1999 = vmatprep.subr.bf16.mxu0 0
        %2000 = vmatpush1.bf16.xpose.msra.mxu0 0
        %2001 = vmatprep.subr.bf16.mxu0 0
        %2002 = vmatpush1.bf16.xpose.msra.mxu0 0
        %2003 = vmatprep.subr.bf16.mxu0 0
        %2004 = vmatpush1.bf16.xpose.msra.mxu0 0
        %2005 = vmatprep.subr.bf16.mxu0 0
        %2006 = vmatpush1.bf16.xpose.msra.mxu0 0
        %2007 = vmatprep.subr.bf16.mxu0 0
        %2008 = vmatpush1.bf16.xpose.msra.mxu0 0
        %2009 = vmatprep.subr.bf16.mxu0 0
        %2010 = vmatpush1.bf16.xpose.msra.mxu0 0
        %2011 = vmatprep.subr.bf16.mxu0 0
        %2012 = vmatpush1.bf16.xpose.msra.mxu0 0
        %2013 = vmatprep.subr.bf16.mxu0 0
        %2014 = vmatpush1.bf16.xpose.msra.mxu0 0
        %2015 = vmatprep.mubr.bf16.mxu0 0
        %2016 = vmatmul.mubr.bf16.gmra.mrb[0].mxu0 %v1936
        %v2017 = vpop.f32.mrb[0].mxu0
        %v2018 = vadd.f32 0.0, %v2017
        %v2019 = vpop.f32.mrb[0].mxu0
        %v2020 = vpop.f32.mrb[0].mxu0
        %v2021 = vadd.f32 0.0, %v2020
        %v2022 = vpop.f32.mrb[0].mxu0
        %2023 = vmatprep.mubr.bf16.mxu0 0
        %2024 = vmatmul.mubr.bf16.gmra.mrb[0].mxu0 %v1939
        %v2025 = vpop.f32.mrb[0].mxu0
        %v2026 = vadd.f32 0.0, %v2025
        %v2027 = vpop.f32.mrb[0].mxu0
        %v2028 = vpop.f32.mrb[0].mxu0
        %v2029 = vadd.f32 0.0, %v2028
        %v2030 = vpop.f32.mrb[0].mxu0
        %2031 = vmatprep.mubr.bf16.mxu0 0
        %2032 = vmatmul.mubr.bf16.gmra.mrb[0].mxu0 %v1942
        %v2033 = vpop.f32.mrb[0].mxu0
        %v2034 = vadd.f32 0.0, %v2033
        %v2035 = vpop.f32.mrb[0].mxu0
        %v2036 = vpop.f32.mrb[0].mxu0
        %v2037 = vadd.f32 0.0, %v2036
        %v2038 = vpop.f32.mrb[0].mxu0
        %2039 = vmatprep.mubr.bf16.mxu0 0
        %2040 = vmatmul.mubr.bf16.gmra.mrb[0].mxu0 %v1945
        %v2041 = vpop.f32.mrb[0].mxu0
        %v2042 = vadd.f32 0.0, %v2041
        %v2043 = vpop.f32.mrb[0].mxu0
        %v2044 = vpop.f32.mrb[0].mxu0
        %v2045 = vadd.f32 0.0, %v2044
        %v2046 = vpop.f32.mrb[0].mxu0
        %2047 = vmatprep.mubr.bf16.mxu0 0
        %2048 = vmatmul.mubr.bf16.gmra.mrb[0].mxu0 %v1948
        %v2049 = vpop.f32.mrb[0].mxu0
        %v2050 = vadd.f32 0.0, %v2049
        %v2051 = vpop.f32.mrb[0].mxu0
        %v2052 = vpop.f32.mrb[0].mxu0
        %v2053 = vadd.f32 0.0, %v2052
        %v2054 = vpop.f32.mrb[0].mxu0
        %2055 = vmatprep.mubr.bf16.mxu0 0
        %2056 = vmatmul.mubr.bf16.gmra.mrb[0].mxu0 %v1951
        %v2057 = vpop.f32.mrb[0].mxu0
        %v2058 = vadd.f32 0.0, %v2057
        %v2059 = vpop.f32.mrb[0].mxu0
        %v2060 = vpop.f32.mrb[0].mxu0
        %v2061 = vadd.f32 0.0, %v2060
        %v2062 = vpop.f32.mrb[0].mxu0
        %2063 = vmatprep.mubr.bf16.mxu0 0
        %2064 = vmatmul.mubr.bf16.gmra.mrb[0].mxu0 %v1954
        %v2065 = vpop.f32.mrb[0].mxu0
        %v2066 = vadd.f32 0.0, %v2065
        %v2067 = vpop.f32.mrb[0].mxu0
        %v2068 = vpop.f32.mrb[0].mxu0
        %v2069 = vadd.f32 0.0, %v2068
        %v2070 = vpop.f32.mrb[0].mxu0
        %2071 = vmatprep.mubr.bf16.mxu0 0
        %2072 = vmatmul.mubr.bf16.gmra.mrb[0].mxu0 %v1957
        %v2073 = vpop.f32.mrb[0].mxu0
        %v2074 = vadd.f32 0.0, %v2073
        %v2075 = vpop.f32.mrb[0].mxu0
        %v2076 = vpop.f32.mrb[0].mxu0
        %v2077 = vadd.f32 0.0, %v2076
        %v2078 = vpop.f32.mrb[0].mxu0
        %2079 = vdwg.mxu0
        %v2081 = vsel %vm1789, %v1622, 0
        %v2084 = vsel %vm1789, %v1624, 0
        %v2087 = vsel %vm1789, %v1626, 0
        %v2090 = vsel %vm1789, %v1628, 0
        %v2093 = vsel %vm1789, %v1630, 0
        %v2096 = vsel %vm1789, %v1632, 0
        %v2099 = vsel %vm1789, %v1634, 0
        %v2102 = vsel %vm1789, %v1636, 0
        %v2105 = vsel %vm1789, %v1678, 0
        %v2108 = vsel %vm1789, %v1680, 0
        %v2111 = vsel %vm1789, %v1682, 0
        %v2114 = vsel %vm1789, %v1684, 0
        %v2117 = vsel %vm1789, %v1686, 0
        %v2120 = vsel %vm1789, %v1688, 0
        %v2123 = vsel %vm1789, %v1690, 0
        %v2126 = vsel %vm1789, %v1692, 0
        %2128 = vmatprep.subr.bf16.mxu0 0
        %2129 = vmatpush1.bf16.xpose.msra.mxu0 %v2105
        %2130 = vmatprep.subr.bf16.mxu0 0
        %2131 = vmatpush1.bf16.xpose.msra.mxu0 %v2108
        %2132 = vmatprep.subr.bf16.mxu0 0
        %2133 = vmatpush1.bf16.xpose.msra.mxu0 %v2111
        %2134 = vmatprep.subr.bf16.mxu0 0
        %2135 = vmatpush1.bf16.xpose.msra.mxu0 %v2114
        %2136 = vmatprep.subr.bf16.mxu0 0
        %2137 = vmatpush1.bf16.xpose.msra.mxu0 %v2117
        %2138 = vmatprep.subr.bf16.mxu0 0
        %2139 = vmatpush1.bf16.xpose.msra.mxu0 %v2120
        %2140 = vmatprep.subr.bf16.mxu0 0
        %2141 = vmatpush1.bf16.xpose.msra.mxu0 %v2123
        %2142 = vmatprep.subr.bf16.mxu0 0
        %2143 = vmatpush1.bf16.xpose.msra.mxu0 %v2126
        %2144 = vmatprep.subr.bf16.mxu0 0
        %2145 = vmatpush1.bf16.xpose.msra.mxu0 0
        %2146 = vmatprep.subr.bf16.mxu0 0
        %2147 = vmatpush1.bf16.xpose.msra.mxu0 0
        %2148 = vmatprep.subr.bf16.mxu0 0
        %2149 = vmatpush1.bf16.xpose.msra.mxu0 0
        %2150 = vmatprep.subr.bf16.mxu0 0
        %2151 = vmatpush1.bf16.xpose.msra.mxu0 0
        %2152 = vmatprep.subr.bf16.mxu0 0
        %2153 = vmatpush1.bf16.xpose.msra.mxu0 0
        %2154 = vmatprep.subr.bf16.mxu0 0
        %2155 = vmatpush1.bf16.xpose.msra.mxu0 0
        %2156 = vmatprep.subr.bf16.mxu0 0
        %2157 = vmatpush1.bf16.xpose.msra.mxu0 0
        %2158 = vmatprep.subr.bf16.mxu0 0
        %2159 = vmatpush1.bf16.xpose.msra.mxu0 0
        %2160 = vmatprep.mubr.bf16.mxu0 0
        %2161 = vmatmul.mubr.bf16.gmra.mrb[0].mxu0 %v2081
        %v2162 = vpop.f32.mrb[0].mxu0
        %v2163 = vadd.f32 0.0, %v2162
        %v2164 = vpop.f32.mrb[0].mxu0
        %v2165 = vpop.f32.mrb[0].mxu0
        %v2166 = vadd.f32 0.0, %v2165
        %v2167 = vpop.f32.mrb[0].mxu0
        %2168 = vmatprep.mubr.bf16.mxu0 0
        %2169 = vmatmul.mubr.bf16.gmra.mrb[0].mxu0 %v2084
        %v2170 = vpop.f32.mrb[0].mxu0
        %v2171 = vadd.f32 0.0, %v2170
        %v2172 = vpop.f32.mrb[0].mxu0
        %v2173 = vpop.f32.mrb[0].mxu0
        %v2174 = vadd.f32 0.0, %v2173
        %v2175 = vpop.f32.mrb[0].mxu0
        %2176 = vmatprep.mubr.bf16.mxu0 0
        %2177 = vmatmul.mubr.bf16.gmra.mrb[0].mxu0 %v2087
        %v2178 = vpop.f32.mrb[0].mxu0
        %v2179 = vadd.f32 0.0, %v2178
        %v2180 = vpop.f32.mrb[0].mxu0
        %v2181 = vpop.f32.mrb[0].mxu0
        %v2182 = vadd.f32 0.0, %v2181
        %v2183 = vpop.f32.mrb[0].mxu0
        %2184 = vmatprep.mubr.bf16.mxu0 0
        %2185 = vmatmul.mubr.bf16.gmra.mrb[0].mxu0 %v2090
        %v2186 = vpop.f32.mrb[0].mxu0
        %v2187 = vadd.f32 0.0, %v2186
        %v2188 = vpop.f32.mrb[0].mxu0
        %v2189 = vpop.f32.mrb[0].mxu0
        %v2190 = vadd.f32 0.0, %v2189
        %v2191 = vpop.f32.mrb[0].mxu0
        %2192 = vmatprep.mubr.bf16.mxu0 0
        %2193 = vmatmul.mubr.bf16.gmra.mrb[0].mxu0 %v2093
        %v2194 = vpop.f32.mrb[0].mxu0
        %v2195 = vadd.f32 0.0, %v2194
        %v2196 = vpop.f32.mrb[0].mxu0
        %v2197 = vpop.f32.mrb[0].mxu0
        %v2198 = vadd.f32 0.0, %v2197
        %v2199 = vpop.f32.mrb[0].mxu0
        %2200 = vmatprep.mubr.bf16.mxu0 0
        %2201 = vmatmul.mubr.bf16.gmra.mrb[0].mxu0 %v2096
        %v2202 = vpop.f32.mrb[0].mxu0
        %v2203 = vadd.f32 0.0, %v2202
        %v2204 = vpop.f32.mrb[0].mxu0
        %v2205 = vpop.f32.mrb[0].mxu0
        %v2206 = vadd.f32 0.0, %v2205
        %v2207 = vpop.f32.mrb[0].mxu0
        %2208 = vmatprep.mubr.bf16.mxu0 0
        %2209 = vmatmul.mubr.bf16.gmra.mrb[0].mxu0 %v2099
        %v2210 = vpop.f32.mrb[0].mxu0
        %v2211 = vadd.f32 0.0, %v2210
        %v2212 = vpop.f32.mrb[0].mxu0
        %v2213 = vpop.f32.mrb[0].mxu0
        %v2214 = vadd.f32 0.0, %v2213
        %v2215 = vpop.f32.mrb[0].mxu0
        %2216 = vmatprep.mubr.bf16.mxu0 0
        %2217 = vmatmul.mubr.bf16.gmra.mrb[0].mxu0 %v2102
        %v2218 = vpop.f32.mrb[0].mxu0
        %v2219 = vadd.f32 0.0, %v2218
        %v2220 = vpop.f32.mrb[0].mxu0
        %v2221 = vpop.f32.mrb[0].mxu0
        %v2222 = vadd.f32 0.0, %v2221
        %v2223 = vpop.f32.mrb[0].mxu0
        %2224 = vdwg.mxu0
        %v2226 = vsel %vm1789, %v1638, 0
        %v2229 = vsel %vm1789, %v1640, 0
        %v2232 = vsel %vm1789, %v1642, 0
        %v2235 = vsel %vm1789, %v1644, 0
        %v2238 = vsel %vm1789, %v1646, 0
        %v2241 = vsel %vm1789, %v1648, 0
        %v2244 = vsel %vm1789, %v1650, 0
        %v2247 = vsel %vm1789, %v1652, 0
        %v2250 = vsel %vm1789, %v1694, 0
        %v2253 = vsel %vm1789, %v1696, 0
        %v2256 = vsel %vm1789, %v1698, 0
        %v2259 = vsel %vm1789, %v1700, 0
        %v2262 = vsel %vm1789, %v1702, 0
        %v2265 = vsel %vm1789, %v1704, 0
        %v2268 = vsel %vm1789, %v1706, 0
        %v2271 = vsel %vm1789, %v1708, 0
        %2273 = vmatprep.subr.bf16.mxu0 0
        %2274 = vmatpush1.bf16.xpose.msra.mxu0 %v2250
        %2275 = vmatprep.subr.bf16.mxu0 0
        %2276 = vmatpush1.bf16.xpose.msra.mxu0 %v2253
        %2277 = vmatprep.subr.bf16.mxu0 0
        %2278 = vmatpush1.bf16.xpose.msra.mxu0 %v2256
        %2279 = vmatprep.subr.bf16.mxu0 0
        %2280 = vmatpush1.bf16.xpose.msra.mxu0 %v2259
        %2281 = vmatprep.subr.bf16.mxu0 0
        %2282 = vmatpush1.bf16.xpose.msra.mxu0 %v2262
        %2283 = vmatprep.subr.bf16.mxu0 0
        %2284 = vmatpush1.bf16.xpose.msra.mxu0 %v2265
        %2285 = vmatprep.subr.bf16.mxu0 0
        %2286 = vmatpush1.bf16.xpose.msra.mxu0 %v2268
        %2287 = vmatprep.subr.bf16.mxu0 0
        %2288 = vmatpush1.bf16.xpose.msra.mxu0 %v2271
        %2289 = vmatprep.subr.bf16.mxu0 0
        %2290 = vmatpush1.bf16.xpose.msra.mxu0 0
        %2291 = vmatprep.subr.bf16.mxu0 0
        %2292 = vmatpush1.bf16.xpose.msra.mxu0 0
        %2293 = vmatprep.subr.bf16.mxu0 0
        %2294 = vmatpush1.bf16.xpose.msra.mxu0 0
        %2295 = vmatprep.subr.bf16.mxu0 0
        %2296 = vmatpush1.bf16.xpose.msra.mxu0 0
        %2297 = vmatprep.subr.bf16.mxu0 0
        %2298 = vmatpush1.bf16.xpose.msra.mxu0 0
        %2299 = vmatprep.subr.bf16.mxu0 0
        %2300 = vmatpush1.bf16.xpose.msra.mxu0 0
        %2301 = vmatprep.subr.bf16.mxu0 0
        %2302 = vmatpush1.bf16.xpose.msra.mxu0 0
        %2303 = vmatprep.subr.bf16.mxu0 0
        %2304 = vmatpush1.bf16.xpose.msra.mxu0 0
        %2305 = vmatprep.mubr.bf16.mxu0 0
        %2306 = vmatmul.mubr.bf16.gmra.mrb[0].mxu0 %v2226
        %v2307 = vpop.f32.mrb[0].mxu0
        %v2308 = vadd.f32 0.0, %v2307
        %v2309 = vpop.f32.mrb[0].mxu0
        %v2310 = vpop.f32.mrb[0].mxu0
        %v2311 = vadd.f32 0.0, %v2310
        %v2312 = vpop.f32.mrb[0].mxu0
        %2313 = vmatprep.mubr.bf16.mxu0 0
        %2314 = vmatmul.mubr.bf16.gmra.mrb[0].mxu0 %v2229
        %v2315 = vpop.f32.mrb[0].mxu0
        %v2316 = vadd.f32 0.0, %v2315
        %v2317 = vpop.f32.mrb[0].mxu0
        %v2318 = vpop.f32.mrb[0].mxu0
        %v2319 = vadd.f32 0.0, %v2318
        %v2320 = vpop.f32.mrb[0].mxu0
        %2321 = vmatprep.mubr.bf16.mxu0 0
        %2322 = vmatmul.mubr.bf16.gmra.mrb[0].mxu0 %v2232
        %v2323 = vpop.f32.mrb[0].mxu0
        %v2324 = vadd.f32 0.0, %v2323
        %v2325 = vpop.f32.mrb[0].mxu0
        %v2326 = vpop.f32.mrb[0].mxu0
        %v2327 = vadd.f32 0.0, %v2326
        %v2328 = vpop.f32.mrb[0].mxu0
        %2329 = vmatprep.mubr.bf16.mxu0 0
        %2330 = vmatmul.mubr.bf16.gmra.mrb[0].mxu0 %v2235
        %v2331 = vpop.f32.mrb[0].mxu0
        %v2332 = vadd.f32 0.0, %v2331
        %v2333 = vpop.f32.mrb[0].mxu0
        %v2334 = vpop.f32.mrb[0].mxu0
        %v2335 = vadd.f32 0.0, %v2334
        %v2336 = vpop.f32.mrb[0].mxu0
        %2337 = vmatprep.mubr.bf16.mxu0 0
        %2338 = vmatmul.mubr.bf16.gmra.mrb[0].mxu0 %v2238
        %v2339 = vpop.f32.mrb[0].mxu0
        %v2340 = vadd.f32 0.0, %v2339
        %v2341 = vpop.f32.mrb[0].mxu0
        %v2342 = vpop.f32.mrb[0].mxu0
        %v2343 = vadd.f32 0.0, %v2342
        %v2344 = vpop.f32.mrb[0].mxu0
        %2345 = vmatprep.mubr.bf16.mxu0 0
        %2346 = vmatmul.mubr.bf16.gmra.mrb[0].mxu0 %v2241
        %v2347 = vpop.f32.mrb[0].mxu0
        %v2348 = vadd.f32 0.0, %v2347
        %v2349 = vpop.f32.mrb[0].mxu0
        %v2350 = vpop.f32.mrb[0].mxu0
        %v2351 = vadd.f32 0.0, %v2350
        %v2352 = vpop.f32.mrb[0].mxu0
        %2353 = vmatprep.mubr.bf16.mxu0 0
        %2354 = vmatmul.mubr.bf16.gmra.mrb[0].mxu0 %v2244
        %v2355 = vpop.f32.mrb[0].mxu0
        %v2356 = vadd.f32 0.0, %v2355
        %v2357 = vpop.f32.mrb[0].mxu0
        %v2358 = vpop.f32.mrb[0].mxu0
        %v2359 = vadd.f32 0.0, %v2358
        %v2360 = vpop.f32.mrb[0].mxu0
        %2361 = vmatprep.mubr.bf16.mxu0 0
        %2362 = vmatmul.mubr.bf16.gmra.mrb[0].mxu0 %v2247
        %v2363 = vpop.f32.mrb[0].mxu0
        %v2364 = vadd.f32 0.0, %v2363
        %v2365 = vpop.f32.mrb[0].mxu0
        %v2366 = vpop.f32.mrb[0].mxu0
        %v2367 = vadd.f32 0.0, %v2366
        %v2368 = vpop.f32.mrb[0].mxu0
        %2369 = vdwg.mxu0
        %v2370 = vmul.f32 %v1873, 0.17677669
        %v2371 = vmul.f32 %v1876, 0.17677669
        %v2372 = vmul.f32 %v1881, 0.17677669
        %v2373 = vmul.f32 %v1884, 0.17677669
        %v2374 = vmul.f32 %v1889, 0.17677669
        %v2375 = vmul.f32 %v1892, 0.17677669
        %v2376 = vmul.f32 %v1897, 0.17677669
        %v2377 = vmul.f32 %v1900, 0.17677669
        %v2378 = vmul.f32 %v1905, 0.17677669
        %v2379 = vmul.f32 %v1908, 0.17677669
        %v2380 = vmul.f32 %v1913, 0.17677669
        %v2381 = vmul.f32 %v1916, 0.17677669
        %v2382 = vmul.f32 %v1921, 0.17677669
        %v2383 = vmul.f32 %v1924, 0.17677669
        %v2384 = vmul.f32 %v1929, 0.17677669
        %v2385 = vmul.f32 %v1932, 0.17677669
        %v2386 = vmul.f32 %v2018, 0.17677669
        %v2387 = vmul.f32 %v2021, 0.17677669
        %v2388 = vmul.f32 %v2026, 0.17677669
        %v2389 = vmul.f32 %v2029, 0.17677669
        %v2390 = vmul.f32 %v2034, 0.17677669
        %v2391 = vmul.f32 %v2037, 0.17677669
        %v2392 = vmul.f32 %v2042, 0.17677669
        %v2393 = vmul.f32 %v2045, 0.17677669
        %v2394 = vmul.f32 %v2050, 0.17677669
        %v2395 = vmul.f32 %v2053, 0.17677669
        %v2396 = vmul.f32 %v2058, 0.17677669
        %v2397 = vmul.f32 %v2061, 0.17677669
        %v2398 = vmul.f32 %v2066, 0.17677669
        %v2399 = vmul.f32 %v2069, 0.17677669
        %v2400 = vmul.f32 %v2074, 0.17677669
        %v2401 = vmul.f32 %v2077, 0.17677669
        %v2402 = vmul.f32 %v2163, 0.17677669
        %v2403 = vmul.f32 %v2166, 0.17677669
        %v2404 = vmul.f32 %v2171, 0.17677669
        %v2405 = vmul.f32 %v2174, 0.17677669
        %v2406 = vmul.f32 %v2179, 0.17677669
        %v2407 = vmul.f32 %v2182, 0.17677669
        %v2408 = vmul.f32 %v2187, 0.17677669
        %v2409 = vmul.f32 %v2190, 0.17677669
        %v2410 = vmul.f32 %v2195, 0.17677669
        %v2411 = vmul.f32 %v2198, 0.17677669
        %v2412 = vmul.f32 %v2203, 0.17677669
        %v2413 = vmul.f32 %v2206, 0.17677669
        %v2414 = vmul.f32 %v2211, 0.17677669
        %v2415 = vmul.f32 %v2214, 0.17677669
        %v2416 = vmul.f32 %v2219, 0.17677669
        %v2417 = vmul.f32 %v2222, 0.17677669
        %v2418 = vmul.f32 %v2308, 0.17677669
        %v2419 = vmul.f32 %v2311, 0.17677669
        %v2420 = vmul.f32 %v2316, 0.17677669
        %v2421 = vmul.f32 %v2319, 0.17677669
        %v2422 = vmul.f32 %v2324, 0.17677669
        %v2423 = vmul.f32 %v2327, 0.17677669
        %v2424 = vmul.f32 %v2332, 0.17677669
        %v2425 = vmul.f32 %v2335, 0.17677669
        %v2426 = vmul.f32 %v2340, 0.17677669
        %v2427 = vmul.f32 %v2343, 0.17677669
        %v2428 = vmul.f32 %v2348, 0.17677669
        %v2429 = vmul.f32 %v2351, 0.17677669
        %v2430 = vmul.f32 %v2356, 0.17677669
        %v2431 = vmul.f32 %v2359, 0.17677669
        %v2432 = vmul.f32 %v2364, 0.17677669
        %v2433 = vmul.f32 %v2367, 0.17677669
        %2434 = vmax.xlane.f32.xlu0 %v2370
        %v2435 = vpop.xlane.xlu0 %2434
        %2436 = vmax.xlane.f32.xlu0 %v2371
        %v2437 = vpop.xlane.xlu0 %2436
        %2438 = vmax.xlane.f32.xlu0 %v2372
        %v2439 = vpop.xlane.xlu0 %2438
        %2440 = vmax.xlane.f32.xlu0 %v2373
        %v2441 = vpop.xlane.xlu0 %2440
        %2442 = vmax.xlane.f32.xlu0 %v2374
        %v2443 = vpop.xlane.xlu0 %2442
        %2444 = vmax.xlane.f32.xlu0 %v2375
        %v2445 = vpop.xlane.xlu0 %2444
        %2446 = vmax.xlane.f32.xlu0 %v2376
        %v2447 = vpop.xlane.xlu0 %2446
        %2448 = vmax.xlane.f32.xlu0 %v2377
        %v2449 = vpop.xlane.xlu0 %2448
        %2450 = vmax.xlane.f32.xlu0 %v2378
        %v2451 = vpop.xlane.xlu0 %2450
        %2452 = vmax.xlane.f32.xlu0 %v2379
        %v2453 = vpop.xlane.xlu0 %2452
        %2454 = vmax.xlane.f32.xlu0 %v2380
        %v2455 = vpop.xlane.xlu0 %2454
        %2456 = vmax.xlane.f32.xlu0 %v2381
        %v2457 = vpop.xlane.xlu0 %2456
        %2458 = vmax.xlane.f32.xlu0 %v2382
        %v2459 = vpop.xlane.xlu0 %2458
        %2460 = vmax.xlane.f32.xlu0 %v2383
        %v2461 = vpop.xlane.xlu0 %2460
        %2462 = vmax.xlane.f32.xlu0 %v2384
        %v2463 = vpop.xlane.xlu0 %2462
        %2464 = vmax.xlane.f32.xlu0 %v2385
        %v2465 = vpop.xlane.xlu0 %2464
        %2466 = vmax.xlane.f32.xlu0 %v2386
        %v2467 = vpop.xlane.xlu0 %2466
        %2468 = vmax.xlane.f32.xlu0 %v2387
        %v2469 = vpop.xlane.xlu0 %2468
        %2470 = vmax.xlane.f32.xlu0 %v2388
        %v2471 = vpop.xlane.xlu0 %2470
        %2472 = vmax.xlane.f32.xlu0 %v2389
        %v2473 = vpop.xlane.xlu0 %2472
        %2474 = vmax.xlane.f32.xlu0 %v2390
        %v2475 = vpop.xlane.xlu0 %2474
        %2476 = vmax.xlane.f32.xlu0 %v2391
        %v2477 = vpop.xlane.xlu0 %2476
        %2478 = vmax.xlane.f32.xlu0 %v2392
        %v2479 = vpop.xlane.xlu0 %2478
        %2480 = vmax.xlane.f32.xlu0 %v2393
        %v2481 = vpop.xlane.xlu0 %2480
        %2482 = vmax.xlane.f32.xlu0 %v2394
        %v2483 = vpop.xlane.xlu0 %2482
        %2484 = vmax.xlane.f32.xlu0 %v2395
        %v2485 = vpop.xlane.xlu0 %2484
        %2486 = vmax.xlane.f32.xlu0 %v2396
        %v2487 = vpop.xlane.xlu0 %2486
        %2488 = vmax.xlane.f32.xlu0 %v2397
        %v2489 = vpop.xlane.xlu0 %2488
        %2490 = vmax.xlane.f32.xlu0 %v2398
        %v2491 = vpop.xlane.xlu0 %2490
        %2492 = vmax.xlane.f32.xlu0 %v2399
        %v2493 = vpop.xlane.xlu0 %2492
        %2494 = vmax.xlane.f32.xlu0 %v2400
        %v2495 = vpop.xlane.xlu0 %2494
        %2496 = vmax.xlane.f32.xlu0 %v2401
        %v2497 = vpop.xlane.xlu0 %2496
        %2498 = vmax.xlane.f32.xlu0 %v2402
        %v2499 = vpop.xlane.xlu0 %2498
        %2500 = vmax.xlane.f32.xlu0 %v2403
        %v2501 = vpop.xlane.xlu0 %2500
        %2502 = vmax.xlane.f32.xlu0 %v2404
        %v2503 = vpop.xlane.xlu0 %2502
        %2504 = vmax.xlane.f32.xlu0 %v2405
        %v2505 = vpop.xlane.xlu0 %2504
        %2506 = vmax.xlane.f32.xlu0 %v2406
        %v2507 = vpop.xlane.xlu0 %2506
        %2508 = vmax.xlane.f32.xlu0 %v2407
        %v2509 = vpop.xlane.xlu0 %2508
        %2510 = vmax.xlane.f32.xlu0 %v2408
        %v2511 = vpop.xlane.xlu0 %2510
        %2512 = vmax.xlane.f32.xlu0 %v2409
        %v2513 = vpop.xlane.xlu0 %2512
        %2514 = vmax.xlane.f32.xlu0 %v2410
        %v2515 = vpop.xlane.xlu0 %2514
        %2516 = vmax.xlane.f32.xlu0 %v2411
        %v2517 = vpop.xlane.xlu0 %2516
        %2518 = vmax.xlane.f32.xlu0 %v2412
        %v2519 = vpop.xlane.xlu0 %2518
        %2520 = vmax.xlane.f32.xlu0 %v2413
        %v2521 = vpop.xlane.xlu0 %2520
        %2522 = vmax.xlane.f32.xlu0 %v2414
        %v2523 = vpop.xlane.xlu0 %2522
        %2524 = vmax.xlane.f32.xlu0 %v2415
        %v2525 = vpop.xlane.xlu0 %2524
        %2526 = vmax.xlane.f32.xlu0 %v2416
        %v2527 = vpop.xlane.xlu0 %2526
        %2528 = vmax.xlane.f32.xlu0 %v2417
        %v2529 = vpop.xlane.xlu0 %2528
        %2530 = vmax.xlane.f32.xlu0 %v2418
        %v2531 = vpop.xlane.xlu0 %2530
        %2532 = vmax.xlane.f32.xlu0 %v2419
        %v2533 = vpop.xlane.xlu0 %2532
        %2534 = vmax.xlane.f32.xlu0 %v2420
        %v2535 = vpop.xlane.xlu0 %2534
        %2536 = vmax.xlane.f32.xlu0 %v2421
        %v2537 = vpop.xlane.xlu0 %2536
        %2538 = vmax.xlane.f32.xlu0 %v2422
        %v2539 = vpop.xlane.xlu0 %2538
        %2540 = vmax.xlane.f32.xlu0 %v2423
        %v2541 = vpop.xlane.xlu0 %2540
        %2542 = vmax.xlane.f32.xlu0 %v2424
        %v2543 = vpop.xlane.xlu0 %2542
        %2544 = vmax.xlane.f32.xlu0 %v2425
        %v2545 = vpop.xlane.xlu0 %2544
        %2546 = vmax.xlane.f32.xlu0 %v2426
        %v2547 = vpop.xlane.xlu0 %2546
        %2548 = vmax.xlane.f32.xlu0 %v2427
        %v2549 = vpop.xlane.xlu0 %2548
        %2550 = vmax.xlane.f32.xlu0 %v2428
        %v2551 = vpop.xlane.xlu0 %2550
        %2552 = vmax.xlane.f32.xlu0 %v2429
        %v2553 = vpop.xlane.xlu0 %2552
        %2554 = vmax.xlane.f32.xlu0 %v2430
        %v2555 = vpop.xlane.xlu0 %2554
        %2556 = vmax.xlane.f32.xlu0 %v2431
        %v2557 = vpop.xlane.xlu0 %2556
        %2558 = vmax.xlane.f32.xlu0 %v2432
        %v2559 = vpop.xlane.xlu0 %2558
        %2560 = vmax.xlane.f32.xlu0 %v2433
        %v2561 = vpop.xlane.xlu0 %2560
        %v2562 = vsub.f32 %v2370, %v2435
        %v2563 = vsub.f32 %v2371, %v2437
        %v2564 = vsub.f32 %v2372, %v2439
        %v2565 = vsub.f32 %v2373, %v2441
        %v2566 = vsub.f32 %v2374, %v2443
        %v2567 = vsub.f32 %v2375, %v2445
        %v2568 = vsub.f32 %v2376, %v2447
        %v2569 = vsub.f32 %v2377, %v2449
        %v2570 = vsub.f32 %v2378, %v2451
        %v2571 = vsub.f32 %v2379, %v2453
        %v2572 = vsub.f32 %v2380, %v2455
        %v2573 = vsub.f32 %v2381, %v2457
        %v2574 = vsub.f32 %v2382, %v2459
        %v2575 = vsub.f32 %v2383, %v2461
        %v2576 = vsub.f32 %v2384, %v2463
        %v2577 = vsub.f32 %v2385, %v2465
        %v2578 = vsub.f32 %v2386, %v2467
        %v2579 = vsub.f32 %v2387, %v2469
        %v2580 = vsub.f32 %v2388, %v2471
        %v2581 = vsub.f32 %v2389, %v2473
        %v2582 = vsub.f32 %v2390, %v2475
        %v2583 = vsub.f32 %v2391, %v2477
        %v2584 = vsub.f32 %v2392, %v2479
        %v2585 = vsub.f32 %v2393, %v2481
        %v2586 = vsub.f32 %v2394, %v2483
        %v2587 = vsub.f32 %v2395, %v2485
        %v2588 = vsub.f32 %v2396, %v2487
        %v2589 = vsub.f32 %v2397, %v2489
        %v2590 = vsub.f32 %v2398, %v2491
        %v2591 = vsub.f32 %v2399, %v2493
        %v2592 = vsub.f32 %v2400, %v2495
        %v2593 = vsub.f32 %v2401, %v2497
        %v2594 = vsub.f32 %v2402, %v2499
        %v2595 = vsub.f32 %v2403, %v2501
        %v2596 = vsub.f32 %v2404, %v2503
        %v2597 = vsub.f32 %v2405, %v2505
        %v2598 = vsub.f32 %v2406, %v2507
        %v2599 = vsub.f32 %v2407, %v2509
        %v2600 = vsub.f32 %v2408, %v2511
        %v2601 = vsub.f32 %v2409, %v2513
        %v2602 = vsub.f32 %v2410, %v2515
        %v2603 = vsub.f32 %v2411, %v2517
        %v2604 = vsub.f32 %v2412, %v2519
        %v2605 = vsub.f32 %v2413, %v2521
        %v2606 = vsub.f32 %v2414, %v2523
        %v2607 = vsub.f32 %v2415, %v2525
        %v2608 = vsub.f32 %v2416, %v2527
        %v2609 = vsub.f32 %v2417, %v2529
        %v2610 = vsub.f32 %v2418, %v2531
        %v2611 = vsub.f32 %v2419, %v2533
        %v2612 = vsub.f32 %v2420, %v2535
        %v2613 = vsub.f32 %v2421, %v2537
        %v2614 = vsub.f32 %v2422, %v2539
        %v2615 = vsub.f32 %v2423, %v2541
        %v2616 = vsub.f32 %v2424, %v2543
        %v2617 = vsub.f32 %v2425, %v2545
        %v2618 = vsub.f32 %v2426, %v2547
        %v2619 = vsub.f32 %v2427, %v2549
        %v2620 = vsub.f32 %v2428, %v2551
        %v2621 = vsub.f32 %v2429, %v2553
        %v2622 = vsub.f32 %v2430, %v2555
        %v2623 = vsub.f32 %v2431, %v2557
        %v2624 = vsub.f32 %v2432, %v2559
        %v2625 = vsub.f32 %v2433, %v2561
        %v2626 = vmul.f32 %v2562, 1.442695
        %v2627 = vpow.pop %v2626
        %v2628 = vmul.f32 %v2563, 1.442695
        %v2629 = vpow.pop %v2628
        %v2630 = vmul.f32 %v2564, 1.442695
        %v2631 = vpow.pop %v2630
        %v2632 = vmul.f32 %v2565, 1.442695
        %v2633 = vpow.pop %v2632
        %v2634 = vmul.f32 %v2566, 1.442695
        %v2635 = vpow.pop %v2634
        %v2636 = vmul.f32 %v2567, 1.442695
        %v2637 = vpow.pop %v2636
        %v2638 = vmul.f32 %v2568, 1.442695
        %v2639 = vpow.pop %v2638
        %v2640 = vmul.f32 %v2569, 1.442695
        %v2641 = vpow.pop %v2640
        %v2642 = vmul.f32 %v2570, 1.442695
        %v2643 = vpow.pop %v2642
        %v2644 = vmul.f32 %v2571, 1.442695
        %v2645 = vpow.pop %v2644
        %v2646 = vmul.f32 %v2572, 1.442695
        %v2647 = vpow.pop %v2646
        %v2648 = vmul.f32 %v2573, 1.442695
        %v2649 = vpow.pop %v2648
        %v2650 = vmul.f32 %v2574, 1.442695
        %v2651 = vpow.pop %v2650
        %v2652 = vmul.f32 %v2575, 1.442695
        %v2653 = vpow.pop %v2652
        %v2654 = vmul.f32 %v2576, 1.442695
        %v2655 = vpow.pop %v2654
        %v2656 = vmul.f32 %v2577, 1.442695
        %v2657 = vpow.pop %v2656
        %v2658 = vmul.f32 %v2578, 1.442695
        %v2659 = vpow.pop %v2658
        %v2660 = vmul.f32 %v2579, 1.442695
        %v2661 = vpow.pop %v2660
        %v2662 = vmul.f32 %v2580, 1.442695
        %v2663 = vpow.pop %v2662
        %v2664 = vmul.f32 %v2581, 1.442695
        %v2665 = vpow.pop %v2664
        %v2666 = vmul.f32 %v2582, 1.442695
        %v2667 = vpow.pop %v2666
        %v2668 = vmul.f32 %v2583, 1.442695
        %v2669 = vpow.pop %v2668
        %v2670 = vmul.f32 %v2584, 1.442695
        %v2671 = vpow.pop %v2670
        %v2672 = vmul.f32 %v2585, 1.442695
        %v2673 = vpow.pop %v2672
        %v2674 = vmul.f32 %v2586, 1.442695
        %v2675 = vpow.pop %v2674
        %v2676 = vmul.f32 %v2587, 1.442695
        %v2677 = vpow.pop %v2676
        %v2678 = vmul.f32 %v2588, 1.442695
        %v2679 = vpow.pop %v2678
        %v2680 = vmul.f32 %v2589, 1.442695
        %v2681 = vpow.pop %v2680
        %v2682 = vmul.f32 %v2590, 1.442695
        %v2683 = vpow.pop %v2682
        %v2684 = vmul.f32 %v2591, 1.442695
        %v2685 = vpow.pop %v2684
        %v2686 = vmul.f32 %v2592, 1.442695
        %v2687 = vpow.pop %v2686
        %v2688 = vmul.f32 %v2593, 1.442695
        %v2689 = vpow.pop %v2688
        %v2690 = vmul.f32 %v2594, 1.442695
        %v2691 = vpow.pop %v2690
        %v2692 = vmul.f32 %v2595, 1.442695
        %v2693 = vpow.pop %v2692
        %v2694 = vmul.f32 %v2596, 1.442695
        %v2695 = vpow.pop %v2694
        %v2696 = vmul.f32 %v2597, 1.442695
        %v2697 = vpow.pop %v2696
        %v2698 = vmul.f32 %v2598, 1.442695
        %v2699 = vpow.pop %v2698
        %v2700 = vmul.f32 %v2599, 1.442695
        %v2701 = vpow.pop %v2700
        %v2702 = vmul.f32 %v2600, 1.442695
        %v2703 = vpow.pop %v2702
        %v2704 = vmul.f32 %v2601, 1.442695
        %v2705 = vpow.pop %v2704
        %v2706 = vmul.f32 %v2602, 1.442695
        %v2707 = vpow.pop %v2706
        %v2708 = vmul.f32 %v2603, 1.442695
        %v2709 = vpow.pop %v2708
        %v2710 = vmul.f32 %v2604, 1.442695
        %v2711 = vpow.pop %v2710
        %v2712 = vmul.f32 %v2605, 1.442695
        %v2713 = vpow.pop %v2712
        %v2714 = vmul.f32 %v2606, 1.442695
        %v2715 = vpow.pop %v2714
        %v2716 = vmul.f32 %v2607, 1.442695
        %v2717 = vpow.pop %v2716
        %v2718 = vmul.f32 %v2608, 1.442695
        %v2719 = vpow.pop %v2718
        %v2720 = vmul.f32 %v2609, 1.442695
        %v2721 = vpow.pop %v2720
        %v2722 = vmul.f32 %v2610, 1.442695
        %v2723 = vpow.pop %v2722
        %v2724 = vmul.f32 %v2611, 1.442695
        %v2725 = vpow.pop %v2724
        %v2726 = vmul.f32 %v2612, 1.442695
        %v2727 = vpow.pop %v2726
        %v2728 = vmul.f32 %v2613, 1.442695
        %v2729 = vpow.pop %v2728
        %v2730 = vmul.f32 %v2614, 1.442695
        %v2731 = vpow.pop %v2730
        %v2732 = vmul.f32 %v2615, 1.442695
        %v2733 = vpow.pop %v2732
        %v2734 = vmul.f32 %v2616, 1.442695
        %v2735 = vpow.pop %v2734
        %v2736 = vmul.f32 %v2617, 1.442695
        %v2737 = vpow.pop %v2736
        %v2738 = vmul.f32 %v2618, 1.442695
        %v2739 = vpow.pop %v2738
        %v2740 = vmul.f32 %v2619, 1.442695
        %v2741 = vpow.pop %v2740
        %v2742 = vmul.f32 %v2620, 1.442695
        %v2743 = vpow.pop %v2742
        %v2744 = vmul.f32 %v2621, 1.442695
        %v2745 = vpow.pop %v2744
        %v2746 = vmul.f32 %v2622, 1.442695
        %v2747 = vpow.pop %v2746
        %v2748 = vmul.f32 %v2623, 1.442695
        %v2749 = vpow.pop %v2748
        %v2750 = vmul.f32 %v2624, 1.442695
        %v2751 = vpow.pop %v2750
        %v2752 = vmul.f32 %v2625, 1.442695
        %v2753 = vpow.pop %v2752
        %2754 = vadd.xlane.f32.xlu0 %v2627
        %v2755 = vpop.xlane.xlu0 %2754
        %2756 = vadd.xlane.f32.xlu0 %v2629
        %v2757 = vpop.xlane.xlu0 %2756
        %2758 = vadd.xlane.f32.xlu0 %v2631
        %v2759 = vpop.xlane.xlu0 %2758
        %2760 = vadd.xlane.f32.xlu0 %v2633
        %v2761 = vpop.xlane.xlu0 %2760
        %2762 = vadd.xlane.f32.xlu0 %v2635
        %v2763 = vpop.xlane.xlu0 %2762
        %2764 = vadd.xlane.f32.xlu0 %v2637
        %v2765 = vpop.xlane.xlu0 %2764
        %2766 = vadd.xlane.f32.xlu0 %v2639
        %v2767 = vpop.xlane.xlu0 %2766
        %2768 = vadd.xlane.f32.xlu0 %v2641
        %v2769 = vpop.xlane.xlu0 %2768
        %2770 = vadd.xlane.f32.xlu0 %v2643
        %v2771 = vpop.xlane.xlu0 %2770
        %2772 = vadd.xlane.f32.xlu0 %v2645
        %v2773 = vpop.xlane.xlu0 %2772
        %2774 = vadd.xlane.f32.xlu0 %v2647
        %v2775 = vpop.xlane.xlu0 %2774
        %2776 = vadd.xlane.f32.xlu0 %v2649
        %v2777 = vpop.xlane.xlu0 %2776
        %2778 = vadd.xlane.f32.xlu0 %v2651
        %v2779 = vpop.xlane.xlu0 %2778
        %2780 = vadd.xlane.f32.xlu0 %v2653
        %v2781 = vpop.xlane.xlu0 %2780
        %2782 = vadd.xlane.f32.xlu0 %v2655
        %v2783 = vpop.xlane.xlu0 %2782
        %2784 = vadd.xlane.f32.xlu0 %v2657
        %v2785 = vpop.xlane.xlu0 %2784
        %2786 = vadd.xlane.f32.xlu0 %v2659
        %v2787 = vpop.xlane.xlu0 %2786
        %2788 = vadd.xlane.f32.xlu0 %v2661
        %v2789 = vpop.xlane.xlu0 %2788
        %2790 = vadd.xlane.f32.xlu0 %v2663
        %v2791 = vpop.xlane.xlu0 %2790
        %2792 = vadd.xlane.f32.xlu0 %v2665
        %v2793 = vpop.xlane.xlu0 %2792
        %2794 = vadd.xlane.f32.xlu0 %v2667
        %v2795 = vpop.xlane.xlu0 %2794
        %2796 = vadd.xlane.f32.xlu0 %v2669
        %v2797 = vpop.xlane.xlu0 %2796
        %2798 = vadd.xlane.f32.xlu0 %v2671
        %v2799 = vpop.xlane.xlu0 %2798
        %2800 = vadd.xlane.f32.xlu0 %v2673
        %v2801 = vpop.xlane.xlu0 %2800
        %2802 = vadd.xlane.f32.xlu0 %v2675
        %v2803 = vpop.xlane.xlu0 %2802
        %2804 = vadd.xlane.f32.xlu0 %v2677
        %v2805 = vpop.xlane.xlu0 %2804
        %2806 = vadd.xlane.f32.xlu0 %v2679
        %v2807 = vpop.xlane.xlu0 %2806
        %2808 = vadd.xlane.f32.xlu0 %v2681
        %v2809 = vpop.xlane.xlu0 %2808
        %2810 = vadd.xlane.f32.xlu0 %v2683
        %v2811 = vpop.xlane.xlu0 %2810
        %2812 = vadd.xlane.f32.xlu0 %v2685
        %v2813 = vpop.xlane.xlu0 %2812
        %2814 = vadd.xlane.f32.xlu0 %v2687
        %v2815 = vpop.xlane.xlu0 %2814
        %2816 = vadd.xlane.f32.xlu0 %v2689
        %v2817 = vpop.xlane.xlu0 %2816
        %2818 = vadd.xlane.f32.xlu0 %v2691
        %v2819 = vpop.xlane.xlu0 %2818
        %2820 = vadd.xlane.f32.xlu0 %v2693
        %v2821 = vpop.xlane.xlu0 %2820
        %2822 = vadd.xlane.f32.xlu0 %v2695
        %v2823 = vpop.xlane.xlu0 %2822
        %2824 = vadd.xlane.f32.xlu0 %v2697
        %v2825 = vpop.xlane.xlu0 %2824
        %2826 = vadd.xlane.f32.xlu0 %v2699
        %v2827 = vpop.xlane.xlu0 %2826
        %2828 = vadd.xlane.f32.xlu0 %v2701
        %v2829 = vpop.xlane.xlu0 %2828
        %2830 = vadd.xlane.f32.xlu0 %v2703
        %v2831 = vpop.xlane.xlu0 %2830
        %2832 = vadd.xlane.f32.xlu0 %v2705
        %v2833 = vpop.xlane.xlu0 %2832
        %2834 = vadd.xlane.f32.xlu0 %v2707
        %v2835 = vpop.xlane.xlu0 %2834
        %2836 = vadd.xlane.f32.xlu0 %v2709
        %v2837 = vpop.xlane.xlu0 %2836
        %2838 = vadd.xlane.f32.xlu0 %v2711
        %v2839 = vpop.xlane.xlu0 %2838
        %2840 = vadd.xlane.f32.xlu0 %v2713
        %v2841 = vpop.xlane.xlu0 %2840
        %2842 = vadd.xlane.f32.xlu0 %v2715
        %v2843 = vpop.xlane.xlu0 %2842
        %2844 = vadd.xlane.f32.xlu0 %v2717
        %v2845 = vpop.xlane.xlu0 %2844
        %2846 = vadd.xlane.f32.xlu0 %v2719
        %v2847 = vpop.xlane.xlu0 %2846
        %2848 = vadd.xlane.f32.xlu0 %v2721
        %v2849 = vpop.xlane.xlu0 %2848
        %2850 = vadd.xlane.f32.xlu0 %v2723
        %v2851 = vpop.xlane.xlu0 %2850
        %2852 = vadd.xlane.f32.xlu0 %v2725
        %v2853 = vpop.xlane.xlu0 %2852
        %2854 = vadd.xlane.f32.xlu0 %v2727
        %v2855 = vpop.xlane.xlu0 %2854
        %2856 = vadd.xlane.f32.xlu0 %v2729
        %v2857 = vpop.xlane.xlu0 %2856
        %2858 = vadd.xlane.f32.xlu0 %v2731
        %v2859 = vpop.xlane.xlu0 %2858
        %2860 = vadd.xlane.f32.xlu0 %v2733
        %v2861 = vpop.xlane.xlu0 %2860
        %2862 = vadd.xlane.f32.xlu0 %v2735
        %v2863 = vpop.xlane.xlu0 %2862
        %2864 = vadd.xlane.f32.xlu0 %v2737
        %v2865 = vpop.xlane.xlu0 %2864
        %2866 = vadd.xlane.f32.xlu0 %v2739
        %v2867 = vpop.xlane.xlu0 %2866
        %2868 = vadd.xlane.f32.xlu0 %v2741
        %v2869 = vpop.xlane.xlu0 %2868
        %2870 = vadd.xlane.f32.xlu0 %v2743
        %v2871 = vpop.xlane.xlu0 %2870
        %2872 = vadd.xlane.f32.xlu0 %v2745
        %v2873 = vpop.xlane.xlu0 %2872
        %2874 = vadd.xlane.f32.xlu0 %v2747
        %v2875 = vpop.xlane.xlu0 %2874
        %2876 = vadd.xlane.f32.xlu0 %v2749
        %v2877 = vpop.xlane.xlu0 %2876
        %2878 = vadd.xlane.f32.xlu0 %v2751
        %v2879 = vpop.xlane.xlu0 %2878
        %2880 = vadd.xlane.f32.xlu0 %v2753
        %v2881 = vpop.xlane.xlu0 %2880
        %v2882 = vrcp.pop %v2755
        %v2883 = vrcp.pop %v2757
        %v2884 = vrcp.pop %v2759
        %v2885 = vrcp.pop %v2761
        %v2886 = vrcp.pop %v2763
        %v2887 = vrcp.pop %v2765
        %v2888 = vrcp.pop %v2767
        %v2889 = vrcp.pop %v2769
        %v2890 = vrcp.pop %v2771
        %v2891 = vrcp.pop %v2773
        %v2892 = vrcp.pop %v2775
        %v2893 = vrcp.pop %v2777
        %v2894 = vrcp.pop %v2779
        %v2895 = vrcp.pop %v2781
        %v2896 = vrcp.pop %v2783
        %v2897 = vrcp.pop %v2785
        %v2898 = vrcp.pop %v2787
        %v2899 = vrcp.pop %v2789
        %v2900 = vrcp.pop %v2791
        %v2901 = vrcp.pop %v2793
        %v2902 = vrcp.pop %v2795
        %v2903 = vrcp.pop %v2797
        %v2904 = vrcp.pop %v2799
        %v2905 = vrcp.pop %v2801
        %v2906 = vrcp.pop %v2803
        %v2907 = vrcp.pop %v2805
        %v2908 = vrcp.pop %v2807
        %v2909 = vrcp.pop %v2809
        %v2910 = vrcp.pop %v2811
        %v2911 = vrcp.pop %v2813
        %v2912 = vrcp.pop %v2815
        %v2913 = vrcp.pop %v2817
        %v2914 = vrcp.pop %v2819
        %v2915 = vrcp.pop %v2821
        %v2916 = vrcp.pop %v2823
        %v2917 = vrcp.pop %v2825
        %v2918 = vrcp.pop %v2827
        %v2919 = vrcp.pop %v2829
        %v2920 = vrcp.pop %v2831
        %v2921 = vrcp.pop %v2833
        %v2922 = vrcp.pop %v2835
        %v2923 = vrcp.pop %v2837
        %v2924 = vrcp.pop %v2839
        %v2925 = vrcp.pop %v2841
        %v2926 = vrcp.pop %v2843
        %v2927 = vrcp.pop %v2845
        %v2928 = vrcp.pop %v2847
        %v2929 = vrcp.pop %v2849
        %v2930 = vrcp.pop %v2851
        %v2931 = vrcp.pop %v2853
        %v2932 = vrcp.pop %v2855
        %v2933 = vrcp.pop %v2857
        %v2934 = vrcp.pop %v2859
        %v2935 = vrcp.pop %v2861
        %v2936 = vrcp.pop %v2863
        %v2937 = vrcp.pop %v2865
        %v2938 = vrcp.pop %v2867
        %v2939 = vrcp.pop %v2869
        %v2940 = vrcp.pop %v2871
        %v2941 = vrcp.pop %v2873
        %v2942 = vrcp.pop %v2875
        %v2943 = vrcp.pop %v2877
        %v2944 = vrcp.pop %v2879
        %v2945 = vrcp.pop %v2881
        %v2946 = vmul.f32 %v2627, %v2882
        %v2947 = vmul.f32 %v2629, %v2883
        %v2948 = vmul.f32 %v2631, %v2884
        %v2949 = vmul.f32 %v2633, %v2885
        %v2950 = vmul.f32 %v2635, %v2886
        %v2951 = vmul.f32 %v2637, %v2887
        %v2952 = vmul.f32 %v2639, %v2888
        %v2953 = vmul.f32 %v2641, %v2889
        %v2954 = vmul.f32 %v2643, %v2890
        %v2955 = vmul.f32 %v2645, %v2891
        %v2956 = vmul.f32 %v2647, %v2892
        %v2957 = vmul.f32 %v2649, %v2893
        %v2958 = vmul.f32 %v2651, %v2894
        %v2959 = vmul.f32 %v2653, %v2895
        %v2960 = vmul.f32 %v2655, %v2896
        %v2961 = vmul.f32 %v2657, %v2897
        %v2962 = vmul.f32 %v2659, %v2898
        %v2963 = vmul.f32 %v2661, %v2899
        %v2964 = vmul.f32 %v2663, %v2900
        %v2965 = vmul.f32 %v2665, %v2901
        %v2966 = vmul.f32 %v2667, %v2902
        %v2967 = vmul.f32 %v2669, %v2903
        %v2968 = vmul.f32 %v2671, %v2904
        %v2969 = vmul.f32 %v2673, %v2905
        %v2970 = vmul.f32 %v2675, %v2906
        %v2971 = vmul.f32 %v2677, %v2907
        %v2972 = vmul.f32 %v2679, %v2908
        %v2973 = vmul.f32 %v2681, %v2909
        %v2974 = vmul.f32 %v2683, %v2910
        %v2975 = vmul.f32 %v2685, %v2911
        %v2976 = vmul.f32 %v2687, %v2912
        %v2977 = vmul.f32 %v2689, %v2913
        %v2978 = vmul.f32 %v2691, %v2914
        %v2979 = vmul.f32 %v2693, %v2915
        %v2980 = vmul.f32 %v2695, %v2916
        %v2981 = vmul.f32 %v2697, %v2917
        %v2982 = vmul.f32 %v2699, %v2918
        %v2983 = vmul.f32 %v2701, %v2919
        %v2984 = vmul.f32 %v2703, %v2920
        %v2985 = vmul.f32 %v2705, %v2921
        %v2986 = vmul.f32 %v2707, %v2922
        %v2987 = vmul.f32 %v2709, %v2923
        %v2988 = vmul.f32 %v2711, %v2924
        %v2989 = vmul.f32 %v2713, %v2925
        %v2990 = vmul.f32 %v2715, %v2926
        %v2991 = vmul.f32 %v2717, %v2927
        %v2992 = vmul.f32 %v2719, %v2928
        %v2993 = vmul.f32 %v2721, %v2929
        %v2994 = vmul.f32 %v2723, %v2930
        %v2995 = vmul.f32 %v2725, %v2931
        %v2996 = vmul.f32 %v2727, %v2932
        %v2997 = vmul.f32 %v2729, %v2933
        %v2998 = vmul.f32 %v2731, %v2934
        %v2999 = vmul.f32 %v2733, %v2935
        %v3000 = vmul.f32 %v2735, %v2936
        %v3001 = vmul.f32 %v2737, %v2937
        %v3002 = vmul.f32 %v2739, %v2938
        %v3003 = vmul.f32 %v2741, %v2939
        %v3004 = vmul.f32 %v2743, %v2940
        %v3005 = vmul.f32 %v2745, %v2941
        %v3006 = vmul.f32 %v2747, %v2942
        %v3007 = vmul.f32 %v2749, %v2943
        %v3008 = vmul.f32 %v2751, %v2944
        %v3009 = vmul.f32 %v2753, %v2945
        %v3010 = vpack.c.bf16 %v2947, %v2946
        %v3011 = vpack.c.bf16 %v2949, %v2948
        %v3012 = vpack.c.bf16 %v2951, %v2950
        %v3013 = vpack.c.bf16 %v2953, %v2952
        %v3014 = vpack.c.bf16 %v2955, %v2954
        %v3015 = vpack.c.bf16 %v2957, %v2956
        %v3016 = vpack.c.bf16 %v2959, %v2958
        %v3017 = vpack.c.bf16 %v2961, %v2960
        %v3018 = vpack.c.bf16 %v2963, %v2962
        %v3019 = vpack.c.bf16 %v2965, %v2964
        %v3020 = vpack.c.bf16 %v2967, %v2966
        %v3021 = vpack.c.bf16 %v2969, %v2968
        %v3022 = vpack.c.bf16 %v2971, %v2970
        %v3023 = vpack.c.bf16 %v2973, %v2972
        %v3024 = vpack.c.bf16 %v2975, %v2974
        %v3025 = vpack.c.bf16 %v2977, %v2976
        %v3026 = vpack.c.bf16 %v2979, %v2978
        %v3027 = vpack.c.bf16 %v2981, %v2980
        %v3028 = vpack.c.bf16 %v2983, %v2982
        %v3029 = vpack.c.bf16 %v2985, %v2984
        %v3030 = vpack.c.bf16 %v2987, %v2986
        %v3031 = vpack.c.bf16 %v2989, %v2988
        %v3032 = vpack.c.bf16 %v2991, %v2990
        %v3033 = vpack.c.bf16 %v2993, %v2992
        %v3034 = vpack.c.bf16 %v2995, %v2994
        %v3035 = vpack.c.bf16 %v2997, %v2996
        %v3036 = vpack.c.bf16 %v2999, %v2998
        %v3037 = vpack.c.bf16 %v3001, %v3000
        %v3038 = vpack.c.bf16 %v3003, %v3002
        %v3039 = vpack.c.bf16 %v3005, %v3004
        %v3040 = vpack.c.bf16 %v3007, %v3006
        %v3041 = vpack.c.bf16 %v3009, %v3008
        %3042 = vmatprep.subr.bf16.mxu0 0
        %3043 = vmatpush1.bf16.msra.mxu0 %v1551
        %3044 = vmatprep.subr.bf16.mxu0 0
        %3045 = vmatpush1.bf16.msra.mxu0 %v1554
        %3046 = vmatprep.subr.bf16.mxu0 0
        %3047 = vmatpush1.bf16.msra.mxu0 %v1557
        %3048 = vmatprep.subr.bf16.mxu0 0
        %3049 = vmatpush1.bf16.msra.mxu0 %v1560
        %3050 = vmatprep.subr.bf16.mxu0 0
        %3051 = vmatpush1.bf16.msra.mxu0 %v1563
        %3052 = vmatprep.subr.bf16.mxu0 0
        %3053 = vmatpush1.bf16.msra.mxu0 %v1566
        %3054 = vmatprep.subr.bf16.mxu0 0
        %3055 = vmatpush1.bf16.msra.mxu0 %v1569
        %3056 = vmatprep.subr.bf16.mxu0 0
        %3057 = vmatpush1.bf16.msra.mxu0 %v1572
        %3058 = vmatprep.subr.bf16.mxu0 0
        %3059 = vmatpush1.bf16.msra.mxu0 0
        %3060 = vmatprep.subr.bf16.mxu0 0
        %3061 = vmatpush1.bf16.msra.mxu0 0
        %3062 = vmatprep.subr.bf16.mxu0 0
        %3063 = vmatpush1.bf16.msra.mxu0 0
        %3064 = vmatprep.subr.bf16.mxu0 0
        %3065 = vmatpush1.bf16.msra.mxu0 0
        %3066 = vmatprep.subr.bf16.mxu0 0
        %3067 = vmatpush1.bf16.msra.mxu0 0
        %3068 = vmatprep.subr.bf16.mxu0 0
        %3069 = vmatpush1.bf16.msra.mxu0 0
        %3070 = vmatprep.subr.bf16.mxu0 0
        %3071 = vmatpush1.bf16.msra.mxu0 0
        %3072 = vmatprep.subr.bf16.mxu0 0
        %3073 = vmatpush1.bf16.msra.mxu0 0
        %3074 = vmatprep.mubr.bf16.mxu0 0
        %3075 = vmatmul.mubr.bf16.gmra.mrb[0].mxu0 %v3010
        %v3076 = vpop.f32.mrb[0].mxu0
        %v3077 = vadd.f32 0.0, %v3076
        %v3078 = vpop.f32.mrb[0].mxu0
        %v3079 = vpop.f32.mrb[0].mxu0
        %v3080 = vadd.f32 0.0, %v3079
        %v3081 = vpop.f32.mrb[0].mxu0
        %3082 = vmatprep.mubr.bf16.mxu0 0
        %3083 = vmatmul.mubr.bf16.gmra.mrb[0].mxu0 %v3011
        %v3084 = vpop.f32.mrb[0].mxu0
        %v3085 = vadd.f32 0.0, %v3084
        %v3086 = vpop.f32.mrb[0].mxu0
        %v3087 = vpop.f32.mrb[0].mxu0
        %v3088 = vadd.f32 0.0, %v3087
        %v3089 = vpop.f32.mrb[0].mxu0
        %3090 = vmatprep.mubr.bf16.mxu0 0
        %3091 = vmatmul.mubr.bf16.gmra.mrb[0].mxu0 %v3012
        %v3092 = vpop.f32.mrb[0].mxu0
        %v3093 = vadd.f32 0.0, %v3092
        %v3094 = vpop.f32.mrb[0].mxu0
        %v3095 = vpop.f32.mrb[0].mxu0
        %v3096 = vadd.f32 0.0, %v3095
        %v3097 = vpop.f32.mrb[0].mxu0
        %3098 = vmatprep.mubr.bf16.mxu0 0
        %3099 = vmatmul.mubr.bf16.gmra.mrb[0].mxu0 %v3013
        %v3100 = vpop.f32.mrb[0].mxu0
        %v3101 = vadd.f32 0.0, %v3100
        %v3102 = vpop.f32.mrb[0].mxu0
        %v3103 = vpop.f32.mrb[0].mxu0
        %v3104 = vadd.f32 0.0, %v3103
        %v3105 = vpop.f32.mrb[0].mxu0
        %3106 = vmatprep.mubr.bf16.mxu0 0
        %3107 = vmatmul.mubr.bf16.gmra.mrb[0].mxu0 %v3014
        %v3108 = vpop.f32.mrb[0].mxu0
        %v3109 = vadd.f32 0.0, %v3108
        %v3110 = vpop.f32.mrb[0].mxu0
        %v3111 = vpop.f32.mrb[0].mxu0
        %v3112 = vadd.f32 0.0, %v3111
        %v3113 = vpop.f32.mrb[0].mxu0
        %3114 = vmatprep.mubr.bf16.mxu0 0
        %3115 = vmatmul.mubr.bf16.gmra.mrb[0].mxu0 %v3015
        %v3116 = vpop.f32.mrb[0].mxu0
        %v3117 = vadd.f32 0.0, %v3116
        %v3118 = vpop.f32.mrb[0].mxu0
        %v3119 = vpop.f32.mrb[0].mxu0
        %v3120 = vadd.f32 0.0, %v3119
        %v3121 = vpop.f32.mrb[0].mxu0
        %3122 = vmatprep.mubr.bf16.mxu0 0
        %3123 = vmatmul.mubr.bf16.gmra.mrb[0].mxu0 %v3016
        %v3124 = vpop.f32.mrb[0].mxu0
        %v3125 = vadd.f32 0.0, %v3124
        %v3126 = vpop.f32.mrb[0].mxu0
        %v3127 = vpop.f32.mrb[0].mxu0
        %v3128 = vadd.f32 0.0, %v3127
        %v3129 = vpop.f32.mrb[0].mxu0
        %3130 = vmatprep.mubr.bf16.mxu0 0
        %3131 = vmatmul.mubr.bf16.gmra.mrb[0].mxu0 %v3017
        %v3132 = vpop.f32.mrb[0].mxu0
        %v3133 = vadd.f32 0.0, %v3132
        %v3134 = vpop.f32.mrb[0].mxu0
        %v3135 = vpop.f32.mrb[0].mxu0
        %v3136 = vadd.f32 0.0, %v3135
        %v3137 = vpop.f32.mrb[0].mxu0
        %3138 = vdwg.mxu0
        %3139 = vmatprep.subr.bf16.mxu0 0
        %3140 = vmatpush1.bf16.msra.mxu0 %v1718
        %3141 = vmatprep.subr.bf16.mxu0 0
        %3142 = vmatpush1.bf16.msra.mxu0 %v1720
        %3143 = vmatprep.subr.bf16.mxu0 0
        %3144 = vmatpush1.bf16.msra.mxu0 %v1722
        %3145 = vmatprep.subr.bf16.mxu0 0
        %3146 = vmatpush1.bf16.msra.mxu0 %v1724
        %3147 = vmatprep.subr.bf16.mxu0 0
        %3148 = vmatpush1.bf16.msra.mxu0 %v1726
        %3149 = vmatprep.subr.bf16.mxu0 0
        %3150 = vmatpush1.bf16.msra.mxu0 %v1728
        %3151 = vmatprep.subr.bf16.mxu0 0
        %3152 = vmatpush1.bf16.msra.mxu0 %v1730
        %3153 = vmatprep.subr.bf16.mxu0 0
        %3154 = vmatpush1.bf16.msra.mxu0 %v1732
        %3155 = vmatprep.subr.bf16.mxu0 0
        %3156 = vmatpush1.bf16.msra.mxu0 0
        %3157 = vmatprep.subr.bf16.mxu0 0
        %3158 = vmatpush1.bf16.msra.mxu0 0
        %3159 = vmatprep.subr.bf16.mxu0 0
        %3160 = vmatpush1.bf16.msra.mxu0 0
        %3161 = vmatprep.subr.bf16.mxu0 0
        %3162 = vmatpush1.bf16.msra.mxu0 0
        %3163 = vmatprep.subr.bf16.mxu0 0
        %3164 = vmatpush1.bf16.msra.mxu0 0
        %3165 = vmatprep.subr.bf16.mxu0 0
        %3166 = vmatpush1.bf16.msra.mxu0 0
        %3167 = vmatprep.subr.bf16.mxu0 0
        %3168 = vmatpush1.bf16.msra.mxu0 0
        %3169 = vmatprep.subr.bf16.mxu0 0
        %3170 = vmatpush1.bf16.msra.mxu0 0
        %3171 = vmatprep.mubr.bf16.mxu0 0
        %3172 = vmatmul.mubr.bf16.gmra.mrb[0].mxu0 %v3018
        %v3173 = vpop.f32.mrb[0].mxu0
        %v3174 = vadd.f32 0.0, %v3173
        %v3175 = vpop.f32.mrb[0].mxu0
        %v3176 = vpop.f32.mrb[0].mxu0
        %v3177 = vadd.f32 0.0, %v3176
        %v3178 = vpop.f32.mrb[0].mxu0
        %3179 = vmatprep.mubr.bf16.mxu0 0
        %3180 = vmatmul.mubr.bf16.gmra.mrb[0].mxu0 %v3019
        %v3181 = vpop.f32.mrb[0].mxu0
        %v3182 = vadd.f32 0.0, %v3181
        %v3183 = vpop.f32.mrb[0].mxu0
        %v3184 = vpop.f32.mrb[0].mxu0
        %v3185 = vadd.f32 0.0, %v3184
        %v3186 = vpop.f32.mrb[0].mxu0
        %3187 = vmatprep.mubr.bf16.mxu0 0
        %3188 = vmatmul.mubr.bf16.gmra.mrb[0].mxu0 %v3020
        %v3189 = vpop.f32.mrb[0].mxu0
        %v3190 = vadd.f32 0.0, %v3189
        %v3191 = vpop.f32.mrb[0].mxu0
        %v3192 = vpop.f32.mrb[0].mxu0
        %v3193 = vadd.f32 0.0, %v3192
        %v3194 = vpop.f32.mrb[0].mxu0
        %3195 = vmatprep.mubr.bf16.mxu0 0
        %3196 = vmatmul.mubr.bf16.gmra.mrb[0].mxu0 %v3021
        %v3197 = vpop.f32.mrb[0].mxu0
        %v3198 = vadd.f32 0.0, %v3197
        %v3199 = vpop.f32.mrb[0].mxu0
        %v3200 = vpop.f32.mrb[0].mxu0
        %v3201 = vadd.f32 0.0, %v3200
        %v3202 = vpop.f32.mrb[0].mxu0
        %3203 = vmatprep.mubr.bf16.mxu0 0
        %3204 = vmatmul.mubr.bf16.gmra.mrb[0].mxu0 %v3022
        %v3205 = vpop.f32.mrb[0].mxu0
        %v3206 = vadd.f32 0.0, %v3205
        %v3207 = vpop.f32.mrb[0].mxu0
        %v3208 = vpop.f32.mrb[0].mxu0
        %v3209 = vadd.f32 0.0, %v3208
        %v3210 = vpop.f32.mrb[0].mxu0
        %3211 = vmatprep.mubr.bf16.mxu0 0
        %3212 = vmatmul.mubr.bf16.gmra.mrb[0].mxu0 %v3023
        %v3213 = vpop.f32.mrb[0].mxu0
        %v3214 = vadd.f32 0.0, %v3213
        %v3215 = vpop.f32.mrb[0].mxu0
        %v3216 = vpop.f32.mrb[0].mxu0
        %v3217 = vadd.f32 0.0, %v3216
        %v3218 = vpop.f32.mrb[0].mxu0
        %3219 = vmatprep.mubr.bf16.mxu0 0
        %3220 = vmatmul.mubr.bf16.gmra.mrb[0].mxu0 %v3024
        %v3221 = vpop.f32.mrb[0].mxu0
        %v3222 = vadd.f32 0.0, %v3221
        %v3223 = vpop.f32.mrb[0].mxu0
        %v3224 = vpop.f32.mrb[0].mxu0
        %v3225 = vadd.f32 0.0, %v3224
        %v3226 = vpop.f32.mrb[0].mxu0
        %3227 = vmatprep.mubr.bf16.mxu0 0
        %3228 = vmatmul.mubr.bf16.gmra.mrb[0].mxu0 %v3025
        %v3229 = vpop.f32.mrb[0].mxu0
        %v3230 = vadd.f32 0.0, %v3229
        %v3231 = vpop.f32.mrb[0].mxu0
        %v3232 = vpop.f32.mrb[0].mxu0
        %v3233 = vadd.f32 0.0, %v3232
        %v3234 = vpop.f32.mrb[0].mxu0
        %3235 = vdwg.mxu0
        %3236 = vmatprep.subr.bf16.mxu0 0
        %3237 = vmatpush1.bf16.msra.mxu0 %v1742
        %3238 = vmatprep.subr.bf16.mxu0 0
        %3239 = vmatpush1.bf16.msra.mxu0 %v1744
        %3240 = vmatprep.subr.bf16.mxu0 0
        %3241 = vmatpush1.bf16.msra.mxu0 %v1746
        %3242 = vmatprep.subr.bf16.mxu0 0
        %3243 = vmatpush1.bf16.msra.mxu0 %v1748
        %3244 = vmatprep.subr.bf16.mxu0 0
        %3245 = vmatpush1.bf16.msra.mxu0 %v1750
        %3246 = vmatprep.subr.bf16.mxu0 0
        %3247 = vmatpush1.bf16.msra.mxu0 %v1752
        %3248 = vmatprep.subr.bf16.mxu0 0
        %3249 = vmatpush1.bf16.msra.mxu0 %v1754
        %3250 = vmatprep.subr.bf16.mxu0 0
        %3251 = vmatpush1.bf16.msra.mxu0 %v1756
        %3252 = vmatprep.subr.bf16.mxu0 0
        %3253 = vmatpush1.bf16.msra.mxu0 0
        %3254 = vmatprep.subr.bf16.mxu0 0
        %3255 = vmatpush1.bf16.msra.mxu0 0
        %3256 = vmatprep.subr.bf16.mxu0 0
        %3257 = vmatpush1.bf16.msra.mxu0 0
        %3258 = vmatprep.subr.bf16.mxu0 0
        %3259 = vmatpush1.bf16.msra.mxu0 0
        %3260 = vmatprep.subr.bf16.mxu0 0
        %3261 = vmatpush1.bf16.msra.mxu0 0
        %3262 = vmatprep.subr.bf16.mxu0 0
        %3263 = vmatpush1.bf16.msra.mxu0 0
        %3264 = vmatprep.subr.bf16.mxu0 0
        %3265 = vmatpush1.bf16.msra.mxu0 0
        %3266 = vmatprep.subr.bf16.mxu0 0
        %3267 = vmatpush1.bf16.msra.mxu0 0
        %3268 = vmatprep.mubr.bf16.mxu0 0
        %3269 = vmatmul.mubr.bf16.gmra.mrb[0].mxu0 %v3026
        %v3270 = vpop.f32.mrb[0].mxu0
        %v3271 = vadd.f32 0.0, %v3270
        %v3272 = vpop.f32.mrb[0].mxu0
        %v3273 = vpop.f32.mrb[0].mxu0
        %v3274 = vadd.f32 0.0, %v3273
        %v3275 = vpop.f32.mrb[0].mxu0
        %3276 = vmatprep.mubr.bf16.mxu0 0
        %3277 = vmatmul.mubr.bf16.gmra.mrb[0].mxu0 %v3027
        %v3278 = vpop.f32.mrb[0].mxu0
        %v3279 = vadd.f32 0.0, %v3278
        %v3280 = vpop.f32.mrb[0].mxu0
        %v3281 = vpop.f32.mrb[0].mxu0
        %v3282 = vadd.f32 0.0, %v3281
        %v3283 = vpop.f32.mrb[0].mxu0
        %3284 = vmatprep.mubr.bf16.mxu0 0
        %3285 = vmatmul.mubr.bf16.gmra.mrb[0].mxu0 %v3028
        %v3286 = vpop.f32.mrb[0].mxu0
        %v3287 = vadd.f32 0.0, %v3286
        %v3288 = vpop.f32.mrb[0].mxu0
        %v3289 = vpop.f32.mrb[0].mxu0
        %v3290 = vadd.f32 0.0, %v3289
        %v3291 = vpop.f32.mrb[0].mxu0
        %3292 = vmatprep.mubr.bf16.mxu0 0
        %3293 = vmatmul.mubr.bf16.gmra.mrb[0].mxu0 %v3029
        %v3294 = vpop.f32.mrb[0].mxu0
        %v3295 = vadd.f32 0.0, %v3294
        %v3296 = vpop.f32.mrb[0].mxu0
        %v3297 = vpop.f32.mrb[0].mxu0
        %v3298 = vadd.f32 0.0, %v3297
        %v3299 = vpop.f32.mrb[0].mxu0
        %3300 = vmatprep.mubr.bf16.mxu0 0
        %3301 = vmatmul.mubr.bf16.gmra.mrb[0].mxu0 %v3030
        %v3302 = vpop.f32.mrb[0].mxu0
        %v3303 = vadd.f32 0.0, %v3302
        %v3304 = vpop.f32.mrb[0].mxu0
        %v3305 = vpop.f32.mrb[0].mxu0
        %v3306 = vadd.f32 0.0, %v3305
        %v3307 = vpop.f32.mrb[0].mxu0
        %3308 = vmatprep.mubr.bf16.mxu0 0
        %3309 = vmatmul.mubr.bf16.gmra.mrb[0].mxu0 %v3031
        %v3310 = vpop.f32.mrb[0].mxu0
        %v3311 = vadd.f32 0.0, %v3310
        %v3312 = vpop.f32.mrb[0].mxu0
        %v3313 = vpop.f32.mrb[0].mxu0
        %v3314 = vadd.f32 0.0, %v3313
        %v3315 = vpop.f32.mrb[0].mxu0
        %3316 = vmatprep.mubr.bf16.mxu0 0
        %3317 = vmatmul.mubr.bf16.gmra.mrb[0].mxu0 %v3032
        %v3318 = vpop.f32.mrb[0].mxu0
        %v3319 = vadd.f32 0.0, %v3318
        %v3320 = vpop.f32.mrb[0].mxu0
        %v3321 = vpop.f32.mrb[0].mxu0
        %v3322 = vadd.f32 0.0, %v3321
        %v3323 = vpop.f32.mrb[0].mxu0
        %3324 = vmatprep.mubr.bf16.mxu0 0
        %3325 = vmatmul.mubr.bf16.gmra.mrb[0].mxu0 %v3033
        %v3326 = vpop.f32.mrb[0].mxu0
        %v3327 = vadd.f32 0.0, %v3326
        %v3328 = vpop.f32.mrb[0].mxu0
        %v3329 = vpop.f32.mrb[0].mxu0
        %v3330 = vadd.f32 0.0, %v3329
        %v3331 = vpop.f32.mrb[0].mxu0
        %3332 = vdwg.mxu0
        %3333 = vmatprep.subr.bf16.mxu0 0
        %3334 = vmatpush1.bf16.msra.mxu0 %v1766
        %3335 = vmatprep.subr.bf16.mxu0 0
        %3336 = vmatpush1.bf16.msra.mxu0 %v1768
        %3337 = vmatprep.subr.bf16.mxu0 0
        %3338 = vmatpush1.bf16.msra.mxu0 %v1770
        %3339 = vmatprep.subr.bf16.mxu0 0
        %3340 = vmatpush1.bf16.msra.mxu0 %v1772
        %3341 = vmatprep.subr.bf16.mxu0 0
        %3342 = vmatpush1.bf16.msra.mxu0 %v1774
        %3343 = vmatprep.subr.bf16.mxu0 0
        %3344 = vmatpush1.bf16.msra.mxu0 %v1776
        %3345 = vmatprep.subr.bf16.mxu0 0
        %3346 = vmatpush1.bf16.msra.mxu0 %v1778
        %3347 = vmatprep.subr.bf16.mxu0 0
        %3348 = vmatpush1.bf16.msra.mxu0 %v1780
        %3349 = vmatprep.subr.bf16.mxu0 0
        %3350 = vmatpush1.bf16.msra.mxu0 0
        %3351 = vmatprep.subr.bf16.mxu0 0
        %3352 = vmatpush1.bf16.msra.mxu0 0
        %3353 = vmatprep.subr.bf16.mxu0 0
        %3354 = vmatpush1.bf16.msra.mxu0 0
        %3355 = vmatprep.subr.bf16.mxu0 0
        %3356 = vmatpush1.bf16.msra.mxu0 0
        %3357 = vmatprep.subr.bf16.mxu0 0
        %3358 = vmatpush1.bf16.msra.mxu0 0
        %3359 = vmatprep.subr.bf16.mxu0 0
        %3360 = vmatpush1.bf16.msra.mxu0 0
        %3361 = vmatprep.subr.bf16.mxu0 0
        %3362 = vmatpush1.bf16.msra.mxu0 0
        %3363 = vmatprep.subr.bf16.mxu0 0
        %3364 = vmatpush1.bf16.msra.mxu0 0
        %3365 = vmatprep.mubr.bf16.mxu0 0
        %3366 = vmatmul.mubr.bf16.gmra.mrb[0].mxu0 %v3034
        %v3367 = vpop.f32.mrb[0].mxu0
        %v3368 = vadd.f32 0.0, %v3367
        %v3369 = vpop.f32.mrb[0].mxu0
        %v3370 = vpop.f32.mrb[0].mxu0
        %v3371 = vadd.f32 0.0, %v3370
        %v3372 = vpop.f32.mrb[0].mxu0
        %3373 = vmatprep.mubr.bf16.mxu0 0
        %3374 = vmatmul.mubr.bf16.gmra.mrb[0].mxu0 %v3035
        %v3375 = vpop.f32.mrb[0].mxu0
        %v3376 = vadd.f32 0.0, %v3375
        %v3377 = vpop.f32.mrb[0].mxu0
        %v3378 = vpop.f32.mrb[0].mxu0
        %v3379 = vadd.f32 0.0, %v3378
        %v3380 = vpop.f32.mrb[0].mxu0
        %3381 = vmatprep.mubr.bf16.mxu0 0
        %3382 = vmatmul.mubr.bf16.gmra.mrb[0].mxu0 %v3036
        %v3383 = vpop.f32.mrb[0].mxu0
        %v3384 = vadd.f32 0.0, %v3383
        %v3385 = vpop.f32.mrb[0].mxu0
        %v3386 = vpop.f32.mrb[0].mxu0
        %v3387 = vadd.f32 0.0, %v3386
        %v3388 = vpop.f32.mrb[0].mxu0
        %3389 = vmatprep.mubr.bf16.mxu0 0
        %3390 = vmatmul.mubr.bf16.gmra.mrb[0].mxu0 %v3037
        %v3391 = vpop.f32.mrb[0].mxu0
        %v3392 = vadd.f32 0.0, %v3391
        %v3393 = vpop.f32.mrb[0].mxu0
        %v3394 = vpop.f32.mrb[0].mxu0
        %v3395 = vadd.f32 0.0, %v3394
        %v3396 = vpop.f32.mrb[0].mxu0
        %3397 = vmatprep.mubr.bf16.mxu0 0
        %3398 = vmatmul.mubr.bf16.gmra.mrb[0].mxu0 %v3038
        %v3399 = vpop.f32.mrb[0].mxu0
        %v3400 = vadd.f32 0.0, %v3399
        %v3401 = vpop.f32.mrb[0].mxu0
        %v3402 = vpop.f32.mrb[0].mxu0
        %v3403 = vadd.f32 0.0, %v3402
        %v3404 = vpop.f32.mrb[0].mxu0
        %3405 = vmatprep.mubr.bf16.mxu0 0
        %3406 = vmatmul.mubr.bf16.gmra.mrb[0].mxu0 %v3039
        %v3407 = vpop.f32.mrb[0].mxu0
        %v3408 = vadd.f32 0.0, %v3407
        %v3409 = vpop.f32.mrb[0].mxu0
        %v3410 = vpop.f32.mrb[0].mxu0
        %v3411 = vadd.f32 0.0, %v3410
        %v3412 = vpop.f32.mrb[0].mxu0
        %3413 = vmatprep.mubr.bf16.mxu0 0
        %3414 = vmatmul.mubr.bf16.gmra.mrb[0].mxu0 %v3040
        %v3415 = vpop.f32.mrb[0].mxu0
        %v3416 = vadd.f32 0.0, %v3415
        %v3417 = vpop.f32.mrb[0].mxu0
        %v3418 = vpop.f32.mrb[0].mxu0
        %v3419 = vadd.f32 0.0, %v3418
        %v3420 = vpop.f32.mrb[0].mxu0
        %3421 = vmatprep.mubr.bf16.mxu0 0
        %3422 = vmatmul.mubr.bf16.gmra.mrb[0].mxu0 %v3041
        %v3423 = vpop.f32.mrb[0].mxu0
        %v3424 = vadd.f32 0.0, %v3423
        %v3425 = vpop.f32.mrb[0].mxu0
        %v3426 = vpop.f32.mrb[0].mxu0
        %v3427 = vadd.f32 0.0, %v3426
        %v3428 = vpop.f32.mrb[0].mxu0
        %3429 = vdwg.mxu0
        %v3430 = vpack.c.bf16 %v3080, %v3077
        %v3431 = vpack.c.bf16 %v3088, %v3085
        %v3432 = vpack.c.bf16 %v3096, %v3093
        %v3433 = vpack.c.bf16 %v3104, %v3101
        %v3434 = vpack.c.bf16 %v3112, %v3109
        %v3435 = vpack.c.bf16 %v3120, %v3117
        %v3436 = vpack.c.bf16 %v3128, %v3125
        %v3437 = vpack.c.bf16 %v3136, %v3133
        %v3438 = vpack.c.bf16 %v3177, %v3174
        %v3439 = vpack.c.bf16 %v3185, %v3182
        %v3440 = vpack.c.bf16 %v3193, %v3190
        %v3441 = vpack.c.bf16 %v3201, %v3198
        %v3442 = vpack.c.bf16 %v3209, %v3206
        %v3443 = vpack.c.bf16 %v3217, %v3214
        %v3444 = vpack.c.bf16 %v3225, %v3222
        %v3445 = vpack.c.bf16 %v3233, %v3230
        %v3446 = vpack.c.bf16 %v3274, %v3271
        %v3447 = vpack.c.bf16 %v3282, %v3279
        %v3448 = vpack.c.bf16 %v3290, %v3287
        %v3449 = vpack.c.bf16 %v3298, %v3295
        %v3450 = vpack.c.bf16 %v3306, %v3303
        %v3451 = vpack.c.bf16 %v3314, %v3311
        %v3452 = vpack.c.bf16 %v3322, %v3319
        %v3453 = vpack.c.bf16 %v3330, %v3327
        %v3454 = vpack.c.bf16 %v3371, %v3368
        %v3455 = vpack.c.bf16 %v3379, %v3376
        %v3456 = vpack.c.bf16 %v3387, %v3384
        %v3457 = vpack.c.bf16 %v3395, %v3392
        %v3458 = vpack.c.bf16 %v3403, %v3400
        %v3459 = vpack.c.bf16 %v3411, %v3408
        %v3460 = vpack.c.bf16 %v3419, %v3416
        %v3461 = vpack.c.bf16 %v3427, %v3424
        %3470 = vrot.lane.b32.xlu0 %v3438, 32
        %v3471 = vpop.permute.xlu0 %3470
        %3472 = vrot.lane.b32.xlu0 %v3439, 32
        %v3473 = vpop.permute.xlu0 %3472
        %3474 = vrot.lane.b32.xlu0 %v3440, 32
        %v3475 = vpop.permute.xlu0 %3474
        %3476 = vrot.lane.b32.xlu0 %v3441, 32
        %v3477 = vpop.permute.xlu0 %3476
        %3478 = vrot.lane.b32.xlu0 %v3442, 32
        %v3479 = vpop.permute.xlu0 %3478
        %3480 = vrot.lane.b32.xlu0 %v3443, 32
        %v3481 = vpop.permute.xlu0 %3480
        %3482 = vrot.lane.b32.xlu0 %v3444, 32
        %v3483 = vpop.permute.xlu0 %3482
        %3484 = vrot.lane.b32.xlu0 %v3445, 32
        %v3485 = vpop.permute.xlu0 %3484
        %3494 = vrot.lane.b32.xlu0 %v3446, 64
        %v3495 = vpop.permute.xlu0 %3494
        %3496 = vrot.lane.b32.xlu0 %v3447, 64
        %v3497 = vpop.permute.xlu0 %3496
        %3498 = vrot.lane.b32.xlu0 %v3448, 64
        %v3499 = vpop.permute.xlu0 %3498
        %3500 = vrot.lane.b32.xlu0 %v3449, 64
        %v3501 = vpop.permute.xlu0 %3500
        %3502 = vrot.lane.b32.xlu0 %v3450, 64
        %v3503 = vpop.permute.xlu0 %3502
        %3504 = vrot.lane.b32.xlu0 %v3451, 64
        %v3505 = vpop.permute.xlu0 %3504
        %3506 = vrot.lane.b32.xlu0 %v3452, 64
        %v3507 = vpop.permute.xlu0 %3506
        %3508 = vrot.lane.b32.xlu0 %v3453, 64
        %v3509 = vpop.permute.xlu0 %3508
        %3518 = vrot.lane.b32.xlu0 %v3454, 96
        %v3519 = vpop.permute.xlu0 %3518
        %3520 = vrot.lane.b32.xlu0 %v3455, 96
        %v3521 = vpop.permute.xlu0 %3520
        %3522 = vrot.lane.b32.xlu0 %v3456, 96
        %v3523 = vpop.permute.xlu0 %3522
        %3524 = vrot.lane.b32.xlu0 %v3457, 96
        %v3525 = vpop.permute.xlu0 %3524
        %3526 = vrot.lane.b32.xlu0 %v3458, 96
        %v3527 = vpop.permute.xlu0 %3526
        %3528 = vrot.lane.b32.xlu0 %v3459, 96
        %v3529 = vpop.permute.xlu0 %3528
        %3530 = vrot.lane.b32.xlu0 %v3460, 96
        %v3531 = vpop.permute.xlu0 %3530
        %3532 = vrot.lane.b32.xlu0 %v3461, 96
        %v3533 = vpop.permute.xlu0 %3532
        %v3536 = vsel %vm1789, %v3430, %v3471
        %v3539 = vsel %vm1789, %v3431, %v3473
        %v3542 = vsel %vm1789, %v3432, %v3475
        %v3545 = vsel %vm1789, %v3433, %v3477
        %v3548 = vsel %vm1789, %v3434, %v3479
        %v3551 = vsel %vm1789, %v3435, %v3481
        %v3554 = vsel %vm1789, %v3436, %v3483
        %v3557 = vsel %vm1789, %v3437, %v3485
        %vm3558 = vcmask 523264
        %v3560 = vsel %vm3558, %v3536, %v3495
        %v3562 = vsel %vm3558, %v3539, %v3497
        %v3564 = vsel %vm3558, %v3542, %v3499
        %v3566 = vsel %vm3558, %v3545, %v3501
        %v3568 = vsel %vm3558, %v3548, %v3503
        %v3570 = vsel %vm3558, %v3551, %v3505
        %v3572 = vsel %vm3558, %v3554, %v3507
        %v3574 = vsel %vm3558, %v3557, %v3509
        %vm3575 = vcmask 785408
        %v3577 = vsel %vm3575, %v3560, %v3519
        %v3580 = vsel %vm3575, %v3562, %v3521
        %v3583 = vsel %vm3575, %v3564, %v3523
        %v3586 = vsel %vm3575, %v3566, %v3525
        %v3589 = vsel %vm3575, %v3568, %v3527
        %v3592 = vsel %vm3575, %v3570, %v3529
        %v3595 = vsel %vm3575, %v3572, %v3531
        %v3598 = vsel %vm3575, %v3574, %v3533
        %3608 = vrot.lane.b32.xlu0 %v1573, 96
        %v3609 = vpop.permute.xlu0 %3608
        %3610 = vrot.lane.b32.xlu0 %v1576, 96
        %v3611 = vpop.permute.xlu0 %3610
        %3612 = vrot.lane.b32.xlu0 %v1579, 96
        %v3613 = vpop.permute.xlu0 %3612
        %3614 = vrot.lane.b32.xlu0 %v1582, 96
        %v3615 = vpop.permute.xlu0 %3614
        %3616 = vrot.lane.b32.xlu0 %v1585, 96
        %v3617 = vpop.permute.xlu0 %3616
        %3618 = vrot.lane.b32.xlu0 %v1588, 96
        %v3619 = vpop.permute.xlu0 %3618
        %3620 = vrot.lane.b32.xlu0 %v1591, 96
        %v3621 = vpop.permute.xlu0 %3620
        %3622 = vrot.lane.b32.xlu0 %v1594, 96
        %v3623 = vpop.permute.xlu0 %3622
        %3624 = vrot.lane.b32.xlu0 %v1573, 64
        %v3625 = vpop.permute.xlu0 %3624
        %3626 = vrot.lane.b32.xlu0 %v1576, 64
        %v3627 = vpop.permute.xlu0 %3626
        %3628 = vrot.lane.b32.xlu0 %v1579, 64
        %v3629 = vpop.permute.xlu0 %3628
        %3630 = vrot.lane.b32.xlu0 %v1582, 64
        %v3631 = vpop.permute.xlu0 %3630
        %3632 = vrot.lane.b32.xlu0 %v1585, 64
        %v3633 = vpop.permute.xlu0 %3632
        %3634 = vrot.lane.b32.xlu0 %v1588, 64
        %v3635 = vpop.permute.xlu0 %3634
        %3636 = vrot.lane.b32.xlu0 %v1591, 64
        %v3637 = vpop.permute.xlu0 %3636
        %3638 = vrot.lane.b32.xlu0 %v1594, 64
        %v3639 = vpop.permute.xlu0 %3638
        %3640 = vrot.lane.b32.xlu0 %v1573, 32
        %v3641 = vpop.permute.xlu0 %3640
        %3642 = vrot.lane.b32.xlu0 %v1576, 32
        %v3643 = vpop.permute.xlu0 %3642
        %3644 = vrot.lane.b32.xlu0 %v1579, 32
        %v3645 = vpop.permute.xlu0 %3644
        %3646 = vrot.lane.b32.xlu0 %v1582, 32
        %v3647 = vpop.permute.xlu0 %3646
        %3648 = vrot.lane.b32.xlu0 %v1585, 32
        %v3649 = vpop.permute.xlu0 %3648
        %3650 = vrot.lane.b32.xlu0 %v1588, 32
        %v3651 = vpop.permute.xlu0 %3650
        %3652 = vrot.lane.b32.xlu0 %v1591, 32
        %v3653 = vpop.permute.xlu0 %3652
        %3654 = vrot.lane.b32.xlu0 %v1594, 32
        %v3655 = vpop.permute.xlu0 %3654
        %3664 = vrot.lane.b32.xlu0 %v1574, 96
        %v3665 = vpop.permute.xlu0 %3664
        %3666 = vrot.lane.b32.xlu0 %v1577, 96
        %v3667 = vpop.permute.xlu0 %3666
        %3668 = vrot.lane.b32.xlu0 %v1580, 96
        %v3669 = vpop.permute.xlu0 %3668
        %3670 = vrot.lane.b32.xlu0 %v1583, 96
        %v3671 = vpop.permute.xlu0 %3670
        %3672 = vrot.lane.b32.xlu0 %v1586, 96
        %v3673 = vpop.permute.xlu0 %3672
        %3674 = vrot.lane.b32.xlu0 %v1589, 96
        %v3675 = vpop.permute.xlu0 %3674
        %3676 = vrot.lane.b32.xlu0 %v1592, 96
        %v3677 = vpop.permute.xlu0 %3676
        %3678 = vrot.lane.b32.xlu0 %v1595, 96
        %v3679 = vpop.permute.xlu0 %3678
        %3680 = vrot.lane.b32.xlu0 %v1574, 64
        %v3681 = vpop.permute.xlu0 %3680
        %3682 = vrot.lane.b32.xlu0 %v1577, 64
        %v3683 = vpop.permute.xlu0 %3682
        %3684 = vrot.lane.b32.xlu0 %v1580, 64
        %v3685 = vpop.permute.xlu0 %3684
        %3686 = vrot.lane.b32.xlu0 %v1583, 64
        %v3687 = vpop.permute.xlu0 %3686
        %3688 = vrot.lane.b32.xlu0 %v1586, 64
        %v3689 = vpop.permute.xlu0 %3688
        %3690 = vrot.lane.b32.xlu0 %v1589, 64
        %v3691 = vpop.permute.xlu0 %3690
        %3692 = vrot.lane.b32.xlu0 %v1592, 64
        %v3693 = vpop.permute.xlu0 %3692
        %3694 = vrot.lane.b32.xlu0 %v1595, 64
        %v3695 = vpop.permute.xlu0 %3694
        %3696 = vrot.lane.b32.xlu0 %v1574, 32
        %v3697 = vpop.permute.xlu0 %3696
        %3698 = vrot.lane.b32.xlu0 %v1577, 32
        %v3699 = vpop.permute.xlu0 %3698
        %3700 = vrot.lane.b32.xlu0 %v1580, 32
        %v3701 = vpop.permute.xlu0 %3700
        %3702 = vrot.lane.b32.xlu0 %v1583, 32
        %v3703 = vpop.permute.xlu0 %3702
        %3704 = vrot.lane.b32.xlu0 %v1586, 32
        %v3705 = vpop.permute.xlu0 %3704
        %3706 = vrot.lane.b32.xlu0 %v1589, 32
        %v3707 = vpop.permute.xlu0 %3706
        %3708 = vrot.lane.b32.xlu0 %v1592, 32
        %v3709 = vpop.permute.xlu0 %3708
        %3710 = vrot.lane.b32.xlu0 %v1595, 32
        %v3711 = vpop.permute.xlu0 %3710
        %3720 = vrot.lane.b32.xlu0 %v1575, 96
        %v3721 = vpop.permute.xlu0 %3720
        %3722 = vrot.lane.b32.xlu0 %v1578, 96
        %v3723 = vpop.permute.xlu0 %3722
        %3724 = vrot.lane.b32.xlu0 %v1581, 96
        %v3725 = vpop.permute.xlu0 %3724
        %3726 = vrot.lane.b32.xlu0 %v1584, 96
        %v3727 = vpop.permute.xlu0 %3726
        %3728 = vrot.lane.b32.xlu0 %v1587, 96
        %v3729 = vpop.permute.xlu0 %3728
        %3730 = vrot.lane.b32.xlu0 %v1590, 96
        %v3731 = vpop.permute.xlu0 %3730
        %3732 = vrot.lane.b32.xlu0 %v1593, 96
        %v3733 = vpop.permute.xlu0 %3732
        %3734 = vrot.lane.b32.xlu0 %v1596, 96
        %v3735 = vpop.permute.xlu0 %3734
        %3744 = vrot.lane.b32.xlu0 %v1575, 64
        %v3745 = vpop.permute.xlu0 %3744
        %3746 = vrot.lane.b32.xlu0 %v1578, 64
        %v3747 = vpop.permute.xlu0 %3746
        %3748 = vrot.lane.b32.xlu0 %v1581, 64
        %v3749 = vpop.permute.xlu0 %3748
        %3750 = vrot.lane.b32.xlu0 %v1584, 64
        %v3751 = vpop.permute.xlu0 %3750
        %3752 = vrot.lane.b32.xlu0 %v1587, 64
        %v3753 = vpop.permute.xlu0 %3752
        %3754 = vrot.lane.b32.xlu0 %v1590, 64
        %v3755 = vpop.permute.xlu0 %3754
        %3756 = vrot.lane.b32.xlu0 %v1593, 64
        %v3757 = vpop.permute.xlu0 %3756
        %3758 = vrot.lane.b32.xlu0 %v1596, 64
        %v3759 = vpop.permute.xlu0 %3758
        %3768 = vrot.lane.b32.xlu0 %v1575, 32
        %v3769 = vpop.permute.xlu0 %3768
        %3770 = vrot.lane.b32.xlu0 %v1578, 32
        %v3771 = vpop.permute.xlu0 %3770
        %3772 = vrot.lane.b32.xlu0 %v1581, 32
        %v3773 = vpop.permute.xlu0 %3772
        %3774 = vrot.lane.b32.xlu0 %v1584, 32
        %v3775 = vpop.permute.xlu0 %3774
        %3776 = vrot.lane.b32.xlu0 %v1587, 32
        %v3777 = vpop.permute.xlu0 %3776
        %3778 = vrot.lane.b32.xlu0 %v1590, 32
        %v3779 = vpop.permute.xlu0 %3778
        %3780 = vrot.lane.b32.xlu0 %v1593, 32
        %v3781 = vpop.permute.xlu0 %3780
        %3782 = vrot.lane.b32.xlu0 %v1596, 32
        %v3783 = vpop.permute.xlu0 %3782
        %v3793 = vsel %vm1789, %v1573, 0
        %v3796 = vsel %vm1789, %v1576, 0
        %v3799 = vsel %vm1789, %v1579, 0
        %v3802 = vsel %vm1789, %v1582, 0
        %v3805 = vsel %vm1789, %v1585, 0
        %v3808 = vsel %vm1789, %v1588, 0
        %v3811 = vsel %vm1789, %v1591, 0
        %v3814 = vsel %vm1789, %v1594, 0
        %v3817 = vsel %vm1789, %v1574, 0
        %v3820 = vsel %vm1789, %v1577, 0
        %v3823 = vsel %vm1789, %v1580, 0
        %v3826 = vsel %vm1789, %v1583, 0
        %v3829 = vsel %vm1789, %v1586, 0
        %v3832 = vsel %vm1789, %v1589, 0
        %v3835 = vsel %vm1789, %v1592, 0
        %v3838 = vsel %vm1789, %v1595, 0
        %3840 = vmatprep.subr.bf16.mxu0 0
        %3841 = vmatpush1.bf16.xpose.msra.mxu0 %v3817
        %3842 = vmatprep.subr.bf16.mxu0 0
        %3843 = vmatpush1.bf16.xpose.msra.mxu0 %v3820
        %3844 = vmatprep.subr.bf16.mxu0 0
        %3845 = vmatpush1.bf16.xpose.msra.mxu0 %v3823
        %3846 = vmatprep.subr.bf16.mxu0 0
        %3847 = vmatpush1.bf16.xpose.msra.mxu0 %v3826
        %3848 = vmatprep.subr.bf16.mxu0 0
        %3849 = vmatpush1.bf16.xpose.msra.mxu0 %v3829
        %3850 = vmatprep.subr.bf16.mxu0 0
        %3851 = vmatpush1.bf16.xpose.msra.mxu0 %v3832
        %3852 = vmatprep.subr.bf16.mxu0 0
        %3853 = vmatpush1.bf16.xpose.msra.mxu0 %v3835
        %3854 = vmatprep.subr.bf16.mxu0 0
        %3855 = vmatpush1.bf16.xpose.msra.mxu0 %v3838
        %3856 = vmatprep.subr.bf16.mxu0 0
        %3857 = vmatpush1.bf16.xpose.msra.mxu0 0
        %3858 = vmatprep.subr.bf16.mxu0 0
        %3859 = vmatpush1.bf16.xpose.msra.mxu0 0
        %3860 = vmatprep.subr.bf16.mxu0 0
        %3861 = vmatpush1.bf16.xpose.msra.mxu0 0
        %3862 = vmatprep.subr.bf16.mxu0 0
        %3863 = vmatpush1.bf16.xpose.msra.mxu0 0
        %3864 = vmatprep.subr.bf16.mxu0 0
        %3865 = vmatpush1.bf16.xpose.msra.mxu0 0
        %3866 = vmatprep.subr.bf16.mxu0 0
        %3867 = vmatpush1.bf16.xpose.msra.mxu0 0
        %3868 = vmatprep.subr.bf16.mxu0 0
        %3869 = vmatpush1.bf16.xpose.msra.mxu0 0
        %3870 = vmatprep.subr.bf16.mxu0 0
        %3871 = vmatpush1.bf16.xpose.msra.mxu0 0
        %3872 = vmatprep.mubr.bf16.mxu0 0
        %3873 = vmatmul.mubr.bf16.gmra.mrb[0].mxu0 %v3793
        %v3874 = vpop.f32.mrb[0].mxu0
        %v3875 = vadd.f32 0.0, %v3874
        %v3876 = vpop.f32.mrb[0].mxu0
        %v3877 = vpop.f32.mrb[0].mxu0
        %v3878 = vadd.f32 0.0, %v3877
        %v3879 = vpop.f32.mrb[0].mxu0
        %3880 = vmatprep.mubr.bf16.mxu0 0
        %3881 = vmatmul.mubr.bf16.gmra.mrb[0].mxu0 %v3796
        %v3882 = vpop.f32.mrb[0].mxu0
        %v3883 = vadd.f32 0.0, %v3882
        %v3884 = vpop.f32.mrb[0].mxu0
        %v3885 = vpop.f32.mrb[0].mxu0
        %v3886 = vadd.f32 0.0, %v3885
        %v3887 = vpop.f32.mrb[0].mxu0
        %3888 = vmatprep.mubr.bf16.mxu0 0
        %3889 = vmatmul.mubr.bf16.gmra.mrb[0].mxu0 %v3799
        %v3890 = vpop.f32.mrb[0].mxu0
        %v3891 = vadd.f32 0.0, %v3890
        %v3892 = vpop.f32.mrb[0].mxu0
        %v3893 = vpop.f32.mrb[0].mxu0
        %v3894 = vadd.f32 0.0, %v3893
        %v3895 = vpop.f32.mrb[0].mxu0
        %3896 = vmatprep.mubr.bf16.mxu0 0
        %3897 = vmatmul.mubr.bf16.gmra.mrb[0].mxu0 %v3802
        %v3898 = vpop.f32.mrb[0].mxu0
        %v3899 = vadd.f32 0.0, %v3898
        %v3900 = vpop.f32.mrb[0].mxu0
        %v3901 = vpop.f32.mrb[0].mxu0
        %v3902 = vadd.f32 0.0, %v3901
        %v3903 = vpop.f32.mrb[0].mxu0
        %3904 = vmatprep.mubr.bf16.mxu0 0
        %3905 = vmatmul.mubr.bf16.gmra.mrb[0].mxu0 %v3805
        %v3906 = vpop.f32.mrb[0].mxu0
        %v3907 = vadd.f32 0.0, %v3906
        %v3908 = vpop.f32.mrb[0].mxu0
        %v3909 = vpop.f32.mrb[0].mxu0
        %v3910 = vadd.f32 0.0, %v3909
        %v3911 = vpop.f32.mrb[0].mxu0
        %3912 = vmatprep.mubr.bf16.mxu0 0
        %3913 = vmatmul.mubr.bf16.gmra.mrb[0].mxu0 %v3808
        %v3914 = vpop.f32.mrb[0].mxu0
        %v3915 = vadd.f32 0.0, %v3914
        %v3916 = vpop.f32.mrb[0].mxu0
        %v3917 = vpop.f32.mrb[0].mxu0
        %v3918 = vadd.f32 0.0, %v3917
        %v3919 = vpop.f32.mrb[0].mxu0
        %3920 = vmatprep.mubr.bf16.mxu0 0
        %3921 = vmatmul.mubr.bf16.gmra.mrb[0].mxu0 %v3811
        %v3922 = vpop.f32.mrb[0].mxu0
        %v3923 = vadd.f32 0.0, %v3922
        %v3924 = vpop.f32.mrb[0].mxu0
        %v3925 = vpop.f32.mrb[0].mxu0
        %v3926 = vadd.f32 0.0, %v3925
        %v3927 = vpop.f32.mrb[0].mxu0
        %3928 = vmatprep.mubr.bf16.mxu0 0
        %3929 = vmatmul.mubr.bf16.gmra.mrb[0].mxu0 %v3814
        %v3930 = vpop.f32.mrb[0].mxu0
        %v3931 = vadd.f32 0.0, %v3930
        %v3932 = vpop.f32.mrb[0].mxu0
        %v3933 = vpop.f32.mrb[0].mxu0
        %v3934 = vadd.f32 0.0, %v3933
        %v3935 = vpop.f32.mrb[0].mxu0
        %3936 = vdwg.mxu0
        %v3938 = vsel %vm1789, %v3609, 0
        %v3941 = vsel %vm1789, %v3611, 0
        %v3944 = vsel %vm1789, %v3613, 0
        %v3947 = vsel %vm1789, %v3615, 0
        %v3950 = vsel %vm1789, %v3617, 0
        %v3953 = vsel %vm1789, %v3619, 0
        %v3956 = vsel %vm1789, %v3621, 0
        %v3959 = vsel %vm1789, %v3623, 0
        %v3962 = vsel %vm1789, %v3665, 0
        %v3965 = vsel %vm1789, %v3667, 0
        %v3968 = vsel %vm1789, %v3669, 0
        %v3971 = vsel %vm1789, %v3671, 0
        %v3974 = vsel %vm1789, %v3673, 0
        %v3977 = vsel %vm1789, %v3675, 0
        %v3980 = vsel %vm1789, %v3677, 0
        %v3983 = vsel %vm1789, %v3679, 0
        %3985 = vmatprep.subr.bf16.mxu0 0
        %3986 = vmatpush1.bf16.xpose.msra.mxu0 %v3962
        %3987 = vmatprep.subr.bf16.mxu0 0
        %3988 = vmatpush1.bf16.xpose.msra.mxu0 %v3965
        %3989 = vmatprep.subr.bf16.mxu0 0
        %3990 = vmatpush1.bf16.xpose.msra.mxu0 %v3968
        %3991 = vmatprep.subr.bf16.mxu0 0
        %3992 = vmatpush1.bf16.xpose.msra.mxu0 %v3971
        %3993 = vmatprep.subr.bf16.mxu0 0
        %3994 = vmatpush1.bf16.xpose.msra.mxu0 %v3974
        %3995 = vmatprep.subr.bf16.mxu0 0
        %3996 = vmatpush1.bf16.xpose.msra.mxu0 %v3977
        %3997 = vmatprep.subr.bf16.mxu0 0
        %3998 = vmatpush1.bf16.xpose.msra.mxu0 %v3980
        %3999 = vmatprep.subr.bf16.mxu0 0
        %4000 = vmatpush1.bf16.xpose.msra.mxu0 %v3983
        %4001 = vmatprep.subr.bf16.mxu0 0
        %4002 = vmatpush1.bf16.xpose.msra.mxu0 0
        %4003 = vmatprep.subr.bf16.mxu0 0
        %4004 = vmatpush1.bf16.xpose.msra.mxu0 0
        %4005 = vmatprep.subr.bf16.mxu0 0
        %4006 = vmatpush1.bf16.xpose.msra.mxu0 0
        %4007 = vmatprep.subr.bf16.mxu0 0
        %4008 = vmatpush1.bf16.xpose.msra.mxu0 0
        %4009 = vmatprep.subr.bf16.mxu0 0
        %4010 = vmatpush1.bf16.xpose.msra.mxu0 0
        %4011 = vmatprep.subr.bf16.mxu0 0
        %4012 = vmatpush1.bf16.xpose.msra.mxu0 0
        %4013 = vmatprep.subr.bf16.mxu0 0
        %4014 = vmatpush1.bf16.xpose.msra.mxu0 0
        %4015 = vmatprep.subr.bf16.mxu0 0
        %4016 = vmatpush1.bf16.xpose.msra.mxu0 0
        %4017 = vmatprep.mubr.bf16.mxu0 0
        %4018 = vmatmul.mubr.bf16.gmra.mrb[0].mxu0 %v3938
        %v4019 = vpop.f32.mrb[0].mxu0
        %v4020 = vadd.f32 0.0, %v4019
        %v4021 = vpop.f32.mrb[0].mxu0
        %v4022 = vpop.f32.mrb[0].mxu0
        %v4023 = vadd.f32 0.0, %v4022
        %v4024 = vpop.f32.mrb[0].mxu0
        %4025 = vmatprep.mubr.bf16.mxu0 0
        %4026 = vmatmul.mubr.bf16.gmra.mrb[0].mxu0 %v3941
        %v4027 = vpop.f32.mrb[0].mxu0
        %v4028 = vadd.f32 0.0, %v4027
        %v4029 = vpop.f32.mrb[0].mxu0
        %v4030 = vpop.f32.mrb[0].mxu0
        %v4031 = vadd.f32 0.0, %v4030
        %v4032 = vpop.f32.mrb[0].mxu0
        %4033 = vmatprep.mubr.bf16.mxu0 0
        %4034 = vmatmul.mubr.bf16.gmra.mrb[0].mxu0 %v3944
        %v4035 = vpop.f32.mrb[0].mxu0
        %v4036 = vadd.f32 0.0, %v4035
        %v4037 = vpop.f32.mrb[0].mxu0
        %v4038 = vpop.f32.mrb[0].mxu0
        %v4039 = vadd.f32 0.0, %v4038
        %v4040 = vpop.f32.mrb[0].mxu0
        %4041 = vmatprep.mubr.bf16.mxu0 0
        %4042 = vmatmul.mubr.bf16.gmra.mrb[0].mxu0 %v3947
        %v4043 = vpop.f32.mrb[0].mxu0
        %v4044 = vadd.f32 0.0, %v4043
        %v4045 = vpop.f32.mrb[0].mxu0
        %v4046 = vpop.f32.mrb[0].mxu0
        %v4047 = vadd.f32 0.0, %v4046
        %v4048 = vpop.f32.mrb[0].mxu0
        %4049 = vmatprep.mubr.bf16.mxu0 0
        %4050 = vmatmul.mubr.bf16.gmra.mrb[0].mxu0 %v3950
        %v4051 = vpop.f32.mrb[0].mxu0
        %v4052 = vadd.f32 0.0, %v4051
        %v4053 = vpop.f32.mrb[0].mxu0
        %v4054 = vpop.f32.mrb[0].mxu0
        %v4055 = vadd.f32 0.0, %v4054
        %v4056 = vpop.f32.mrb[0].mxu0
        %4057 = vmatprep.mubr.bf16.mxu0 0
        %4058 = vmatmul.mubr.bf16.gmra.mrb[0].mxu0 %v3953
        %v4059 = vpop.f32.mrb[0].mxu0
        %v4060 = vadd.f32 0.0, %v4059
        %v4061 = vpop.f32.mrb[0].mxu0
        %v4062 = vpop.f32.mrb[0].mxu0
        %v4063 = vadd.f32 0.0, %v4062
        %v4064 = vpop.f32.mrb[0].mxu0
        %4065 = vmatprep.mubr.bf16.mxu0 0
        %4066 = vmatmul.mubr.bf16.gmra.mrb[0].mxu0 %v3956
        %v4067 = vpop.f32.mrb[0].mxu0
        %v4068 = vadd.f32 0.0, %v4067
        %v4069 = vpop.f32.mrb[0].mxu0
        %v4070 = vpop.f32.mrb[0].mxu0
        %v4071 = vadd.f32 0.0, %v4070
        %v4072 = vpop.f32.mrb[0].mxu0
        %4073 = vmatprep.mubr.bf16.mxu0 0
        %4074 = vmatmul.mubr.bf16.gmra.mrb[0].mxu0 %v3959
        %v4075 = vpop.f32.mrb[0].mxu0
        %v4076 = vadd.f32 0.0, %v4075
        %v4077 = vpop.f32.mrb[0].mxu0
        %v4078 = vpop.f32.mrb[0].mxu0
        %v4079 = vadd.f32 0.0, %v4078
        %v4080 = vpop.f32.mrb[0].mxu0
        %4081 = vdwg.mxu0
        %v4083 = vsel %vm1789, %v3625, 0
        %v4086 = vsel %vm1789, %v3627, 0
        %v4089 = vsel %vm1789, %v3629, 0
        %v4092 = vsel %vm1789, %v3631, 0
        %v4095 = vsel %vm1789, %v3633, 0
        %v4098 = vsel %vm1789, %v3635, 0
        %v4101 = vsel %vm1789, %v3637, 0
        %v4104 = vsel %vm1789, %v3639, 0
        %v4107 = vsel %vm1789, %v3681, 0
        %v4110 = vsel %vm1789, %v3683, 0
        %v4113 = vsel %vm1789, %v3685, 0
        %v4116 = vsel %vm1789, %v3687, 0
        %v4119 = vsel %vm1789, %v3689, 0
        %v4122 = vsel %vm1789, %v3691, 0
        %v4125 = vsel %vm1789, %v3693, 0
        %v4128 = vsel %vm1789, %v3695, 0
        %4130 = vmatprep.subr.bf16.mxu0 0
        %4131 = vmatpush1.bf16.xpose.msra.mxu0 %v4107
        %4132 = vmatprep.subr.bf16.mxu0 0
        %4133 = vmatpush1.bf16.xpose.msra.mxu0 %v4110
        %4134 = vmatprep.subr.bf16.mxu0 0
        %4135 = vmatpush1.bf16.xpose.msra.mxu0 %v4113
        %4136 = vmatprep.subr.bf16.mxu0 0
        %4137 = vmatpush1.bf16.xpose.msra.mxu0 %v4116
        %4138 = vmatprep.subr.bf16.mxu0 0
        %4139 = vmatpush1.bf16.xpose.msra.mxu0 %v4119
        %4140 = vmatprep.subr.bf16.mxu0 0
        %4141 = vmatpush1.bf16.xpose.msra.mxu0 %v4122
        %4142 = vmatprep.subr.bf16.mxu0 0
        %4143 = vmatpush1.bf16.xpose.msra.mxu0 %v4125
        %4144 = vmatprep.subr.bf16.mxu0 0
        %4145 = vmatpush1.bf16.xpose.msra.mxu0 %v4128
        %4146 = vmatprep.subr.bf16.mxu0 0
        %4147 = vmatpush1.bf16.xpose.msra.mxu0 0
        %4148 = vmatprep.subr.bf16.mxu0 0
        %4149 = vmatpush1.bf16.xpose.msra.mxu0 0
        %4150 = vmatprep.subr.bf16.mxu0 0
        %4151 = vmatpush1.bf16.xpose.msra.mxu0 0
        %4152 = vmatprep.subr.bf16.mxu0 0
        %4153 = vmatpush1.bf16.xpose.msra.mxu0 0
        %4154 = vmatprep.subr.bf16.mxu0 0
        %4155 = vmatpush1.bf16.xpose.msra.mxu0 0
        %4156 = vmatprep.subr.bf16.mxu0 0
        %4157 = vmatpush1.bf16.xpose.msra.mxu0 0
        %4158 = vmatprep.subr.bf16.mxu0 0
        %4159 = vmatpush1.bf16.xpose.msra.mxu0 0
        %4160 = vmatprep.subr.bf16.mxu0 0
        %4161 = vmatpush1.bf16.xpose.msra.mxu0 0
        %4162 = vmatprep.mubr.bf16.mxu0 0
        %4163 = vmatmul.mubr.bf16.gmra.mrb[0].mxu0 %v4083
        %v4164 = vpop.f32.mrb[0].mxu0
        %v4165 = vadd.f32 0.0, %v4164
        %v4166 = vpop.f32.mrb[0].mxu0
        %v4167 = vpop.f32.mrb[0].mxu0
        %v4168 = vadd.f32 0.0, %v4167
        %v4169 = vpop.f32.mrb[0].mxu0
        %4170 = vmatprep.mubr.bf16.mxu0 0
        %4171 = vmatmul.mubr.bf16.gmra.mrb[0].mxu0 %v4086
        %v4172 = vpop.f32.mrb[0].mxu0
        %v4173 = vadd.f32 0.0, %v4172
        %v4174 = vpop.f32.mrb[0].mxu0
        %v4175 = vpop.f32.mrb[0].mxu0
        %v4176 = vadd.f32 0.0, %v4175
        %v4177 = vpop.f32.mrb[0].mxu0
        %4178 = vmatprep.mubr.bf16.mxu0 0
        %4179 = vmatmul.mubr.bf16.gmra.mrb[0].mxu0 %v4089
        %v4180 = vpop.f32.mrb[0].mxu0
        %v4181 = vadd.f32 0.0, %v4180
        %v4182 = vpop.f32.mrb[0].mxu0
        %v4183 = vpop.f32.mrb[0].mxu0
        %v4184 = vadd.f32 0.0, %v4183
        %v4185 = vpop.f32.mrb[0].mxu0
        %4186 = vmatprep.mubr.bf16.mxu0 0
        %4187 = vmatmul.mubr.bf16.gmra.mrb[0].mxu0 %v4092
        %v4188 = vpop.f32.mrb[0].mxu0
        %v4189 = vadd.f32 0.0, %v4188
        %v4190 = vpop.f32.mrb[0].mxu0
        %v4191 = vpop.f32.mrb[0].mxu0
        %v4192 = vadd.f32 0.0, %v4191
        %v4193 = vpop.f32.mrb[0].mxu0
        %4194 = vmatprep.mubr.bf16.mxu0 0
        %4195 = vmatmul.mubr.bf16.gmra.mrb[0].mxu0 %v4095
        %v4196 = vpop.f32.mrb[0].mxu0
        %v4197 = vadd.f32 0.0, %v4196
        %v4198 = vpop.f32.mrb[0].mxu0
        %v4199 = vpop.f32.mrb[0].mxu0
        %v4200 = vadd.f32 0.0, %v4199
        %v4201 = vpop.f32.mrb[0].mxu0
        %4202 = vmatprep.mubr.bf16.mxu0 0
        %4203 = vmatmul.mubr.bf16.gmra.mrb[0].mxu0 %v4098
        %v4204 = vpop.f32.mrb[0].mxu0
        %v4205 = vadd.f32 0.0, %v4204
        %v4206 = vpop.f32.mrb[0].mxu0
        %v4207 = vpop.f32.mrb[0].mxu0
        %v4208 = vadd.f32 0.0, %v4207
        %v4209 = vpop.f32.mrb[0].mxu0
        %4210 = vmatprep.mubr.bf16.mxu0 0
        %4211 = vmatmul.mubr.bf16.gmra.mrb[0].mxu0 %v4101
        %v4212 = vpop.f32.mrb[0].mxu0
        %v4213 = vadd.f32 0.0, %v4212
        %v4214 = vpop.f32.mrb[0].mxu0
        %v4215 = vpop.f32.mrb[0].mxu0
        %v4216 = vadd.f32 0.0, %v4215
        %v4217 = vpop.f32.mrb[0].mxu0
        %4218 = vmatprep.mubr.bf16.mxu0 0
        %4219 = vmatmul.mubr.bf16.gmra.mrb[0].mxu0 %v4104
        %v4220 = vpop.f32.mrb[0].mxu0
        %v4221 = vadd.f32 0.0, %v4220
        %v4222 = vpop.f32.mrb[0].mxu0
        %v4223 = vpop.f32.mrb[0].mxu0
        %v4224 = vadd.f32 0.0, %v4223
        %v4225 = vpop.f32.mrb[0].mxu0
        %4226 = vdwg.mxu0
        %v4228 = vsel %vm1789, %v3641, 0
        %v4231 = vsel %vm1789, %v3643, 0
        %v4234 = vsel %vm1789, %v3645, 0
        %v4237 = vsel %vm1789, %v3647, 0
        %v4240 = vsel %vm1789, %v3649, 0
        %v4243 = vsel %vm1789, %v3651, 0
        %v4246 = vsel %vm1789, %v3653, 0
        %v4249 = vsel %vm1789, %v3655, 0
        %v4252 = vsel %vm1789, %v3697, 0
        %v4255 = vsel %vm1789, %v3699, 0
        %v4258 = vsel %vm1789, %v3701, 0
        %v4261 = vsel %vm1789, %v3703, 0
        %v4264 = vsel %vm1789, %v3705, 0
        %v4267 = vsel %vm1789, %v3707, 0
        %v4270 = vsel %vm1789, %v3709, 0
        %v4273 = vsel %vm1789, %v3711, 0
        %4275 = vmatprep.subr.bf16.mxu0 0
        %4276 = vmatpush1.bf16.xpose.msra.mxu0 %v4252
        %4277 = vmatprep.subr.bf16.mxu0 0
        %4278 = vmatpush1.bf16.xpose.msra.mxu0 %v4255
        %4279 = vmatprep.subr.bf16.mxu0 0
        %4280 = vmatpush1.bf16.xpose.msra.mxu0 %v4258
        %4281 = vmatprep.subr.bf16.mxu0 0
        %4282 = vmatpush1.bf16.xpose.msra.mxu0 %v4261
        %4283 = vmatprep.subr.bf16.mxu0 0
        %4284 = vmatpush1.bf16.xpose.msra.mxu0 %v4264
        %4285 = vmatprep.subr.bf16.mxu0 0
        %4286 = vmatpush1.bf16.xpose.msra.mxu0 %v4267
        %4287 = vmatprep.subr.bf16.mxu0 0
        %4288 = vmatpush1.bf16.xpose.msra.mxu0 %v4270
        %4289 = vmatprep.subr.bf16.mxu0 0
        %4290 = vmatpush1.bf16.xpose.msra.mxu0 %v4273
        %4291 = vmatprep.subr.bf16.mxu0 0
        %4292 = vmatpush1.bf16.xpose.msra.mxu0 0
        %4293 = vmatprep.subr.bf16.mxu0 0
        %4294 = vmatpush1.bf16.xpose.msra.mxu0 0
        %4295 = vmatprep.subr.bf16.mxu0 0
        %4296 = vmatpush1.bf16.xpose.msra.mxu0 0
        %4297 = vmatprep.subr.bf16.mxu0 0
        %4298 = vmatpush1.bf16.xpose.msra.mxu0 0
        %4299 = vmatprep.subr.bf16.mxu0 0
        %4300 = vmatpush1.bf16.xpose.msra.mxu0 0
        %4301 = vmatprep.subr.bf16.mxu0 0
        %4302 = vmatpush1.bf16.xpose.msra.mxu0 0
        %4303 = vmatprep.subr.bf16.mxu0 0
        %4304 = vmatpush1.bf16.xpose.msra.mxu0 0
        %4305 = vmatprep.subr.bf16.mxu0 0
        %4306 = vmatpush1.bf16.xpose.msra.mxu0 0
        %4307 = vmatprep.mubr.bf16.mxu0 0
        %4308 = vmatmul.mubr.bf16.gmra.mrb[0].mxu0 %v4228
        %v4309 = vpop.f32.mrb[0].mxu0
        %v4310 = vadd.f32 0.0, %v4309
        %v4311 = vpop.f32.mrb[0].mxu0
        %v4312 = vpop.f32.mrb[0].mxu0
        %v4313 = vadd.f32 0.0, %v4312
        %v4314 = vpop.f32.mrb[0].mxu0
        %4315 = vmatprep.mubr.bf16.mxu0 0
        %4316 = vmatmul.mubr.bf16.gmra.mrb[0].mxu0 %v4231
        %v4317 = vpop.f32.mrb[0].mxu0
        %v4318 = vadd.f32 0.0, %v4317
        %v4319 = vpop.f32.mrb[0].mxu0
        %v4320 = vpop.f32.mrb[0].mxu0
        %v4321 = vadd.f32 0.0, %v4320
        %v4322 = vpop.f32.mrb[0].mxu0
        %4323 = vmatprep.mubr.bf16.mxu0 0
        %4324 = vmatmul.mubr.bf16.gmra.mrb[0].mxu0 %v4234
        %v4325 = vpop.f32.mrb[0].mxu0
        %v4326 = vadd.f32 0.0, %v4325
        %v4327 = vpop.f32.mrb[0].mxu0
        %v4328 = vpop.f32.mrb[0].mxu0
        %v4329 = vadd.f32 0.0, %v4328
        %v4330 = vpop.f32.mrb[0].mxu0
        %4331 = vmatprep.mubr.bf16.mxu0 0
        %4332 = vmatmul.mubr.bf16.gmra.mrb[0].mxu0 %v4237
        %v4333 = vpop.f32.mrb[0].mxu0
        %v4334 = vadd.f32 0.0, %v4333
        %v4335 = vpop.f32.mrb[0].mxu0
        %v4336 = vpop.f32.mrb[0].mxu0
        %v4337 = vadd.f32 0.0, %v4336
        %v4338 = vpop.f32.mrb[0].mxu0
        %4339 = vmatprep.mubr.bf16.mxu0 0
        %4340 = vmatmul.mubr.bf16.gmra.mrb[0].mxu0 %v4240
        %v4341 = vpop.f32.mrb[0].mxu0
        %v4342 = vadd.f32 0.0, %v4341
        %v4343 = vpop.f32.mrb[0].mxu0
        %v4344 = vpop.f32.mrb[0].mxu0
        %v4345 = vadd.f32 0.0, %v4344
        %v4346 = vpop.f32.mrb[0].mxu0
        %4347 = vmatprep.mubr.bf16.mxu0 0
        %4348 = vmatmul.mubr.bf16.gmra.mrb[0].mxu0 %v4243
        %v4349 = vpop.f32.mrb[0].mxu0
        %v4350 = vadd.f32 0.0, %v4349
        %v4351 = vpop.f32.mrb[0].mxu0
        %v4352 = vpop.f32.mrb[0].mxu0
        %v4353 = vadd.f32 0.0, %v4352
        %v4354 = vpop.f32.mrb[0].mxu0
        %4355 = vmatprep.mubr.bf16.mxu0 0
        %4356 = vmatmul.mubr.bf16.gmra.mrb[0].mxu0 %v4246
        %v4357 = vpop.f32.mrb[0].mxu0
        %v4358 = vadd.f32 0.0, %v4357
        %v4359 = vpop.f32.mrb[0].mxu0
        %v4360 = vpop.f32.mrb[0].mxu0
        %v4361 = vadd.f32 0.0, %v4360
        %v4362 = vpop.f32.mrb[0].mxu0
        %4363 = vmatprep.mubr.bf16.mxu0 0
        %4364 = vmatmul.mubr.bf16.gmra.mrb[0].mxu0 %v4249
        %v4365 = vpop.f32.mrb[0].mxu0
        %v4366 = vadd.f32 0.0, %v4365
        %v4367 = vpop.f32.mrb[0].mxu0
        %v4368 = vpop.f32.mrb[0].mxu0
        %v4369 = vadd.f32 0.0, %v4368
        %v4370 = vpop.f32.mrb[0].mxu0
        %4371 = vdwg.mxu0
        %v4372 = vmul.f32 %v3875, 0.17677669
        %v4373 = vmul.f32 %v3878, 0.17677669
        %v4374 = vmul.f32 %v3883, 0.17677669
        %v4375 = vmul.f32 %v3886, 0.17677669
        %v4376 = vmul.f32 %v3891, 0.17677669
        %v4377 = vmul.f32 %v3894, 0.17677669
        %v4378 = vmul.f32 %v3899, 0.17677669
        %v4379 = vmul.f32 %v3902, 0.17677669
        %v4380 = vmul.f32 %v3907, 0.17677669
        %v4381 = vmul.f32 %v3910, 0.17677669
        %v4382 = vmul.f32 %v3915, 0.17677669
        %v4383 = vmul.f32 %v3918, 0.17677669
        %v4384 = vmul.f32 %v3923, 0.17677669
        %v4385 = vmul.f32 %v3926, 0.17677669
        %v4386 = vmul.f32 %v3931, 0.17677669
        %v4387 = vmul.f32 %v3934, 0.17677669
        %v4388 = vmul.f32 %v4020, 0.17677669
        %v4389 = vmul.f32 %v4023, 0.17677669
        %v4390 = vmul.f32 %v4028, 0.17677669
        %v4391 = vmul.f32 %v4031, 0.17677669
        %v4392 = vmul.f32 %v4036, 0.17677669
        %v4393 = vmul.f32 %v4039, 0.17677669
        %v4394 = vmul.f32 %v4044, 0.17677669
        %v4395 = vmul.f32 %v4047, 0.17677669
        %v4396 = vmul.f32 %v4052, 0.17677669
        %v4397 = vmul.f32 %v4055, 0.17677669
        %v4398 = vmul.f32 %v4060, 0.17677669
        %v4399 = vmul.f32 %v4063, 0.17677669
        %v4400 = vmul.f32 %v4068, 0.17677669
        %v4401 = vmul.f32 %v4071, 0.17677669
        %v4402 = vmul.f32 %v4076, 0.17677669
        %v4403 = vmul.f32 %v4079, 0.17677669
        %v4404 = vmul.f32 %v4165, 0.17677669
        %v4405 = vmul.f32 %v4168, 0.17677669
        %v4406 = vmul.f32 %v4173, 0.17677669
        %v4407 = vmul.f32 %v4176, 0.17677669
        %v4408 = vmul.f32 %v4181, 0.17677669
        %v4409 = vmul.f32 %v4184, 0.17677669
        %v4410 = vmul.f32 %v4189, 0.17677669
        %v4411 = vmul.f32 %v4192, 0.17677669
        %v4412 = vmul.f32 %v4197, 0.17677669
        %v4413 = vmul.f32 %v4200, 0.17677669
        %v4414 = vmul.f32 %v4205, 0.17677669
        %v4415 = vmul.f32 %v4208, 0.17677669
        %v4416 = vmul.f32 %v4213, 0.17677669
        %v4417 = vmul.f32 %v4216, 0.17677669
        %v4418 = vmul.f32 %v4221, 0.17677669
        %v4419 = vmul.f32 %v4224, 0.17677669
        %v4420 = vmul.f32 %v4310, 0.17677669
        %v4421 = vmul.f32 %v4313, 0.17677669
        %v4422 = vmul.f32 %v4318, 0.17677669
        %v4423 = vmul.f32 %v4321, 0.17677669
        %v4424 = vmul.f32 %v4326, 0.17677669
        %v4425 = vmul.f32 %v4329, 0.17677669
        %v4426 = vmul.f32 %v4334, 0.17677669
        %v4427 = vmul.f32 %v4337, 0.17677669
        %v4428 = vmul.f32 %v4342, 0.17677669
        %v4429 = vmul.f32 %v4345, 0.17677669
        %v4430 = vmul.f32 %v4350, 0.17677669
        %v4431 = vmul.f32 %v4353, 0.17677669
        %v4432 = vmul.f32 %v4358, 0.17677669
        %v4433 = vmul.f32 %v4361, 0.17677669
        %v4434 = vmul.f32 %v4366, 0.17677669
        %v4435 = vmul.f32 %v4369, 0.17677669
        %4436 = vmax.xlane.f32.xlu0 %v4372
        %v4437 = vpop.xlane.xlu0 %4436
        %4438 = vmax.xlane.f32.xlu0 %v4373
        %v4439 = vpop.xlane.xlu0 %4438
        %4440 = vmax.xlane.f32.xlu0 %v4374
        %v4441 = vpop.xlane.xlu0 %4440
        %4442 = vmax.xlane.f32.xlu0 %v4375
        %v4443 = vpop.xlane.xlu0 %4442
        %4444 = vmax.xlane.f32.xlu0 %v4376
        %v4445 = vpop.xlane.xlu0 %4444
        %4446 = vmax.xlane.f32.xlu0 %v4377
        %v4447 = vpop.xlane.xlu0 %4446
        %4448 = vmax.xlane.f32.xlu0 %v4378
        %v4449 = vpop.xlane.xlu0 %4448
        %4450 = vmax.xlane.f32.xlu0 %v4379
        %v4451 = vpop.xlane.xlu0 %4450
        %4452 = vmax.xlane.f32.xlu0 %v4380
        %v4453 = vpop.xlane.xlu0 %4452
        %4454 = vmax.xlane.f32.xlu0 %v4381
        %v4455 = vpop.xlane.xlu0 %4454
        %4456 = vmax.xlane.f32.xlu0 %v4382
        %v4457 = vpop.xlane.xlu0 %4456
        %4458 = vmax.xlane.f32.xlu0 %v4383
        %v4459 = vpop.xlane.xlu0 %4458
        %4460 = vmax.xlane.f32.xlu0 %v4384
        %v4461 = vpop.xlane.xlu0 %4460
        %4462 = vmax.xlane.f32.xlu0 %v4385
        %v4463 = vpop.xlane.xlu0 %4462
        %4464 = vmax.xlane.f32.xlu0 %v4386
        %v4465 = vpop.xlane.xlu0 %4464
        %4466 = vmax.xlane.f32.xlu0 %v4387
        %v4467 = vpop.xlane.xlu0 %4466
        %4468 = vmax.xlane.f32.xlu0 %v4388
        %v4469 = vpop.xlane.xlu0 %4468
        %4470 = vmax.xlane.f32.xlu0 %v4389
        %v4471 = vpop.xlane.xlu0 %4470
        %4472 = vmax.xlane.f32.xlu0 %v4390
        %v4473 = vpop.xlane.xlu0 %4472
        %4474 = vmax.xlane.f32.xlu0 %v4391
        %v4475 = vpop.xlane.xlu0 %4474
        %4476 = vmax.xlane.f32.xlu0 %v4392
        %v4477 = vpop.xlane.xlu0 %4476
        %4478 = vmax.xlane.f32.xlu0 %v4393
        %v4479 = vpop.xlane.xlu0 %4478
        %4480 = vmax.xlane.f32.xlu0 %v4394
        %v4481 = vpop.xlane.xlu0 %4480
        %4482 = vmax.xlane.f32.xlu0 %v4395
        %v4483 = vpop.xlane.xlu0 %4482
        %4484 = vmax.xlane.f32.xlu0 %v4396
        %v4485 = vpop.xlane.xlu0 %4484
        %4486 = vmax.xlane.f32.xlu0 %v4397
        %v4487 = vpop.xlane.xlu0 %4486
        %4488 = vmax.xlane.f32.xlu0 %v4398
        %v4489 = vpop.xlane.xlu0 %4488
        %4490 = vmax.xlane.f32.xlu0 %v4399
        %v4491 = vpop.xlane.xlu0 %4490
        %4492 = vmax.xlane.f32.xlu0 %v4400
        %v4493 = vpop.xlane.xlu0 %4492
        %4494 = vmax.xlane.f32.xlu0 %v4401
        %v4495 = vpop.xlane.xlu0 %4494
        %4496 = vmax.xlane.f32.xlu0 %v4402
        %v4497 = vpop.xlane.xlu0 %4496
        %4498 = vmax.xlane.f32.xlu0 %v4403
        %v4499 = vpop.xlane.xlu0 %4498
        %4500 = vmax.xlane.f32.xlu0 %v4404
        %v4501 = vpop.xlane.xlu0 %4500
        %4502 = vmax.xlane.f32.xlu0 %v4405
        %v4503 = vpop.xlane.xlu0 %4502
        %4504 = vmax.xlane.f32.xlu0 %v4406
        %v4505 = vpop.xlane.xlu0 %4504
        %4506 = vmax.xlane.f32.xlu0 %v4407
        %v4507 = vpop.xlane.xlu0 %4506
        %4508 = vmax.xlane.f32.xlu0 %v4408
        %v4509 = vpop.xlane.xlu0 %4508
        %4510 = vmax.xlane.f32.xlu0 %v4409
        %v4511 = vpop.xlane.xlu0 %4510
        %4512 = vmax.xlane.f32.xlu0 %v4410
        %v4513 = vpop.xlane.xlu0 %4512
        %4514 = vmax.xlane.f32.xlu0 %v4411
        %v4515 = vpop.xlane.xlu0 %4514
        %4516 = vmax.xlane.f32.xlu0 %v4412
        %v4517 = vpop.xlane.xlu0 %4516
        %4518 = vmax.xlane.f32.xlu0 %v4413
        %v4519 = vpop.xlane.xlu0 %4518
        %4520 = vmax.xlane.f32.xlu0 %v4414
        %v4521 = vpop.xlane.xlu0 %4520
        %4522 = vmax.xlane.f32.xlu0 %v4415
        %v4523 = vpop.xlane.xlu0 %4522
        %4524 = vmax.xlane.f32.xlu0 %v4416
        %v4525 = vpop.xlane.xlu0 %4524
        %4526 = vmax.xlane.f32.xlu0 %v4417
        %v4527 = vpop.xlane.xlu0 %4526
        %4528 = vmax.xlane.f32.xlu0 %v4418
        %v4529 = vpop.xlane.xlu0 %4528
        %4530 = vmax.xlane.f32.xlu0 %v4419
        %v4531 = vpop.xlane.xlu0 %4530
        %4532 = vmax.xlane.f32.xlu0 %v4420
        %v4533 = vpop.xlane.xlu0 %4532
        %4534 = vmax.xlane.f32.xlu0 %v4421
        %v4535 = vpop.xlane.xlu0 %4534
        %4536 = vmax.xlane.f32.xlu0 %v4422
        %v4537 = vpop.xlane.xlu0 %4536
        %4538 = vmax.xlane.f32.xlu0 %v4423
        %v4539 = vpop.xlane.xlu0 %4538
        %4540 = vmax.xlane.f32.xlu0 %v4424
        %v4541 = vpop.xlane.xlu0 %4540
        %4542 = vmax.xlane.f32.xlu0 %v4425
        %v4543 = vpop.xlane.xlu0 %4542
        %4544 = vmax.xlane.f32.xlu0 %v4426
        %v4545 = vpop.xlane.xlu0 %4544
        %4546 = vmax.xlane.f32.xlu0 %v4427
        %v4547 = vpop.xlane.xlu0 %4546
        %4548 = vmax.xlane.f32.xlu0 %v4428
        %v4549 = vpop.xlane.xlu0 %4548
        %4550 = vmax.xlane.f32.xlu0 %v4429
        %v4551 = vpop.xlane.xlu0 %4550
        %4552 = vmax.xlane.f32.xlu0 %v4430
        %v4553 = vpop.xlane.xlu0 %4552
        %4554 = vmax.xlane.f32.xlu0 %v4431
        %v4555 = vpop.xlane.xlu0 %4554
        %4556 = vmax.xlane.f32.xlu0 %v4432
        %v4557 = vpop.xlane.xlu0 %4556
        %4558 = vmax.xlane.f32.xlu0 %v4433
        %v4559 = vpop.xlane.xlu0 %4558
        %4560 = vmax.xlane.f32.xlu0 %v4434
        %v4561 = vpop.xlane.xlu0 %4560
        %4562 = vmax.xlane.f32.xlu0 %v4435
        %v4563 = vpop.xlane.xlu0 %4562
        %v4564 = vsub.f32 %v4372, %v4437
        %v4565 = vsub.f32 %v4373, %v4439
        %v4566 = vsub.f32 %v4374, %v4441
        %v4567 = vsub.f32 %v4375, %v4443
        %v4568 = vsub.f32 %v4376, %v4445
        %v4569 = vsub.f32 %v4377, %v4447
        %v4570 = vsub.f32 %v4378, %v4449
        %v4571 = vsub.f32 %v4379, %v4451
        %v4572 = vsub.f32 %v4380, %v4453
        %v4573 = vsub.f32 %v4381, %v4455
        %v4574 = vsub.f32 %v4382, %v4457
        %v4575 = vsub.f32 %v4383, %v4459
        %v4576 = vsub.f32 %v4384, %v4461
        %v4577 = vsub.f32 %v4385, %v4463
        %v4578 = vsub.f32 %v4386, %v4465
        %v4579 = vsub.f32 %v4387, %v4467
        %v4580 = vsub.f32 %v4388, %v4469
        %v4581 = vsub.f32 %v4389, %v4471
        %v4582 = vsub.f32 %v4390, %v4473
        %v4583 = vsub.f32 %v4391, %v4475
        %v4584 = vsub.f32 %v4392, %v4477
        %v4585 = vsub.f32 %v4393, %v4479
        %v4586 = vsub.f32 %v4394, %v4481
        %v4587 = vsub.f32 %v4395, %v4483
        %v4588 = vsub.f32 %v4396, %v4485
        %v4589 = vsub.f32 %v4397, %v4487
        %v4590 = vsub.f32 %v4398, %v4489
        %v4591 = vsub.f32 %v4399, %v4491
        %v4592 = vsub.f32 %v4400, %v4493
        %v4593 = vsub.f32 %v4401, %v4495
        %v4594 = vsub.f32 %v4402, %v4497
        %v4595 = vsub.f32 %v4403, %v4499
        %v4596 = vsub.f32 %v4404, %v4501
        %v4597 = vsub.f32 %v4405, %v4503
        %v4598 = vsub.f32 %v4406, %v4505
        %v4599 = vsub.f32 %v4407, %v4507
        %v4600 = vsub.f32 %v4408, %v4509
        %v4601 = vsub.f32 %v4409, %v4511
        %v4602 = vsub.f32 %v4410, %v4513
        %v4603 = vsub.f32 %v4411, %v4515
        %v4604 = vsub.f32 %v4412, %v4517
        %v4605 = vsub.f32 %v4413, %v4519
        %v4606 = vsub.f32 %v4414, %v4521
        %v4607 = vsub.f32 %v4415, %v4523
        %v4608 = vsub.f32 %v4416, %v4525
        %v4609 = vsub.f32 %v4417, %v4527
        %v4610 = vsub.f32 %v4418, %v4529
        %v4611 = vsub.f32 %v4419, %v4531
        %v4612 = vsub.f32 %v4420, %v4533
        %v4613 = vsub.f32 %v4421, %v4535
        %v4614 = vsub.f32 %v4422, %v4537
        %v4615 = vsub.f32 %v4423, %v4539
        %v4616 = vsub.f32 %v4424, %v4541
        %v4617 = vsub.f32 %v4425, %v4543
        %v4618 = vsub.f32 %v4426, %v4545
        %v4619 = vsub.f32 %v4427, %v4547
        %v4620 = vsub.f32 %v4428, %v4549
        %v4621 = vsub.f32 %v4429, %v4551
        %v4622 = vsub.f32 %v4430, %v4553
        %v4623 = vsub.f32 %v4431, %v4555
        %v4624 = vsub.f32 %v4432, %v4557
        %v4625 = vsub.f32 %v4433, %v4559
        %v4626 = vsub.f32 %v4434, %v4561
        %v4627 = vsub.f32 %v4435, %v4563
        %v4628 = vmul.f32 %v4564, 1.442695
        %v4629 = vpow.pop %v4628
        %v4630 = vmul.f32 %v4565, 1.442695
        %v4631 = vpow.pop %v4630
        %v4632 = vmul.f32 %v4566, 1.442695
        %v4633 = vpow.pop %v4632
        %v4634 = vmul.f32 %v4567, 1.442695
        %v4635 = vpow.pop %v4634
        %v4636 = vmul.f32 %v4568, 1.442695
        %v4637 = vpow.pop %v4636
        %v4638 = vmul.f32 %v4569, 1.442695
        %v4639 = vpow.pop %v4638
        %v4640 = vmul.f32 %v4570, 1.442695
        %v4641 = vpow.pop %v4640
        %v4642 = vmul.f32 %v4571, 1.442695
        %v4643 = vpow.pop %v4642
        %v4644 = vmul.f32 %v4572, 1.442695
        %v4645 = vpow.pop %v4644
        %v4646 = vmul.f32 %v4573, 1.442695
        %v4647 = vpow.pop %v4646
        %v4648 = vmul.f32 %v4574, 1.442695
        %v4649 = vpow.pop %v4648
        %v4650 = vmul.f32 %v4575, 1.442695
        %v4651 = vpow.pop %v4650
        %v4652 = vmul.f32 %v4576, 1.442695
        %v4653 = vpow.pop %v4652
        %v4654 = vmul.f32 %v4577, 1.442695
        %v4655 = vpow.pop %v4654
        %v4656 = vmul.f32 %v4578, 1.442695
        %v4657 = vpow.pop %v4656
        %v4658 = vmul.f32 %v4579, 1.442695
        %v4659 = vpow.pop %v4658
        %v4660 = vmul.f32 %v4580, 1.442695
        %v4661 = vpow.pop %v4660
        %v4662 = vmul.f32 %v4581, 1.442695
        %v4663 = vpow.pop %v4662
        %v4664 = vmul.f32 %v4582, 1.442695
        %v4665 = vpow.pop %v4664
        %v4666 = vmul.f32 %v4583, 1.442695
        %v4667 = vpow.pop %v4666
        %v4668 = vmul.f32 %v4584, 1.442695
        %v4669 = vpow.pop %v4668
        %v4670 = vmul.f32 %v4585, 1.442695
        %v4671 = vpow.pop %v4670
        %v4672 = vmul.f32 %v4586, 1.442695
        %v4673 = vpow.pop %v4672
        %v4674 = vmul.f32 %v4587, 1.442695
        %v4675 = vpow.pop %v4674
        %v4676 = vmul.f32 %v4588, 1.442695
        %v4677 = vpow.pop %v4676
        %v4678 = vmul.f32 %v4589, 1.442695
        %v4679 = vpow.pop %v4678
        %v4680 = vmul.f32 %v4590, 1.442695
        %v4681 = vpow.pop %v4680
        %v4682 = vmul.f32 %v4591, 1.442695
        %v4683 = vpow.pop %v4682
        %v4684 = vmul.f32 %v4592, 1.442695
        %v4685 = vpow.pop %v4684
        %v4686 = vmul.f32 %v4593, 1.442695
        %v4687 = vpow.pop %v4686
        %v4688 = vmul.f32 %v4594, 1.442695
        %v4689 = vpow.pop %v4688
        %v4690 = vmul.f32 %v4595, 1.442695
        %v4691 = vpow.pop %v4690
        %v4692 = vmul.f32 %v4596, 1.442695
        %v4693 = vpow.pop %v4692
        %v4694 = vmul.f32 %v4597, 1.442695
        %v4695 = vpow.pop %v4694
        %v4696 = vmul.f32 %v4598, 1.442695
        %v4697 = vpow.pop %v4696
        %v4698 = vmul.f32 %v4599, 1.442695
        %v4699 = vpow.pop %v4698
        %v4700 = vmul.f32 %v4600, 1.442695
        %v4701 = vpow.pop %v4700
        %v4702 = vmul.f32 %v4601, 1.442695
        %v4703 = vpow.pop %v4702
        %v4704 = vmul.f32 %v4602, 1.442695
        %v4705 = vpow.pop %v4704
        %v4706 = vmul.f32 %v4603, 1.442695
        %v4707 = vpow.pop %v4706
        %v4708 = vmul.f32 %v4604, 1.442695
        %v4709 = vpow.pop %v4708
        %v4710 = vmul.f32 %v4605, 1.442695
        %v4711 = vpow.pop %v4710
        %v4712 = vmul.f32 %v4606, 1.442695
        %v4713 = vpow.pop %v4712
        %v4714 = vmul.f32 %v4607, 1.442695
        %v4715 = vpow.pop %v4714
        %v4716 = vmul.f32 %v4608, 1.442695
        %v4717 = vpow.pop %v4716
        %v4718 = vmul.f32 %v4609, 1.442695
        %v4719 = vpow.pop %v4718
        %v4720 = vmul.f32 %v4610, 1.442695
        %v4721 = vpow.pop %v4720
        %v4722 = vmul.f32 %v4611, 1.442695
        %v4723 = vpow.pop %v4722
        %v4724 = vmul.f32 %v4612, 1.442695
        %v4725 = vpow.pop %v4724
        %v4726 = vmul.f32 %v4613, 1.442695
        %v4727 = vpow.pop %v4726
        %v4728 = vmul.f32 %v4614, 1.442695
        %v4729 = vpow.pop %v4728
        %v4730 = vmul.f32 %v4615, 1.442695
        %v4731 = vpow.pop %v4730
        %v4732 = vmul.f32 %v4616, 1.442695
        %v4733 = vpow.pop %v4732
        %v4734 = vmul.f32 %v4617, 1.442695
        %v4735 = vpow.pop %v4734
        %v4736 = vmul.f32 %v4618, 1.442695
        %v4737 = vpow.pop %v4736
        %v4738 = vmul.f32 %v4619, 1.442695
        %v4739 = vpow.pop %v4738
        %v4740 = vmul.f32 %v4620, 1.442695
        %v4741 = vpow.pop %v4740
        %v4742 = vmul.f32 %v4621, 1.442695
        %v4743 = vpow.pop %v4742
        %v4744 = vmul.f32 %v4622, 1.442695
        %v4745 = vpow.pop %v4744
        %v4746 = vmul.f32 %v4623, 1.442695
        %v4747 = vpow.pop %v4746
        %v4748 = vmul.f32 %v4624, 1.442695
        %v4749 = vpow.pop %v4748
        %v4750 = vmul.f32 %v4625, 1.442695
        %v4751 = vpow.pop %v4750
        %v4752 = vmul.f32 %v4626, 1.442695
        %v4753 = vpow.pop %v4752
        %v4754 = vmul.f32 %v4627, 1.442695
        %v4755 = vpow.pop %v4754
        %4756 = vadd.xlane.f32.xlu0 %v4629
        %v4757 = vpop.xlane.xlu0 %4756
        %4758 = vadd.xlane.f32.xlu0 %v4631
        %v4759 = vpop.xlane.xlu0 %4758
        %4760 = vadd.xlane.f32.xlu0 %v4633
        %v4761 = vpop.xlane.xlu0 %4760
        %4762 = vadd.xlane.f32.xlu0 %v4635
        %v4763 = vpop.xlane.xlu0 %4762
        %4764 = vadd.xlane.f32.xlu0 %v4637
        %v4765 = vpop.xlane.xlu0 %4764
        %4766 = vadd.xlane.f32.xlu0 %v4639
        %v4767 = vpop.xlane.xlu0 %4766
        %4768 = vadd.xlane.f32.xlu0 %v4641
        %v4769 = vpop.xlane.xlu0 %4768
        %4770 = vadd.xlane.f32.xlu0 %v4643
        %v4771 = vpop.xlane.xlu0 %4770
        %4772 = vadd.xlane.f32.xlu0 %v4645
        %v4773 = vpop.xlane.xlu0 %4772
        %4774 = vadd.xlane.f32.xlu0 %v4647
        %v4775 = vpop.xlane.xlu0 %4774
        %4776 = vadd.xlane.f32.xlu0 %v4649
        %v4777 = vpop.xlane.xlu0 %4776
        %4778 = vadd.xlane.f32.xlu0 %v4651
        %v4779 = vpop.xlane.xlu0 %4778
        %4780 = vadd.xlane.f32.xlu0 %v4653
        %v4781 = vpop.xlane.xlu0 %4780
        %4782 = vadd.xlane.f32.xlu0 %v4655
        %v4783 = vpop.xlane.xlu0 %4782
        %4784 = vadd.xlane.f32.xlu0 %v4657
        %v4785 = vpop.xlane.xlu0 %4784
        %4786 = vadd.xlane.f32.xlu0 %v4659
        %v4787 = vpop.xlane.xlu0 %4786
        %4788 = vadd.xlane.f32.xlu0 %v4661
        %v4789 = vpop.xlane.xlu0 %4788
        %4790 = vadd.xlane.f32.xlu0 %v4663
        %v4791 = vpop.xlane.xlu0 %4790
        %4792 = vadd.xlane.f32.xlu0 %v4665
        %v4793 = vpop.xlane.xlu0 %4792
        %4794 = vadd.xlane.f32.xlu0 %v4667
        %v4795 = vpop.xlane.xlu0 %4794
        %4796 = vadd.xlane.f32.xlu0 %v4669
        %v4797 = vpop.xlane.xlu0 %4796
        %4798 = vadd.xlane.f32.xlu0 %v4671
        %v4799 = vpop.xlane.xlu0 %4798
        %4800 = vadd.xlane.f32.xlu0 %v4673
        %v4801 = vpop.xlane.xlu0 %4800
        %4802 = vadd.xlane.f32.xlu0 %v4675
        %v4803 = vpop.xlane.xlu0 %4802
        %4804 = vadd.xlane.f32.xlu0 %v4677
        %v4805 = vpop.xlane.xlu0 %4804
        %4806 = vadd.xlane.f32.xlu0 %v4679
        %v4807 = vpop.xlane.xlu0 %4806
        %4808 = vadd.xlane.f32.xlu0 %v4681
        %v4809 = vpop.xlane.xlu0 %4808
        %4810 = vadd.xlane.f32.xlu0 %v4683
        %v4811 = vpop.xlane.xlu0 %4810
        %4812 = vadd.xlane.f32.xlu0 %v4685
        %v4813 = vpop.xlane.xlu0 %4812
        %4814 = vadd.xlane.f32.xlu0 %v4687
        %v4815 = vpop.xlane.xlu0 %4814
        %4816 = vadd.xlane.f32.xlu0 %v4689
        %v4817 = vpop.xlane.xlu0 %4816
        %4818 = vadd.xlane.f32.xlu0 %v4691
        %v4819 = vpop.xlane.xlu0 %4818
        %4820 = vadd.xlane.f32.xlu0 %v4693
        %v4821 = vpop.xlane.xlu0 %4820
        %4822 = vadd.xlane.f32.xlu0 %v4695
        %v4823 = vpop.xlane.xlu0 %4822
        %4824 = vadd.xlane.f32.xlu0 %v4697
        %v4825 = vpop.xlane.xlu0 %4824
        %4826 = vadd.xlane.f32.xlu0 %v4699
        %v4827 = vpop.xlane.xlu0 %4826
        %4828 = vadd.xlane.f32.xlu0 %v4701
        %v4829 = vpop.xlane.xlu0 %4828
        %4830 = vadd.xlane.f32.xlu0 %v4703
        %v4831 = vpop.xlane.xlu0 %4830
        %4832 = vadd.xlane.f32.xlu0 %v4705
        %v4833 = vpop.xlane.xlu0 %4832
        %4834 = vadd.xlane.f32.xlu0 %v4707
        %v4835 = vpop.xlane.xlu0 %4834
        %4836 = vadd.xlane.f32.xlu0 %v4709
        %v4837 = vpop.xlane.xlu0 %4836
        %4838 = vadd.xlane.f32.xlu0 %v4711
        %v4839 = vpop.xlane.xlu0 %4838
        %4840 = vadd.xlane.f32.xlu0 %v4713
        %v4841 = vpop.xlane.xlu0 %4840
        %4842 = vadd.xlane.f32.xlu0 %v4715
        %v4843 = vpop.xlane.xlu0 %4842
        %4844 = vadd.xlane.f32.xlu0 %v4717
        %v4845 = vpop.xlane.xlu0 %4844
        %4846 = vadd.xlane.f32.xlu0 %v4719
        %v4847 = vpop.xlane.xlu0 %4846
        %4848 = vadd.xlane.f32.xlu0 %v4721
        %v4849 = vpop.xlane.xlu0 %4848
        %4850 = vadd.xlane.f32.xlu0 %v4723
        %v4851 = vpop.xlane.xlu0 %4850
        %4852 = vadd.xlane.f32.xlu0 %v4725
        %v4853 = vpop.xlane.xlu0 %4852
        %4854 = vadd.xlane.f32.xlu0 %v4727
        %v4855 = vpop.xlane.xlu0 %4854
        %4856 = vadd.xlane.f32.xlu0 %v4729
        %v4857 = vpop.xlane.xlu0 %4856
        %4858 = vadd.xlane.f32.xlu0 %v4731
        %v4859 = vpop.xlane.xlu0 %4858
        %4860 = vadd.xlane.f32.xlu0 %v4733
        %v4861 = vpop.xlane.xlu0 %4860
        %4862 = vadd.xlane.f32.xlu0 %v4735
        %v4863 = vpop.xlane.xlu0 %4862
        %4864 = vadd.xlane.f32.xlu0 %v4737
        %v4865 = vpop.xlane.xlu0 %4864
        %4866 = vadd.xlane.f32.xlu0 %v4739
        %v4867 = vpop.xlane.xlu0 %4866
        %4868 = vadd.xlane.f32.xlu0 %v4741
        %v4869 = vpop.xlane.xlu0 %4868
        %4870 = vadd.xlane.f32.xlu0 %v4743
        %v4871 = vpop.xlane.xlu0 %4870
        %4872 = vadd.xlane.f32.xlu0 %v4745
        %v4873 = vpop.xlane.xlu0 %4872
        %4874 = vadd.xlane.f32.xlu0 %v4747
        %v4875 = vpop.xlane.xlu0 %4874
        %4876 = vadd.xlane.f32.xlu0 %v4749
        %v4877 = vpop.xlane.xlu0 %4876
        %4878 = vadd.xlane.f32.xlu0 %v4751
        %v4879 = vpop.xlane.xlu0 %4878
        %4880 = vadd.xlane.f32.xlu0 %v4753
        %v4881 = vpop.xlane.xlu0 %4880
        %4882 = vadd.xlane.f32.xlu0 %v4755
        %v4883 = vpop.xlane.xlu0 %4882
        %v4884 = vrcp.pop %v4757
        %v4885 = vrcp.pop %v4759
        %v4886 = vrcp.pop %v4761
        %v4887 = vrcp.pop %v4763
        %v4888 = vrcp.pop %v4765
        %v4889 = vrcp.pop %v4767
        %v4890 = vrcp.pop %v4769
        %v4891 = vrcp.pop %v4771
        %v4892 = vrcp.pop %v4773
        %v4893 = vrcp.pop %v4775
        %v4894 = vrcp.pop %v4777
        %v4895 = vrcp.pop %v4779
        %v4896 = vrcp.pop %v4781
        %v4897 = vrcp.pop %v4783
        %v4898 = vrcp.pop %v4785
        %v4899 = vrcp.pop %v4787
        %v4900 = vrcp.pop %v4789
        %v4901 = vrcp.pop %v4791
        %v4902 = vrcp.pop %v4793
        %v4903 = vrcp.pop %v4795
        %v4904 = vrcp.pop %v4797
        %v4905 = vrcp.pop %v4799
        %v4906 = vrcp.pop %v4801
        %v4907 = vrcp.pop %v4803
        %v4908 = vrcp.pop %v4805
        %v4909 = vrcp.pop %v4807
        %v4910 = vrcp.pop %v4809
        %v4911 = vrcp.pop %v4811
        %v4912 = vrcp.pop %v4813
        %v4913 = vrcp.pop %v4815
        %v4914 = vrcp.pop %v4817
        %v4915 = vrcp.pop %v4819
        %v4916 = vrcp.pop %v4821
        %v4917 = vrcp.pop %v4823
        %v4918 = vrcp.pop %v4825
        %v4919 = vrcp.pop %v4827
        %v4920 = vrcp.pop %v4829
        %v4921 = vrcp.pop %v4831
        %v4922 = vrcp.pop %v4833
        %v4923 = vrcp.pop %v4835
        %v4924 = vrcp.pop %v4837
        %v4925 = vrcp.pop %v4839
        %v4926 = vrcp.pop %v4841
        %v4927 = vrcp.pop %v4843
        %v4928 = vrcp.pop %v4845
        %v4929 = vrcp.pop %v4847
        %v4930 = vrcp.pop %v4849
        %v4931 = vrcp.pop %v4851
        %v4932 = vrcp.pop %v4853
        %v4933 = vrcp.pop %v4855
        %v4934 = vrcp.pop %v4857
        %v4935 = vrcp.pop %v4859
        %v4936 = vrcp.pop %v4861
        %v4937 = vrcp.pop %v4863
        %v4938 = vrcp.pop %v4865
        %v4939 = vrcp.pop %v4867
        %v4940 = vrcp.pop %v4869
        %v4941 = vrcp.pop %v4871
        %v4942 = vrcp.pop %v4873
        %v4943 = vrcp.pop %v4875
        %v4944 = vrcp.pop %v4877
        %v4945 = vrcp.pop %v4879
        %v4946 = vrcp.pop %v4881
        %v4947 = vrcp.pop %v4883
        %v4948 = vmul.f32 %v4629, %v4884
        %v4949 = vmul.f32 %v4631, %v4885
        %v4950 = vmul.f32 %v4633, %v4886
        %v4951 = vmul.f32 %v4635, %v4887
        %v4952 = vmul.f32 %v4637, %v4888
        %v4953 = vmul.f32 %v4639, %v4889
        %v4954 = vmul.f32 %v4641, %v4890
        %v4955 = vmul.f32 %v4643, %v4891
        %v4956 = vmul.f32 %v4645, %v4892
        %v4957 = vmul.f32 %v4647, %v4893
        %v4958 = vmul.f32 %v4649, %v4894
        %v4959 = vmul.f32 %v4651, %v4895
        %v4960 = vmul.f32 %v4653, %v4896
        %v4961 = vmul.f32 %v4655, %v4897
        %v4962 = vmul.f32 %v4657, %v4898
        %v4963 = vmul.f32 %v4659, %v4899
        %v4964 = vmul.f32 %v4661, %v4900
        %v4965 = vmul.f32 %v4663, %v4901
        %v4966 = vmul.f32 %v4665, %v4902
        %v4967 = vmul.f32 %v4667, %v4903
        %v4968 = vmul.f32 %v4669, %v4904
        %v4969 = vmul.f32 %v4671, %v4905
        %v4970 = vmul.f32 %v4673, %v4906
        %v4971 = vmul.f32 %v4675, %v4907
        %v4972 = vmul.f32 %v4677, %v4908
        %v4973 = vmul.f32 %v4679, %v4909
        %v4974 = vmul.f32 %v4681, %v4910
        %v4975 = vmul.f32 %v4683, %v4911
        %v4976 = vmul.f32 %v4685, %v4912
        %v4977 = vmul.f32 %v4687, %v4913
        %v4978 = vmul.f32 %v4689, %v4914
        %v4979 = vmul.f32 %v4691, %v4915
        %v4980 = vmul.f32 %v4693, %v4916
        %v4981 = vmul.f32 %v4695, %v4917
        %v4982 = vmul.f32 %v4697, %v4918
        %v4983 = vmul.f32 %v4699, %v4919
        %v4984 = vmul.f32 %v4701, %v4920
        %v4985 = vmul.f32 %v4703, %v4921
        %v4986 = vmul.f32 %v4705, %v4922
        %v4987 = vmul.f32 %v4707, %v4923
        %v4988 = vmul.f32 %v4709, %v4924
        %v4989 = vmul.f32 %v4711, %v4925
        %v4990 = vmul.f32 %v4713, %v4926
        %v4991 = vmul.f32 %v4715, %v4927
        %v4992 = vmul.f32 %v4717, %v4928
        %v4993 = vmul.f32 %v4719, %v4929
        %v4994 = vmul.f32 %v4721, %v4930
        %v4995 = vmul.f32 %v4723, %v4931
        %v4996 = vmul.f32 %v4725, %v4932
        %v4997 = vmul.f32 %v4727, %v4933
        %v4998 = vmul.f32 %v4729, %v4934
        %v4999 = vmul.f32 %v4731, %v4935
        %v5000 = vmul.f32 %v4733, %v4936
        %v5001 = vmul.f32 %v4735, %v4937
        %v5002 = vmul.f32 %v4737, %v4938
        %v5003 = vmul.f32 %v4739, %v4939
        %v5004 = vmul.f32 %v4741, %v4940
        %v5005 = vmul.f32 %v4743, %v4941
        %v5006 = vmul.f32 %v4745, %v4942
        %v5007 = vmul.f32 %v4747, %v4943
        %v5008 = vmul.f32 %v4749, %v4944
        %v5009 = vmul.f32 %v4751, %v4945
        %v5010 = vmul.f32 %v4753, %v4946
        %v5011 = vmul.f32 %v4755, %v4947
        %v5012 = vpack.c.bf16 %v4949, %v4948
        %v5013 = vpack.c.bf16 %v4951, %v4950
        %v5014 = vpack.c.bf16 %v4953, %v4952
        %v5015 = vpack.c.bf16 %v4955, %v4954
        %v5016 = vpack.c.bf16 %v4957, %v4956
        %v5017 = vpack.c.bf16 %v4959, %v4958
        %v5018 = vpack.c.bf16 %v4961, %v4960
        %v5019 = vpack.c.bf16 %v4963, %v4962
        %v5020 = vpack.c.bf16 %v4965, %v4964
        %v5021 = vpack.c.bf16 %v4967, %v4966
        %v5022 = vpack.c.bf16 %v4969, %v4968
        %v5023 = vpack.c.bf16 %v4971, %v4970
        %v5024 = vpack.c.bf16 %v4973, %v4972
        %v5025 = vpack.c.bf16 %v4975, %v4974
        %v5026 = vpack.c.bf16 %v4977, %v4976
        %v5027 = vpack.c.bf16 %v4979, %v4978
        %v5028 = vpack.c.bf16 %v4981, %v4980
        %v5029 = vpack.c.bf16 %v4983, %v4982
        %v5030 = vpack.c.bf16 %v4985, %v4984
        %v5031 = vpack.c.bf16 %v4987, %v4986
        %v5032 = vpack.c.bf16 %v4989, %v4988
        %v5033 = vpack.c.bf16 %v4991, %v4990
        %v5034 = vpack.c.bf16 %v4993, %v4992
        %v5035 = vpack.c.bf16 %v4995, %v4994
        %v5036 = vpack.c.bf16 %v4997, %v4996
        %v5037 = vpack.c.bf16 %v4999, %v4998
        %v5038 = vpack.c.bf16 %v5001, %v5000
        %v5039 = vpack.c.bf16 %v5003, %v5002
        %v5040 = vpack.c.bf16 %v5005, %v5004
        %v5041 = vpack.c.bf16 %v5007, %v5006
        %v5042 = vpack.c.bf16 %v5009, %v5008
        %v5043 = vpack.c.bf16 %v5011, %v5010
        %5044 = vmatprep.subr.bf16.mxu0 0
        %5045 = vmatpush1.bf16.msra.mxu0 %v1575
        %5046 = vmatprep.subr.bf16.mxu0 0
        %5047 = vmatpush1.bf16.msra.mxu0 %v1578
        %5048 = vmatprep.subr.bf16.mxu0 0
        %5049 = vmatpush1.bf16.msra.mxu0 %v1581
        %5050 = vmatprep.subr.bf16.mxu0 0
        %5051 = vmatpush1.bf16.msra.mxu0 %v1584
        %5052 = vmatprep.subr.bf16.mxu0 0
        %5053 = vmatpush1.bf16.msra.mxu0 %v1587
        %5054 = vmatprep.subr.bf16.mxu0 0
        %5055 = vmatpush1.bf16.msra.mxu0 %v1590
        %5056 = vmatprep.subr.bf16.mxu0 0
        %5057 = vmatpush1.bf16.msra.mxu0 %v1593
        %5058 = vmatprep.subr.bf16.mxu0 0
        %5059 = vmatpush1.bf16.msra.mxu0 %v1596
        %5060 = vmatprep.subr.bf16.mxu0 0
        %5061 = vmatpush1.bf16.msra.mxu0 0
        %5062 = vmatprep.subr.bf16.mxu0 0
        %5063 = vmatpush1.bf16.msra.mxu0 0
        %5064 = vmatprep.subr.bf16.mxu0 0
        %5065 = vmatpush1.bf16.msra.mxu0 0
        %5066 = vmatprep.subr.bf16.mxu0 0
        %5067 = vmatpush1.bf16.msra.mxu0 0
        %5068 = vmatprep.subr.bf16.mxu0 0
        %5069 = vmatpush1.bf16.msra.mxu0 0
        %5070 = vmatprep.subr.bf16.mxu0 0
        %5071 = vmatpush1.bf16.msra.mxu0 0
        %5072 = vmatprep.subr.bf16.mxu0 0
        %5073 = vmatpush1.bf16.msra.mxu0 0
        %5074 = vmatprep.subr.bf16.mxu0 0
        %5075 = vmatpush1.bf16.msra.mxu0 0
        %5076 = vmatprep.mubr.bf16.mxu0 0
        %5077 = vmatmul.mubr.bf16.gmra.mrb[0].mxu0 %v5012
        %v5078 = vpop.f32.mrb[0].mxu0
        %v5079 = vadd.f32 0.0, %v5078
        %v5080 = vpop.f32.mrb[0].mxu0
        %v5081 = vpop.f32.mrb[0].mxu0
        %v5082 = vadd.f32 0.0, %v5081
        %v5083 = vpop.f32.mrb[0].mxu0
        %5084 = vmatprep.mubr.bf16.mxu0 0
        %5085 = vmatmul.mubr.bf16.gmra.mrb[0].mxu0 %v5013
        %v5086 = vpop.f32.mrb[0].mxu0
        %v5087 = vadd.f32 0.0, %v5086
        %v5088 = vpop.f32.mrb[0].mxu0
        %v5089 = vpop.f32.mrb[0].mxu0
        %v5090 = vadd.f32 0.0, %v5089
        %v5091 = vpop.f32.mrb[0].mxu0
        %5092 = vmatprep.mubr.bf16.mxu0 0
        %5093 = vmatmul.mubr.bf16.gmra.mrb[0].mxu0 %v5014
        %v5094 = vpop.f32.mrb[0].mxu0
        %v5095 = vadd.f32 0.0, %v5094
        %v5096 = vpop.f32.mrb[0].mxu0
        %v5097 = vpop.f32.mrb[0].mxu0
        %v5098 = vadd.f32 0.0, %v5097
        %v5099 = vpop.f32.mrb[0].mxu0
        %5100 = vmatprep.mubr.bf16.mxu0 0
        %5101 = vmatmul.mubr.bf16.gmra.mrb[0].mxu0 %v5015
        %v5102 = vpop.f32.mrb[0].mxu0
        %v5103 = vadd.f32 0.0, %v5102
        %v5104 = vpop.f32.mrb[0].mxu0
        %v5105 = vpop.f32.mrb[0].mxu0
        %v5106 = vadd.f32 0.0, %v5105
        %v5107 = vpop.f32.mrb[0].mxu0
        %5108 = vmatprep.mubr.bf16.mxu0 0
        %5109 = vmatmul.mubr.bf16.gmra.mrb[0].mxu0 %v5016
        %v5110 = vpop.f32.mrb[0].mxu0
        %v5111 = vadd.f32 0.0, %v5110
        %v5112 = vpop.f32.mrb[0].mxu0
        %v5113 = vpop.f32.mrb[0].mxu0
        %v5114 = vadd.f32 0.0, %v5113
        %v5115 = vpop.f32.mrb[0].mxu0
        %5116 = vmatprep.mubr.bf16.mxu0 0
        %5117 = vmatmul.mubr.bf16.gmra.mrb[0].mxu0 %v5017
        %v5118 = vpop.f32.mrb[0].mxu0
        %v5119 = vadd.f32 0.0, %v5118
        %v5120 = vpop.f32.mrb[0].mxu0
        %v5121 = vpop.f32.mrb[0].mxu0
        %v5122 = vadd.f32 0.0, %v5121
        %v5123 = vpop.f32.mrb[0].mxu0
        %5124 = vmatprep.mubr.bf16.mxu0 0
        %5125 = vmatmul.mubr.bf16.gmra.mrb[0].mxu0 %v5018
        %v5126 = vpop.f32.mrb[0].mxu0
        %v5127 = vadd.f32 0.0, %v5126
        %v5128 = vpop.f32.mrb[0].mxu0
        %v5129 = vpop.f32.mrb[0].mxu0
        %v5130 = vadd.f32 0.0, %v5129
        %v5131 = vpop.f32.mrb[0].mxu0
        %5132 = vmatprep.mubr.bf16.mxu0 0
        %5133 = vmatmul.mubr.bf16.gmra.mrb[0].mxu0 %v5019
        %v5134 = vpop.f32.mrb[0].mxu0
        %v5135 = vadd.f32 0.0, %v5134
        %v5136 = vpop.f32.mrb[0].mxu0
        %v5137 = vpop.f32.mrb[0].mxu0
        %v5138 = vadd.f32 0.0, %v5137
        %v5139 = vpop.f32.mrb[0].mxu0
        %5140 = vdwg.mxu0
        %5141 = vmatprep.subr.bf16.mxu0 0
        %5142 = vmatpush1.bf16.msra.mxu0 %v3721
        %5143 = vmatprep.subr.bf16.mxu0 0
        %5144 = vmatpush1.bf16.msra.mxu0 %v3723
        %5145 = vmatprep.subr.bf16.mxu0 0
        %5146 = vmatpush1.bf16.msra.mxu0 %v3725
        %5147 = vmatprep.subr.bf16.mxu0 0
        %5148 = vmatpush1.bf16.msra.mxu0 %v3727
        %5149 = vmatprep.subr.bf16.mxu0 0
        %5150 = vmatpush1.bf16.msra.mxu0 %v3729
        %5151 = vmatprep.subr.bf16.mxu0 0
        %5152 = vmatpush1.bf16.msra.mxu0 %v3731
        %5153 = vmatprep.subr.bf16.mxu0 0
        %5154 = vmatpush1.bf16.msra.mxu0 %v3733
        %5155 = vmatprep.subr.bf16.mxu0 0
        %5156 = vmatpush1.bf16.msra.mxu0 %v3735
        %5157 = vmatprep.subr.bf16.mxu0 0
        %5158 = vmatpush1.bf16.msra.mxu0 0
        %5159 = vmatprep.subr.bf16.mxu0 0
        %5160 = vmatpush1.bf16.msra.mxu0 0
        %5161 = vmatprep.subr.bf16.mxu0 0
        %5162 = vmatpush1.bf16.msra.mxu0 0
        %5163 = vmatprep.subr.bf16.mxu0 0
        %5164 = vmatpush1.bf16.msra.mxu0 0
        %5165 = vmatprep.subr.bf16.mxu0 0
        %5166 = vmatpush1.bf16.msra.mxu0 0
        %5167 = vmatprep.subr.bf16.mxu0 0
        %5168 = vmatpush1.bf16.msra.mxu0 0
        %5169 = vmatprep.subr.bf16.mxu0 0
        %5170 = vmatpush1.bf16.msra.mxu0 0
        %5171 = vmatprep.subr.bf16.mxu0 0
        %5172 = vmatpush1.bf16.msra.mxu0 0
        %5173 = vmatprep.mubr.bf16.mxu0 0
        %5174 = vmatmul.mubr.bf16.gmra.mrb[0].mxu0 %v5020
        %v5175 = vpop.f32.mrb[0].mxu0
        %v5176 = vadd.f32 0.0, %v5175
        %v5177 = vpop.f32.mrb[0].mxu0
        %v5178 = vpop.f32.mrb[0].mxu0
        %v5179 = vadd.f32 0.0, %v5178
        %v5180 = vpop.f32.mrb[0].mxu0
        %5181 = vmatprep.mubr.bf16.mxu0 0
        %5182 = vmatmul.mubr.bf16.gmra.mrb[0].mxu0 %v5021
        %v5183 = vpop.f32.mrb[0].mxu0
        %v5184 = vadd.f32 0.0, %v5183
        %v5185 = vpop.f32.mrb[0].mxu0
        %v5186 = vpop.f32.mrb[0].mxu0
        %v5187 = vadd.f32 0.0, %v5186
        %v5188 = vpop.f32.mrb[0].mxu0
        %5189 = vmatprep.mubr.bf16.mxu0 0
        %5190 = vmatmul.mubr.bf16.gmra.mrb[0].mxu0 %v5022
        %v5191 = vpop.f32.mrb[0].mxu0
        %v5192 = vadd.f32 0.0, %v5191
        %v5193 = vpop.f32.mrb[0].mxu0
        %v5194 = vpop.f32.mrb[0].mxu0
        %v5195 = vadd.f32 0.0, %v5194
        %v5196 = vpop.f32.mrb[0].mxu0
        %5197 = vmatprep.mubr.bf16.mxu0 0
        %5198 = vmatmul.mubr.bf16.gmra.mrb[0].mxu0 %v5023
        %v5199 = vpop.f32.mrb[0].mxu0
        %v5200 = vadd.f32 0.0, %v5199
        %v5201 = vpop.f32.mrb[0].mxu0
        %v5202 = vpop.f32.mrb[0].mxu0
        %v5203 = vadd.f32 0.0, %v5202
        %v5204 = vpop.f32.mrb[0].mxu0
        %5205 = vmatprep.mubr.bf16.mxu0 0
        %5206 = vmatmul.mubr.bf16.gmra.mrb[0].mxu0 %v5024
        %v5207 = vpop.f32.mrb[0].mxu0
        %v5208 = vadd.f32 0.0, %v5207
        %v5209 = vpop.f32.mrb[0].mxu0
        %v5210 = vpop.f32.mrb[0].mxu0
        %v5211 = vadd.f32 0.0, %v5210
        %v5212 = vpop.f32.mrb[0].mxu0
        %5213 = vmatprep.mubr.bf16.mxu0 0
        %5214 = vmatmul.mubr.bf16.gmra.mrb[0].mxu0 %v5025
        %v5215 = vpop.f32.mrb[0].mxu0
        %v5216 = vadd.f32 0.0, %v5215
        %v5217 = vpop.f32.mrb[0].mxu0
        %v5218 = vpop.f32.mrb[0].mxu0
        %v5219 = vadd.f32 0.0, %v5218
        %v5220 = vpop.f32.mrb[0].mxu0
        %5221 = vmatprep.mubr.bf16.mxu0 0
        %5222 = vmatmul.mubr.bf16.gmra.mrb[0].mxu0 %v5026
        %v5223 = vpop.f32.mrb[0].mxu0
        %v5224 = vadd.f32 0.0, %v5223
        %v5225 = vpop.f32.mrb[0].mxu0
        %v5226 = vpop.f32.mrb[0].mxu0
        %v5227 = vadd.f32 0.0, %v5226
        %v5228 = vpop.f32.mrb[0].mxu0
        %5229 = vmatprep.mubr.bf16.mxu0 0
        %5230 = vmatmul.mubr.bf16.gmra.mrb[0].mxu0 %v5027
        %v5231 = vpop.f32.mrb[0].mxu0
        %v5232 = vadd.f32 0.0, %v5231
        %v5233 = vpop.f32.mrb[0].mxu0
        %v5234 = vpop.f32.mrb[0].mxu0
        %v5235 = vadd.f32 0.0, %v5234
        %v5236 = vpop.f32.mrb[0].mxu0
        %5237 = vdwg.mxu0
        %5238 = vmatprep.subr.bf16.mxu0 0
        %5239 = vmatpush1.bf16.msra.mxu0 %v3745
        %5240 = vmatprep.subr.bf16.mxu0 0
        %5241 = vmatpush1.bf16.msra.mxu0 %v3747
        %5242 = vmatprep.subr.bf16.mxu0 0
        %5243 = vmatpush1.bf16.msra.mxu0 %v3749
        %5244 = vmatprep.subr.bf16.mxu0 0
        %5245 = vmatpush1.bf16.msra.mxu0 %v3751
        %5246 = vmatprep.subr.bf16.mxu0 0
        %5247 = vmatpush1.bf16.msra.mxu0 %v3753
        %5248 = vmatprep.subr.bf16.mxu0 0
        %5249 = vmatpush1.bf16.msra.mxu0 %v3755
        %5250 = vmatprep.subr.bf16.mxu0 0
        %5251 = vmatpush1.bf16.msra.mxu0 %v3757
        %5252 = vmatprep.subr.bf16.mxu0 0
        %5253 = vmatpush1.bf16.msra.mxu0 %v3759
        %5254 = vmatprep.subr.bf16.mxu0 0
        %5255 = vmatpush1.bf16.msra.mxu0 0
        %5256 = vmatprep.subr.bf16.mxu0 0
        %5257 = vmatpush1.bf16.msra.mxu0 0
        %5258 = vmatprep.subr.bf16.mxu0 0
        %5259 = vmatpush1.bf16.msra.mxu0 0
        %5260 = vmatprep.subr.bf16.mxu0 0
        %5261 = vmatpush1.bf16.msra.mxu0 0
        %5262 = vmatprep.subr.bf16.mxu0 0
        %5263 = vmatpush1.bf16.msra.mxu0 0
        %5264 = vmatprep.subr.bf16.mxu0 0
        %5265 = vmatpush1.bf16.msra.mxu0 0
        %5266 = vmatprep.subr.bf16.mxu0 0
        %5267 = vmatpush1.bf16.msra.mxu0 0
        %5268 = vmatprep.subr.bf16.mxu0 0
        %5269 = vmatpush1.bf16.msra.mxu0 0
        %5270 = vmatprep.mubr.bf16.mxu0 0
        %5271 = vmatmul.mubr.bf16.gmra.mrb[0].mxu0 %v5028
        %v5272 = vpop.f32.mrb[0].mxu0
        %v5273 = vadd.f32 0.0, %v5272
        %v5274 = vpop.f32.mrb[0].mxu0
        %v5275 = vpop.f32.mrb[0].mxu0
        %v5276 = vadd.f32 0.0, %v5275
        %v5277 = vpop.f32.mrb[0].mxu0
        %5278 = vmatprep.mubr.bf16.mxu0 0
        %5279 = vmatmul.mubr.bf16.gmra.mrb[0].mxu0 %v5029
        %v5280 = vpop.f32.mrb[0].mxu0
        %v5281 = vadd.f32 0.0, %v5280
        %v5282 = vpop.f32.mrb[0].mxu0
        %v5283 = vpop.f32.mrb[0].mxu0
        %v5284 = vadd.f32 0.0, %v5283
        %v5285 = vpop.f32.mrb[0].mxu0
        %5286 = vmatprep.mubr.bf16.mxu0 0
        %5287 = vmatmul.mubr.bf16.gmra.mrb[0].mxu0 %v5030
        %v5288 = vpop.f32.mrb[0].mxu0
        %v5289 = vadd.f32 0.0, %v5288
        %v5290 = vpop.f32.mrb[0].mxu0
        %v5291 = vpop.f32.mrb[0].mxu0
        %v5292 = vadd.f32 0.0, %v5291
        %v5293 = vpop.f32.mrb[0].mxu0
        %5294 = vmatprep.mubr.bf16.mxu0 0
        %5295 = vmatmul.mubr.bf16.gmra.mrb[0].mxu0 %v5031
        %v5296 = vpop.f32.mrb[0].mxu0
        %v5297 = vadd.f32 0.0, %v5296
        %v5298 = vpop.f32.mrb[0].mxu0
        %v5299 = vpop.f32.mrb[0].mxu0
        %v5300 = vadd.f32 0.0, %v5299
        %v5301 = vpop.f32.mrb[0].mxu0
        %5302 = vmatprep.mubr.bf16.mxu0 0
        %5303 = vmatmul.mubr.bf16.gmra.mrb[0].mxu0 %v5032
        %v5304 = vpop.f32.mrb[0].mxu0
        %v5305 = vadd.f32 0.0, %v5304
        %v5306 = vpop.f32.mrb[0].mxu0
        %v5307 = vpop.f32.mrb[0].mxu0
        %v5308 = vadd.f32 0.0, %v5307
        %v5309 = vpop.f32.mrb[0].mxu0
        %5310 = vmatprep.mubr.bf16.mxu0 0
        %5311 = vmatmul.mubr.bf16.gmra.mrb[0].mxu0 %v5033
        %v5312 = vpop.f32.mrb[0].mxu0
        %v5313 = vadd.f32 0.0, %v5312
        %v5314 = vpop.f32.mrb[0].mxu0
        %v5315 = vpop.f32.mrb[0].mxu0
        %v5316 = vadd.f32 0.0, %v5315
        %v5317 = vpop.f32.mrb[0].mxu0
        %5318 = vmatprep.mubr.bf16.mxu0 0
        %5319 = vmatmul.mubr.bf16.gmra.mrb[0].mxu0 %v5034
        %v5320 = vpop.f32.mrb[0].mxu0
        %v5321 = vadd.f32 0.0, %v5320
        %v5322 = vpop.f32.mrb[0].mxu0
        %v5323 = vpop.f32.mrb[0].mxu0
        %v5324 = vadd.f32 0.0, %v5323
        %v5325 = vpop.f32.mrb[0].mxu0
        %5326 = vmatprep.mubr.bf16.mxu0 0
        %5327 = vmatmul.mubr.bf16.gmra.mrb[0].mxu0 %v5035
        %v5328 = vpop.f32.mrb[0].mxu0
        %v5329 = vadd.f32 0.0, %v5328
        %v5330 = vpop.f32.mrb[0].mxu0
        %v5331 = vpop.f32.mrb[0].mxu0
        %v5332 = vadd.f32 0.0, %v5331
        %v5333 = vpop.f32.mrb[0].mxu0
        %5334 = vdwg.mxu0
        %5335 = vmatprep.subr.bf16.mxu0 0
        %5336 = vmatpush1.bf16.msra.mxu0 %v3769
        %5337 = vmatprep.subr.bf16.mxu0 0
        %5338 = vmatpush1.bf16.msra.mxu0 %v3771
        %5339 = vmatprep.subr.bf16.mxu0 0
        %5340 = vmatpush1.bf16.msra.mxu0 %v3773
        %5341 = vmatprep.subr.bf16.mxu0 0
        %5342 = vmatpush1.bf16.msra.mxu0 %v3775
        %5343 = vmatprep.subr.bf16.mxu0 0
        %5344 = vmatpush1.bf16.msra.mxu0 %v3777
        %5345 = vmatprep.subr.bf16.mxu0 0
        %5346 = vmatpush1.bf16.msra.mxu0 %v3779
        %5347 = vmatprep.subr.bf16.mxu0 0
        %5348 = vmatpush1.bf16.msra.mxu0 %v3781
        %5349 = vmatprep.subr.bf16.mxu0 0
        %5350 = vmatpush1.bf16.msra.mxu0 %v3783
        %5351 = vmatprep.subr.bf16.mxu0 0
        %5352 = vmatpush1.bf16.msra.mxu0 0
        %5353 = vmatprep.subr.bf16.mxu0 0
        %5354 = vmatpush1.bf16.msra.mxu0 0
        %5355 = vmatprep.subr.bf16.mxu0 0
        %5356 = vmatpush1.bf16.msra.mxu0 0
        %5357 = vmatprep.subr.bf16.mxu0 0
        %5358 = vmatpush1.bf16.msra.mxu0 0
        %5359 = vmatprep.subr.bf16.mxu0 0
        %5360 = vmatpush1.bf16.msra.mxu0 0
        %5361 = vmatprep.subr.bf16.mxu0 0
        %5362 = vmatpush1.bf16.msra.mxu0 0
        %5363 = vmatprep.subr.bf16.mxu0 0
        %5364 = vmatpush1.bf16.msra.mxu0 0
        %5365 = vmatprep.subr.bf16.mxu0 0
        %5366 = vmatpush1.bf16.msra.mxu0 0
        %5367 = vmatprep.mubr.bf16.mxu0 0
        %5368 = vmatmul.mubr.bf16.gmra.mrb[0].mxu0 %v5036
        %v5369 = vpop.f32.mrb[0].mxu0
        %v5370 = vadd.f32 0.0, %v5369
        %v5371 = vpop.f32.mrb[0].mxu0
        %v5372 = vpop.f32.mrb[0].mxu0
        %v5373 = vadd.f32 0.0, %v5372
        %v5374 = vpop.f32.mrb[0].mxu0
        %5375 = vmatprep.mubr.bf16.mxu0 0
        %5376 = vmatmul.mubr.bf16.gmra.mrb[0].mxu0 %v5037
        %v5377 = vpop.f32.mrb[0].mxu0
        %v5378 = vadd.f32 0.0, %v5377
        %v5379 = vpop.f32.mrb[0].mxu0
        %v5380 = vpop.f32.mrb[0].mxu0
        %v5381 = vadd.f32 0.0, %v5380
        %v5382 = vpop.f32.mrb[0].mxu0
        %5383 = vmatprep.mubr.bf16.mxu0 0
        %5384 = vmatmul.mubr.bf16.gmra.mrb[0].mxu0 %v5038
        %v5385 = vpop.f32.mrb[0].mxu0
        %v5386 = vadd.f32 0.0, %v5385
        %v5387 = vpop.f32.mrb[0].mxu0
        %v5388 = vpop.f32.mrb[0].mxu0
        %v5389 = vadd.f32 0.0, %v5388
        %v5390 = vpop.f32.mrb[0].mxu0
        %5391 = vmatprep.mubr.bf16.mxu0 0
        %5392 = vmatmul.mubr.bf16.gmra.mrb[0].mxu0 %v5039
        %v5393 = vpop.f32.mrb[0].mxu0
        %v5394 = vadd.f32 0.0, %v5393
        %v5395 = vpop.f32.mrb[0].mxu0
        %v5396 = vpop.f32.mrb[0].mxu0
        %v5397 = vadd.f32 0.0, %v5396
        %v5398 = vpop.f32.mrb[0].mxu0
        %5399 = vmatprep.mubr.bf16.mxu0 0
        %5400 = vmatmul.mubr.bf16.gmra.mrb[0].mxu0 %v5040
        %v5401 = vpop.f32.mrb[0].mxu0
        %v5402 = vadd.f32 0.0, %v5401
        %v5403 = vpop.f32.mrb[0].mxu0
        %v5404 = vpop.f32.mrb[0].mxu0
        %v5405 = vadd.f32 0.0, %v5404
        %v5406 = vpop.f32.mrb[0].mxu0
        %5407 = vmatprep.mubr.bf16.mxu0 0
        %5408 = vmatmul.mubr.bf16.gmra.mrb[0].mxu0 %v5041
        %v5409 = vpop.f32.mrb[0].mxu0
        %v5410 = vadd.f32 0.0, %v5409
        %v5411 = vpop.f32.mrb[0].mxu0
        %v5412 = vpop.f32.mrb[0].mxu0
        %v5413 = vadd.f32 0.0, %v5412
        %v5414 = vpop.f32.mrb[0].mxu0
        %5415 = vmatprep.mubr.bf16.mxu0 0
        %5416 = vmatmul.mubr.bf16.gmra.mrb[0].mxu0 %v5042
        %v5417 = vpop.f32.mrb[0].mxu0
        %v5418 = vadd.f32 0.0, %v5417
        %v5419 = vpop.f32.mrb[0].mxu0
        %v5420 = vpop.f32.mrb[0].mxu0
        %v5421 = vadd.f32 0.0, %v5420
        %v5422 = vpop.f32.mrb[0].mxu0
        %5423 = vmatprep.mubr.bf16.mxu0 0
        %5424 = vmatmul.mubr.bf16.gmra.mrb[0].mxu0 %v5043
        %v5425 = vpop.f32.mrb[0].mxu0
        %v5426 = vadd.f32 0.0, %v5425
        %v5427 = vpop.f32.mrb[0].mxu0
        %v5428 = vpop.f32.mrb[0].mxu0
        %v5429 = vadd.f32 0.0, %v5428
        %v5430 = vpop.f32.mrb[0].mxu0
        %5431 = vdwg.mxu0
        %v5432 = vpack.c.bf16 %v5082, %v5079
        %v5433 = vpack.c.bf16 %v5090, %v5087
        %v5434 = vpack.c.bf16 %v5098, %v5095
        %v5435 = vpack.c.bf16 %v5106, %v5103
        %v5436 = vpack.c.bf16 %v5114, %v5111
        %v5437 = vpack.c.bf16 %v5122, %v5119
        %v5438 = vpack.c.bf16 %v5130, %v5127
        %v5439 = vpack.c.bf16 %v5138, %v5135
        %v5440 = vpack.c.bf16 %v5179, %v5176
        %v5441 = vpack.c.bf16 %v5187, %v5184
        %v5442 = vpack.c.bf16 %v5195, %v5192
        %v5443 = vpack.c.bf16 %v5203, %v5200
        %v5444 = vpack.c.bf16 %v5211, %v5208
        %v5445 = vpack.c.bf16 %v5219, %v5216
        %v5446 = vpack.c.bf16 %v5227, %v5224
        %v5447 = vpack.c.bf16 %v5235, %v5232
        %v5448 = vpack.c.bf16 %v5276, %v5273
        %v5449 = vpack.c.bf16 %v5284, %v5281
        %v5450 = vpack.c.bf16 %v5292, %v5289
        %v5451 = vpack.c.bf16 %v5300, %v5297
        %v5452 = vpack.c.bf16 %v5308, %v5305
        %v5453 = vpack.c.bf16 %v5316, %v5313
        %v5454 = vpack.c.bf16 %v5324, %v5321
        %v5455 = vpack.c.bf16 %v5332, %v5329
        %v5456 = vpack.c.bf16 %v5373, %v5370
        %v5457 = vpack.c.bf16 %v5381, %v5378
        %v5458 = vpack.c.bf16 %v5389, %v5386
        %v5459 = vpack.c.bf16 %v5397, %v5394
        %v5460 = vpack.c.bf16 %v5405, %v5402
        %v5461 = vpack.c.bf16 %v5413, %v5410
        %v5462 = vpack.c.bf16 %v5421, %v5418
        %v5463 = vpack.c.bf16 %v5429, %v5426
        %5472 = vrot.lane.b32.xlu0 %v5440, 32
        %v5473 = vpop.permute.xlu0 %5472
        %5474 = vrot.lane.b32.xlu0 %v5441, 32
        %v5475 = vpop.permute.xlu0 %5474
        %5476 = vrot.lane.b32.xlu0 %v5442, 32
        %v5477 = vpop.permute.xlu0 %5476
        %5478 = vrot.lane.b32.xlu0 %v5443, 32
        %v5479 = vpop.permute.xlu0 %5478
        %5480 = vrot.lane.b32.xlu0 %v5444, 32
        %v5481 = vpop.permute.xlu0 %5480
        %5482 = vrot.lane.b32.xlu0 %v5445, 32
        %v5483 = vpop.permute.xlu0 %5482
        %5484 = vrot.lane.b32.xlu0 %v5446, 32
        %v5485 = vpop.permute.xlu0 %5484
        %5486 = vrot.lane.b32.xlu0 %v5447, 32
        %v5487 = vpop.permute.xlu0 %5486
        %5496 = vrot.lane.b32.xlu0 %v5448, 64
        %v5497 = vpop.permute.xlu0 %5496
        %5498 = vrot.lane.b32.xlu0 %v5449, 64
        %v5499 = vpop.permute.xlu0 %5498
        %5500 = vrot.lane.b32.xlu0 %v5450, 64
        %v5501 = vpop.permute.xlu0 %5500
        %5502 = vrot.lane.b32.xlu0 %v5451, 64
        %v5503 = vpop.permute.xlu0 %5502
        %5504 = vrot.lane.b32.xlu0 %v5452, 64
        %v5505 = vpop.permute.xlu0 %5504
        %5506 = vrot.lane.b32.xlu0 %v5453, 64
        %v5507 = vpop.permute.xlu0 %5506
        %5508 = vrot.lane.b32.xlu0 %v5454, 64
        %v5509 = vpop.permute.xlu0 %5508
        %5510 = vrot.lane.b32.xlu0 %v5455, 64
        %v5511 = vpop.permute.xlu0 %5510
        %5520 = vrot.lane.b32.xlu0 %v5456, 96
        %v5521 = vpop.permute.xlu0 %5520
        %5522 = vrot.lane.b32.xlu0 %v5457, 96
        %v5523 = vpop.permute.xlu0 %5522
        %5524 = vrot.lane.b32.xlu0 %v5458, 96
        %v5525 = vpop.permute.xlu0 %5524
        %5526 = vrot.lane.b32.xlu0 %v5459, 96
        %v5527 = vpop.permute.xlu0 %5526
        %5528 = vrot.lane.b32.xlu0 %v5460, 96
        %v5529 = vpop.permute.xlu0 %5528
        %5530 = vrot.lane.b32.xlu0 %v5461, 96
        %v5531 = vpop.permute.xlu0 %5530
        %5532 = vrot.lane.b32.xlu0 %v5462, 96
        %v5533 = vpop.permute.xlu0 %5532
        %5534 = vrot.lane.b32.xlu0 %v5463, 96
        %v5535 = vpop.permute.xlu0 %5534
        %v5538 = vsel %vm1789, %v5432, %v5473
        %v5541 = vsel %vm1789, %v5433, %v5475
        %v5544 = vsel %vm1789, %v5434, %v5477
        %v5547 = vsel %vm1789, %v5435, %v5479
        %v5550 = vsel %vm1789, %v5436, %v5481
        %v5553 = vsel %vm1789, %v5437, %v5483
        %v5556 = vsel %vm1789, %v5438, %v5485
        %v5559 = vsel %vm1789, %v5439, %v5487
        %v5561 = vsel %vm3558, %v5538, %v5497
        %v5563 = vsel %vm3558, %v5541, %v5499
        %v5565 = vsel %vm3558, %v5544, %v5501
        %v5567 = vsel %vm3558, %v5547, %v5503
        %v5569 = vsel %vm3558, %v5550, %v5505
        %v5571 = vsel %vm3558, %v5553, %v5507
        %v5573 = vsel %vm3558, %v5556, %v5509
        %v5575 = vsel %vm3558, %v5559, %v5511
        %v5577 = vsel %vm3575, %v5561, %v5521
        %v5580 = vsel %vm3575, %v5563, %v5523
        %v5583 = vsel %vm3575, %v5565, %v5525
        %v5586 = vsel %vm3575, %v5567, %v5527
        %v5589 = vsel %vm3575, %v5569, %v5529
        %v5592 = vsel %vm3575, %v5571, %v5531
        %v5595 = vsel %vm3575, %v5573, %v5533
        %v5598 = vsel %vm3575, %v5575, %v5535
        %v5600 = vld [vmem:[#allocation7] sm:$0xf]
        %v5601 = vld [vmem:[#allocation7 + $0x4] sm:$0xf]
        %v5602 = vld [vmem:[#allocation7 + $0x8] sm:$0xf]
        %v5603 = vld [vmem:[#allocation7 + $0xc] sm:$0xf]
        %v5604 = vld [vmem:[#allocation7 + $0x10] sm:$0xf]
        %v5605 = vld [vmem:[#allocation7 + $0x14] sm:$0xf]
        %v5606 = vld [vmem:[#allocation7 + $0x18] sm:$0xf]
        %v5607 = vld [vmem:[#allocation7 + $0x1c] sm:$0xf]
        %v5608 = vld [vmem:[#allocation7 + $0x20] sm:$0xf]
        %v5609 = vld [vmem:[#allocation7 + $0x24] sm:$0xf]
        %v5610 = vld [vmem:[#allocation7 + $0x28] sm:$0xf]
        %v5611 = vld [vmem:[#allocation7 + $0x2c] sm:$0xf]
        %v5612 = vld [vmem:[#allocation7 + $0x30] sm:$0xf]
        %v5613 = vld [vmem:[#allocation7 + $0x34] sm:$0xf]
        %v5614 = vld [vmem:[#allocation7 + $0x38] sm:$0xf]
        %v5615 = vld [vmem:[#allocation7 + $0x3c] sm:$0xf]
        %v5617 = vlaneseq
        %v5618 = vshrl.u32 %v5617, 7
        %v5619 = vsub.s32 0, %v5618
        %v5620 = vrot.slane %v571, %v5619
        %v5638 = vunpack.c.l.b16 %v5600
        %v5639 = vunpack.c.l.b16 %v5601
        %v5640 = vunpack.c.l.b16 %v5602
        %v5641 = vunpack.c.l.b16 %v5603
        %v5642 = vunpack.c.l.b16 %v5604
        %v5643 = vunpack.c.l.b16 %v5605
        %v5644 = vunpack.c.l.b16 %v5606
        %v5645 = vunpack.c.l.b16 %v5607
        %v5646 = vunpack.c.l.b16 %v5608
        %v5647 = vunpack.c.l.b16 %v5609
        %v5648 = vunpack.c.l.b16 %v5610
        %v5649 = vunpack.c.l.b16 %v5611
        %v5650 = vunpack.c.l.b16 %v5612
        %v5651 = vunpack.c.l.b16 %v5613
        %v5652 = vunpack.c.l.b16 %v5614
        %v5653 = vunpack.c.l.b16 %v5615
        %v5654 = vpack.c.b16 %v5639, %v5638
        %v5655 = vpack.c.b16 %v5641, %v5640
        %v5656 = vpack.c.b16 %v5643, %v5642
        %v5657 = vpack.c.b16 %v5645, %v5644
        %v5658 = vpack.c.b16 %v5647, %v5646
        %v5659 = vpack.c.b16 %v5649, %v5648
        %v5660 = vpack.c.b16 %v5651, %v5650
        %v5661 = vpack.c.b16 %v5653, %v5652
        %5670 = vmatprep.subr.bf16.mxu0 0
        %5671 = vmatpush1.bf16.msra.mxu0 %v5654
        %5672 = vmatprep.subr.bf16.mxu0 0
        %5673 = vmatpush1.bf16.msra.mxu0 %v5655
        %5674 = vmatprep.subr.bf16.mxu0 0
        %5675 = vmatpush1.bf16.msra.mxu0 %v5656
        %5676 = vmatprep.subr.bf16.mxu0 0
        %5677 = vmatpush1.bf16.msra.mxu0 %v5657
        %5678 = vmatprep.subr.bf16.mxu0 0
        %5679 = vmatpush1.bf16.msra.mxu0 %v5658
        %5680 = vmatprep.subr.bf16.mxu0 0
        %5681 = vmatpush1.bf16.msra.mxu0 %v5659
        %5682 = vmatprep.subr.bf16.mxu0 0
        %5683 = vmatpush1.bf16.msra.mxu0 %v5660
        %5684 = vmatprep.subr.bf16.mxu0 0
        %5685 = vmatpush1.bf16.msra.mxu0 %v5661
        %5686 = vmatprep.subr.bf16.mxu0 0
        %5687 = vmatpush1.bf16.msra.mxu0 0
        %5688 = vmatprep.subr.bf16.mxu0 0
        %5689 = vmatpush1.bf16.msra.mxu0 0
        %5690 = vmatprep.subr.bf16.mxu0 0
        %5691 = vmatpush1.bf16.msra.mxu0 0
        %5692 = vmatprep.subr.bf16.mxu0 0
        %5693 = vmatpush1.bf16.msra.mxu0 0
        %5694 = vmatprep.subr.bf16.mxu0 0
        %5695 = vmatpush1.bf16.msra.mxu0 0
        %5696 = vmatprep.subr.bf16.mxu0 0
        %5697 = vmatpush1.bf16.msra.mxu0 0
        %5698 = vmatprep.subr.bf16.mxu0 0
        %5699 = vmatpush1.bf16.msra.mxu0 0
        %5700 = vmatprep.subr.bf16.mxu0 0
        %5701 = vmatpush1.bf16.msra.mxu0 0
        %5702 = vmatprep.mubr.bf16.mxu0 0
        %5703 = vmatmul.mubr.bf16.gmra.mrb[0].mxu0 %v3577
        %v5704 = vpop.f32.mrb[0].mxu0
        %v5705 = vadd.f32 %v5620, %v5704
        %v5706 = vpop.f32.mrb[0].mxu0
        %v5707 = vpop.f32.mrb[0].mxu0
        %v5708 = vadd.f32 %v5620, %v5707
        %v5709 = vpop.f32.mrb[0].mxu0
        %5710 = vmatprep.mubr.bf16.mxu0 0
        %5711 = vmatmul.mubr.bf16.gmra.mrb[0].mxu0 %v3580
        %v5712 = vpop.f32.mrb[0].mxu0
        %v5713 = vadd.f32 %v5620, %v5712
        %v5714 = vpop.f32.mrb[0].mxu0
        %v5715 = vpop.f32.mrb[0].mxu0
        %v5716 = vadd.f32 %v5620, %v5715
        %v5717 = vpop.f32.mrb[0].mxu0
        %5718 = vmatprep.mubr.bf16.mxu0 0
        %5719 = vmatmul.mubr.bf16.gmra.mrb[0].mxu0 %v3583
        %v5720 = vpop.f32.mrb[0].mxu0
        %v5721 = vadd.f32 %v5620, %v5720
        %v5722 = vpop.f32.mrb[0].mxu0
        %v5723 = vpop.f32.mrb[0].mxu0
        %v5724 = vadd.f32 %v5620, %v5723
        %v5725 = vpop.f32.mrb[0].mxu0
        %5726 = vmatprep.mubr.bf16.mxu0 0
        %5727 = vmatmul.mubr.bf16.gmra.mrb[0].mxu0 %v3586
        %v5728 = vpop.f32.mrb[0].mxu0
        %v5729 = vadd.f32 %v5620, %v5728
        %v5730 = vpop.f32.mrb[0].mxu0
        %v5731 = vpop.f32.mrb[0].mxu0
        %v5732 = vadd.f32 %v5620, %v5731
        %v5733 = vpop.f32.mrb[0].mxu0
        %5734 = vmatprep.mubr.bf16.mxu0 0
        %5735 = vmatmul.mubr.bf16.gmra.mrb[0].mxu0 %v3589
        %v5736 = vpop.f32.mrb[0].mxu0
        %v5737 = vadd.f32 %v5620, %v5736
        %v5738 = vpop.f32.mrb[0].mxu0
        %v5739 = vpop.f32.mrb[0].mxu0
        %v5740 = vadd.f32 %v5620, %v5739
        %v5741 = vpop.f32.mrb[0].mxu0
        %5742 = vmatprep.mubr.bf16.mxu0 0
        %5743 = vmatmul.mubr.bf16.gmra.mrb[0].mxu0 %v3592
        %v5744 = vpop.f32.mrb[0].mxu0
        %v5745 = vadd.f32 %v5620, %v5744
        %v5746 = vpop.f32.mrb[0].mxu0
        %v5747 = vpop.f32.mrb[0].mxu0
        %v5748 = vadd.f32 %v5620, %v5747
        %v5749 = vpop.f32.mrb[0].mxu0
        %5750 = vmatprep.mubr.bf16.mxu0 0
        %5751 = vmatmul.mubr.bf16.gmra.mrb[0].mxu0 %v3595
        %v5752 = vpop.f32.mrb[0].mxu0
        %v5753 = vadd.f32 %v5620, %v5752
        %v5754 = vpop.f32.mrb[0].mxu0
        %v5755 = vpop.f32.mrb[0].mxu0
        %v5756 = vadd.f32 %v5620, %v5755
        %v5757 = vpop.f32.mrb[0].mxu0
        %5758 = vmatprep.mubr.bf16.mxu0 0
        %5759 = vmatmul.mubr.bf16.gmra.mrb[0].mxu0 %v3598
        %v5760 = vpop.f32.mrb[0].mxu0
        %v5761 = vadd.f32 %v5620, %v5760
        %v5762 = vpop.f32.mrb[0].mxu0
        %v5763 = vpop.f32.mrb[0].mxu0
        %v5764 = vadd.f32 %v5620, %v5763
        %v5765 = vpop.f32.mrb[0].mxu0
        %5766 = vmatprep.mubr.bf16.mxu0 0
        %5767 = vmatmul.mubr.bf16.gmra.mrb[0].mxu0 %v5577
        %v5768 = vpop.f32.mrb[0].mxu0
        %v5769 = vadd.f32 %v5620, %v5768
        %v5770 = vpop.f32.mrb[0].mxu0
        %v5771 = vpop.f32.mrb[0].mxu0
        %v5772 = vadd.f32 %v5620, %v5771
        %v5773 = vpop.f32.mrb[0].mxu0
        %5774 = vmatprep.mubr.bf16.mxu0 0
        %5775 = vmatmul.mubr.bf16.gmra.mrb[0].mxu0 %v5580
        %v5776 = vpop.f32.mrb[0].mxu0
        %v5777 = vadd.f32 %v5620, %v5776
        %v5778 = vpop.f32.mrb[0].mxu0
        %v5779 = vpop.f32.mrb[0].mxu0
        %v5780 = vadd.f32 %v5620, %v5779
        %v5781 = vpop.f32.mrb[0].mxu0
        %5782 = vmatprep.mubr.bf16.mxu0 0
        %5783 = vmatmul.mubr.bf16.gmra.mrb[0].mxu0 %v5583
        %v5784 = vpop.f32.mrb[0].mxu0
        %v5785 = vadd.f32 %v5620, %v5784
        %v5786 = vpop.f32.mrb[0].mxu0
        %v5787 = vpop.f32.mrb[0].mxu0
        %v5788 = vadd.f32 %v5620, %v5787
        %v5789 = vpop.f32.mrb[0].mxu0
        %5790 = vmatprep.mubr.bf16.mxu0 0
        %5791 = vmatmul.mubr.bf16.gmra.mrb[0].mxu0 %v5586
        %v5792 = vpop.f32.mrb[0].mxu0
        %v5793 = vadd.f32 %v5620, %v5792
        %v5794 = vpop.f32.mrb[0].mxu0
        %v5795 = vpop.f32.mrb[0].mxu0
        %v5796 = vadd.f32 %v5620, %v5795
        %v5797 = vpop.f32.mrb[0].mxu0
        %5798 = vmatprep.mubr.bf16.mxu0 0
        %5799 = vmatmul.mubr.bf16.gmra.mrb[0].mxu0 %v5589
        %v5800 = vpop.f32.mrb[0].mxu0
        %v5801 = vadd.f32 %v5620, %v5800
        %v5802 = vpop.f32.mrb[0].mxu0
        %v5803 = vpop.f32.mrb[0].mxu0
        %v5804 = vadd.f32 %v5620, %v5803
        %v5805 = vpop.f32.mrb[0].mxu0
        %5806 = vmatprep.mubr.bf16.mxu0 0
        %5807 = vmatmul.mubr.bf16.gmra.mrb[0].mxu0 %v5592
        %v5808 = vpop.f32.mrb[0].mxu0
        %v5809 = vadd.f32 %v5620, %v5808
        %v5810 = vpop.f32.mrb[0].mxu0
        %v5811 = vpop.f32.mrb[0].mxu0
        %v5812 = vadd.f32 %v5620, %v5811
        %v5813 = vpop.f32.mrb[0].mxu0
        %5814 = vmatprep.mubr.bf16.mxu0 0
        %5815 = vmatmul.mubr.bf16.gmra.mrb[0].mxu0 %v5595
        %v5816 = vpop.f32.mrb[0].mxu0
        %v5817 = vadd.f32 %v5620, %v5816
        %v5818 = vpop.f32.mrb[0].mxu0
        %v5819 = vpop.f32.mrb[0].mxu0
        %v5820 = vadd.f32 %v5620, %v5819
        %v5821 = vpop.f32.mrb[0].mxu0
        %5822 = vmatprep.mubr.bf16.mxu0 0
        %5823 = vmatmul.mubr.bf16.gmra.mrb[0].mxu0 %v5598
        %v5824 = vpop.f32.mrb[0].mxu0
        %v5825 = vadd.f32 %v5620, %v5824
        %v5826 = vpop.f32.mrb[0].mxu0
        %v5827 = vpop.f32.mrb[0].mxu0
        %v5828 = vadd.f32 %v5620, %v5827
        %v5829 = vpop.f32.mrb[0].mxu0
        %5830 = vdwg.mxu0
        %v5831 = vadd.f32 %v534, %v5705
        %v5832 = vadd.f32 %v535, %v5708
        %v5833 = vadd.f32 %v536, %v5713
        %v5834 = vadd.f32 %v537, %v5716
        %v5835 = vadd.f32 %v538, %v5721
        %v5836 = vadd.f32 %v539, %v5724
        %v5837 = vadd.f32 %v540, %v5729
        %v5838 = vadd.f32 %v541, %v5732
        %v5839 = vadd.f32 %v542, %v5737
        %v5840 = vadd.f32 %v543, %v5740
        %v5841 = vadd.f32 %v544, %v5745
        %v5842 = vadd.f32 %v545, %v5748
        %v5843 = vadd.f32 %v546, %v5753
        %v5844 = vadd.f32 %v547, %v5756
        %v5845 = vadd.f32 %v548, %v5761
        %v5846 = vadd.f32 %v549, %v5764
        %v5847 = vadd.f32 %v550, %v5769
        %v5848 = vadd.f32 %v551, %v5772
        %v5849 = vadd.f32 %v552, %v5777
        %v5850 = vadd.f32 %v553, %v5780
        %v5851 = vadd.f32 %v554, %v5785
        %v5852 = vadd.f32 %v555, %v5788
        %v5853 = vadd.f32 %v556, %v5793
        %v5854 = vadd.f32 %v557, %v5796
        %v5855 = vadd.f32 %v558, %v5801
        %v5856 = vadd.f32 %v559, %v5804
        %v5857 = vadd.f32 %v560, %v5809
        %v5858 = vadd.f32 %v561, %v5812
        %v5859 = vadd.f32 %v562, %v5817
        %v5860 = vadd.f32 %v563, %v5820
        %v5861 = vadd.f32 %v564, %v5825
        %v5862 = vadd.f32 %v565, %v5828
        %5863 = vadd.xlane.f32.xlu0 %v5831
        %v5864 = vpop.xlane.xlu0 %5863
        %5865 = vadd.xlane.f32.xlu0 %v5832
        %v5866 = vpop.xlane.xlu0 %5865
        %5867 = vadd.xlane.f32.xlu0 %v5833
        %v5868 = vpop.xlane.xlu0 %5867
        %5869 = vadd.xlane.f32.xlu0 %v5834
        %v5870 = vpop.xlane.xlu0 %5869
        %5871 = vadd.xlane.f32.xlu0 %v5835
        %v5872 = vpop.xlane.xlu0 %5871
        %5873 = vadd.xlane.f32.xlu0 %v5836
        %v5874 = vpop.xlane.xlu0 %5873
        %5875 = vadd.xlane.f32.xlu0 %v5837
        %v5876 = vpop.xlane.xlu0 %5875
        %5877 = vadd.xlane.f32.xlu0 %v5838
        %v5878 = vpop.xlane.xlu0 %5877
        %5879 = vadd.xlane.f32.xlu0 %v5839
        %v5880 = vpop.xlane.xlu0 %5879
        %5881 = vadd.xlane.f32.xlu0 %v5840
        %v5882 = vpop.xlane.xlu0 %5881
        %5883 = vadd.xlane.f32.xlu0 %v5841
        %v5884 = vpop.xlane.xlu0 %5883
        %5885 = vadd.xlane.f32.xlu0 %v5842
        %v5886 = vpop.xlane.xlu0 %5885
        %5887 = vadd.xlane.f32.xlu0 %v5843
        %v5888 = vpop.xlane.xlu0 %5887
        %5889 = vadd.xlane.f32.xlu0 %v5844
        %v5890 = vpop.xlane.xlu0 %5889
        %5891 = vadd.xlane.f32.xlu0 %v5845
        %v5892 = vpop.xlane.xlu0 %5891
        %5893 = vadd.xlane.f32.xlu0 %v5846
        %v5894 = vpop.xlane.xlu0 %5893
        %5895 = vadd.xlane.f32.xlu0 %v5847
        %v5896 = vpop.xlane.xlu0 %5895
        %5897 = vadd.xlane.f32.xlu0 %v5848
        %v5898 = vpop.xlane.xlu0 %5897
        %5899 = vadd.xlane.f32.xlu0 %v5849
        %v5900 = vpop.xlane.xlu0 %5899
        %5901 = vadd.xlane.f32.xlu0 %v5850
        %v5902 = vpop.xlane.xlu0 %5901
        %5903 = vadd.xlane.f32.xlu0 %v5851
        %v5904 = vpop.xlane.xlu0 %5903
        %5905 = vadd.xlane.f32.xlu0 %v5852
        %v5906 = vpop.xlane.xlu0 %5905
        %5907 = vadd.xlane.f32.xlu0 %v5853
        %v5908 = vpop.xlane.xlu0 %5907
        %5909 = vadd.xlane.f32.xlu0 %v5854
        %v5910 = vpop.xlane.xlu0 %5909
        %5911 = vadd.xlane.f32.xlu0 %v5855
        %v5912 = vpop.xlane.xlu0 %5911
        %5913 = vadd.xlane.f32.xlu0 %v5856
        %v5914 = vpop.xlane.xlu0 %5913
        %5915 = vadd.xlane.f32.xlu0 %v5857
        %v5916 = vpop.xlane.xlu0 %5915
        %5917 = vadd.xlane.f32.xlu0 %v5858
        %v5918 = vpop.xlane.xlu0 %5917
        %5919 = vadd.xlane.f32.xlu0 %v5859
        %v5920 = vpop.xlane.xlu0 %5919
        %5921 = vadd.xlane.f32.xlu0 %v5860
        %v5922 = vpop.xlane.xlu0 %5921
        %5923 = vadd.xlane.f32.xlu0 %v5861
        %v5924 = vpop.xlane.xlu0 %5923
        %5925 = vadd.xlane.f32.xlu0 %v5862
        %v5926 = vpop.xlane.xlu0 %5925
        %v5927 = vmul.f32 %v5864, %v638
        %v5928 = vmul.f32 %v5866, %v638
        %v5929 = vmul.f32 %v5868, %v638
        %v5930 = vmul.f32 %v5870, %v638
        %v5931 = vmul.f32 %v5872, %v638
        %v5932 = vmul.f32 %v5874, %v638
        %v5933 = vmul.f32 %v5876, %v638
        %v5934 = vmul.f32 %v5878, %v638
        %v5935 = vmul.f32 %v5880, %v638
        %v5936 = vmul.f32 %v5882, %v638
        %v5937 = vmul.f32 %v5884, %v638
        %v5938 = vmul.f32 %v5886, %v638
        %v5939 = vmul.f32 %v5888, %v638
        %v5940 = vmul.f32 %v5890, %v638
        %v5941 = vmul.f32 %v5892, %v638
        %v5942 = vmul.f32 %v5894, %v638
        %v5943 = vmul.f32 %v5896, %v638
        %v5944 = vmul.f32 %v5898, %v638
        %v5945 = vmul.f32 %v5900, %v638
        %v5946 = vmul.f32 %v5902, %v638
        %v5947 = vmul.f32 %v5904, %v638
        %v5948 = vmul.f32 %v5906, %v638
        %v5949 = vmul.f32 %v5908, %v638
        %v5950 = vmul.f32 %v5910, %v638
        %v5951 = vmul.f32 %v5912, %v638
        %v5952 = vmul.f32 %v5914, %v638
        %v5953 = vmul.f32 %v5916, %v638
        %v5954 = vmul.f32 %v5918, %v638
        %v5955 = vmul.f32 %v5920, %v638
        %v5956 = vmul.f32 %v5922, %v638
        %v5957 = vmul.f32 %v5924, %v638
        %v5958 = vmul.f32 %v5926, %v638
        %v5959 = vsub.f32 %v5831, %v5927
        %v5960 = vsub.f32 %v5832, %v5928
        %v5961 = vsub.f32 %v5833, %v5929
        %v5962 = vsub.f32 %v5834, %v5930
        %v5963 = vsub.f32 %v5835, %v5931
        %v5964 = vsub.f32 %v5836, %v5932
        %v5965 = vsub.f32 %v5837, %v5933
        %v5966 = vsub.f32 %v5838, %v5934
        %v5967 = vsub.f32 %v5839, %v5935
        %v5968 = vsub.f32 %v5840, %v5936
        %v5969 = vsub.f32 %v5841, %v5937
        %v5970 = vsub.f32 %v5842, %v5938
        %v5971 = vsub.f32 %v5843, %v5939
        %v5972 = vsub.f32 %v5844, %v5940
        %v5973 = vsub.f32 %v5845, %v5941
        %v5974 = vsub.f32 %v5846, %v5942
        %v5975 = vsub.f32 %v5847, %v5943
        %v5976 = vsub.f32 %v5848, %v5944
        %v5977 = vsub.f32 %v5849, %v5945
        %v5978 = vsub.f32 %v5850, %v5946
        %v5979 = vsub.f32 %v5851, %v5947
        %v5980 = vsub.f32 %v5852, %v5948
        %v5981 = vsub.f32 %v5853, %v5949
        %v5982 = vsub.f32 %v5854, %v5950
        %v5983 = vsub.f32 %v5855, %v5951
        %v5984 = vsub.f32 %v5856, %v5952
        %v5985 = vsub.f32 %v5857, %v5953
        %v5986 = vsub.f32 %v5858, %v5954
        %v5987 = vsub.f32 %v5859, %v5955
        %v5988 = vsub.f32 %v5860, %v5956
        %v5989 = vsub.f32 %v5861, %v5957
        %v5990 = vsub.f32 %v5862, %v5958
        %v5991 = vmul.f32 %v5959, %v5959
        %v5992 = vmul.f32 %v5960, %v5960
        %v5993 = vmul.f32 %v5961, %v5961
        %v5994 = vmul.f32 %v5962, %v5962
        %v5995 = vmul.f32 %v5963, %v5963
        %v5996 = vmul.f32 %v5964, %v5964
        %v5997 = vmul.f32 %v5965, %v5965
        %v5998 = vmul.f32 %v5966, %v5966
        %v5999 = vmul.f32 %v5967, %v5967
        %v6000 = vmul.f32 %v5968, %v5968
        %v6001 = vmul.f32 %v5969, %v5969
        %v6002 = vmul.f32 %v5970, %v5970
        %v6003 = vmul.f32 %v5971, %v5971
        %v6004 = vmul.f32 %v5972, %v5972
        %v6005 = vmul.f32 %v5973, %v5973
        %v6006 = vmul.f32 %v5974, %v5974
        %v6007 = vmul.f32 %v5975, %v5975
        %v6008 = vmul.f32 %v5976, %v5976
        %v6009 = vmul.f32 %v5977, %v5977
        %v6010 = vmul.f32 %v5978, %v5978
        %v6011 = vmul.f32 %v5979, %v5979
        %v6012 = vmul.f32 %v5980, %v5980
        %v6013 = vmul.f32 %v5981, %v5981
        %v6014 = vmul.f32 %v5982, %v5982
        %v6015 = vmul.f32 %v5983, %v5983
        %v6016 = vmul.f32 %v5984, %v5984
        %v6017 = vmul.f32 %v5985, %v5985
        %v6018 = vmul.f32 %v5986, %v5986
        %v6019 = vmul.f32 %v5987, %v5987
        %v6020 = vmul.f32 %v5988, %v5988
        %v6021 = vmul.f32 %v5989, %v5989
        %v6022 = vmul.f32 %v5990, %v5990
        %6023 = vadd.xlane.f32.xlu0 %v5991
        %v6024 = vpop.xlane.xlu0 %6023
        %6025 = vadd.xlane.f32.xlu0 %v5992
        %v6026 = vpop.xlane.xlu0 %6025
        %6027 = vadd.xlane.f32.xlu0 %v5993
        %v6028 = vpop.xlane.xlu0 %6027
        %6029 = vadd.xlane.f32.xlu0 %v5994
        %v6030 = vpop.xlane.xlu0 %6029
        %6031 = vadd.xlane.f32.xlu0 %v5995
        %v6032 = vpop.xlane.xlu0 %6031
        %6033 = vadd.xlane.f32.xlu0 %v5996
        %v6034 = vpop.xlane.xlu0 %6033
        %6035 = vadd.xlane.f32.xlu0 %v5997
        %v6036 = vpop.xlane.xlu0 %6035
        %6037 = vadd.xlane.f32.xlu0 %v5998
        %v6038 = vpop.xlane.xlu0 %6037
        %6039 = vadd.xlane.f32.xlu0 %v5999
        %v6040 = vpop.xlane.xlu0 %6039
        %6041 = vadd.xlane.f32.xlu0 %v6000
        %v6042 = vpop.xlane.xlu0 %6041
        %6043 = vadd.xlane.f32.xlu0 %v6001
        %v6044 = vpop.xlane.xlu0 %6043
        %6045 = vadd.xlane.f32.xlu0 %v6002
        %v6046 = vpop.xlane.xlu0 %6045
        %6047 = vadd.xlane.f32.xlu0 %v6003
        %v6048 = vpop.xlane.xlu0 %6047
        %6049 = vadd.xlane.f32.xlu0 %v6004
        %v6050 = vpop.xlane.xlu0 %6049
        %6051 = vadd.xlane.f32.xlu0 %v6005
        %v6052 = vpop.xlane.xlu0 %6051
        %6053 = vadd.xlane.f32.xlu0 %v6006
        %v6054 = vpop.xlane.xlu0 %6053
        %6055 = vadd.xlane.f32.xlu0 %v6007
        %v6056 = vpop.xlane.xlu0 %6055
        %6057 = vadd.xlane.f32.xlu0 %v6008
        %v6058 = vpop.xlane.xlu0 %6057
        %6059 = vadd.xlane.f32.xlu0 %v6009
        %v6060 = vpop.xlane.xlu0 %6059
        %6061 = vadd.xlane.f32.xlu0 %v6010
        %v6062 = vpop.xlane.xlu0 %6061
        %6063 = vadd.xlane.f32.xlu0 %v6011
        %v6064 = vpop.xlane.xlu0 %6063
        %6065 = vadd.xlane.f32.xlu0 %v6012
        %v6066 = vpop.xlane.xlu0 %6065
        %6067 = vadd.xlane.f32.xlu0 %v6013
        %v6068 = vpop.xlane.xlu0 %6067
        %6069 = vadd.xlane.f32.xlu0 %v6014
        %v6070 = vpop.xlane.xlu0 %6069
        %6071 = vadd.xlane.f32.xlu0 %v6015
        %v6072 = vpop.xlane.xlu0 %6071
        %6073 = vadd.xlane.f32.xlu0 %v6016
        %v6074 = vpop.xlane.xlu0 %6073
        %6075 = vadd.xlane.f32.xlu0 %v6017
        %v6076 = vpop.xlane.xlu0 %6075
        %6077 = vadd.xlane.f32.xlu0 %v6018
        %v6078 = vpop.xlane.xlu0 %6077
        %6079 = vadd.xlane.f32.xlu0 %v6019
        %v6080 = vpop.xlane.xlu0 %6079
        %6081 = vadd.xlane.f32.xlu0 %v6020
        %v6082 = vpop.xlane.xlu0 %6081
        %6083 = vadd.xlane.f32.xlu0 %v6021
        %v6084 = vpop.xlane.xlu0 %6083
        %6085 = vadd.xlane.f32.xlu0 %v6022
        %v6086 = vpop.xlane.xlu0 %6085
        %v6087 = vmul.f32 %v6024, %v638
        %v6088 = vmul.f32 %v6026, %v638
        %v6089 = vmul.f32 %v6028, %v638
        %v6090 = vmul.f32 %v6030, %v638
        %v6091 = vmul.f32 %v6032, %v638
        %v6092 = vmul.f32 %v6034, %v638
        %v6093 = vmul.f32 %v6036, %v638
        %v6094 = vmul.f32 %v6038, %v638
        %v6095 = vmul.f32 %v6040, %v638
        %v6096 = vmul.f32 %v6042, %v638
        %v6097 = vmul.f32 %v6044, %v638
        %v6098 = vmul.f32 %v6046, %v638
        %v6099 = vmul.f32 %v6048, %v638
        %v6100 = vmul.f32 %v6050, %v638
        %v6101 = vmul.f32 %v6052, %v638
        %v6102 = vmul.f32 %v6054, %v638
        %v6103 = vmul.f32 %v6056, %v638
        %v6104 = vmul.f32 %v6058, %v638
        %v6105 = vmul.f32 %v6060, %v638
        %v6106 = vmul.f32 %v6062, %v638
        %v6107 = vmul.f32 %v6064, %v638
        %v6108 = vmul.f32 %v6066, %v638
        %v6109 = vmul.f32 %v6068, %v638
        %v6110 = vmul.f32 %v6070, %v638
        %v6111 = vmul.f32 %v6072, %v638
        %v6112 = vmul.f32 %v6074, %v638
        %v6113 = vmul.f32 %v6076, %v638
        %v6114 = vmul.f32 %v6078, %v638
        %v6115 = vmul.f32 %v6080, %v638
        %v6116 = vmul.f32 %v6082, %v638
        %v6117 = vmul.f32 %v6084, %v638
        %v6118 = vmul.f32 %v6086, %v638
        %v6119 = vadd.f32 %v6087, 1e-05
        %v6120 = vadd.f32 %v6088, 1e-05
        %v6121 = vadd.f32 %v6089, 1e-05
        %v6122 = vadd.f32 %v6090, 1e-05
        %v6123 = vadd.f32 %v6091, 1e-05
        %v6124 = vadd.f32 %v6092, 1e-05
        %v6125 = vadd.f32 %v6093, 1e-05
        %v6126 = vadd.f32 %v6094, 1e-05
        %v6127 = vadd.f32 %v6095, 1e-05
        %v6128 = vadd.f32 %v6096, 1e-05
        %v6129 = vadd.f32 %v6097, 1e-05
        %v6130 = vadd.f32 %v6098, 1e-05
        %v6131 = vadd.f32 %v6099, 1e-05
        %v6132 = vadd.f32 %v6100, 1e-05
        %v6133 = vadd.f32 %v6101, 1e-05
        %v6134 = vadd.f32 %v6102, 1e-05
        %v6135 = vadd.f32 %v6103, 1e-05
        %v6136 = vadd.f32 %v6104, 1e-05
        %v6137 = vadd.f32 %v6105, 1e-05
        %v6138 = vadd.f32 %v6106, 1e-05
        %v6139 = vadd.f32 %v6107, 1e-05
        %v6140 = vadd.f32 %v6108, 1e-05
        %v6141 = vadd.f32 %v6109, 1e-05
        %v6142 = vadd.f32 %v6110, 1e-05
        %v6143 = vadd.f32 %v6111, 1e-05
        %v6144 = vadd.f32 %v6112, 1e-05
        %v6145 = vadd.f32 %v6113, 1e-05
        %v6146 = vadd.f32 %v6114, 1e-05
        %v6147 = vadd.f32 %v6115, 1e-05
        %v6148 = vadd.f32 %v6116, 1e-05
        %v6149 = vadd.f32 %v6117, 1e-05
        %v6150 = vadd.f32 %v6118, 1e-05
        %v6151 = vrsqrt.pop %v6119
        %v6152 = vrsqrt.pop %v6120
        %v6153 = vrsqrt.pop %v6121
        %v6154 = vrsqrt.pop %v6122
        %v6155 = vrsqrt.pop %v6123
        %v6156 = vrsqrt.pop %v6124
        %v6157 = vrsqrt.pop %v6125
        %v6158 = vrsqrt.pop %v6126
        %v6159 = vrsqrt.pop %v6127
        %v6160 = vrsqrt.pop %v6128
        %v6161 = vrsqrt.pop %v6129
        %v6162 = vrsqrt.pop %v6130
        %v6163 = vrsqrt.pop %v6131
        %v6164 = vrsqrt.pop %v6132
        %v6165 = vrsqrt.pop %v6133
        %v6166 = vrsqrt.pop %v6134
        %v6167 = vrsqrt.pop %v6135
        %v6168 = vrsqrt.pop %v6136
        %v6169 = vrsqrt.pop %v6137
        %v6170 = vrsqrt.pop %v6138
        %v6171 = vrsqrt.pop %v6139
        %v6172 = vrsqrt.pop %v6140
        %v6173 = vrsqrt.pop %v6141
        %v6174 = vrsqrt.pop %v6142
        %v6175 = vrsqrt.pop %v6143
        %v6176 = vrsqrt.pop %v6144
        %v6177 = vrsqrt.pop %v6145
        %v6178 = vrsqrt.pop %v6146
        %v6179 = vrsqrt.pop %v6147
        %v6180 = vrsqrt.pop %v6148
        %v6181 = vrsqrt.pop %v6149
        %v6182 = vrsqrt.pop %v6150
        %v6183 = vmul.f32 %v5959, %v6151
        %v6184 = vmul.f32 %v5960, %v6152
        %v6185 = vmul.f32 %v5961, %v6153
        %v6186 = vmul.f32 %v5962, %v6154
        %v6187 = vmul.f32 %v5963, %v6155
        %v6188 = vmul.f32 %v5964, %v6156
        %v6189 = vmul.f32 %v5965, %v6157
        %v6190 = vmul.f32 %v5966, %v6158
        %v6191 = vmul.f32 %v5967, %v6159
        %v6192 = vmul.f32 %v5968, %v6160
        %v6193 = vmul.f32 %v5969, %v6161
        %v6194 = vmul.f32 %v5970, %v6162
        %v6195 = vmul.f32 %v5971, %v6163
        %v6196 = vmul.f32 %v5972, %v6164
        %v6197 = vmul.f32 %v5973, %v6165
        %v6198 = vmul.f32 %v5974, %v6166
        %v6199 = vmul.f32 %v5975, %v6167
        %v6200 = vmul.f32 %v5976, %v6168
        %v6201 = vmul.f32 %v5977, %v6169
        %v6202 = vmul.f32 %v5978, %v6170
        %v6203 = vmul.f32 %v5979, %v6171
        %v6204 = vmul.f32 %v5980, %v6172
        %v6205 = vmul.f32 %v5981, %v6173
        %v6206 = vmul.f32 %v5982, %v6174
        %v6207 = vmul.f32 %v5983, %v6175
        %v6208 = vmul.f32 %v5984, %v6176
        %v6209 = vmul.f32 %v5985, %v6177
        %v6210 = vmul.f32 %v5986, %v6178
        %v6211 = vmul.f32 %v5987, %v6179
        %v6212 = vmul.f32 %v5988, %v6180
        %v6213 = vmul.f32 %v5989, %v6181
        %v6214 = vmul.f32 %v5990, %v6182
        %v6216 = vlaneseq
        %v6217 = vshrl.u32 %v6216, 7
        %v6218 = vsub.s32 0, %v6217
        %v6219 = vrot.slane %v568, %v6218
        %v6221 = vmul.f32 %v6183, %v6219
        %v6222 = vmul.f32 %v6184, %v6219
        %v6223 = vmul.f32 %v6185, %v6219
        %v6224 = vmul.f32 %v6186, %v6219
        %v6225 = vmul.f32 %v6187, %v6219
        %v6226 = vmul.f32 %v6188, %v6219
        %v6227 = vmul.f32 %v6189, %v6219
        %v6228 = vmul.f32 %v6190, %v6219
        %v6229 = vmul.f32 %v6191, %v6219
        %v6230 = vmul.f32 %v6192, %v6219
        %v6231 = vmul.f32 %v6193, %v6219
        %v6232 = vmul.f32 %v6194, %v6219
        %v6233 = vmul.f32 %v6195, %v6219
        %v6234 = vmul.f32 %v6196, %v6219
        %v6235 = vmul.f32 %v6197, %v6219
        %v6236 = vmul.f32 %v6198, %v6219
        %v6237 = vmul.f32 %v6199, %v6219
        %v6238 = vmul.f32 %v6200, %v6219
        %v6239 = vmul.f32 %v6201, %v6219
        %v6240 = vmul.f32 %v6202, %v6219
        %v6241 = vmul.f32 %v6203, %v6219
        %v6242 = vmul.f32 %v6204, %v6219
        %v6243 = vmul.f32 %v6205, %v6219
        %v6244 = vmul.f32 %v6206, %v6219
        %v6245 = vmul.f32 %v6207, %v6219
        %v6246 = vmul.f32 %v6208, %v6219
        %v6247 = vmul.f32 %v6209, %v6219
        %v6248 = vmul.f32 %v6210, %v6219
        %v6249 = vmul.f32 %v6211, %v6219
        %v6250 = vmul.f32 %v6212, %v6219
        %v6251 = vmul.f32 %v6213, %v6219
        %v6252 = vmul.f32 %v6214, %v6219
        %v6254 = vlaneseq
        %v6255 = vshrl.u32 %v6254, 7
        %v6256 = vsub.s32 0, %v6255
        %v6257 = vrot.slane %v569, %v6256
        %v6259 = vadd.f32 %v6221, %v6257
        %v6260 = vadd.f32 %v6222, %v6257
        %v6261 = vadd.f32 %v6223, %v6257
        %v6262 = vadd.f32 %v6224, %v6257
        %v6263 = vadd.f32 %v6225, %v6257
        %v6264 = vadd.f32 %v6226, %v6257
        %v6265 = vadd.f32 %v6227, %v6257
        %v6266 = vadd.f32 %v6228, %v6257
        %v6267 = vadd.f32 %v6229, %v6257
        %v6268 = vadd.f32 %v6230, %v6257
        %v6269 = vadd.f32 %v6231, %v6257
        %v6270 = vadd.f32 %v6232, %v6257
        %v6271 = vadd.f32 %v6233, %v6257
        %v6272 = vadd.f32 %v6234, %v6257
        %v6273 = vadd.f32 %v6235, %v6257
        %v6274 = vadd.f32 %v6236, %v6257
        %v6275 = vadd.f32 %v6237, %v6257
        %v6276 = vadd.f32 %v6238, %v6257
        %v6277 = vadd.f32 %v6239, %v6257
        %v6278 = vadd.f32 %v6240, %v6257
        %v6279 = vadd.f32 %v6241, %v6257
        %v6280 = vadd.f32 %v6242, %v6257
        %v6281 = vadd.f32 %v6243, %v6257
        %v6282 = vadd.f32 %v6244, %v6257
        %v6283 = vadd.f32 %v6245, %v6257
        %v6284 = vadd.f32 %v6246, %v6257
        %v6285 = vadd.f32 %v6247, %v6257
        %v6286 = vadd.f32 %v6248, %v6257
        %v6287 = vadd.f32 %v6249, %v6257
        %v6288 = vadd.f32 %v6250, %v6257
        %v6289 = vadd.f32 %v6251, %v6257
        %v6290 = vadd.f32 %v6252, %v6257
        %v6291 = vpack.c.bf16 %v6260, %v6259
        %v6292 = vpack.c.bf16 %v6262, %v6261
        %v6293 = vpack.c.bf16 %v6264, %v6263
        %v6294 = vpack.c.bf16 %v6266, %v6265
        %v6295 = vpack.c.bf16 %v6268, %v6267
        %v6296 = vpack.c.bf16 %v6270, %v6269
        %v6297 = vpack.c.bf16 %v6272, %v6271
        %v6298 = vpack.c.bf16 %v6274, %v6273
        %v6299 = vpack.c.bf16 %v6276, %v6275
        %v6300 = vpack.c.bf16 %v6278, %v6277
        %v6301 = vpack.c.bf16 %v6280, %v6279
        %v6302 = vpack.c.bf16 %v6282, %v6281
        %v6303 = vpack.c.bf16 %v6284, %v6283
        %v6304 = vpack.c.bf16 %v6286, %v6285
        %v6305 = vpack.c.bf16 %v6288, %v6287
        %v6306 = vpack.c.bf16 %v6290, %v6289
        %v6307 = vld [vmem:[#allocation8] sm:$0xff]
        %v6308 = vld [vmem:[#allocation8 + $0x8] sm:$0xff]
        %v6309 = vld [vmem:[#allocation8 + $0x10] sm:$0xff]
        %v6310 = vld [vmem:[#allocation8 + $0x18] sm:$0xff]
        %v6311 = vld [vmem:[#allocation8 + $0x20] sm:$0xff]
        %v6312 = vld [vmem:[#allocation8 + $0x28] sm:$0xff]
        %v6313 = vld [vmem:[#allocation8 + $0x30] sm:$0xff]
        %v6314 = vld [vmem:[#allocation8 + $0x38] sm:$0xff]
        %v6315 = vld [vmem:[#allocation8 + $0x40] sm:$0xff]
        %v6316 = vld [vmem:[#allocation8 + $0x48] sm:$0xff]
        %v6317 = vld [vmem:[#allocation8 + $0x50] sm:$0xff]
        %v6318 = vld [vmem:[#allocation8 + $0x58] sm:$0xff]
        %v6319 = vld [vmem:[#allocation8 + $0x60] sm:$0xff]
        %v6320 = vld [vmem:[#allocation8 + $0x68] sm:$0xff]
        %v6321 = vld [vmem:[#allocation8 + $0x70] sm:$0xff]
        %v6322 = vld [vmem:[#allocation8 + $0x78] sm:$0xff]
        %v6324 = vlaneseq
        %v6325 = vshrl.u32 %v6324, 7
        %v6326 = vsub.s32 0, %v6325
        %v6327 = vrot.slane %v572, %v6326
        %v6328 = vlaneseq
        %v6329 = vshrl.u32 %v6328, 7
        %v6330 = vsub.s32 1, %v6329
        %v6331 = vrot.slane %v572, %v6330
        %v6350 = vunpack.c.l.b16 %v6307
        %v6351 = vunpack.c.h.b16 %v6307
        %v6352 = vunpack.c.l.b16 %v6308
        %v6353 = vunpack.c.h.b16 %v6308
        %v6354 = vunpack.c.l.b16 %v6309
        %v6355 = vunpack.c.h.b16 %v6309
        %v6356 = vunpack.c.l.b16 %v6310
        %v6357 = vunpack.c.h.b16 %v6310
        %v6358 = vunpack.c.l.b16 %v6311
        %v6359 = vunpack.c.h.b16 %v6311
        %v6360 = vunpack.c.l.b16 %v6312
        %v6361 = vunpack.c.h.b16 %v6312
        %v6362 = vunpack.c.l.b16 %v6313
        %v6363 = vunpack.c.h.b16 %v6313
        %v6364 = vunpack.c.l.b16 %v6314
        %v6365 = vunpack.c.h.b16 %v6314
        %v6366 = vunpack.c.l.b16 %v6315
        %v6367 = vunpack.c.h.b16 %v6315
        %v6368 = vunpack.c.l.b16 %v6316
        %v6369 = vunpack.c.h.b16 %v6316
        %v6370 = vunpack.c.l.b16 %v6317
        %v6371 = vunpack.c.h.b16 %v6317
        %v6372 = vunpack.c.l.b16 %v6318
        %v6373 = vunpack.c.h.b16 %v6318
        %v6374 = vunpack.c.l.b16 %v6319
        %v6375 = vunpack.c.h.b16 %v6319
        %v6376 = vunpack.c.l.b16 %v6320
        %v6377 = vunpack.c.h.b16 %v6320
        %v6378 = vunpack.c.l.b16 %v6321
        %v6379 = vunpack.c.h.b16 %v6321
        %v6380 = vunpack.c.l.b16 %v6322
        %v6381 = vunpack.c.h.b16 %v6322
        %v6382 = vpack.c.b16 %v6352, %v6350
        %v6383 = vpack.c.b16 %v6353, %v6351
        %v6384 = vpack.c.b16 %v6356, %v6354
        %v6385 = vpack.c.b16 %v6357, %v6355
        %v6386 = vpack.c.b16 %v6360, %v6358
        %v6387 = vpack.c.b16 %v6361, %v6359
        %v6388 = vpack.c.b16 %v6364, %v6362
        %v6389 = vpack.c.b16 %v6365, %v6363
        %v6390 = vpack.c.b16 %v6368, %v6366
        %v6391 = vpack.c.b16 %v6369, %v6367
        %v6392 = vpack.c.b16 %v6372, %v6370
        %v6393 = vpack.c.b16 %v6373, %v6371
        %v6394 = vpack.c.b16 %v6376, %v6374
        %v6395 = vpack.c.b16 %v6377, %v6375
        %v6396 = vpack.c.b16 %v6380, %v6378
        %v6397 = vpack.c.b16 %v6381, %v6379
        %6414 = vmatprep.subr.bf16.mxu0 %v6383
        %6415 = vmatpush1.bf16.msra.mxu0 %v6382
        %6416 = vmatprep.subr.bf16.mxu0 %v6385
        %6417 = vmatpush1.bf16.msra.mxu0 %v6384
        %6418 = vmatprep.subr.bf16.mxu0 %v6387
        %6419 = vmatpush1.bf16.msra.mxu0 %v6386
        %6420 = vmatprep.subr.bf16.mxu0 %v6389
        %6421 = vmatpush1.bf16.msra.mxu0 %v6388
        %6422 = vmatprep.subr.bf16.mxu0 %v6391
        %6423 = vmatpush1.bf16.msra.mxu0 %v6390
        %6424 = vmatprep.subr.bf16.mxu0 %v6393
        %6425 = vmatpush1.bf16.msra.mxu0 %v6392
        %6426 = vmatprep.subr.bf16.mxu0 %v6395
        %6427 = vmatpush1.bf16.msra.mxu0 %v6394
        %6428 = vmatprep.subr.bf16.mxu0 %v6397
        %6429 = vmatpush1.bf16.msra.mxu0 %v6396
        %6430 = vmatprep.subr.bf16.mxu0 0
        %6431 = vmatpush1.bf16.msra.mxu0 0
        %6432 = vmatprep.subr.bf16.mxu0 0
        %6433 = vmatpush1.bf16.msra.mxu0 0
        %6434 = vmatprep.subr.bf16.mxu0 0
        %6435 = vmatpush1.bf16.msra.mxu0 0
        %6436 = vmatprep.subr.bf16.mxu0 0
        %6437 = vmatpush1.bf16.msra.mxu0 0
        %6438 = vmatprep.subr.bf16.mxu0 0
        %6439 = vmatpush1.bf16.msra.mxu0 0
        %6440 = vmatprep.subr.bf16.mxu0 0
        %6441 = vmatpush1.bf16.msra.mxu0 0
        %6442 = vmatprep.subr.bf16.mxu0 0
        %6443 = vmatpush1.bf16.msra.mxu0 0
        %6444 = vmatprep.subr.bf16.mxu0 0
        %6445 = vmatpush1.bf16.msra.mxu0 0
        %6446 = vmatprep.mubr.bf16.mxu0 0
        %6447 = vmatmul.mubr.bf16.gmra.mrb[0].mxu0 %v6291
        %v6448 = vpop.f32.mrb[0].mxu0
        %v6449 = vadd.f32 %v6327, %v6448
        %v6450 = vpop.f32.mrb[0].mxu0
        %v6451 = vadd.f32 %v6331, %v6450
        %v6452 = vpop.f32.mrb[0].mxu0
        %v6453 = vadd.f32 %v6327, %v6452
        %v6454 = vpop.f32.mrb[0].mxu0
        %v6455 = vadd.f32 %v6331, %v6454
        %6456 = vmatprep.mubr.bf16.mxu0 0
        %6457 = vmatmul.mubr.bf16.gmra.mrb[0].mxu0 %v6292
        %v6458 = vpop.f32.mrb[0].mxu0
        %v6459 = vadd.f32 %v6327, %v6458
        %v6460 = vpop.f32.mrb[0].mxu0
        %v6461 = vadd.f32 %v6331, %v6460
        %v6462 = vpop.f32.mrb[0].mxu0
        %v6463 = vadd.f32 %v6327, %v6462
        %v6464 = vpop.f32.mrb[0].mxu0
        %v6465 = vadd.f32 %v6331, %v6464
        %6466 = vmatprep.mubr.bf16.mxu0 0
        %6467 = vmatmul.mubr.bf16.gmra.mrb[0].mxu0 %v6293
        %v6468 = vpop.f32.mrb[0].mxu0
        %v6469 = vadd.f32 %v6327, %v6468
        %v6470 = vpop.f32.mrb[0].mxu0
        %v6471 = vadd.f32 %v6331, %v6470
        %v6472 = vpop.f32.mrb[0].mxu0
        %v6473 = vadd.f32 %v6327, %v6472
        %v6474 = vpop.f32.mrb[0].mxu0
        %v6475 = vadd.f32 %v6331, %v6474
        %6476 = vmatprep.mubr.bf16.mxu0 0
        %6477 = vmatmul.mubr.bf16.gmra.mrb[0].mxu0 %v6294
        %v6478 = vpop.f32.mrb[0].mxu0
        %v6479 = vadd.f32 %v6327, %v6478
        %v6480 = vpop.f32.mrb[0].mxu0
        %v6481 = vadd.f32 %v6331, %v6480
        %v6482 = vpop.f32.mrb[0].mxu0
        %v6483 = vadd.f32 %v6327, %v6482
        %v6484 = vpop.f32.mrb[0].mxu0
        %v6485 = vadd.f32 %v6331, %v6484
        %6486 = vmatprep.mubr.bf16.mxu0 0
        %6487 = vmatmul.mubr.bf16.gmra.mrb[0].mxu0 %v6295
        %v6488 = vpop.f32.mrb[0].mxu0
        %v6489 = vadd.f32 %v6327, %v6488
        %v6490 = vpop.f32.mrb[0].mxu0
        %v6491 = vadd.f32 %v6331, %v6490
        %v6492 = vpop.f32.mrb[0].mxu0
        %v6493 = vadd.f32 %v6327, %v6492
        %v6494 = vpop.f32.mrb[0].mxu0
        %v6495 = vadd.f32 %v6331, %v6494
        %6496 = vmatprep.mubr.bf16.mxu0 0
        %6497 = vmatmul.mubr.bf16.gmra.mrb[0].mxu0 %v6296
        %v6498 = vpop.f32.mrb[0].mxu0
        %v6499 = vadd.f32 %v6327, %v6498
        %v6500 = vpop.f32.mrb[0].mxu0
        %v6501 = vadd.f32 %v6331, %v6500
        %v6502 = vpop.f32.mrb[0].mxu0
        %v6503 = vadd.f32 %v6327, %v6502
        %v6504 = vpop.f32.mrb[0].mxu0
        %v6505 = vadd.f32 %v6331, %v6504
        %6506 = vmatprep.mubr.bf16.mxu0 0
        %6507 = vmatmul.mubr.bf16.gmra.mrb[0].mxu0 %v6297
        %v6508 = vpop.f32.mrb[0].mxu0
        %v6509 = vadd.f32 %v6327, %v6508
        %v6510 = vpop.f32.mrb[0].mxu0
        %v6511 = vadd.f32 %v6331, %v6510
        %v6512 = vpop.f32.mrb[0].mxu0
        %v6513 = vadd.f32 %v6327, %v6512
        %v6514 = vpop.f32.mrb[0].mxu0
        %v6515 = vadd.f32 %v6331, %v6514
        %6516 = vmatprep.mubr.bf16.mxu0 0
        %6517 = vmatmul.mubr.bf16.gmra.mrb[0].mxu0 %v6298
        %v6518 = vpop.f32.mrb[0].mxu0
        %v6519 = vadd.f32 %v6327, %v6518
        %v6520 = vpop.f32.mrb[0].mxu0
        %v6521 = vadd.f32 %v6331, %v6520
        %v6522 = vpop.f32.mrb[0].mxu0
        %v6523 = vadd.f32 %v6327, %v6522
        %v6524 = vpop.f32.mrb[0].mxu0
        %v6525 = vadd.f32 %v6331, %v6524
        %6526 = vmatprep.mubr.bf16.mxu0 0
        %6527 = vmatmul.mubr.bf16.gmra.mrb[0].mxu0 %v6299
        %v6528 = vpop.f32.mrb[0].mxu0
        %v6529 = vadd.f32 %v6327, %v6528
        %v6530 = vpop.f32.mrb[0].mxu0
        %v6531 = vadd.f32 %v6331, %v6530
        %v6532 = vpop.f32.mrb[0].mxu0
        %v6533 = vadd.f32 %v6327, %v6532
        %v6534 = vpop.f32.mrb[0].mxu0
        %v6535 = vadd.f32 %v6331, %v6534
        %6536 = vmatprep.mubr.bf16.mxu0 0
        %6537 = vmatmul.mubr.bf16.gmra.mrb[0].mxu0 %v6300
        %v6538 = vpop.f32.mrb[0].mxu0
        %v6539 = vadd.f32 %v6327, %v6538
        %v6540 = vpop.f32.mrb[0].mxu0
        %v6541 = vadd.f32 %v6331, %v6540
        %v6542 = vpop.f32.mrb[0].mxu0
        %v6543 = vadd.f32 %v6327, %v6542
        %v6544 = vpop.f32.mrb[0].mxu0
        %v6545 = vadd.f32 %v6331, %v6544
        %6546 = vmatprep.mubr.bf16.mxu0 0
        %6547 = vmatmul.mubr.bf16.gmra.mrb[0].mxu0 %v6301
        %v6548 = vpop.f32.mrb[0].mxu0
        %v6549 = vadd.f32 %v6327, %v6548
        %v6550 = vpop.f32.mrb[0].mxu0
        %v6551 = vadd.f32 %v6331, %v6550
        %v6552 = vpop.f32.mrb[0].mxu0
        %v6553 = vadd.f32 %v6327, %v6552
        %v6554 = vpop.f32.mrb[0].mxu0
        %v6555 = vadd.f32 %v6331, %v6554
        %6556 = vmatprep.mubr.bf16.mxu0 0
        %6557 = vmatmul.mubr.bf16.gmra.mrb[0].mxu0 %v6302
        %v6558 = vpop.f32.mrb[0].mxu0
        %v6559 = vadd.f32 %v6327, %v6558
        %v6560 = vpop.f32.mrb[0].mxu0
        %v6561 = vadd.f32 %v6331, %v6560
        %v6562 = vpop.f32.mrb[0].mxu0
        %v6563 = vadd.f32 %v6327, %v6562
        %v6564 = vpop.f32.mrb[0].mxu0
        %v6565 = vadd.f32 %v6331, %v6564
        %6566 = vmatprep.mubr.bf16.mxu0 0
        %6567 = vmatmul.mubr.bf16.gmra.mrb[0].mxu0 %v6303
        %v6568 = vpop.f32.mrb[0].mxu0
        %v6569 = vadd.f32 %v6327, %v6568
        %v6570 = vpop.f32.mrb[0].mxu0
        %v6571 = vadd.f32 %v6331, %v6570
        %v6572 = vpop.f32.mrb[0].mxu0
        %v6573 = vadd.f32 %v6327, %v6572
        %v6574 = vpop.f32.mrb[0].mxu0
        %v6575 = vadd.f32 %v6331, %v6574
        %6576 = vmatprep.mubr.bf16.mxu0 0
        %6577 = vmatmul.mubr.bf16.gmra.mrb[0].mxu0 %v6304
        %v6578 = vpop.f32.mrb[0].mxu0
        %v6579 = vadd.f32 %v6327, %v6578
        %v6580 = vpop.f32.mrb[0].mxu0
        %v6581 = vadd.f32 %v6331, %v6580
        %v6582 = vpop.f32.mrb[0].mxu0
        %v6583 = vadd.f32 %v6327, %v6582
        %v6584 = vpop.f32.mrb[0].mxu0
        %v6585 = vadd.f32 %v6331, %v6584
        %6586 = vmatprep.mubr.bf16.mxu0 0
        %6587 = vmatmul.mubr.bf16.gmra.mrb[0].mxu0 %v6305
        %v6588 = vpop.f32.mrb[0].mxu0
        %v6589 = vadd.f32 %v6327, %v6588
        %v6590 = vpop.f32.mrb[0].mxu0
        %v6591 = vadd.f32 %v6331, %v6590
        %v6592 = vpop.f32.mrb[0].mxu0
        %v6593 = vadd.f32 %v6327, %v6592
        %v6594 = vpop.f32.mrb[0].mxu0
        %v6595 = vadd.f32 %v6331, %v6594
        %6596 = vmatprep.mubr.bf16.mxu0 0
        %6597 = vmatmul.mubr.bf16.gmra.mrb[0].mxu0 %v6306
        %v6598 = vpop.f32.mrb[0].mxu0
        %v6599 = vadd.f32 %v6327, %v6598
        %v6600 = vpop.f32.mrb[0].mxu0
        %v6601 = vadd.f32 %v6331, %v6600
        %v6602 = vpop.f32.mrb[0].mxu0
        %v6603 = vadd.f32 %v6327, %v6602
        %v6604 = vpop.f32.mrb[0].mxu0
        %v6605 = vadd.f32 %v6331, %v6604
        %6606 = vdwg.mxu0
        %v6607 = vmax.f32 %v6449, 0.0
        %v6608 = vmax.f32 %v6451, 0.0
        %v6609 = vmax.f32 %v6453, 0.0
        %v6610 = vmax.f32 %v6455, 0.0
        %v6611 = vmax.f32 %v6459, 0.0
        %v6612 = vmax.f32 %v6461, 0.0
        %v6613 = vmax.f32 %v6463, 0.0
        %v6614 = vmax.f32 %v6465, 0.0
        %v6615 = vmax.f32 %v6469, 0.0
        %v6616 = vmax.f32 %v6471, 0.0
        %v6617 = vmax.f32 %v6473, 0.0
        %v6618 = vmax.f32 %v6475, 0.0
        %v6619 = vmax.f32 %v6479, 0.0
        %v6620 = vmax.f32 %v6481, 0.0
        %v6621 = vmax.f32 %v6483, 0.0
        %v6622 = vmax.f32 %v6485, 0.0
        %v6623 = vmax.f32 %v6489, 0.0
        %v6624 = vmax.f32 %v6491, 0.0
        %v6625 = vmax.f32 %v6493, 0.0
        %v6626 = vmax.f32 %v6495, 0.0
        %v6627 = vmax.f32 %v6499, 0.0
        %v6628 = vmax.f32 %v6501, 0.0
        %v6629 = vmax.f32 %v6503, 0.0
        %v6630 = vmax.f32 %v6505, 0.0
        %v6631 = vmax.f32 %v6509, 0.0
        %v6632 = vmax.f32 %v6511, 0.0
        %v6633 = vmax.f32 %v6513, 0.0
        %v6634 = vmax.f32 %v6515, 0.0
        %v6635 = vmax.f32 %v6519, 0.0
        %v6636 = vmax.f32 %v6521, 0.0
        %v6637 = vmax.f32 %v6523, 0.0
        %v6638 = vmax.f32 %v6525, 0.0
        %v6639 = vmax.f32 %v6529, 0.0
        %v6640 = vmax.f32 %v6531, 0.0
        %v6641 = vmax.f32 %v6533, 0.0
        %v6642 = vmax.f32 %v6535, 0.0
        %v6643 = vmax.f32 %v6539, 0.0
        %v6644 = vmax.f32 %v6541, 0.0
        %v6645 = vmax.f32 %v6543, 0.0
        %v6646 = vmax.f32 %v6545, 0.0
        %v6647 = vmax.f32 %v6549, 0.0
        %v6648 = vmax.f32 %v6551, 0.0
        %v6649 = vmax.f32 %v6553, 0.0
        %v6650 = vmax.f32 %v6555, 0.0
        %v6651 = vmax.f32 %v6559, 0.0
        %v6652 = vmax.f32 %v6561, 0.0
        %v6653 = vmax.f32 %v6563, 0.0
        %v6654 = vmax.f32 %v6565, 0.0
        %v6655 = vmax.f32 %v6569, 0.0
        %v6656 = vmax.f32 %v6571, 0.0
        %v6657 = vmax.f32 %v6573, 0.0
        %v6658 = vmax.f32 %v6575, 0.0
        %v6659 = vmax.f32 %v6579, 0.0
        %v6660 = vmax.f32 %v6581, 0.0
        %v6661 = vmax.f32 %v6583, 0.0
        %v6662 = vmax.f32 %v6585, 0.0
        %v6663 = vmax.f32 %v6589, 0.0
        %v6664 = vmax.f32 %v6591, 0.0
        %v6665 = vmax.f32 %v6593, 0.0
        %v6666 = vmax.f32 %v6595, 0.0
        %v6667 = vmax.f32 %v6599, 0.0
        %v6668 = vmax.f32 %v6601, 0.0
        %v6669 = vmax.f32 %v6603, 0.0
        %v6670 = vmax.f32 %v6605, 0.0
        %v6671 = vpack.c.bf16 %v6609, %v6607
        %v6672 = vpack.c.bf16 %v6610, %v6608
        %v6673 = vpack.c.bf16 %v6613, %v6611
        %v6674 = vpack.c.bf16 %v6614, %v6612
        %v6675 = vpack.c.bf16 %v6617, %v6615
        %v6676 = vpack.c.bf16 %v6618, %v6616
        %v6677 = vpack.c.bf16 %v6621, %v6619
        %v6678 = vpack.c.bf16 %v6622, %v6620
        %v6679 = vpack.c.bf16 %v6625, %v6623
        %v6680 = vpack.c.bf16 %v6626, %v6624
        %v6681 = vpack.c.bf16 %v6629, %v6627
        %v6682 = vpack.c.bf16 %v6630, %v6628
        %v6683 = vpack.c.bf16 %v6633, %v6631
        %v6684 = vpack.c.bf16 %v6634, %v6632
        %v6685 = vpack.c.bf16 %v6637, %v6635
        %v6686 = vpack.c.bf16 %v6638, %v6636
        %v6687 = vpack.c.bf16 %v6641, %v6639
        %v6688 = vpack.c.bf16 %v6642, %v6640
        %v6689 = vpack.c.bf16 %v6645, %v6643
        %v6690 = vpack.c.bf16 %v6646, %v6644
        %v6691 = vpack.c.bf16 %v6649, %v6647
        %v6692 = vpack.c.bf16 %v6650, %v6648
        %v6693 = vpack.c.bf16 %v6653, %v6651
        %v6694 = vpack.c.bf16 %v6654, %v6652
        %v6695 = vpack.c.bf16 %v6657, %v6655
        %v6696 = vpack.c.bf16 %v6658, %v6656
        %v6697 = vpack.c.bf16 %v6661, %v6659
        %v6698 = vpack.c.bf16 %v6662, %v6660
        %v6699 = vpack.c.bf16 %v6665, %v6663
        %v6700 = vpack.c.bf16 %v6666, %v6664
        %v6701 = vpack.c.bf16 %v6669, %v6667
        %v6702 = vpack.c.bf16 %v6670, %v6668
        %v6703 = vld [vmem:[#allocation10] sm:$0xf]
        %v6704 = vld [vmem:[#allocation10 + $0x4] sm:$0xf]
        %v6705 = vld [vmem:[#allocation10 + $0x8] sm:$0xf]
        %v6706 = vld [vmem:[#allocation10 + $0xc] sm:$0xf]
        %v6707 = vld [vmem:[#allocation10 + $0x10] sm:$0xf]
        %v6708 = vld [vmem:[#allocation10 + $0x14] sm:$0xf]
        %v6709 = vld [vmem:[#allocation10 + $0x18] sm:$0xf]
        %v6710 = vld [vmem:[#allocation10 + $0x1c] sm:$0xf]
        %v6711 = vld [vmem:[#allocation10 + $0x20] sm:$0xf]
        %v6712 = vld [vmem:[#allocation10 + $0x24] sm:$0xf]
        %v6713 = vld [vmem:[#allocation10 + $0x28] sm:$0xf]
        %v6714 = vld [vmem:[#allocation10 + $0x2c] sm:$0xf]
        %v6715 = vld [vmem:[#allocation10 + $0x30] sm:$0xf]
        %v6716 = vld [vmem:[#allocation10 + $0x34] sm:$0xf]
        %v6717 = vld [vmem:[#allocation10 + $0x38] sm:$0xf]
        %v6718 = vld [vmem:[#allocation10 + $0x3c] sm:$0xf]
        %v6719 = vld [vmem:[#allocation10 + $0x40] sm:$0xf]
        %v6720 = vld [vmem:[#allocation10 + $0x44] sm:$0xf]
        %v6721 = vld [vmem:[#allocation10 + $0x48] sm:$0xf]
        %v6722 = vld [vmem:[#allocation10 + $0x4c] sm:$0xf]
        %v6723 = vld [vmem:[#allocation10 + $0x50] sm:$0xf]
        %v6724 = vld [vmem:[#allocation10 + $0x54] sm:$0xf]
        %v6725 = vld [vmem:[#allocation10 + $0x58] sm:$0xf]
        %v6726 = vld [vmem:[#allocation10 + $0x5c] sm:$0xf]
        %v6727 = vld [vmem:[#allocation10 + $0x60] sm:$0xf]
        %v6728 = vld [vmem:[#allocation10 + $0x64] sm:$0xf]
        %v6729 = vld [vmem:[#allocation10 + $0x68] sm:$0xf]
        %v6730 = vld [vmem:[#allocation10 + $0x6c] sm:$0xf]
        %v6731 = vld [vmem:[#allocation10 + $0x70] sm:$0xf]
        %v6732 = vld [vmem:[#allocation10 + $0x74] sm:$0xf]
        %v6733 = vld [vmem:[#allocation10 + $0x78] sm:$0xf]
        %v6734 = vld [vmem:[#allocation10 + $0x7c] sm:$0xf]
        %v6736 = vlaneseq
        %v6737 = vshrl.u32 %v6736, 7
        %v6738 = vsub.s32 0, %v6737
        %v6739 = vrot.slane %v573, %v6738
        %v6773 = vunpack.c.l.b16 %v6703
        %v6774 = vunpack.c.l.b16 %v6704
        %v6775 = vunpack.c.l.b16 %v6705
        %v6776 = vunpack.c.l.b16 %v6706
        %v6777 = vunpack.c.l.b16 %v6707
        %v6778 = vunpack.c.l.b16 %v6708
        %v6779 = vunpack.c.l.b16 %v6709
        %v6780 = vunpack.c.l.b16 %v6710
        %v6781 = vunpack.c.l.b16 %v6711
        %v6782 = vunpack.c.l.b16 %v6712
        %v6783 = vunpack.c.l.b16 %v6713
        %v6784 = vunpack.c.l.b16 %v6714
        %v6785 = vunpack.c.l.b16 %v6715
        %v6786 = vunpack.c.l.b16 %v6716
        %v6787 = vunpack.c.l.b16 %v6717
        %v6788 = vunpack.c.l.b16 %v6718
        %v6789 = vunpack.c.l.b16 %v6719
        %v6790 = vunpack.c.l.b16 %v6720
        %v6791 = vunpack.c.l.b16 %v6721
        %v6792 = vunpack.c.l.b16 %v6722
        %v6793 = vunpack.c.l.b16 %v6723
        %v6794 = vunpack.c.l.b16 %v6724
        %v6795 = vunpack.c.l.b16 %v6725
        %v6796 = vunpack.c.l.b16 %v6726
        %v6797 = vunpack.c.l.b16 %v6727
        %v6798 = vunpack.c.l.b16 %v6728
        %v6799 = vunpack.c.l.b16 %v6729
        %v6800 = vunpack.c.l.b16 %v6730
        %v6801 = vunpack.c.l.b16 %v6731
        %v6802 = vunpack.c.l.b16 %v6732
        %v6803 = vunpack.c.l.b16 %v6733
        %v6804 = vunpack.c.l.b16 %v6734
        %v6805 = vpack.c.b16 %v6774, %v6773
        %v6806 = vpack.c.b16 %v6776, %v6775
        %v6807 = vpack.c.b16 %v6778, %v6777
        %v6808 = vpack.c.b16 %v6780, %v6779
        %v6809 = vpack.c.b16 %v6782, %v6781
        %v6810 = vpack.c.b16 %v6784, %v6783
        %v6811 = vpack.c.b16 %v6786, %v6785
        %v6812 = vpack.c.b16 %v6788, %v6787
        %v6813 = vpack.c.b16 %v6790, %v6789
        %v6814 = vpack.c.b16 %v6792, %v6791
        %v6815 = vpack.c.b16 %v6794, %v6793
        %v6816 = vpack.c.b16 %v6796, %v6795
        %v6817 = vpack.c.b16 %v6798, %v6797
        %v6818 = vpack.c.b16 %v6800, %v6799
        %v6819 = vpack.c.b16 %v6802, %v6801
        %v6820 = vpack.c.b16 %v6804, %v6803
        %6837 = vmatprep.subr.bf16.mxu0 0
        %6838 = vmatpush1.bf16.msra.mxu0 %v6805
        %6839 = vmatprep.subr.bf16.mxu0 0
        %6840 = vmatpush1.bf16.msra.mxu0 %v6806
        %6841 = vmatprep.subr.bf16.mxu0 0
        %6842 = vmatpush1.bf16.msra.mxu0 %v6807
        %6843 = vmatprep.subr.bf16.mxu0 0
        %6844 = vmatpush1.bf16.msra.mxu0 %v6808
        %6845 = vmatprep.subr.bf16.mxu0 0
        %6846 = vmatpush1.bf16.msra.mxu0 %v6809
        %6847 = vmatprep.subr.bf16.mxu0 0
        %6848 = vmatpush1.bf16.msra.mxu0 %v6810
        %6849 = vmatprep.subr.bf16.mxu0 0
        %6850 = vmatpush1.bf16.msra.mxu0 %v6811
        %6851 = vmatprep.subr.bf16.mxu0 0
        %6852 = vmatpush1.bf16.msra.mxu0 %v6812
        %6853 = vmatprep.subr.bf16.mxu0 0
        %6854 = vmatpush1.bf16.msra.mxu0 %v6813
        %6855 = vmatprep.subr.bf16.mxu0 0
        %6856 = vmatpush1.bf16.msra.mxu0 %v6814
        %6857 = vmatprep.subr.bf16.mxu0 0
        %6858 = vmatpush1.bf16.msra.mxu0 %v6815
        %6859 = vmatprep.subr.bf16.mxu0 0
        %6860 = vmatpush1.bf16.msra.mxu0 %v6816
        %6861 = vmatprep.subr.bf16.mxu0 0
        %6862 = vmatpush1.bf16.msra.mxu0 %v6817
        %6863 = vmatprep.subr.bf16.mxu0 0
        %6864 = vmatpush1.bf16.msra.mxu0 %v6818
        %6865 = vmatprep.subr.bf16.mxu0 0
        %6866 = vmatpush1.bf16.msra.mxu0 %v6819
        %6867 = vmatprep.subr.bf16.mxu0 0
        %6868 = vmatpush1.bf16.msra.mxu0 %v6820
        %6869 = vmatprep.mubr.bf16.mxu0 %v6672
        %6870 = vmatmul.mubr.bf16.gmra.mrb[0].mxu0 %v6671
        %v6871 = vpop.f32.mrb[0].mxu0
        %v6872 = vadd.f32 %v6739, %v6871
        %v6873 = vpop.f32.mrb[0].mxu0
        %v6874 = vpop.f32.mrb[0].mxu0
        %v6875 = vadd.f32 %v6739, %v6874
        %v6876 = vpop.f32.mrb[0].mxu0
        %6877 = vmatprep.mubr.bf16.mxu0 %v6674
        %6878 = vmatmul.mubr.bf16.gmra.mrb[0].mxu0 %v6673
        %v6879 = vpop.f32.mrb[0].mxu0
        %v6880 = vadd.f32 %v6739, %v6879
        %v6881 = vpop.f32.mrb[0].mxu0
        %v6882 = vpop.f32.mrb[0].mxu0
        %v6883 = vadd.f32 %v6739, %v6882
        %v6884 = vpop.f32.mrb[0].mxu0
        %6885 = vmatprep.mubr.bf16.mxu0 %v6676
        %6886 = vmatmul.mubr.bf16.gmra.mrb[0].mxu0 %v6675
        %v6887 = vpop.f32.mrb[0].mxu0
        %v6888 = vadd.f32 %v6739, %v6887
        %v6889 = vpop.f32.mrb[0].mxu0
        %v6890 = vpop.f32.mrb[0].mxu0
        %v6891 = vadd.f32 %v6739, %v6890
        %v6892 = vpop.f32.mrb[0].mxu0
        %6893 = vmatprep.mubr.bf16.mxu0 %v6678
        %6894 = vmatmul.mubr.bf16.gmra.mrb[0].mxu0 %v6677
        %v6895 = vpop.f32.mrb[0].mxu0
        %v6896 = vadd.f32 %v6739, %v6895
        %v6897 = vpop.f32.mrb[0].mxu0
        %v6898 = vpop.f32.mrb[0].mxu0
        %v6899 = vadd.f32 %v6739, %v6898
        %v6900 = vpop.f32.mrb[0].mxu0
        %6901 = vmatprep.mubr.bf16.mxu0 %v6680
        %6902 = vmatmul.mubr.bf16.gmra.mrb[0].mxu0 %v6679
        %v6903 = vpop.f32.mrb[0].mxu0
        %v6904 = vadd.f32 %v6739, %v6903
        %v6905 = vpop.f32.mrb[0].mxu0
        %v6906 = vpop.f32.mrb[0].mxu0
        %v6907 = vadd.f32 %v6739, %v6906
        %v6908 = vpop.f32.mrb[0].mxu0
        %6909 = vmatprep.mubr.bf16.mxu0 %v6682
        %6910 = vmatmul.mubr.bf16.gmra.mrb[0].mxu0 %v6681
        %v6911 = vpop.f32.mrb[0].mxu0
        %v6912 = vadd.f32 %v6739, %v6911
        %v6913 = vpop.f32.mrb[0].mxu0
        %v6914 = vpop.f32.mrb[0].mxu0
        %v6915 = vadd.f32 %v6739, %v6914
        %v6916 = vpop.f32.mrb[0].mxu0
        %6917 = vmatprep.mubr.bf16.mxu0 %v6684
        %6918 = vmatmul.mubr.bf16.gmra.mrb[0].mxu0 %v6683
        %v6919 = vpop.f32.mrb[0].mxu0
        %v6920 = vadd.f32 %v6739, %v6919
        %v6921 = vpop.f32.mrb[0].mxu0
        %v6922 = vpop.f32.mrb[0].mxu0
        %v6923 = vadd.f32 %v6739, %v6922
        %v6924 = vpop.f32.mrb[0].mxu0
        %6925 = vmatprep.mubr.bf16.mxu0 %v6686
        %6926 = vmatmul.mubr.bf16.gmra.mrb[0].mxu0 %v6685
        %v6927 = vpop.f32.mrb[0].mxu0
        %v6928 = vadd.f32 %v6739, %v6927
        %v6929 = vpop.f32.mrb[0].mxu0
        %v6930 = vpop.f32.mrb[0].mxu0
        %v6931 = vadd.f32 %v6739, %v6930
        %v6932 = vpop.f32.mrb[0].mxu0
        %6933 = vmatprep.mubr.bf16.mxu0 %v6688
        %6934 = vmatmul.mubr.bf16.gmra.mrb[0].mxu0 %v6687
        %v6935 = vpop.f32.mrb[0].mxu0
        %v6936 = vadd.f32 %v6739, %v6935
        %v6937 = vpop.f32.mrb[0].mxu0
        %v6938 = vpop.f32.mrb[0].mxu0
        %v6939 = vadd.f32 %v6739, %v6938
        %v6940 = vpop.f32.mrb[0].mxu0
        %6941 = vmatprep.mubr.bf16.mxu0 %v6690
        %6942 = vmatmul.mubr.bf16.gmra.mrb[0].mxu0 %v6689
        %v6943 = vpop.f32.mrb[0].mxu0
        %v6944 = vadd.f32 %v6739, %v6943
        %v6945 = vpop.f32.mrb[0].mxu0
        %v6946 = vpop.f32.mrb[0].mxu0
        %v6947 = vadd.f32 %v6739, %v6946
        %v6948 = vpop.f32.mrb[0].mxu0
        %6949 = vmatprep.mubr.bf16.mxu0 %v6692
        %6950 = vmatmul.mubr.bf16.gmra.mrb[0].mxu0 %v6691
        %v6951 = vpop.f32.mrb[0].mxu0
        %v6952 = vadd.f32 %v6739, %v6951
        %v6953 = vpop.f32.mrb[0].mxu0
        %v6954 = vpop.f32.mrb[0].mxu0
        %v6955 = vadd.f32 %v6739, %v6954
        %v6956 = vpop.f32.mrb[0].mxu0
        %6957 = vmatprep.mubr.bf16.mxu0 %v6694
        %6958 = vmatmul.mubr.bf16.gmra.mrb[0].mxu0 %v6693
        %v6959 = vpop.f32.mrb[0].mxu0
        %v6960 = vadd.f32 %v6739, %v6959
        %v6961 = vpop.f32.mrb[0].mxu0
        %v6962 = vpop.f32.mrb[0].mxu0
        %v6963 = vadd.f32 %v6739, %v6962
        %v6964 = vpop.f32.mrb[0].mxu0
        %6965 = vmatprep.mubr.bf16.mxu0 %v6696
        %6966 = vmatmul.mubr.bf16.gmra.mrb[0].mxu0 %v6695
        %v6967 = vpop.f32.mrb[0].mxu0
        %v6968 = vadd.f32 %v6739, %v6967
        %v6969 = vpop.f32.mrb[0].mxu0
        %v6970 = vpop.f32.mrb[0].mxu0
        %v6971 = vadd.f32 %v6739, %v6970
        %v6972 = vpop.f32.mrb[0].mxu0
        %6973 = vmatprep.mubr.bf16.mxu0 %v6698
        %6974 = vmatmul.mubr.bf16.gmra.mrb[0].mxu0 %v6697
        %v6975 = vpop.f32.mrb[0].mxu0
        %v6976 = vadd.f32 %v6739, %v6975
        %v6977 = vpop.f32.mrb[0].mxu0
        %v6978 = vpop.f32.mrb[0].mxu0
        %v6979 = vadd.f32 %v6739, %v6978
        %v6980 = vpop.f32.mrb[0].mxu0
        %6981 = vmatprep.mubr.bf16.mxu0 %v6700
        %6982 = vmatmul.mubr.bf16.gmra.mrb[0].mxu0 %v6699
        %v6983 = vpop.f32.mrb[0].mxu0
        %v6984 = vadd.f32 %v6739, %v6983
        %v6985 = vpop.f32.mrb[0].mxu0
        %v6986 = vpop.f32.mrb[0].mxu0
        %v6987 = vadd.f32 %v6739, %v6986
        %v6988 = vpop.f32.mrb[0].mxu0
        %6989 = vmatprep.mubr.bf16.mxu0 %v6702
        %6990 = vmatmul.mubr.bf16.gmra.mrb[0].mxu0 %v6701
        %v6991 = vpop.f32.mrb[0].mxu0
        %v6992 = vadd.f32 %v6739, %v6991
        %v6993 = vpop.f32.mrb[0].mxu0
        %v6994 = vpop.f32.mrb[0].mxu0
        %v6995 = vadd.f32 %v6739, %v6994
        %v6996 = vpop.f32.mrb[0].mxu0
        %6997 = vdwg.mxu0
        %v6998 = vadd.f32 %v5831, %v6872
        %v6999 = vadd.f32 %v5832, %v6875
        %v7000 = vadd.f32 %v5833, %v6880
        %v7001 = vadd.f32 %v5834, %v6883
        %v7002 = vadd.f32 %v5835, %v6888
        %v7003 = vadd.f32 %v5836, %v6891
        %v7004 = vadd.f32 %v5837, %v6896
        %v7005 = vadd.f32 %v5838, %v6899
        %v7006 = vadd.f32 %v5839, %v6904
        %v7007 = vadd.f32 %v5840, %v6907
        %v7008 = vadd.f32 %v5841, %v6912
        %v7009 = vadd.f32 %v5842, %v6915
        %v7010 = vadd.f32 %v5843, %v6920
        %v7011 = vadd.f32 %v5844, %v6923
        %v7012 = vadd.f32 %v5845, %v6928
        %v7013 = vadd.f32 %v5846, %v6931
        %v7014 = vadd.f32 %v5847, %v6936
        %v7015 = vadd.f32 %v5848, %v6939
        %v7016 = vadd.f32 %v5849, %v6944
        %v7017 = vadd.f32 %v5850, %v6947
        %v7018 = vadd.f32 %v5851, %v6952
        %v7019 = vadd.f32 %v5852, %v6955
        %v7020 = vadd.f32 %v5853, %v6960
        %v7021 = vadd.f32 %v5854, %v6963
        %v7022 = vadd.f32 %v5855, %v6968
        %v7023 = vadd.f32 %v5856, %v6971
        %v7024 = vadd.f32 %v5857, %v6976
        %v7025 = vadd.f32 %v5858, %v6979
        %v7026 = vadd.f32 %v5859, %v6984
        %v7027 = vadd.f32 %v5860, %v6987
        %v7028 = vadd.f32 %v5861, %v6992
        %v7029 = vadd.f32 %v5862, %v6995
        %7030 = vst [vmem:[%s530] sm:$0xff] %v6998
        %7031 = vst [vmem:[%s530 + $0x8] sm:$0xff] %v6999
        %7032 = vst [vmem:[%s530 + $0x10] sm:$0xff] %v7000
        %7033 = vst [vmem:[%s530 + $0x18] sm:$0xff] %v7001
        %7034 = vst [vmem:[%s530 + $0x20] sm:$0xff] %v7002
        %7035 = vst [vmem:[%s530 + $0x28] sm:$0xff] %v7003
        %7036 = vst [vmem:[%s530 + $0x30] sm:$0xff] %v7004
        %7037 = vst [vmem:[%s530 + $0x38] sm:$0xff] %v7005
        %7038 = vst [vmem:[%s530 + $0x40] sm:$0xff] %v7006
        %7039 = vst [vmem:[%s530 + $0x48] sm:$0xff] %v7007
        %7040 = vst [vmem:[%s530 + $0x50] sm:$0xff] %v7008
        %7041 = vst [vmem:[%s530 + $0x58] sm:$0xff] %v7009
        %7042 = vst [vmem:[%s530 + $0x60] sm:$0xff] %v7010
        %7043 = vst [vmem:[%s530 + $0x68] sm:$0xff] %v7011
        %7044 = vst [vmem:[%s530 + $0x70] sm:$0xff] %v7012
        %7045 = vst [vmem:[%s530 + $0x78] sm:$0xff] %v7013
        %7046 = vst [vmem:[%s530 + $0x80] sm:$0xff] %v7014
        %7047 = vst [vmem:[%s530 + $0x88] sm:$0xff] %v7015
        %7048 = vst [vmem:[%s530 + $0x90] sm:$0xff] %v7016
        %7049 = vst [vmem:[%s530 + $0x98] sm:$0xff] %v7017
        %7050 = vst [vmem:[%s530 + $0xa0] sm:$0xff] %v7018
        %7051 = vst [vmem:[%s530 + $0xa8] sm:$0xff] %v7019
        %7052 = vst [vmem:[%s530 + $0xb0] sm:$0xff] %v7020
        %7053 = vst [vmem:[%s530 + $0xb8] sm:$0xff] %v7021
        %7054 = vst [vmem:[%s530 + $0xc0] sm:$0xff] %v7022
        %7055 = vst [vmem:[%s530 + $0xc8] sm:$0xff] %v7023
        %7056 = vst [vmem:[%s530 + $0xd0] sm:$0xff] %v7024
        %7057 = vst [vmem:[%s530 + $0xd8] sm:$0xff] %v7025
        %7058 = vst [vmem:[%s530 + $0xe0] sm:$0xff] %v7026
        %7059 = vst [vmem:[%s530 + $0xe8] sm:$0xff] %v7027
        %7060 = vst [vmem:[%s530 + $0xf0] sm:$0xff] %v7028
        %7061 = vst [vmem:[%s530 + $0xf8] sm:$0xff] %v7029
        %s7062 = sand.u32 %s319, 1
        %s7063 = scalar_lea.sflag [#allocation4], %s7062
        %s7064 = sand.u32 %s319, 1
        %s7065 = smul.addr %s7064, 256
        %s7066 = scalar_lea.vmem [#allocation13], %s7065
        // Predicated region
        $region97: #{decoder_layer.1} parent=71 // pred_check
          %p7067 = pneg %p329
        $region98: #{decoder_layer.1} parent=71 // pred_check_branch
          %7069 = sbr.rel (%p7067) target = $region100
        $region99: #{decoder_layer.1} parent=71 // pred_region
          %s7070 = smul.u32 2, %s33
          %s7072 = ssub.s32 4096, 4096
          %7073 = vsyncadd %s7063, %s7072
          %s7074 = smul.addr %s7070, 16
          %s7075 = smul.addr %s7074, 128
          %s7076 = scalar_lea.hbm %s13, %s7075
          %s7077 = sshll.u32 %s7066, 4
          %s7078 = int_to_ptr.vmem [resolvable:$true] %s7077
          %7083 = dma.vmem_to_hbm [thread:$0]  %s7078, 4096, %s7076, %s7063, 128, 128, 8
        $region100: #{decoder_layer.1} parent=71 // pred_fallthru
          _
      $region72: #{decoder_layer.1} parent=5 // pred_fallthru
        _
      %p7084 = scmp.le.s32.totalorder 2, %s28
      // Predicated region
      $region101: #{decoder_layer.1} parent=5 // pred_check
        %p7085 = pneg %p7084
      $region102: #{decoder_layer.1} parent=5 // pred_check_branch
        %7087 = sbr.rel (%p7085) target = $region104
      $region103: #{decoder_layer.1} parent=5 // pred_region
        %s7088 = ssub.s32 %s28, 2
        // Predicated region
        $region105: #{decoder_layer.1} parent=103 // pred_check
          %p7089 = pneg %p335
        $region106: #{decoder_layer.1} parent=103 // pred_check_branch
          %7091 = sbr.rel (%p7089) target = $region108
        $region107: #{decoder_layer.1} parent=103 // pred_region
          %s7092 = sand.u32 %s320, 1
          %s7093 = scalar_lea.sflag [#allocation4], %s7092
          %s7094 = sand.u32 %s320, 1
          %s7095 = smul.addr %s7094, 256
          %s7096 = scalar_lea.vmem [#allocation13], %s7095
          %7097 = dma.done %s7093, 4096
        $region108: #{decoder_layer.1} parent=103 // pred_fallthru
          _
      $region104: #{decoder_layer.1} parent=5 // pred_fallthru
        _
    $region6: #{decoder_layer.1} parent=1 // loop_footer
      %s32 = sadd.s32 1, %s28
    $region7: #{decoder_layer.1} parent=1 // loop_footer_branch
      %27 = sbr.rel target = $region3
    $region8: #{decoder_layer.1} parent=1 // loop_exit
      _
    %7098 = vsyncpa [#allocation3], 1
    %s7099 = scalar_lea.sflag [#allocation3], 1
    %7100 = vsyncpa %s7099, 1
    %7101 = vsyncpa [#allocation6], 1
    %7102 = vsyncpa [#allocation9], 1
    %7103 = vsyncpa [#allocation12], 1
    %7104 = vsyncpa [#allocation4], 1
    %s7105 = scalar_lea.sflag [#allocation4], 1
    %7106 = vsyncpa %s7105, 1

</llo_original>
